<compile_context>
chip_gen: v7x
topology: tpu7x:2x2x1
jax: 0.10.0
libtpu: 0.0.40
codegen_flags: <defaults>
</compile_context>

<pallas_src>
from functools import partial

import numpy as np
import jax
import jax.numpy as jnp
from jax import lax
from jax.experimental import pallas as pl
from jax.experimental.pallas import tpu as pltpu


# --------------------------- Pallas kernel -------------------------------

def _make_seq_translator_kernel(num_layers, hidden, num_steps):
    L, H, T = num_layers, hidden, num_steps
    H2 = 2 * H

    def kernel(*refs):
        # Input refs (in order):
        #   gi0 (T,B,3H)              encoder layer-0 input projections (+bias)
        #   f0  (B,C_out)             initial decoder frame
        #   enc_whh (L,H,3H), enc_bhh (L,1,3H)
        #   [L>1] enc_wih_rest (L-1,H,3H), enc_bih_rest (L-1,1,3H)
        #   dec_wih0 (C_out,3H), dec_bih0 (1,3H)
        #   dec_whh (L,H,3H), dec_bhh (L,1,3H)
        #   [L>1] dec_wih_rest (L-1,H,3H), dec_bih_rest (L-1,1,3H)
        #   fc_w (H,C_out), fc_b (1,C_out)
        # Output ref: out (T,B,C_out)
        gi0_ref, f0_ref, enc_whh_ref, enc_bhh_ref = refs[0:4]
        idx = 4
        if L > 1:
            enc_wih_ref, enc_bih_ref = refs[idx], refs[idx + 1]
            idx += 2
        else:
            enc_wih_ref = enc_bih_ref = None
        dec_wih0_ref, dec_bih0_ref, dec_whh_ref, dec_bhh_ref = refs[idx:idx + 4]
        idx += 4
        if L > 1:
            dec_wih_ref, dec_bih_ref = refs[idx], refs[idx + 1]
            idx += 2
        else:
            dec_wih_ref = dec_bih_ref = None
        fc_w_ref, fc_b_ref, out_ref = refs[idx], refs[idx + 1], refs[idx + 2]

        B = gi0_ref.shape[1]
        f32 = jnp.float32

        def dot(a, w):
            return jnp.dot(a, w, preferred_element_type=f32)

        def gru_update(gi, gh, h):
            # gi, gh: (B, 3H) with gate blocks [r | z | n] along lanes.
            rz = jax.nn.sigmoid(gi[:, :H2] + gh[:, :H2])   # one EUP pass for r,z
            r = rz[:, :H]
            z = rz[:, H:]
            n = jnp.tanh(gi[:, H2:] + r * gh[:, H2:])
            return (1.0 - z) * n + z * h

        # ---------------- encoder: h0 = 0, run T steps ----------------
        h_init = tuple(jnp.zeros((B, H), f32) for _ in range(L))

        def enc_step(t, hs):
            hs = list(hs)
            # layer 0: input-to-hidden projection precomputed in the wrapper
            gi = gi0_ref[t]                                          # (B, 3H)
            gh = dot(hs[0], enc_whh_ref[0]) + enc_bhh_ref[0]
            hs[0] = gru_update(gi, gh, hs[0])
            inp = hs[0]
            for l in range(1, L):
                gi = dot(inp, enc_wih_ref[l - 1]) + enc_bih_ref[l - 1]
                gh = dot(hs[l], enc_whh_ref[l]) + enc_bhh_ref[l]
                hs[l] = gru_update(gi, gh, hs[l])
                inp = hs[l]
            return tuple(hs)

        hs = lax.fori_loop(0, T, enc_step, h_init, unroll=True)

        # -------- autoregressive decoder + FC head (T steps) ----------
        def dec_step(t, carry):
            hs, frame = carry                                        # (B, C_out)
            hs = list(hs)
            gi = dot(frame, dec_wih0_ref[...]) + dec_bih0_ref[...]
            gh = dot(hs[0], dec_whh_ref[0]) + dec_bhh_ref[0]
            hs[0] = gru_update(gi, gh, hs[0])
            inp = hs[0]
            for l in range(1, L):
                gi = dot(inp, dec_wih_ref[l - 1]) + dec_bih_ref[l - 1]
                gh = dot(hs[l], dec_whh_ref[l]) + dec_bhh_ref[l]
                hs[l] = gru_update(gi, gh, hs[l])
                inp = hs[l]
            frame = dot(inp, fc_w_ref[...]) + fc_b_ref[...]
            out_ref[t] = frame
            return (tuple(hs), frame)

        lax.fori_loop(0, T, dec_step, (hs, f0_ref[...]), unroll=True)

    return kernel


# ------------------------------ Wrapper ----------------------------------

@partial(jax.jit, static_argnames=("batch_blocks",))
def seq_translator_rnn_forward(x, frame_0, params, *, batch_blocks=1):
    """x: (B, C_in, T), frame_0: (B, C_out, 1) -> (B, C_out, T)."""
    B, _, T = x.shape
    C_out = frame_0.shape[1]
    assert frame_0.shape[2] == 1  # TODO(synk): T0 > 1 not implemented.
    fc_w, fc_b = params["fc"]
    H = fc_w.shape[1]
    L = len(params["enc"])
    assert B % batch_blocks == 0
    Bb = B // batch_blocks

    f32 = jnp.float32

    def prep_w(w):   # PyTorch (3H, in), gate-stacked -> (in, 3H), gates along lanes
        return jnp.transpose(w).astype(f32)

    def prep_b(b):   # (3H,) -> (1, 3H)
        return b.reshape(1, 3 * H).astype(f32)

    enc, dec = params["enc"], params["dec"]

    # Encoder layer-0 input projection hoisted off the serial recurrence:
    # one batched (T*B, C_in) @ (C_in, 3H) matmul in f32, done once under jit.
    w_ih0, _, b_ih0, _ = enc[0]
    gi0 = jnp.einsum("bct,ck->tbk", x.astype(f32), prep_w(w_ih0),
                     precision=jax.lax.Precision.HIGHEST) + prep_b(b_ih0)  # (T,B,3H)

    args = [gi0, frame_0[:, :, 0].astype(f32)]
    args += [jnp.stack([prep_w(l[1]) for l in enc]),          # enc_whh (L,H,3H)
             jnp.stack([prep_b(l[3]) for l in enc])]          # enc_bhh (L,1,3H)
    if L > 1:
        args += [jnp.stack([prep_w(enc[l][0]) for l in range(1, L)]),   # (L-1,H,3H)
                 jnp.stack([prep_b(enc[l][2]) for l in range(1, L)])]   # (L-1,1,3H)
    args += [prep_w(dec[0][0]),                               # dec_wih0 (C_out,3H)
             prep_b(dec[0][2]),                               # dec_bih0 (1,3H)
             jnp.stack([prep_w(l[1]) for l in dec]),          # dec_whh (L,H,3H)
             jnp.stack([prep_b(l[3]) for l in dec])]          # dec_bhh (L,1,3H)
    if L > 1:
        args += [jnp.stack([prep_w(dec[l][0]) for l in range(1, L)]),
                 jnp.stack([prep_b(dec[l][2]) for l in range(1, L)])]
    args += [jnp.transpose(fc_w).astype(f32),                 # fc_w (H, C_out)
             fc_b.reshape(1, C_out).astype(f32)]              # fc_b (1, C_out)

    def bcast_spec(shape):
        nd = len(shape)
        return pl.BlockSpec(shape, lambda i, _nd=nd: (0,) * _nd)

    in_specs = [pl.BlockSpec((T, Bb, 3 * H), lambda i: (0, i, 0)),   # gi0: split batch
                pl.BlockSpec((Bb, C_out), lambda i: (i, 0))]         # f0:  split batch
    in_specs += [bcast_spec(a.shape) for a in args[2:]]              # weights: broadcast

    out_tbc = pl.pallas_call(
        _make_seq_translator_kernel(L, H, T),
        out_shape=jax.ShapeDtypeStruct((T, B, C_out), f32),
        grid=(batch_blocks,),
        in_specs=in_specs,
        out_specs=pl.BlockSpec((T, Bb, C_out), lambda i: (0, i, 0)),
        compiler_params=pltpu.CompilerParams(
            dimension_semantics=("parallel",)),
    )(*args)
    return jnp.transpose(out_tbc, (1, 2, 0))                         # (B, C_out, T)


# --------------------------- Params / reference --------------------------

def init_params(key, C_in, C_out, hidden, num_layers):
    """PyTorch-style GRU + Linear parameters (uniform(-1/sqrt(H), 1/sqrt(H)))."""
    H = hidden
    bound = 1.0 / np.sqrt(H)
    keys = jax.random.split(key, 2 * num_layers * 4 + 2)
    ki = iter(range(len(keys)))

    def u(shape, b):
        return jax.random.uniform(keys[next(ki)], shape, jnp.float32, -b, b)

    params = {"enc": [], "dec": [], "fc": None}
    for side, in0 in (("enc", C_in), ("dec", C_out)):
        for l in range(num_layers):
            in_size = in0 if l == 0 else H
            w_ih = u((3 * H, in_size), bound)
            w_hh = u((3 * H, H), bound)
            b_ih = u((3 * H,), bound)
            b_hh = u((3 * H,), bound)
            params[side].append((w_ih, w_hh, b_ih, b_hh))
    params["fc"] = (u((C_out, H), bound), u((C_out,), bound))
    return params


def _gru_cell_ref(x, h, w_ih, w_hh, b_ih, b_hh):
    gi = x @ w_ih.T + b_ih
    gh = h @ w_hh.T + b_hh
    i_r, i_z, i_n = jnp.split(gi, 3, axis=-1)
    h_r, h_z, h_n = jnp.split(gh, 3, axis=-1)
    r = jax.nn.sigmoid(i_r + h_r)
    z = jax.nn.sigmoid(i_z + h_z)
    n = jnp.tanh(i_n + r * h_n)
    return (1.0 - z) * n + z * h


def ref_forward(x, frame_0, params):
    """Pure-JAX reference mirroring the PyTorch forward."""
    B, _, T = x.shape
    fc_w, fc_b = params["fc"]
    H = fc_w.shape[1]
    L = len(params["enc"])

    xt = jnp.transpose(x, (0, 2, 1)).astype(jnp.float32)       # (B, T, C_in)
    hs = [jnp.zeros((B, H), jnp.float32) for _ in range(L)]
    for t in range(T):
        inp = xt[:, t, :]
        for l in range(L):
            hs[l] = _gru_cell_ref(inp, hs[l], *params["enc"][l])
            inp = hs[l]

    frame = frame_0[:, :, 0].astype(jnp.float32)               # (B, C_out)
    outs = []
    for _ in range(T):
        inp = frame
        for l in range(L):
            hs[l] = _gru_cell_ref(inp, hs[l], *params["dec"][l])
            inp = hs[l]
        frame = inp @ fc_w.T + fc_b
        outs.append(frame)
    return jnp.stack(outs, axis=-1)                            # (B, C_out, T)


# ------------------------------- Main -------------------------------------

if __name__ == "__main__":
    B, C_IN, C_OUT, HIDDEN, NUM_LAYERS, T = 2, 6, 4, 32, 2, 8

    key = jax.random.PRNGKey(0)
    kx, kf, kp = jax.random.split(key, 3)
    x = jax.random.normal(kx, (B, C_IN, T), jnp.float32)
    frame_0 = jax.random.normal(kf, (B, C_OUT, 1), jnp.float32)
    params = init_params(kp, C_IN, C_OUT, HIDDEN, NUM_LAYERS)

    out = seq_translator_rnn_forward(x, frame_0, params)
    out = jax.block_until_ready(out)
    assert out.shape == (B, C_OUT, T), out.shape

    ref = jax.block_until_ready(ref_forward(x, frame_0, params))
    np.testing.assert_allclose(np.asarray(out), np.asarray(ref), rtol=2e-3, atol=2e-3)

    print("KERNEL_OK")
</pallas_src>

<mosaic_0001>
module attributes {stable_mosaic.version = 11 : i64} {
  func.func @kernel(%arg0: i32, %arg1: memref<8x2x96xf32, #tpu.memory_space<vmem>>, %arg2: memref<2x4xf32, #tpu.memory_space<vmem>>, %arg3: memref<2x32x96xf32, #tpu.memory_space<vmem>>, %arg4: memref<2x1x96xf32, #tpu.memory_space<vmem>>, %arg5: memref<1x32x96xf32, #tpu.memory_space<vmem>>, %arg6: memref<1x1x96xf32, #tpu.memory_space<vmem>>, %arg7: memref<4x96xf32, #tpu.memory_space<vmem>>, %arg8: memref<1x96xf32, #tpu.memory_space<vmem>>, %arg9: memref<2x32x96xf32, #tpu.memory_space<vmem>>, %arg10: memref<2x1x96xf32, #tpu.memory_space<vmem>>, %arg11: memref<1x32x96xf32, #tpu.memory_space<vmem>>, %arg12: memref<1x1x96xf32, #tpu.memory_space<vmem>>, %arg13: memref<32x4xf32, #tpu.memory_space<vmem>>, %arg14: memref<1x4xf32, #tpu.memory_space<vmem>>, %arg15: memref<8x2x4xf32, #tpu.memory_space<vmem>>) attributes {dimension_semantics = [#tpu.dimension_semantics<parallel>], iteration_bounds = array<i64: 1>, scalar_prefetch = 0 : i64, scratch_operands = 0 : i64, tpu.core_type = #tpu.core_type<tc>, window_params = [{transform_indices = @transform_0, window_bounds = array<i64: 8, 2, 96>}, {transform_indices = @transform_1, window_bounds = array<i64: 2, 4>}, {pipeline_mode = #tpu.pipeline_mode<synchronous>, transform_indices = @transform_2, window_bounds = array<i64: 2, 32, 96>}, {pipeline_mode = #tpu.pipeline_mode<synchronous>, transform_indices = @transform_3, window_bounds = array<i64: 2, 1, 96>}, {pipeline_mode = #tpu.pipeline_mode<synchronous>, transform_indices = @transform_4, window_bounds = array<i64: 1, 32, 96>}, {pipeline_mode = #tpu.pipeline_mode<synchronous>, transform_indices = @transform_5, window_bounds = array<i64: 1, 1, 96>}, {pipeline_mode = #tpu.pipeline_mode<synchronous>, transform_indices = @transform_6, window_bounds = array<i64: 4, 96>}, {pipeline_mode = #tpu.pipeline_mode<synchronous>, transform_indices = @transform_7, window_bounds = array<i64: 1, 96>}, {pipeline_mode = #tpu.pipeline_mode<synchronous>, transform_indices = @transform_8, window_bounds = array<i64: 2, 32, 96>}, {pipeline_mode = #tpu.pipeline_mode<synchronous>, transform_indices = @transform_9, window_bounds = array<i64: 2, 1, 96>}, {pipeline_mode = #tpu.pipeline_mode<synchronous>, transform_indices = @transform_10, window_bounds = array<i64: 1, 32, 96>}, {pipeline_mode = #tpu.pipeline_mode<synchronous>, transform_indices = @transform_11, window_bounds = array<i64: 1, 1, 96>}, {pipeline_mode = #tpu.pipeline_mode<synchronous>, transform_indices = @transform_12, window_bounds = array<i64: 32, 4>}, {pipeline_mode = #tpu.pipeline_mode<synchronous>, transform_indices = @transform_13, window_bounds = array<i64: 1, 4>}, {transform_indices = @transform_14, window_bounds = array<i64: 8, 2, 4>}]} {
    %cst = arith.constant 0.000000e+00 : f32
    %0 = vector.broadcast %cst : f32 to vector<2x32xf32>
    %cst_0 = arith.constant 0.000000e+00 : f32
    %1 = vector.broadcast %cst_0 : f32 to vector<2x32xf32>
    %c0_i32 = arith.constant 0 : i32
    %2 = arith.index_cast %c0_i32 : i32 to index
    %c0 = arith.constant 0 : index
    %c0_1 = arith.constant 0 : index
    %3 = vector.load %arg1[%2, %c0, %c0_1] : memref<8x2x96xf32, #tpu.memory_space<vmem>>, vector<1x2x96xf32>
    %4 = vector.shape_cast %3 : vector<1x2x96xf32> to vector<2x96xf32>
    %c0_2 = arith.constant 0 : index
    %c0_3 = arith.constant 0 : index
    %c0_4 = arith.constant 0 : index
    %5 = vector.load %arg3[%c0_2, %c0_3, %c0_4] : memref<2x32x96xf32, #tpu.memory_space<vmem>>, vector<1x32x96xf32>
    %6 = vector.shape_cast %5 : vector<1x32x96xf32> to vector<32x96xf32>
    %cst_5 = arith.constant dense<0.000000e+00> : vector<2x96xf32>
    %7 = tpu.matmul %0, %6, %cst_5 {dimension_numbers = #tpu.dot_dimension_numbers<[1], [0], [0], [1], [0, 0, 1, 1], [], []>} : vector<2x32xf32>, vector<32x96xf32>, vector<2x96xf32> -> vector<2x96xf32>
    %c0_6 = arith.constant 0 : index
    %c0_7 = arith.constant 0 : index
    %c0_8 = arith.constant 0 : index
    %8 = vector.load %arg4[%c0_6, %c0_7, %c0_8] : memref<2x1x96xf32, #tpu.memory_space<vmem>>, vector<1x1x96xf32>
    %9 = vector.shape_cast %8 : vector<1x1x96xf32> to vector<1x96xf32>
    %10 = vector.broadcast %9 : vector<1x96xf32> to vector<2x96xf32>
    %11 = arith.addf %7, %10 : vector<2x96xf32>
    %12 = vector.extract_strided_slice %4 {offsets = [0, 0], sizes = [2, 64], strides = [1, 1]} : vector<2x96xf32> to vector<2x64xf32>
    %13 = vector.extract_strided_slice %11 {offsets = [0, 0], sizes = [2, 64], strides = [1, 1]} : vector<2x96xf32> to vector<2x64xf32>
    %14 = arith.addf %12, %13 : vector<2x64xf32>
    %15 = arith.negf %14 : vector<2x64xf32>
    %16 = math.exp %15 : vector<2x64xf32>
    %cst_9 = arith.constant 1.000000e+00 : f32
    %17 = vector.broadcast %cst_9 : f32 to vector<2x64xf32>
    %18 = arith.addf %17, %16 : vector<2x64xf32>
    %19 = arith.divf %17, %18 : vector<2x64xf32>
    %20 = vector.extract_strided_slice %19 {offsets = [0, 0], sizes = [2, 32], strides = [1, 1]} : vector<2x64xf32> to vector<2x32xf32>
    %21 = vector.extract_strided_slice %19 {offsets = [0, 32], sizes = [2, 32], strides = [1, 1]} : vector<2x64xf32> to vector<2x32xf32>
    %22 = vector.extract_strided_slice %4 {offsets = [0, 64], sizes = [2, 32], strides = [1, 1]} : vector<2x96xf32> to vector<2x32xf32>
    %23 = vector.extract_strided_slice %11 {offsets = [0, 64], sizes = [2, 32], strides = [1, 1]} : vector<2x96xf32> to vector<2x32xf32>
    %24 = arith.mulf %20, %23 : vector<2x32xf32>
    %25 = arith.addf %22, %24 : vector<2x32xf32>
    %26 = math.tanh %25 : vector<2x32xf32>
    %cst_10 = arith.constant 1.000000e+00 : f32
    %27 = vector.broadcast %cst_10 : f32 to vector<2x32xf32>
    %28 = arith.subf %27, %21 : vector<2x32xf32>
    %29 = arith.mulf %28, %26 : vector<2x32xf32>
    %30 = arith.mulf %21, %0 : vector<2x32xf32>
    %31 = arith.addf %29, %30 : vector<2x32xf32>
    %c0_11 = arith.constant 0 : index
    %c0_12 = arith.constant 0 : index
    %c0_13 = arith.constant 0 : index
    %32 = vector.load %arg5[%c0_11, %c0_12, %c0_13] : memref<1x32x96xf32, #tpu.memory_space<vmem>>, vector<1x32x96xf32>
    %33 = vector.shape_cast %32 : vector<1x32x96xf32> to vector<32x96xf32>
    %cst_14 = arith.constant dense<0.000000e+00> : vector<2x96xf32>
    %34 = tpu.matmul %31, %33, %cst_14 {dimension_numbers = #tpu.dot_dimension_numbers<[1], [0], [0], [1], [0, 0, 1, 1], [], []>} : vector<2x32xf32>, vector<32x96xf32>, vector<2x96xf32> -> vector<2x96xf32>
    %c0_15 = arith.constant 0 : index
    %c0_16 = arith.constant 0 : index
    %c0_17 = arith.constant 0 : index
    %35 = vector.load %arg6[%c0_15, %c0_16, %c0_17] : memref<1x1x96xf32, #tpu.memory_space<vmem>>, vector<1x1x96xf32>
    %36 = vector.shape_cast %35 : vector<1x1x96xf32> to vector<1x96xf32>
    %37 = vector.broadcast %36 : vector<1x96xf32> to vector<2x96xf32>
    %38 = arith.addf %34, %37 : vector<2x96xf32>
    %c1 = arith.constant 1 : index
    %c0_18 = arith.constant 0 : index
    %c0_19 = arith.constant 0 : index
    %39 = vector.load %arg3[%c1, %c0_18, %c0_19] : memref<2x32x96xf32, #tpu.memory_space<vmem>>, vector<1x32x96xf32>
    %40 = vector.shape_cast %39 : vector<1x32x96xf32> to vector<32x96xf32>
    %cst_20 = arith.constant dense<0.000000e+00> : vector<2x96xf32>
    %41 = tpu.matmul %1, %40, %cst_20 {dimension_numbers = #tpu.dot_dimension_numbers<[1], [0], [0], [1], [0, 0, 1, 1], [], []>} : vector<2x32xf32>, vector<32x96xf32>, vector<2x96xf32> -> vector<2x96xf32>
    %c1_21 = arith.constant 1 : index
    %c0_22 = arith.constant 0 : index
    %c0_23 = arith.constant 0 : index
    %42 = vector.load %arg4[%c1_21, %c0_22, %c0_23] : memref<2x1x96xf32, #tpu.memory_space<vmem>>, vector<1x1x96xf32>
    %43 = vector.shape_cast %42 : vector<1x1x96xf32> to vector<1x96xf32>
    %44 = vector.broadcast %43 : vector<1x96xf32> to vector<2x96xf32>
    %45 = arith.addf %41, %44 : vector<2x96xf32>
    %46 = vector.extract_strided_slice %38 {offsets = [0, 0], sizes = [2, 64], strides = [1, 1]} : vector<2x96xf32> to vector<2x64xf32>
    %47 = vector.extract_strided_slice %45 {offsets = [0, 0], sizes = [2, 64], strides = [1, 1]} : vector<2x96xf32> to vector<2x64xf32>
    %48 = arith.addf %46, %47 : vector<2x64xf32>
    %49 = arith.negf %48 : vector<2x64xf32>
    %50 = math.exp %49 : vector<2x64xf32>
    %cst_24 = arith.constant 1.000000e+00 : f32
    %51 = vector.broadcast %cst_24 : f32 to vector<2x64xf32>
    %52 = arith.addf %51, %50 : vector<2x64xf32>
    %53 = arith.divf %51, %52 : vector<2x64xf32>
    %54 = vector.extract_strided_slice %53 {offsets = [0, 0], sizes = [2, 32], strides = [1, 1]} : vector<2x64xf32> to vector<2x32xf32>
    %55 = vector.extract_strided_slice %53 {offsets = [0, 32], sizes = [2, 32], strides = [1, 1]} : vector<2x64xf32> to vector<2x32xf32>
    %56 = vector.extract_strided_slice %38 {offsets = [0, 64], sizes = [2, 32], strides = [1, 1]} : vector<2x96xf32> to vector<2x32xf32>
    %57 = vector.extract_strided_slice %45 {offsets = [0, 64], sizes = [2, 32], strides = [1, 1]} : vector<2x96xf32> to vector<2x32xf32>
    %58 = arith.mulf %54, %57 : vector<2x32xf32>
    %59 = arith.addf %56, %58 : vector<2x32xf32>
    %60 = math.tanh %59 : vector<2x32xf32>
    %cst_25 = arith.constant 1.000000e+00 : f32
    %61 = vector.broadcast %cst_25 : f32 to vector<2x32xf32>
    %62 = arith.subf %61, %55 : vector<2x32xf32>
    %63 = arith.mulf %62, %60 : vector<2x32xf32>
    %64 = arith.mulf %55, %1 : vector<2x32xf32>
    %65 = arith.addf %63, %64 : vector<2x32xf32>
    %c1_i32 = arith.constant 1 : i32
    %66 = arith.index_cast %c1_i32 : i32 to index
    %c0_26 = arith.constant 0 : index
    %c0_27 = arith.constant 0 : index
    %67 = vector.load %arg1[%66, %c0_26, %c0_27] : memref<8x2x96xf32, #tpu.memory_space<vmem>>, vector<1x2x96xf32>
    %68 = vector.shape_cast %67 : vector<1x2x96xf32> to vector<2x96xf32>
    %c0_28 = arith.constant 0 : index
    %c0_29 = arith.constant 0 : index
    %c0_30 = arith.constant 0 : index
    %69 = vector.load %arg3[%c0_28, %c0_29, %c0_30] : memref<2x32x96xf32, #tpu.memory_space<vmem>>, vector<1x32x96xf32>
    %70 = vector.shape_cast %69 : vector<1x32x96xf32> to vector<32x96xf32>
    %cst_31 = arith.constant dense<0.000000e+00> : vector<2x96xf32>
    %71 = tpu.matmul %31, %70, %cst_31 {dimension_numbers = #tpu.dot_dimension_numbers<[1], [0], [0], [1], [0, 0, 1, 1], [], []>} : vector<2x32xf32>, vector<32x96xf32>, vector<2x96xf32> -> vector<2x96xf32>
    %c0_32 = arith.constant 0 : index
    %c0_33 = arith.constant 0 : index
    %c0_34 = arith.constant 0 : index
    %72 = vector.load %arg4[%c0_32, %c0_33, %c0_34] : memref<2x1x96xf32, #tpu.memory_space<vmem>>, vector<1x1x96xf32>
    %73 = vector.shape_cast %72 : vector<1x1x96xf32> to vector<1x96xf32>
    %74 = vector.broadcast %73 : vector<1x96xf32> to vector<2x96xf32>
    %75 = arith.addf %71, %74 : vector<2x96xf32>
    %76 = vector.extract_strided_slice %68 {offsets = [0, 0], sizes = [2, 64], strides = [1, 1]} : vector<2x96xf32> to vector<2x64xf32>
    %77 = vector.extract_strided_slice %75 {offsets = [0, 0], sizes = [2, 64], strides = [1, 1]} : vector<2x96xf32> to vector<2x64xf32>
    %78 = arith.addf %76, %77 : vector<2x64xf32>
    %79 = arith.negf %78 : vector<2x64xf32>
    %80 = math.exp %79 : vector<2x64xf32>
    %cst_35 = arith.constant 1.000000e+00 : f32
    %81 = vector.broadcast %cst_35 : f32 to vector<2x64xf32>
    %82 = arith.addf %81, %80 : vector<2x64xf32>
    %83 = arith.divf %81, %82 : vector<2x64xf32>
    %84 = vector.extract_strided_slice %83 {offsets = [0, 0], sizes = [2, 32], strides = [1, 1]} : vector<2x64xf32> to vector<2x32xf32>
    %85 = vector.extract_strided_slice %83 {offsets = [0, 32], sizes = [2, 32], strides = [1, 1]} : vector<2x64xf32> to vector<2x32xf32>
    %86 = vector.extract_strided_slice %68 {offsets = [0, 64], sizes = [2, 32], strides = [1, 1]} : vector<2x96xf32> to vector<2x32xf32>
    %87 = vector.extract_strided_slice %75 {offsets = [0, 64], sizes = [2, 32], strides = [1, 1]} : vector<2x96xf32> to vector<2x32xf32>
    %88 = arith.mulf %84, %87 : vector<2x32xf32>
    %89 = arith.addf %86, %88 : vector<2x32xf32>
    %90 = math.tanh %89 : vector<2x32xf32>
    %cst_36 = arith.constant 1.000000e+00 : f32
    %91 = vector.broadcast %cst_36 : f32 to vector<2x32xf32>
    %92 = arith.subf %91, %85 : vector<2x32xf32>
    %93 = arith.mulf %92, %90 : vector<2x32xf32>
    %94 = arith.mulf %85, %31 : vector<2x32xf32>
    %95 = arith.addf %93, %94 : vector<2x32xf32>
    %c0_37 = arith.constant 0 : index
    %c0_38 = arith.constant 0 : index
    %c0_39 = arith.constant 0 : index
    %96 = vector.load %arg5[%c0_37, %c0_38, %c0_39] : memref<1x32x96xf32, #tpu.memory_space<vmem>>, vector<1x32x96xf32>
    %97 = vector.shape_cast %96 : vector<1x32x96xf32> to vector<32x96xf32>
    %cst_40 = arith.constant dense<0.000000e+00> : vector<2x96xf32>
    %98 = tpu.matmul %95, %97, %cst_40 {dimension_numbers = #tpu.dot_dimension_numbers<[1], [0], [0], [1], [0, 0, 1, 1], [], []>} : vector<2x32xf32>, vector<32x96xf32>, vector<2x96xf32> -> vector<2x96xf32>
    %c0_41 = arith.constant 0 : index
    %c0_42 = arith.constant 0 : index
    %c0_43 = arith.constant 0 : index
    %99 = vector.load %arg6[%c0_41, %c0_42, %c0_43] : memref<1x1x96xf32, #tpu.memory_space<vmem>>, vector<1x1x96xf32>
    %100 = vector.shape_cast %99 : vector<1x1x96xf32> to vector<1x96xf32>
    %101 = vector.broadcast %100 : vector<1x96xf32> to vector<2x96xf32>
    %102 = arith.addf %98, %101 : vector<2x96xf32>
    %c1_44 = arith.constant 1 : index
    %c0_45 = arith.constant 0 : index
    %c0_46 = arith.constant 0 : index
    %103 = vector.load %arg3[%c1_44, %c0_45, %c0_46] : memref<2x32x96xf32, #tpu.memory_space<vmem>>, vector<1x32x96xf32>
    %104 = vector.shape_cast %103 : vector<1x32x96xf32> to vector<32x96xf32>
    %cst_47 = arith.constant dense<0.000000e+00> : vector<2x96xf32>
    %105 = tpu.matmul %65, %104, %cst_47 {dimension_numbers = #tpu.dot_dimension_numbers<[1], [0], [0], [1], [0, 0, 1, 1], [], []>} : vector<2x32xf32>, vector<32x96xf32>, vector<2x96xf32> -> vector<2x96xf32>
    %c1_48 = arith.constant 1 : index
    %c0_49 = arith.constant 0 : index
    %c0_50 = arith.constant 0 : index
    %106 = vector.load %arg4[%c1_48, %c0_49, %c0_50] : memref<2x1x96xf32, #tpu.memory_space<vmem>>, vector<1x1x96xf32>
    %107 = vector.shape_cast %106 : vector<1x1x96xf32> to vector<1x96xf32>
    %108 = vector.broadcast %107 : vector<1x96xf32> to vector<2x96xf32>
    %109 = arith.addf %105, %108 : vector<2x96xf32>
    %110 = vector.extract_strided_slice %102 {offsets = [0, 0], sizes = [2, 64], strides = [1, 1]} : vector<2x96xf32> to vector<2x64xf32>
    %111 = vector.extract_strided_slice %109 {offsets = [0, 0], sizes = [2, 64], strides = [1, 1]} : vector<2x96xf32> to vector<2x64xf32>
    %112 = arith.addf %110, %111 : vector<2x64xf32>
    %113 = arith.negf %112 : vector<2x64xf32>
    %114 = math.exp %113 : vector<2x64xf32>
    %cst_51 = arith.constant 1.000000e+00 : f32
    %115 = vector.broadcast %cst_51 : f32 to vector<2x64xf32>
    %116 = arith.addf %115, %114 : vector<2x64xf32>
    %117 = arith.divf %115, %116 : vector<2x64xf32>
    %118 = vector.extract_strided_slice %117 {offsets = [0, 0], sizes = [2, 32], strides = [1, 1]} : vector<2x64xf32> to vector<2x32xf32>
    %119 = vector.extract_strided_slice %117 {offsets = [0, 32], sizes = [2, 32], strides = [1, 1]} : vector<2x64xf32> to vector<2x32xf32>
    %120 = vector.extract_strided_slice %102 {offsets = [0, 64], sizes = [2, 32], strides = [1, 1]} : vector<2x96xf32> to vector<2x32xf32>
    %121 = vector.extract_strided_slice %109 {offsets = [0, 64], sizes = [2, 32], strides = [1, 1]} : vector<2x96xf32> to vector<2x32xf32>
    %122 = arith.mulf %118, %121 : vector<2x32xf32>
    %123 = arith.addf %120, %122 : vector<2x32xf32>
    %124 = math.tanh %123 : vector<2x32xf32>
    %cst_52 = arith.constant 1.000000e+00 : f32
    %125 = vector.broadcast %cst_52 : f32 to vector<2x32xf32>
    %126 = arith.subf %125, %119 : vector<2x32xf32>
    %127 = arith.mulf %126, %124 : vector<2x32xf32>
    %128 = arith.mulf %119, %65 : vector<2x32xf32>
    %129 = arith.addf %127, %128 : vector<2x32xf32>
    %c2_i32 = arith.constant 2 : i32
    %130 = arith.index_cast %c2_i32 : i32 to index
    %c0_53 = arith.constant 0 : index
    %c0_54 = arith.constant 0 : index
    %131 = vector.load %arg1[%130, %c0_53, %c0_54] : memref<8x2x96xf32, #tpu.memory_space<vmem>>, vector<1x2x96xf32>
    %132 = vector.shape_cast %131 : vector<1x2x96xf32> to vector<2x96xf32>
    %c0_55 = arith.constant 0 : index
    %c0_56 = arith.constant 0 : index
    %c0_57 = arith.constant 0 : index
    %133 = vector.load %arg3[%c0_55, %c0_56, %c0_57] : memref<2x32x96xf32, #tpu.memory_space<vmem>>, vector<1x32x96xf32>
    %134 = vector.shape_cast %133 : vector<1x32x96xf32> to vector<32x96xf32>
    %cst_58 = arith.constant dense<0.000000e+00> : vector<2x96xf32>
    %135 = tpu.matmul %95, %134, %cst_58 {dimension_numbers = #tpu.dot_dimension_numbers<[1], [0], [0], [1], [0, 0, 1, 1], [], []>} : vector<2x32xf32>, vector<32x96xf32>, vector<2x96xf32> -> vector<2x96xf32>
    %c0_59 = arith.constant 0 : index
    %c0_60 = arith.constant 0 : index
    %c0_61 = arith.constant 0 : index
    %136 = vector.load %arg4[%c0_59, %c0_60, %c0_61] : memref<2x1x96xf32, #tpu.memory_space<vmem>>, vector<1x1x96xf32>
    %137 = vector.shape_cast %136 : vector<1x1x96xf32> to vector<1x96xf32>
    %138 = vector.broadcast %137 : vector<1x96xf32> to vector<2x96xf32>
    %139 = arith.addf %135, %138 : vector<2x96xf32>
    %140 = vector.extract_strided_slice %132 {offsets = [0, 0], sizes = [2, 64], strides = [1, 1]} : vector<2x96xf32> to vector<2x64xf32>
    %141 = vector.extract_strided_slice %139 {offsets = [0, 0], sizes = [2, 64], strides = [1, 1]} : vector<2x96xf32> to vector<2x64xf32>
    %142 = arith.addf %140, %141 : vector<2x64xf32>
    %143 = arith.negf %142 : vector<2x64xf32>
    %144 = math.exp %143 : vector<2x64xf32>
    %cst_62 = arith.constant 1.000000e+00 : f32
    %145 = vector.broadcast %cst_62 : f32 to vector<2x64xf32>
    %146 = arith.addf %145, %144 : vector<2x64xf32>
    %147 = arith.divf %145, %146 : vector<2x64xf32>
    %148 = vector.extract_strided_slice %147 {offsets = [0, 0], sizes = [2, 32], strides = [1, 1]} : vector<2x64xf32> to vector<2x32xf32>
    %149 = vector.extract_strided_slice %147 {offsets = [0, 32], sizes = [2, 32], strides = [1, 1]} : vector<2x64xf32> to vector<2x32xf32>
    %150 = vector.extract_strided_slice %132 {offsets = [0, 64], sizes = [2, 32], strides = [1, 1]} : vector<2x96xf32> to vector<2x32xf32>
    %151 = vector.extract_strided_slice %139 {offsets = [0, 64], sizes = [2, 32], strides = [1, 1]} : vector<2x96xf32> to vector<2x32xf32>
    %152 = arith.mulf %148, %151 : vector<2x32xf32>
    %153 = arith.addf %150, %152 : vector<2x32xf32>
    %154 = math.tanh %153 : vector<2x32xf32>
    %cst_63 = arith.constant 1.000000e+00 : f32
    %155 = vector.broadcast %cst_63 : f32 to vector<2x32xf32>
    %156 = arith.subf %155, %149 : vector<2x32xf32>
    %157 = arith.mulf %156, %154 : vector<2x32xf32>
    %158 = arith.mulf %149, %95 : vector<2x32xf32>
    %159 = arith.addf %157, %158 : vector<2x32xf32>
    %c0_64 = arith.constant 0 : index
    %c0_65 = arith.constant 0 : index
    %c0_66 = arith.constant 0 : index
    %160 = vector.load %arg5[%c0_64, %c0_65, %c0_66] : memref<1x32x96xf32, #tpu.memory_space<vmem>>, vector<1x32x96xf32>
    %161 = vector.shape_cast %160 : vector<1x32x96xf32> to vector<32x96xf32>
    %cst_67 = arith.constant dense<0.000000e+00> : vector<2x96xf32>
    %162 = tpu.matmul %159, %161, %cst_67 {dimension_numbers = #tpu.dot_dimension_numbers<[1], [0], [0], [1], [0, 0, 1, 1], [], []>} : vector<2x32xf32>, vector<32x96xf32>, vector<2x96xf32> -> vector<2x96xf32>
    %c0_68 = arith.constant 0 : index
    %c0_69 = arith.constant 0 : index
    %c0_70 = arith.constant 0 : index
    %163 = vector.load %arg6[%c0_68, %c0_69, %c0_70] : memref<1x1x96xf32, #tpu.memory_space<vmem>>, vector<1x1x96xf32>
    %164 = vector.shape_cast %163 : vector<1x1x96xf32> to vector<1x96xf32>
    %165 = vector.broadcast %164 : vector<1x96xf32> to vector<2x96xf32>
    %166 = arith.addf %162, %165 : vector<2x96xf32>
    %c1_71 = arith.constant 1 : index
    %c0_72 = arith.constant 0 : index
    %c0_73 = arith.constant 0 : index
    %167 = vector.load %arg3[%c1_71, %c0_72, %c0_73] : memref<2x32x96xf32, #tpu.memory_space<vmem>>, vector<1x32x96xf32>
    %168 = vector.shape_cast %167 : vector<1x32x96xf32> to vector<32x96xf32>
    %cst_74 = arith.constant dense<0.000000e+00> : vector<2x96xf32>
    %169 = tpu.matmul %129, %168, %cst_74 {dimension_numbers = #tpu.dot_dimension_numbers<[1], [0], [0], [1], [0, 0, 1, 1], [], []>} : vector<2x32xf32>, vector<32x96xf32>, vector<2x96xf32> -> vector<2x96xf32>
    %c1_75 = arith.constant 1 : index
    %c0_76 = arith.constant 0 : index
    %c0_77 = arith.constant 0 : index
    %170 = vector.load %arg4[%c1_75, %c0_76, %c0_77] : memref<2x1x96xf32, #tpu.memory_space<vmem>>, vector<1x1x96xf32>
    %171 = vector.shape_cast %170 : vector<1x1x96xf32> to vector<1x96xf32>
    %172 = vector.broadcast %171 : vector<1x96xf32> to vector<2x96xf32>
    %173 = arith.addf %169, %172 : vector<2x96xf32>
    %174 = vector.extract_strided_slice %166 {offsets = [0, 0], sizes = [2, 64], strides = [1, 1]} : vector<2x96xf32> to vector<2x64xf32>
    %175 = vector.extract_strided_slice %173 {offsets = [0, 0], sizes = [2, 64], strides = [1, 1]} : vector<2x96xf32> to vector<2x64xf32>
    %176 = arith.addf %174, %175 : vector<2x64xf32>
    %177 = arith.negf %176 : vector<2x64xf32>
    %178 = math.exp %177 : vector<2x64xf32>
    %cst_78 = arith.constant 1.000000e+00 : f32
    %179 = vector.broadcast %cst_78 : f32 to vector<2x64xf32>
    %180 = arith.addf %179, %178 : vector<2x64xf32>
    %181 = arith.divf %179, %180 : vector<2x64xf32>
    %182 = vector.extract_strided_slice %181 {offsets = [0, 0], sizes = [2, 32], strides = [1, 1]} : vector<2x64xf32> to vector<2x32xf32>
    %183 = vector.extract_strided_slice %181 {offsets = [0, 32], sizes = [2, 32], strides = [1, 1]} : vector<2x64xf32> to vector<2x32xf32>
    %184 = vector.extract_strided_slice %166 {offsets = [0, 64], sizes = [2, 32], strides = [1, 1]} : vector<2x96xf32> to vector<2x32xf32>
    %185 = vector.extract_strided_slice %173 {offsets = [0, 64], sizes = [2, 32], strides = [1, 1]} : vector<2x96xf32> to vector<2x32xf32>
    %186 = arith.mulf %182, %185 : vector<2x32xf32>
    %187 = arith.addf %184, %186 : vector<2x32xf32>
    %188 = math.tanh %187 : vector<2x32xf32>
    %cst_79 = arith.constant 1.000000e+00 : f32
    %189 = vector.broadcast %cst_79 : f32 to vector<2x32xf32>
    %190 = arith.subf %189, %183 : vector<2x32xf32>
    %191 = arith.mulf %190, %188 : vector<2x32xf32>
    %192 = arith.mulf %183, %129 : vector<2x32xf32>
    %193 = arith.addf %191, %192 : vector<2x32xf32>
    %c3_i32 = arith.constant 3 : i32
    %194 = arith.index_cast %c3_i32 : i32 to index
    %c0_80 = arith.constant 0 : index
    %c0_81 = arith.constant 0 : index
    %195 = vector.load %arg1[%194, %c0_80, %c0_81] : memref<8x2x96xf32, #tpu.memory_space<vmem>>, vector<1x2x96xf32>
    %196 = vector.shape_cast %195 : vector<1x2x96xf32> to vector<2x96xf32>
    %c0_82 = arith.constant 0 : index
    %c0_83 = arith.constant 0 : index
    %c0_84 = arith.constant 0 : index
    %197 = vector.load %arg3[%c0_82, %c0_83, %c0_84] : memref<2x32x96xf32, #tpu.memory_space<vmem>>, vector<1x32x96xf32>
    %198 = vector.shape_cast %197 : vector<1x32x96xf32> to vector<32x96xf32>
    %cst_85 = arith.constant dense<0.000000e+00> : vector<2x96xf32>
    %199 = tpu.matmul %159, %198, %cst_85 {dimension_numbers = #tpu.dot_dimension_numbers<[1], [0], [0], [1], [0, 0, 1, 1], [], []>} : vector<2x32xf32>, vector<32x96xf32>, vector<2x96xf32> -> vector<2x96xf32>
    %c0_86 = arith.constant 0 : index
    %c0_87 = arith.constant 0 : index
    %c0_88 = arith.constant 0 : index
    %200 = vector.load %arg4[%c0_86, %c0_87, %c0_88] : memref<2x1x96xf32, #tpu.memory_space<vmem>>, vector<1x1x96xf32>
    %201 = vector.shape_cast %200 : vector<1x1x96xf32> to vector<1x96xf32>
    %202 = vector.broadcast %201 : vector<1x96xf32> to vector<2x96xf32>
    %203 = arith.addf %199, %202 : vector<2x96xf32>
    %204 = vector.extract_strided_slice %196 {offsets = [0, 0], sizes = [2, 64], strides = [1, 1]} : vector<2x96xf32> to vector<2x64xf32>
    %205 = vector.extract_strided_slice %203 {offsets = [0, 0], sizes = [2, 64], strides = [1, 1]} : vector<2x96xf32> to vector<2x64xf32>
    %206 = arith.addf %204, %205 : vector<2x64xf32>
    %207 = arith.negf %206 : vector<2x64xf32>
    %208 = math.exp %207 : vector<2x64xf32>
    %cst_89 = arith.constant 1.000000e+00 : f32
    %209 = vector.broadcast %cst_89 : f32 to vector<2x64xf32>
    %210 = arith.addf %209, %208 : vector<2x64xf32>
    %211 = arith.divf %209, %210 : vector<2x64xf32>
    %212 = vector.extract_strided_slice %211 {offsets = [0, 0], sizes = [2, 32], strides = [1, 1]} : vector<2x64xf32> to vector<2x32xf32>
    %213 = vector.extract_strided_slice %211 {offsets = [0, 32], sizes = [2, 32], strides = [1, 1]} : vector<2x64xf32> to vector<2x32xf32>
    %214 = vector.extract_strided_slice %196 {offsets = [0, 64], sizes = [2, 32], strides = [1, 1]} : vector<2x96xf32> to vector<2x32xf32>
    %215 = vector.extract_strided_slice %203 {offsets = [0, 64], sizes = [2, 32], strides = [1, 1]} : vector<2x96xf32> to vector<2x32xf32>
    %216 = arith.mulf %212, %215 : vector<2x32xf32>
    %217 = arith.addf %214, %216 : vector<2x32xf32>
    %218 = math.tanh %217 : vector<2x32xf32>
    %cst_90 = arith.constant 1.000000e+00 : f32
    %219 = vector.broadcast %cst_90 : f32 to vector<2x32xf32>
    %220 = arith.subf %219, %213 : vector<2x32xf32>
    %221 = arith.mulf %220, %218 : vector<2x32xf32>
    %222 = arith.mulf %213, %159 : vector<2x32xf32>
    %223 = arith.addf %221, %222 : vector<2x32xf32>
    %c0_91 = arith.constant 0 : index
    %c0_92 = arith.constant 0 : index
    %c0_93 = arith.constant 0 : index
    %224 = vector.load %arg5[%c0_91, %c0_92, %c0_93] : memref<1x32x96xf32, #tpu.memory_space<vmem>>, vector<1x32x96xf32>
    %225 = vector.shape_cast %224 : vector<1x32x96xf32> to vector<32x96xf32>
    %cst_94 = arith.constant dense<0.000000e+00> : vector<2x96xf32>
    %226 = tpu.matmul %223, %225, %cst_94 {dimension_numbers = #tpu.dot_dimension_numbers<[1], [0], [0], [1], [0, 0, 1, 1], [], []>} : vector<2x32xf32>, vector<32x96xf32>, vector<2x96xf32> -> vector<2x96xf32>
    %c0_95 = arith.constant 0 : index
    %c0_96 = arith.constant 0 : index
    %c0_97 = arith.constant 0 : index
    %227 = vector.load %arg6[%c0_95, %c0_96, %c0_97] : memref<1x1x96xf32, #tpu.memory_space<vmem>>, vector<1x1x96xf32>
    %228 = vector.shape_cast %227 : vector<1x1x96xf32> to vector<1x96xf32>
    %229 = vector.broadcast %228 : vector<1x96xf32> to vector<2x96xf32>
    %230 = arith.addf %226, %229 : vector<2x96xf32>
    %c1_98 = arith.constant 1 : index
    %c0_99 = arith.constant 0 : index
    %c0_100 = arith.constant 0 : index
    %231 = vector.load %arg3[%c1_98, %c0_99, %c0_100] : memref<2x32x96xf32, #tpu.memory_space<vmem>>, vector<1x32x96xf32>
    %232 = vector.shape_cast %231 : vector<1x32x96xf32> to vector<32x96xf32>
    %cst_101 = arith.constant dense<0.000000e+00> : vector<2x96xf32>
    %233 = tpu.matmul %193, %232, %cst_101 {dimension_numbers = #tpu.dot_dimension_numbers<[1], [0], [0], [1], [0, 0, 1, 1], [], []>} : vector<2x32xf32>, vector<32x96xf32>, vector<2x96xf32> -> vector<2x96xf32>
    %c1_102 = arith.constant 1 : index
    %c0_103 = arith.constant 0 : index
    %c0_104 = arith.constant 0 : index
    %234 = vector.load %arg4[%c1_102, %c0_103, %c0_104] : memref<2x1x96xf32, #tpu.memory_space<vmem>>, vector<1x1x96xf32>
    %235 = vector.shape_cast %234 : vector<1x1x96xf32> to vector<1x96xf32>
    %236 = vector.broadcast %235 : vector<1x96xf32> to vector<2x96xf32>
    %237 = arith.addf %233, %236 : vector<2x96xf32>
    %238 = vector.extract_strided_slice %230 {offsets = [0, 0], sizes = [2, 64], strides = [1, 1]} : vector<2x96xf32> to vector<2x64xf32>
    %239 = vector.extract_strided_slice %237 {offsets = [0, 0], sizes = [2, 64], strides = [1, 1]} : vector<2x96xf32> to vector<2x64xf32>
    %240 = arith.addf %238, %239 : vector<2x64xf32>
    %241 = arith.negf %240 : vector<2x64xf32>
    %242 = math.exp %241 : vector<2x64xf32>
    %cst_105 = arith.constant 1.000000e+00 : f32
    %243 = vector.broadcast %cst_105 : f32 to vector<2x64xf32>
    %244 = arith.addf %243, %242 : vector<2x64xf32>
    %245 = arith.divf %243, %244 : vector<2x64xf32>
    %246 = vector.extract_strided_slice %245 {offsets = [0, 0], sizes = [2, 32], strides = [1, 1]} : vector<2x64xf32> to vector<2x32xf32>
    %247 = vector.extract_strided_slice %245 {offsets = [0, 32], sizes = [2, 32], strides = [1, 1]} : vector<2x64xf32> to vector<2x32xf32>
    %248 = vector.extract_strided_slice %230 {offsets = [0, 64], sizes = [2, 32], strides = [1, 1]} : vector<2x96xf32> to vector<2x32xf32>
    %249 = vector.extract_strided_slice %237 {offsets = [0, 64], sizes = [2, 32], strides = [1, 1]} : vector<2x96xf32> to vector<2x32xf32>
    %250 = arith.mulf %246, %249 : vector<2x32xf32>
    %251 = arith.addf %248, %250 : vector<2x32xf32>
    %252 = math.tanh %251 : vector<2x32xf32>
    %cst_106 = arith.constant 1.000000e+00 : f32
    %253 = vector.broadcast %cst_106 : f32 to vector<2x32xf32>
    %254 = arith.subf %253, %247 : vector<2x32xf32>
    %255 = arith.mulf %254, %252 : vector<2x32xf32>
    %256 = arith.mulf %247, %193 : vector<2x32xf32>
    %257 = arith.addf %255, %256 : vector<2x32xf32>
    %c4_i32 = arith.constant 4 : i32
    %258 = arith.index_cast %c4_i32 : i32 to index
    %c0_107 = arith.constant 0 : index
    %c0_108 = arith.constant 0 : index
    %259 = vector.load %arg1[%258, %c0_107, %c0_108] : memref<8x2x96xf32, #tpu.memory_space<vmem>>, vector<1x2x96xf32>
    %260 = vector.shape_cast %259 : vector<1x2x96xf32> to vector<2x96xf32>
    %c0_109 = arith.constant 0 : index
    %c0_110 = arith.constant 0 : index
    %c0_111 = arith.constant 0 : index
    %261 = vector.load %arg3[%c0_109, %c0_110, %c0_111] : memref<2x32x96xf32, #tpu.memory_space<vmem>>, vector<1x32x96xf32>
    %262 = vector.shape_cast %261 : vector<1x32x96xf32> to vector<32x96xf32>
    %cst_112 = arith.constant dense<0.000000e+00> : vector<2x96xf32>
    %263 = tpu.matmul %223, %262, %cst_112 {dimension_numbers = #tpu.dot_dimension_numbers<[1], [0], [0], [1], [0, 0, 1, 1], [], []>} : vector<2x32xf32>, vector<32x96xf32>, vector<2x96xf32> -> vector<2x96xf32>
    %c0_113 = arith.constant 0 : index
    %c0_114 = arith.constant 0 : index
    %c0_115 = arith.constant 0 : index
    %264 = vector.load %arg4[%c0_113, %c0_114, %c0_115] : memref<2x1x96xf32, #tpu.memory_space<vmem>>, vector<1x1x96xf32>
    %265 = vector.shape_cast %264 : vector<1x1x96xf32> to vector<1x96xf32>
    %266 = vector.broadcast %265 : vector<1x96xf32> to vector<2x96xf32>
    %267 = arith.addf %263, %266 : vector<2x96xf32>
    %268 = vector.extract_strided_slice %260 {offsets = [0, 0], sizes = [2, 64], strides = [1, 1]} : vector<2x96xf32> to vector<2x64xf32>
    %269 = vector.extract_strided_slice %267 {offsets = [0, 0], sizes = [2, 64], strides = [1, 1]} : vector<2x96xf32> to vector<2x64xf32>
    %270 = arith.addf %268, %269 : vector<2x64xf32>
    %271 = arith.negf %270 : vector<2x64xf32>
    %272 = math.exp %271 : vector<2x64xf32>
    %cst_116 = arith.constant 1.000000e+00 : f32
    %273 = vector.broadcast %cst_116 : f32 to vector<2x64xf32>
    %274 = arith.addf %273, %272 : vector<2x64xf32>
    %275 = arith.divf %273, %274 : vector<2x64xf32>
    %276 = vector.extract_strided_slice %275 {offsets = [0, 0], sizes = [2, 32], strides = [1, 1]} : vector<2x64xf32> to vector<2x32xf32>
    %277 = vector.extract_strided_slice %275 {offsets = [0, 32], sizes = [2, 32], strides = [1, 1]} : vector<2x64xf32> to vector<2x32xf32>
    %278 = vector.extract_strided_slice %260 {offsets = [0, 64], sizes = [2, 32], strides = [1, 1]} : vector<2x96xf32> to vector<2x32xf32>
    %279 = vector.extract_strided_slice %267 {offsets = [0, 64], sizes = [2, 32], strides = [1, 1]} : vector<2x96xf32> to vector<2x32xf32>
    %280 = arith.mulf %276, %279 : vector<2x32xf32>
    %281 = arith.addf %278, %280 : vector<2x32xf32>
    %282 = math.tanh %281 : vector<2x32xf32>
    %cst_117 = arith.constant 1.000000e+00 : f32
    %283 = vector.broadcast %cst_117 : f32 to vector<2x32xf32>
    %284 = arith.subf %283, %277 : vector<2x32xf32>
    %285 = arith.mulf %284, %282 : vector<2x32xf32>
    %286 = arith.mulf %277, %223 : vector<2x32xf32>
    %287 = arith.addf %285, %286 : vector<2x32xf32>
    %c0_118 = arith.constant 0 : index
    %c0_119 = arith.constant 0 : index
    %c0_120 = arith.constant 0 : index
    %288 = vector.load %arg5[%c0_118, %c0_119, %c0_120] : memref<1x32x96xf32, #tpu.memory_space<vmem>>, vector<1x32x96xf32>
    %289 = vector.shape_cast %288 : vector<1x32x96xf32> to vector<32x96xf32>
    %cst_121 = arith.constant dense<0.000000e+00> : vector<2x96xf32>
    %290 = tpu.matmul %287, %289, %cst_121 {dimension_numbers = #tpu.dot_dimension_numbers<[1], [0], [0], [1], [0, 0, 1, 1], [], []>} : vector<2x32xf32>, vector<32x96xf32>, vector<2x96xf32> -> vector<2x96xf32>
    %c0_122 = arith.constant 0 : index
    %c0_123 = arith.constant 0 : index
    %c0_124 = arith.constant 0 : index
    %291 = vector.load %arg6[%c0_122, %c0_123, %c0_124] : memref<1x1x96xf32, #tpu.memory_space<vmem>>, vector<1x1x96xf32>
    %292 = vector.shape_cast %291 : vector<1x1x96xf32> to vector<1x96xf32>
    %293 = vector.broadcast %292 : vector<1x96xf32> to vector<2x96xf32>
    %294 = arith.addf %290, %293 : vector<2x96xf32>
    %c1_125 = arith.constant 1 : index
    %c0_126 = arith.constant 0 : index
    %c0_127 = arith.constant 0 : index
    %295 = vector.load %arg3[%c1_125, %c0_126, %c0_127] : memref<2x32x96xf32, #tpu.memory_space<vmem>>, vector<1x32x96xf32>
    %296 = vector.shape_cast %295 : vector<1x32x96xf32> to vector<32x96xf32>
    %cst_128 = arith.constant dense<0.000000e+00> : vector<2x96xf32>
    %297 = tpu.matmul %257, %296, %cst_128 {dimension_numbers = #tpu.dot_dimension_numbers<[1], [0], [0], [1], [0, 0, 1, 1], [], []>} : vector<2x32xf32>, vector<32x96xf32>, vector<2x96xf32> -> vector<2x96xf32>
    %c1_129 = arith.constant 1 : index
    %c0_130 = arith.constant 0 : index
    %c0_131 = arith.constant 0 : index
    %298 = vector.load %arg4[%c1_129, %c0_130, %c0_131] : memref<2x1x96xf32, #tpu.memory_space<vmem>>, vector<1x1x96xf32>
    %299 = vector.shape_cast %298 : vector<1x1x96xf32> to vector<1x96xf32>
    %300 = vector.broadcast %299 : vector<1x96xf32> to vector<2x96xf32>
    %301 = arith.addf %297, %300 : vector<2x96xf32>
    %302 = vector.extract_strided_slice %294 {offsets = [0, 0], sizes = [2, 64], strides = [1, 1]} : vector<2x96xf32> to vector<2x64xf32>
    %303 = vector.extract_strided_slice %301 {offsets = [0, 0], sizes = [2, 64], strides = [1, 1]} : vector<2x96xf32> to vector<2x64xf32>
    %304 = arith.addf %302, %303 : vector<2x64xf32>
    %305 = arith.negf %304 : vector<2x64xf32>
    %306 = math.exp %305 : vector<2x64xf32>
    %cst_132 = arith.constant 1.000000e+00 : f32
    %307 = vector.broadcast %cst_132 : f32 to vector<2x64xf32>
    %308 = arith.addf %307, %306 : vector<2x64xf32>
    %309 = arith.divf %307, %308 : vector<2x64xf32>
    %310 = vector.extract_strided_slice %309 {offsets = [0, 0], sizes = [2, 32], strides = [1, 1]} : vector<2x64xf32> to vector<2x32xf32>
    %311 = vector.extract_strided_slice %309 {offsets = [0, 32], sizes = [2, 32], strides = [1, 1]} : vector<2x64xf32> to vector<2x32xf32>
    %312 = vector.extract_strided_slice %294 {offsets = [0, 64], sizes = [2, 32], strides = [1, 1]} : vector<2x96xf32> to vector<2x32xf32>
    %313 = vector.extract_strided_slice %301 {offsets = [0, 64], sizes = [2, 32], strides = [1, 1]} : vector<2x96xf32> to vector<2x32xf32>
    %314 = arith.mulf %310, %313 : vector<2x32xf32>
    %315 = arith.addf %312, %314 : vector<2x32xf32>
    %316 = math.tanh %315 : vector<2x32xf32>
    %cst_133 = arith.constant 1.000000e+00 : f32
    %317 = vector.broadcast %cst_133 : f32 to vector<2x32xf32>
    %318 = arith.subf %317, %311 : vector<2x32xf32>
    %319 = arith.mulf %318, %316 : vector<2x32xf32>
    %320 = arith.mulf %311, %257 : vector<2x32xf32>
    %321 = arith.addf %319, %320 : vector<2x32xf32>
    %c5_i32 = arith.constant 5 : i32
    %322 = arith.index_cast %c5_i32 : i32 to index
    %c0_134 = arith.constant 0 : index
    %c0_135 = arith.constant 0 : index
    %323 = vector.load %arg1[%322, %c0_134, %c0_135] : memref<8x2x96xf32, #tpu.memory_space<vmem>>, vector<1x2x96xf32>
    %324 = vector.shape_cast %323 : vector<1x2x96xf32> to vector<2x96xf32>
    %c0_136 = arith.constant 0 : index
    %c0_137 = arith.constant 0 : index
    %c0_138 = arith.constant 0 : index
    %325 = vector.load %arg3[%c0_136, %c0_137, %c0_138] : memref<2x32x96xf32, #tpu.memory_space<vmem>>, vector<1x32x96xf32>
    %326 = vector.shape_cast %325 : vector<1x32x96xf32> to vector<32x96xf32>
    %cst_139 = arith.constant dense<0.000000e+00> : vector<2x96xf32>
    %327 = tpu.matmul %287, %326, %cst_139 {dimension_numbers = #tpu.dot_dimension_numbers<[1], [0], [0], [1], [0, 0, 1, 1], [], []>} : vector<2x32xf32>, vector<32x96xf32>, vector<2x96xf32> -> vector<2x96xf32>
    %c0_140 = arith.constant 0 : index
    %c0_141 = arith.constant 0 : index
    %c0_142 = arith.constant 0 : index
    %328 = vector.load %arg4[%c0_140, %c0_141, %c0_142] : memref<2x1x96xf32, #tpu.memory_space<vmem>>, vector<1x1x96xf32>
    %329 = vector.shape_cast %328 : vector<1x1x96xf32> to vector<1x96xf32>
    %330 = vector.broadcast %329 : vector<1x96xf32> to vector<2x96xf32>
    %331 = arith.addf %327, %330 : vector<2x96xf32>
    %332 = vector.extract_strided_slice %324 {offsets = [0, 0], sizes = [2, 64], strides = [1, 1]} : vector<2x96xf32> to vector<2x64xf32>
    %333 = vector.extract_strided_slice %331 {offsets = [0, 0], sizes = [2, 64], strides = [1, 1]} : vector<2x96xf32> to vector<2x64xf32>
    %334 = arith.addf %332, %333 : vector<2x64xf32>
    %335 = arith.negf %334 : vector<2x64xf32>
    %336 = math.exp %335 : vector<2x64xf32>
    %cst_143 = arith.constant 1.000000e+00 : f32
    %337 = vector.broadcast %cst_143 : f32 to vector<2x64xf32>
    %338 = arith.addf %337, %336 : vector<2x64xf32>
    %339 = arith.divf %337, %338 : vector<2x64xf32>
    %340 = vector.extract_strided_slice %339 {offsets = [0, 0], sizes = [2, 32], strides = [1, 1]} : vector<2x64xf32> to vector<2x32xf32>
    %341 = vector.extract_strided_slice %339 {offsets = [0, 32], sizes = [2, 32], strides = [1, 1]} : vector<2x64xf32> to vector<2x32xf32>
    %342 = vector.extract_strided_slice %324 {offsets = [0, 64], sizes = [2, 32], strides = [1, 1]} : vector<2x96xf32> to vector<2x32xf32>
    %343 = vector.extract_strided_slice %331 {offsets = [0, 64], sizes = [2, 32], strides = [1, 1]} : vector<2x96xf32> to vector<2x32xf32>
    %344 = arith.mulf %340, %343 : vector<2x32xf32>
    %345 = arith.addf %342, %344 : vector<2x32xf32>
    %346 = math.tanh %345 : vector<2x32xf32>
    %cst_144 = arith.constant 1.000000e+00 : f32
    %347 = vector.broadcast %cst_144 : f32 to vector<2x32xf32>
    %348 = arith.subf %347, %341 : vector<2x32xf32>
    %349 = arith.mulf %348, %346 : vector<2x32xf32>
    %350 = arith.mulf %341, %287 : vector<2x32xf32>
    %351 = arith.addf %349, %350 : vector<2x32xf32>
    %c0_145 = arith.constant 0 : index
    %c0_146 = arith.constant 0 : index
    %c0_147 = arith.constant 0 : index
    %352 = vector.load %arg5[%c0_145, %c0_146, %c0_147] : memref<1x32x96xf32, #tpu.memory_space<vmem>>, vector<1x32x96xf32>
    %353 = vector.shape_cast %352 : vector<1x32x96xf32> to vector<32x96xf32>
    %cst_148 = arith.constant dense<0.000000e+00> : vector<2x96xf32>
    %354 = tpu.matmul %351, %353, %cst_148 {dimension_numbers = #tpu.dot_dimension_numbers<[1], [0], [0], [1], [0, 0, 1, 1], [], []>} : vector<2x32xf32>, vector<32x96xf32>, vector<2x96xf32> -> vector<2x96xf32>
    %c0_149 = arith.constant 0 : index
    %c0_150 = arith.constant 0 : index
    %c0_151 = arith.constant 0 : index
    %355 = vector.load %arg6[%c0_149, %c0_150, %c0_151] : memref<1x1x96xf32, #tpu.memory_space<vmem>>, vector<1x1x96xf32>
    %356 = vector.shape_cast %355 : vector<1x1x96xf32> to vector<1x96xf32>
    %357 = vector.broadcast %356 : vector<1x96xf32> to vector<2x96xf32>
    %358 = arith.addf %354, %357 : vector<2x96xf32>
    %c1_152 = arith.constant 1 : index
    %c0_153 = arith.constant 0 : index
    %c0_154 = arith.constant 0 : index
    %359 = vector.load %arg3[%c1_152, %c0_153, %c0_154] : memref<2x32x96xf32, #tpu.memory_space<vmem>>, vector<1x32x96xf32>
    %360 = vector.shape_cast %359 : vector<1x32x96xf32> to vector<32x96xf32>
    %cst_155 = arith.constant dense<0.000000e+00> : vector<2x96xf32>
    %361 = tpu.matmul %321, %360, %cst_155 {dimension_numbers = #tpu.dot_dimension_numbers<[1], [0], [0], [1], [0, 0, 1, 1], [], []>} : vector<2x32xf32>, vector<32x96xf32>, vector<2x96xf32> -> vector<2x96xf32>
    %c1_156 = arith.constant 1 : index
    %c0_157 = arith.constant 0 : index
    %c0_158 = arith.constant 0 : index
    %362 = vector.load %arg4[%c1_156, %c0_157, %c0_158] : memref<2x1x96xf32, #tpu.memory_space<vmem>>, vector<1x1x96xf32>
    %363 = vector.shape_cast %362 : vector<1x1x96xf32> to vector<1x96xf32>
    %364 = vector.broadcast %363 : vector<1x96xf32> to vector<2x96xf32>
    %365 = arith.addf %361, %364 : vector<2x96xf32>
    %366 = vector.extract_strided_slice %358 {offsets = [0, 0], sizes = [2, 64], strides = [1, 1]} : vector<2x96xf32> to vector<2x64xf32>
    %367 = vector.extract_strided_slice %365 {offsets = [0, 0], sizes = [2, 64], strides = [1, 1]} : vector<2x96xf32> to vector<2x64xf32>
    %368 = arith.addf %366, %367 : vector<2x64xf32>
    %369 = arith.negf %368 : vector<2x64xf32>
    %370 = math.exp %369 : vector<2x64xf32>
    %cst_159 = arith.constant 1.000000e+00 : f32
    %371 = vector.broadcast %cst_159 : f32 to vector<2x64xf32>
    %372 = arith.addf %371, %370 : vector<2x64xf32>
    %373 = arith.divf %371, %372 : vector<2x64xf32>
    %374 = vector.extract_strided_slice %373 {offsets = [0, 0], sizes = [2, 32], strides = [1, 1]} : vector<2x64xf32> to vector<2x32xf32>
    %375 = vector.extract_strided_slice %373 {offsets = [0, 32], sizes = [2, 32], strides = [1, 1]} : vector<2x64xf32> to vector<2x32xf32>
    %376 = vector.extract_strided_slice %358 {offsets = [0, 64], sizes = [2, 32], strides = [1, 1]} : vector<2x96xf32> to vector<2x32xf32>
    %377 = vector.extract_strided_slice %365 {offsets = [0, 64], sizes = [2, 32], strides = [1, 1]} : vector<2x96xf32> to vector<2x32xf32>
    %378 = arith.mulf %374, %377 : vector<2x32xf32>
    %379 = arith.addf %376, %378 : vector<2x32xf32>
    %380 = math.tanh %379 : vector<2x32xf32>
    %cst_160 = arith.constant 1.000000e+00 : f32
    %381 = vector.broadcast %cst_160 : f32 to vector<2x32xf32>
    %382 = arith.subf %381, %375 : vector<2x32xf32>
    %383 = arith.mulf %382, %380 : vector<2x32xf32>
    %384 = arith.mulf %375, %321 : vector<2x32xf32>
    %385 = arith.addf %383, %384 : vector<2x32xf32>
    %c6_i32 = arith.constant 6 : i32
    %386 = arith.index_cast %c6_i32 : i32 to index
    %c0_161 = arith.constant 0 : index
    %c0_162 = arith.constant 0 : index
    %387 = vector.load %arg1[%386, %c0_161, %c0_162] : memref<8x2x96xf32, #tpu.memory_space<vmem>>, vector<1x2x96xf32>
    %388 = vector.shape_cast %387 : vector<1x2x96xf32> to vector<2x96xf32>
    %c0_163 = arith.constant 0 : index
    %c0_164 = arith.constant 0 : index
    %c0_165 = arith.constant 0 : index
    %389 = vector.load %arg3[%c0_163, %c0_164, %c0_165] : memref<2x32x96xf32, #tpu.memory_space<vmem>>, vector<1x32x96xf32>
    %390 = vector.shape_cast %389 : vector<1x32x96xf32> to vector<32x96xf32>
    %cst_166 = arith.constant dense<0.000000e+00> : vector<2x96xf32>
    %391 = tpu.matmul %351, %390, %cst_166 {dimension_numbers = #tpu.dot_dimension_numbers<[1], [0], [0], [1], [0, 0, 1, 1], [], []>} : vector<2x32xf32>, vector<32x96xf32>, vector<2x96xf32> -> vector<2x96xf32>
    %c0_167 = arith.constant 0 : index
    %c0_168 = arith.constant 0 : index
    %c0_169 = arith.constant 0 : index
    %392 = vector.load %arg4[%c0_167, %c0_168, %c0_169] : memref<2x1x96xf32, #tpu.memory_space<vmem>>, vector<1x1x96xf32>
    %393 = vector.shape_cast %392 : vector<1x1x96xf32> to vector<1x96xf32>
    %394 = vector.broadcast %393 : vector<1x96xf32> to vector<2x96xf32>
    %395 = arith.addf %391, %394 : vector<2x96xf32>
    %396 = vector.extract_strided_slice %388 {offsets = [0, 0], sizes = [2, 64], strides = [1, 1]} : vector<2x96xf32> to vector<2x64xf32>
    %397 = vector.extract_strided_slice %395 {offsets = [0, 0], sizes = [2, 64], strides = [1, 1]} : vector<2x96xf32> to vector<2x64xf32>
    %398 = arith.addf %396, %397 : vector<2x64xf32>
    %399 = arith.negf %398 : vector<2x64xf32>
    %400 = math.exp %399 : vector<2x64xf32>
    %cst_170 = arith.constant 1.000000e+00 : f32
    %401 = vector.broadcast %cst_170 : f32 to vector<2x64xf32>
    %402 = arith.addf %401, %400 : vector<2x64xf32>
    %403 = arith.divf %401, %402 : vector<2x64xf32>
    %404 = vector.extract_strided_slice %403 {offsets = [0, 0], sizes = [2, 32], strides = [1, 1]} : vector<2x64xf32> to vector<2x32xf32>
    %405 = vector.extract_strided_slice %403 {offsets = [0, 32], sizes = [2, 32], strides = [1, 1]} : vector<2x64xf32> to vector<2x32xf32>
    %406 = vector.extract_strided_slice %388 {offsets = [0, 64], sizes = [2, 32], strides = [1, 1]} : vector<2x96xf32> to vector<2x32xf32>
    %407 = vector.extract_strided_slice %395 {offsets = [0, 64], sizes = [2, 32], strides = [1, 1]} : vector<2x96xf32> to vector<2x32xf32>
    %408 = arith.mulf %404, %407 : vector<2x32xf32>
    %409 = arith.addf %406, %408 : vector<2x32xf32>
    %410 = math.tanh %409 : vector<2x32xf32>
    %cst_171 = arith.constant 1.000000e+00 : f32
    %411 = vector.broadcast %cst_171 : f32 to vector<2x32xf32>
    %412 = arith.subf %411, %405 : vector<2x32xf32>
    %413 = arith.mulf %412, %410 : vector<2x32xf32>
    %414 = arith.mulf %405, %351 : vector<2x32xf32>
    %415 = arith.addf %413, %414 : vector<2x32xf32>
    %c0_172 = arith.constant 0 : index
    %c0_173 = arith.constant 0 : index
    %c0_174 = arith.constant 0 : index
    %416 = vector.load %arg5[%c0_172, %c0_173, %c0_174] : memref<1x32x96xf32, #tpu.memory_space<vmem>>, vector<1x32x96xf32>
    %417 = vector.shape_cast %416 : vector<1x32x96xf32> to vector<32x96xf32>
    %cst_175 = arith.constant dense<0.000000e+00> : vector<2x96xf32>
    %418 = tpu.matmul %415, %417, %cst_175 {dimension_numbers = #tpu.dot_dimension_numbers<[1], [0], [0], [1], [0, 0, 1, 1], [], []>} : vector<2x32xf32>, vector<32x96xf32>, vector<2x96xf32> -> vector<2x96xf32>
    %c0_176 = arith.constant 0 : index
    %c0_177 = arith.constant 0 : index
    %c0_178 = arith.constant 0 : index
    %419 = vector.load %arg6[%c0_176, %c0_177, %c0_178] : memref<1x1x96xf32, #tpu.memory_space<vmem>>, vector<1x1x96xf32>
    %420 = vector.shape_cast %419 : vector<1x1x96xf32> to vector<1x96xf32>
    %421 = vector.broadcast %420 : vector<1x96xf32> to vector<2x96xf32>
    %422 = arith.addf %418, %421 : vector<2x96xf32>
    %c1_179 = arith.constant 1 : index
    %c0_180 = arith.constant 0 : index
    %c0_181 = arith.constant 0 : index
    %423 = vector.load %arg3[%c1_179, %c0_180, %c0_181] : memref<2x32x96xf32, #tpu.memory_space<vmem>>, vector<1x32x96xf32>
    %424 = vector.shape_cast %423 : vector<1x32x96xf32> to vector<32x96xf32>
    %cst_182 = arith.constant dense<0.000000e+00> : vector<2x96xf32>
    %425 = tpu.matmul %385, %424, %cst_182 {dimension_numbers = #tpu.dot_dimension_numbers<[1], [0], [0], [1], [0, 0, 1, 1], [], []>} : vector<2x32xf32>, vector<32x96xf32>, vector<2x96xf32> -> vector<2x96xf32>
    %c1_183 = arith.constant 1 : index
    %c0_184 = arith.constant 0 : index
    %c0_185 = arith.constant 0 : index
    %426 = vector.load %arg4[%c1_183, %c0_184, %c0_185] : memref<2x1x96xf32, #tpu.memory_space<vmem>>, vector<1x1x96xf32>
    %427 = vector.shape_cast %426 : vector<1x1x96xf32> to vector<1x96xf32>
    %428 = vector.broadcast %427 : vector<1x96xf32> to vector<2x96xf32>
    %429 = arith.addf %425, %428 : vector<2x96xf32>
    %430 = vector.extract_strided_slice %422 {offsets = [0, 0], sizes = [2, 64], strides = [1, 1]} : vector<2x96xf32> to vector<2x64xf32>
    %431 = vector.extract_strided_slice %429 {offsets = [0, 0], sizes = [2, 64], strides = [1, 1]} : vector<2x96xf32> to vector<2x64xf32>
    %432 = arith.addf %430, %431 : vector<2x64xf32>
    %433 = arith.negf %432 : vector<2x64xf32>
    %434 = math.exp %433 : vector<2x64xf32>
    %cst_186 = arith.constant 1.000000e+00 : f32
    %435 = vector.broadcast %cst_186 : f32 to vector<2x64xf32>
    %436 = arith.addf %435, %434 : vector<2x64xf32>
    %437 = arith.divf %435, %436 : vector<2x64xf32>
    %438 = vector.extract_strided_slice %437 {offsets = [0, 0], sizes = [2, 32], strides = [1, 1]} : vector<2x64xf32> to vector<2x32xf32>
    %439 = vector.extract_strided_slice %437 {offsets = [0, 32], sizes = [2, 32], strides = [1, 1]} : vector<2x64xf32> to vector<2x32xf32>
    %440 = vector.extract_strided_slice %422 {offsets = [0, 64], sizes = [2, 32], strides = [1, 1]} : vector<2x96xf32> to vector<2x32xf32>
    %441 = vector.extract_strided_slice %429 {offsets = [0, 64], sizes = [2, 32], strides = [1, 1]} : vector<2x96xf32> to vector<2x32xf32>
    %442 = arith.mulf %438, %441 : vector<2x32xf32>
    %443 = arith.addf %440, %442 : vector<2x32xf32>
    %444 = math.tanh %443 : vector<2x32xf32>
    %cst_187 = arith.constant 1.000000e+00 : f32
    %445 = vector.broadcast %cst_187 : f32 to vector<2x32xf32>
    %446 = arith.subf %445, %439 : vector<2x32xf32>
    %447 = arith.mulf %446, %444 : vector<2x32xf32>
    %448 = arith.mulf %439, %385 : vector<2x32xf32>
    %449 = arith.addf %447, %448 : vector<2x32xf32>
    %c7_i32 = arith.constant 7 : i32
    %450 = arith.index_cast %c7_i32 : i32 to index
    %c0_188 = arith.constant 0 : index
    %c0_189 = arith.constant 0 : index
    %451 = vector.load %arg1[%450, %c0_188, %c0_189] : memref<8x2x96xf32, #tpu.memory_space<vmem>>, vector<1x2x96xf32>
    %452 = vector.shape_cast %451 : vector<1x2x96xf32> to vector<2x96xf32>
    %c0_190 = arith.constant 0 : index
    %c0_191 = arith.constant 0 : index
    %c0_192 = arith.constant 0 : index
    %453 = vector.load %arg3[%c0_190, %c0_191, %c0_192] : memref<2x32x96xf32, #tpu.memory_space<vmem>>, vector<1x32x96xf32>
    %454 = vector.shape_cast %453 : vector<1x32x96xf32> to vector<32x96xf32>
    %cst_193 = arith.constant dense<0.000000e+00> : vector<2x96xf32>
    %455 = tpu.matmul %415, %454, %cst_193 {dimension_numbers = #tpu.dot_dimension_numbers<[1], [0], [0], [1], [0, 0, 1, 1], [], []>} : vector<2x32xf32>, vector<32x96xf32>, vector<2x96xf32> -> vector<2x96xf32>
    %c0_194 = arith.constant 0 : index
    %c0_195 = arith.constant 0 : index
    %c0_196 = arith.constant 0 : index
    %456 = vector.load %arg4[%c0_194, %c0_195, %c0_196] : memref<2x1x96xf32, #tpu.memory_space<vmem>>, vector<1x1x96xf32>
    %457 = vector.shape_cast %456 : vector<1x1x96xf32> to vector<1x96xf32>
    %458 = vector.broadcast %457 : vector<1x96xf32> to vector<2x96xf32>
    %459 = arith.addf %455, %458 : vector<2x96xf32>
    %460 = vector.extract_strided_slice %452 {offsets = [0, 0], sizes = [2, 64], strides = [1, 1]} : vector<2x96xf32> to vector<2x64xf32>
    %461 = vector.extract_strided_slice %459 {offsets = [0, 0], sizes = [2, 64], strides = [1, 1]} : vector<2x96xf32> to vector<2x64xf32>
    %462 = arith.addf %460, %461 : vector<2x64xf32>
    %463 = arith.negf %462 : vector<2x64xf32>
    %464 = math.exp %463 : vector<2x64xf32>
    %cst_197 = arith.constant 1.000000e+00 : f32
    %465 = vector.broadcast %cst_197 : f32 to vector<2x64xf32>
    %466 = arith.addf %465, %464 : vector<2x64xf32>
    %467 = arith.divf %465, %466 : vector<2x64xf32>
    %468 = vector.extract_strided_slice %467 {offsets = [0, 0], sizes = [2, 32], strides = [1, 1]} : vector<2x64xf32> to vector<2x32xf32>
    %469 = vector.extract_strided_slice %467 {offsets = [0, 32], sizes = [2, 32], strides = [1, 1]} : vector<2x64xf32> to vector<2x32xf32>
    %470 = vector.extract_strided_slice %452 {offsets = [0, 64], sizes = [2, 32], strides = [1, 1]} : vector<2x96xf32> to vector<2x32xf32>
    %471 = vector.extract_strided_slice %459 {offsets = [0, 64], sizes = [2, 32], strides = [1, 1]} : vector<2x96xf32> to vector<2x32xf32>
    %472 = arith.mulf %468, %471 : vector<2x32xf32>
    %473 = arith.addf %470, %472 : vector<2x32xf32>
    %474 = math.tanh %473 : vector<2x32xf32>
    %cst_198 = arith.constant 1.000000e+00 : f32
    %475 = vector.broadcast %cst_198 : f32 to vector<2x32xf32>
    %476 = arith.subf %475, %469 : vector<2x32xf32>
    %477 = arith.mulf %476, %474 : vector<2x32xf32>
    %478 = arith.mulf %469, %415 : vector<2x32xf32>
    %479 = arith.addf %477, %478 : vector<2x32xf32>
    %c0_199 = arith.constant 0 : index
    %c0_200 = arith.constant 0 : index
    %c0_201 = arith.constant 0 : index
    %480 = vector.load %arg5[%c0_199, %c0_200, %c0_201] : memref<1x32x96xf32, #tpu.memory_space<vmem>>, vector<1x32x96xf32>
    %481 = vector.shape_cast %480 : vector<1x32x96xf32> to vector<32x96xf32>
    %cst_202 = arith.constant dense<0.000000e+00> : vector<2x96xf32>
    %482 = tpu.matmul %479, %481, %cst_202 {dimension_numbers = #tpu.dot_dimension_numbers<[1], [0], [0], [1], [0, 0, 1, 1], [], []>} : vector<2x32xf32>, vector<32x96xf32>, vector<2x96xf32> -> vector<2x96xf32>
    %c0_203 = arith.constant 0 : index
    %c0_204 = arith.constant 0 : index
    %c0_205 = arith.constant 0 : index
    %483 = vector.load %arg6[%c0_203, %c0_204, %c0_205] : memref<1x1x96xf32, #tpu.memory_space<vmem>>, vector<1x1x96xf32>
    %484 = vector.shape_cast %483 : vector<1x1x96xf32> to vector<1x96xf32>
    %485 = vector.broadcast %484 : vector<1x96xf32> to vector<2x96xf32>
    %486 = arith.addf %482, %485 : vector<2x96xf32>
    %c1_206 = arith.constant 1 : index
    %c0_207 = arith.constant 0 : index
    %c0_208 = arith.constant 0 : index
    %487 = vector.load %arg3[%c1_206, %c0_207, %c0_208] : memref<2x32x96xf32, #tpu.memory_space<vmem>>, vector<1x32x96xf32>
    %488 = vector.shape_cast %487 : vector<1x32x96xf32> to vector<32x96xf32>
    %cst_209 = arith.constant dense<0.000000e+00> : vector<2x96xf32>
    %489 = tpu.matmul %449, %488, %cst_209 {dimension_numbers = #tpu.dot_dimension_numbers<[1], [0], [0], [1], [0, 0, 1, 1], [], []>} : vector<2x32xf32>, vector<32x96xf32>, vector<2x96xf32> -> vector<2x96xf32>
    %c1_210 = arith.constant 1 : index
    %c0_211 = arith.constant 0 : index
    %c0_212 = arith.constant 0 : index
    %490 = vector.load %arg4[%c1_210, %c0_211, %c0_212] : memref<2x1x96xf32, #tpu.memory_space<vmem>>, vector<1x1x96xf32>
    %491 = vector.shape_cast %490 : vector<1x1x96xf32> to vector<1x96xf32>
    %492 = vector.broadcast %491 : vector<1x96xf32> to vector<2x96xf32>
    %493 = arith.addf %489, %492 : vector<2x96xf32>
    %494 = vector.extract_strided_slice %486 {offsets = [0, 0], sizes = [2, 64], strides = [1, 1]} : vector<2x96xf32> to vector<2x64xf32>
    %495 = vector.extract_strided_slice %493 {offsets = [0, 0], sizes = [2, 64], strides = [1, 1]} : vector<2x96xf32> to vector<2x64xf32>
    %496 = arith.addf %494, %495 : vector<2x64xf32>
    %497 = arith.negf %496 : vector<2x64xf32>
    %498 = math.exp %497 : vector<2x64xf32>
    %cst_213 = arith.constant 1.000000e+00 : f32
    %499 = vector.broadcast %cst_213 : f32 to vector<2x64xf32>
    %500 = arith.addf %499, %498 : vector<2x64xf32>
    %501 = arith.divf %499, %500 : vector<2x64xf32>
    %502 = vector.extract_strided_slice %501 {offsets = [0, 0], sizes = [2, 32], strides = [1, 1]} : vector<2x64xf32> to vector<2x32xf32>
    %503 = vector.extract_strided_slice %501 {offsets = [0, 32], sizes = [2, 32], strides = [1, 1]} : vector<2x64xf32> to vector<2x32xf32>
    %504 = vector.extract_strided_slice %486 {offsets = [0, 64], sizes = [2, 32], strides = [1, 1]} : vector<2x96xf32> to vector<2x32xf32>
    %505 = vector.extract_strided_slice %493 {offsets = [0, 64], sizes = [2, 32], strides = [1, 1]} : vector<2x96xf32> to vector<2x32xf32>
    %506 = arith.mulf %502, %505 : vector<2x32xf32>
    %507 = arith.addf %504, %506 : vector<2x32xf32>
    %508 = math.tanh %507 : vector<2x32xf32>
    %cst_214 = arith.constant 1.000000e+00 : f32
    %509 = vector.broadcast %cst_214 : f32 to vector<2x32xf32>
    %510 = arith.subf %509, %503 : vector<2x32xf32>
    %511 = arith.mulf %510, %508 : vector<2x32xf32>
    %512 = arith.mulf %503, %449 : vector<2x32xf32>
    %513 = arith.addf %511, %512 : vector<2x32xf32>
    %c8_i32 = arith.constant 8 : i32
    %c0_215 = arith.constant 0 : index
    %c0_216 = arith.constant 0 : index
    %514 = vector.load %arg2[%c0_215, %c0_216] : memref<2x4xf32, #tpu.memory_space<vmem>>, vector<2x4xf32>
    %c0_i32_217 = arith.constant 0 : i32
    %c0_218 = arith.constant 0 : index
    %c0_219 = arith.constant 0 : index
    %515 = vector.load %arg7[%c0_218, %c0_219] : memref<4x96xf32, #tpu.memory_space<vmem>>, vector<4x96xf32>
    %cst_220 = arith.constant dense<0.000000e+00> : vector<2x96xf32>
    %516 = tpu.matmul %514, %515, %cst_220 {dimension_numbers = #tpu.dot_dimension_numbers<[1], [0], [0], [1], [0, 0, 1, 1], [], []>} : vector<2x4xf32>, vector<4x96xf32>, vector<2x96xf32> -> vector<2x96xf32>
    %c0_221 = arith.constant 0 : index
    %c0_222 = arith.constant 0 : index
    %517 = vector.load %arg8[%c0_221, %c0_222] : memref<1x96xf32, #tpu.memory_space<vmem>>, vector<1x96xf32>
    %518 = vector.broadcast %517 : vector<1x96xf32> to vector<2x96xf32>
    %519 = arith.addf %516, %518 : vector<2x96xf32>
    %c0_223 = arith.constant 0 : index
    %c0_224 = arith.constant 0 : index
    %c0_225 = arith.constant 0 : index
    %520 = vector.load %arg9[%c0_223, %c0_224, %c0_225] : memref<2x32x96xf32, #tpu.memory_space<vmem>>, vector<1x32x96xf32>
    %521 = vector.shape_cast %520 : vector<1x32x96xf32> to vector<32x96xf32>
    %cst_226 = arith.constant dense<0.000000e+00> : vector<2x96xf32>
    %522 = tpu.matmul %479, %521, %cst_226 {dimension_numbers = #tpu.dot_dimension_numbers<[1], [0], [0], [1], [0, 0, 1, 1], [], []>} : vector<2x32xf32>, vector<32x96xf32>, vector<2x96xf32> -> vector<2x96xf32>
    %c0_227 = arith.constant 0 : index
    %c0_228 = arith.constant 0 : index
    %c0_229 = arith.constant 0 : index
    %523 = vector.load %arg10[%c0_227, %c0_228, %c0_229] : memref<2x1x96xf32, #tpu.memory_space<vmem>>, vector<1x1x96xf32>
    %524 = vector.shape_cast %523 : vector<1x1x96xf32> to vector<1x96xf32>
    %525 = vector.broadcast %524 : vector<1x96xf32> to vector<2x96xf32>
    %526 = arith.addf %522, %525 : vector<2x96xf32>
    %527 = vector.extract_strided_slice %519 {offsets = [0, 0], sizes = [2, 64], strides = [1, 1]} : vector<2x96xf32> to vector<2x64xf32>
    %528 = vector.extract_strided_slice %526 {offsets = [0, 0], sizes = [2, 64], strides = [1, 1]} : vector<2x96xf32> to vector<2x64xf32>
    %529 = arith.addf %527, %528 : vector<2x64xf32>
    %530 = arith.negf %529 : vector<2x64xf32>
    %531 = math.exp %530 : vector<2x64xf32>
    %cst_230 = arith.constant 1.000000e+00 : f32
    %532 = vector.broadcast %cst_230 : f32 to vector<2x64xf32>
    %533 = arith.addf %532, %531 : vector<2x64xf32>
    %534 = arith.divf %532, %533 : vector<2x64xf32>
    %535 = vector.extract_strided_slice %534 {offsets = [0, 0], sizes = [2, 32], strides = [1, 1]} : vector<2x64xf32> to vector<2x32xf32>
    %536 = vector.extract_strided_slice %534 {offsets = [0, 32], sizes = [2, 32], strides = [1, 1]} : vector<2x64xf32> to vector<2x32xf32>
    %537 = vector.extract_strided_slice %519 {offsets = [0, 64], sizes = [2, 32], strides = [1, 1]} : vector<2x96xf32> to vector<2x32xf32>
    %538 = vector.extract_strided_slice %526 {offsets = [0, 64], sizes = [2, 32], strides = [1, 1]} : vector<2x96xf32> to vector<2x32xf32>
    %539 = arith.mulf %535, %538 : vector<2x32xf32>
    %540 = arith.addf %537, %539 : vector<2x32xf32>
    %541 = math.tanh %540 : vector<2x32xf32>
    %cst_231 = arith.constant 1.000000e+00 : f32
    %542 = vector.broadcast %cst_231 : f32 to vector<2x32xf32>
    %543 = arith.subf %542, %536 : vector<2x32xf32>
    %544 = arith.mulf %543, %541 : vector<2x32xf32>
    %545 = arith.mulf %536, %479 : vector<2x32xf32>
    %546 = arith.addf %544, %545 : vector<2x32xf32>
    %c0_232 = arith.constant 0 : index
    %c0_233 = arith.constant 0 : index
    %c0_234 = arith.constant 0 : index
    %547 = vector.load %arg11[%c0_232, %c0_233, %c0_234] : memref<1x32x96xf32, #tpu.memory_space<vmem>>, vector<1x32x96xf32>
    %548 = vector.shape_cast %547 : vector<1x32x96xf32> to vector<32x96xf32>
    %cst_235 = arith.constant dense<0.000000e+00> : vector<2x96xf32>
    %549 = tpu.matmul %546, %548, %cst_235 {dimension_numbers = #tpu.dot_dimension_numbers<[1], [0], [0], [1], [0, 0, 1, 1], [], []>} : vector<2x32xf32>, vector<32x96xf32>, vector<2x96xf32> -> vector<2x96xf32>
    %c0_236 = arith.constant 0 : index
    %c0_237 = arith.constant 0 : index
    %c0_238 = arith.constant 0 : index
    %550 = vector.load %arg12[%c0_236, %c0_237, %c0_238] : memref<1x1x96xf32, #tpu.memory_space<vmem>>, vector<1x1x96xf32>
    %551 = vector.shape_cast %550 : vector<1x1x96xf32> to vector<1x96xf32>
    %552 = vector.broadcast %551 : vector<1x96xf32> to vector<2x96xf32>
    %553 = arith.addf %549, %552 : vector<2x96xf32>
    %c1_239 = arith.constant 1 : index
    %c0_240 = arith.constant 0 : index
    %c0_241 = arith.constant 0 : index
    %554 = vector.load %arg9[%c1_239, %c0_240, %c0_241] : memref<2x32x96xf32, #tpu.memory_space<vmem>>, vector<1x32x96xf32>
    %555 = vector.shape_cast %554 : vector<1x32x96xf32> to vector<32x96xf32>
    %cst_242 = arith.constant dense<0.000000e+00> : vector<2x96xf32>
    %556 = tpu.matmul %513, %555, %cst_242 {dimension_numbers = #tpu.dot_dimension_numbers<[1], [0], [0], [1], [0, 0, 1, 1], [], []>} : vector<2x32xf32>, vector<32x96xf32>, vector<2x96xf32> -> vector<2x96xf32>
    %c1_243 = arith.constant 1 : index
    %c0_244 = arith.constant 0 : index
    %c0_245 = arith.constant 0 : index
    %557 = vector.load %arg10[%c1_243, %c0_244, %c0_245] : memref<2x1x96xf32, #tpu.memory_space<vmem>>, vector<1x1x96xf32>
    %558 = vector.shape_cast %557 : vector<1x1x96xf32> to vector<1x96xf32>
    %559 = vector.broadcast %558 : vector<1x96xf32> to vector<2x96xf32>
    %560 = arith.addf %556, %559 : vector<2x96xf32>
    %561 = vector.extract_strided_slice %553 {offsets = [0, 0], sizes = [2, 64], strides = [1, 1]} : vector<2x96xf32> to vector<2x64xf32>
    %562 = vector.extract_strided_slice %560 {offsets = [0, 0], sizes = [2, 64], strides = [1, 1]} : vector<2x96xf32> to vector<2x64xf32>
    %563 = arith.addf %561, %562 : vector<2x64xf32>
    %564 = arith.negf %563 : vector<2x64xf32>
    %565 = math.exp %564 : vector<2x64xf32>
    %cst_246 = arith.constant 1.000000e+00 : f32
    %566 = vector.broadcast %cst_246 : f32 to vector<2x64xf32>
    %567 = arith.addf %566, %565 : vector<2x64xf32>
    %568 = arith.divf %566, %567 : vector<2x64xf32>
    %569 = vector.extract_strided_slice %568 {offsets = [0, 0], sizes = [2, 32], strides = [1, 1]} : vector<2x64xf32> to vector<2x32xf32>
    %570 = vector.extract_strided_slice %568 {offsets = [0, 32], sizes = [2, 32], strides = [1, 1]} : vector<2x64xf32> to vector<2x32xf32>
    %571 = vector.extract_strided_slice %553 {offsets = [0, 64], sizes = [2, 32], strides = [1, 1]} : vector<2x96xf32> to vector<2x32xf32>
    %572 = vector.extract_strided_slice %560 {offsets = [0, 64], sizes = [2, 32], strides = [1, 1]} : vector<2x96xf32> to vector<2x32xf32>
    %573 = arith.mulf %569, %572 : vector<2x32xf32>
    %574 = arith.addf %571, %573 : vector<2x32xf32>
    %575 = math.tanh %574 : vector<2x32xf32>
    %cst_247 = arith.constant 1.000000e+00 : f32
    %576 = vector.broadcast %cst_247 : f32 to vector<2x32xf32>
    %577 = arith.subf %576, %570 : vector<2x32xf32>
    %578 = arith.mulf %577, %575 : vector<2x32xf32>
    %579 = arith.mulf %570, %513 : vector<2x32xf32>
    %580 = arith.addf %578, %579 : vector<2x32xf32>
    %c0_248 = arith.constant 0 : index
    %c0_249 = arith.constant 0 : index
    %581 = vector.load %arg13[%c0_248, %c0_249] : memref<32x4xf32, #tpu.memory_space<vmem>>, vector<32x4xf32>
    %cst_250 = arith.constant dense<0.000000e+00> : vector<2x4xf32>
    %582 = tpu.matmul %580, %581, %cst_250 {dimension_numbers = #tpu.dot_dimension_numbers<[1], [0], [0], [1], [0, 0, 1, 1], [], []>} : vector<2x32xf32>, vector<32x4xf32>, vector<2x4xf32> -> vector<2x4xf32>
    %c0_251 = arith.constant 0 : index
    %c0_252 = arith.constant 0 : index
    %583 = vector.load %arg14[%c0_251, %c0_252] : memref<1x4xf32, #tpu.memory_space<vmem>>, vector<1x4xf32>
    %584 = vector.broadcast %583 : vector<1x4xf32> to vector<2x4xf32>
    %585 = arith.addf %582, %584 : vector<2x4xf32>
    %586 = arith.index_cast %c0_i32_217 : i32 to index
    %c0_253 = arith.constant 0 : index
    %c0_254 = arith.constant 0 : index
    %587 = vector.load %arg15[%586, %c0_253, %c0_254] : memref<8x2x4xf32, #tpu.memory_space<vmem>>, vector<1x2x4xf32>
    %588 = vector.shape_cast %587 : vector<1x2x4xf32> to vector<2x4xf32>
    %589 = vector.shape_cast %585 : vector<2x4xf32> to vector<1x2x4xf32>
    tpu.vector_store %arg15[%586, %c0_253, %c0_254], %589 {strides = array<i32>} : memref<8x2x4xf32, #tpu.memory_space<vmem>>, vector<1x2x4xf32>,
    %c1_i32_255 = arith.constant 1 : i32
    %c0_256 = arith.constant 0 : index
    %c0_257 = arith.constant 0 : index
    %590 = vector.load %arg7[%c0_256, %c0_257] : memref<4x96xf32, #tpu.memory_space<vmem>>, vector<4x96xf32>
    %cst_258 = arith.constant dense<0.000000e+00> : vector<2x96xf32>
    %591 = tpu.matmul %585, %590, %cst_258 {dimension_numbers = #tpu.dot_dimension_numbers<[1], [0], [0], [1], [0, 0, 1, 1], [], []>} : vector<2x4xf32>, vector<4x96xf32>, vector<2x96xf32> -> vector<2x96xf32>
    %c0_259 = arith.constant 0 : index
    %c0_260 = arith.constant 0 : index
    %592 = vector.load %arg8[%c0_259, %c0_260] : memref<1x96xf32, #tpu.memory_space<vmem>>, vector<1x96xf32>
    %593 = vector.broadcast %592 : vector<1x96xf32> to vector<2x96xf32>
    %594 = arith.addf %591, %593 : vector<2x96xf32>
    %c0_261 = arith.constant 0 : index
    %c0_262 = arith.constant 0 : index
    %c0_263 = arith.constant 0 : index
    %595 = vector.load %arg9[%c0_261, %c0_262, %c0_263] : memref<2x32x96xf32, #tpu.memory_space<vmem>>, vector<1x32x96xf32>
    %596 = vector.shape_cast %595 : vector<1x32x96xf32> to vector<32x96xf32>
    %cst_264 = arith.constant dense<0.000000e+00> : vector<2x96xf32>
    %597 = tpu.matmul %546, %596, %cst_264 {dimension_numbers = #tpu.dot_dimension_numbers<[1], [0], [0], [1], [0, 0, 1, 1], [], []>} : vector<2x32xf32>, vector<32x96xf32>, vector<2x96xf32> -> vector<2x96xf32>
    %c0_265 = arith.constant 0 : index
    %c0_266 = arith.constant 0 : index
    %c0_267 = arith.constant 0 : index
    %598 = vector.load %arg10[%c0_265, %c0_266, %c0_267] : memref<2x1x96xf32, #tpu.memory_space<vmem>>, vector<1x1x96xf32>
    %599 = vector.shape_cast %598 : vector<1x1x96xf32> to vector<1x96xf32>
    %600 = vector.broadcast %599 : vector<1x96xf32> to vector<2x96xf32>
    %601 = arith.addf %597, %600 : vector<2x96xf32>
    %602 = vector.extract_strided_slice %594 {offsets = [0, 0], sizes = [2, 64], strides = [1, 1]} : vector<2x96xf32> to vector<2x64xf32>
    %603 = vector.extract_strided_slice %601 {offsets = [0, 0], sizes = [2, 64], strides = [1, 1]} : vector<2x96xf32> to vector<2x64xf32>
    %604 = arith.addf %602, %603 : vector<2x64xf32>
    %605 = arith.negf %604 : vector<2x64xf32>
    %606 = math.exp %605 : vector<2x64xf32>
    %cst_268 = arith.constant 1.000000e+00 : f32
    %607 = vector.broadcast %cst_268 : f32 to vector<2x64xf32>
    %608 = arith.addf %607, %606 : vector<2x64xf32>
    %609 = arith.divf %607, %608 : vector<2x64xf32>
    %610 = vector.extract_strided_slice %609 {offsets = [0, 0], sizes = [2, 32], strides = [1, 1]} : vector<2x64xf32> to vector<2x32xf32>
    %611 = vector.extract_strided_slice %609 {offsets = [0, 32], sizes = [2, 32], strides = [1, 1]} : vector<2x64xf32> to vector<2x32xf32>
    %612 = vector.extract_strided_slice %594 {offsets = [0, 64], sizes = [2, 32], strides = [1, 1]} : vector<2x96xf32> to vector<2x32xf32>
    %613 = vector.extract_strided_slice %601 {offsets = [0, 64], sizes = [2, 32], strides = [1, 1]} : vector<2x96xf32> to vector<2x32xf32>
    %614 = arith.mulf %610, %613 : vector<2x32xf32>
    %615 = arith.addf %612, %614 : vector<2x32xf32>
    %616 = math.tanh %615 : vector<2x32xf32>
    %cst_269 = arith.constant 1.000000e+00 : f32
    %617 = vector.broadcast %cst_269 : f32 to vector<2x32xf32>
    %618 = arith.subf %617, %611 : vector<2x32xf32>
    %619 = arith.mulf %618, %616 : vector<2x32xf32>
    %620 = arith.mulf %611, %546 : vector<2x32xf32>
    %621 = arith.addf %619, %620 : vector<2x32xf32>
    %c0_270 = arith.constant 0 : index
    %c0_271 = arith.constant 0 : index
    %c0_272 = arith.constant 0 : index
    %622 = vector.load %arg11[%c0_270, %c0_271, %c0_272] : memref<1x32x96xf32, #tpu.memory_space<vmem>>, vector<1x32x96xf32>
    %623 = vector.shape_cast %622 : vector<1x32x96xf32> to vector<32x96xf32>
    %cst_273 = arith.constant dense<0.000000e+00> : vector<2x96xf32>
    %624 = tpu.matmul %621, %623, %cst_273 {dimension_numbers = #tpu.dot_dimension_numbers<[1], [0], [0], [1], [0, 0, 1, 1], [], []>} : vector<2x32xf32>, vector<32x96xf32>, vector<2x96xf32> -> vector<2x96xf32>
    %c0_274 = arith.constant 0 : index
    %c0_275 = arith.constant 0 : index
    %c0_276 = arith.constant 0 : index
    %625 = vector.load %arg12[%c0_274, %c0_275, %c0_276] : memref<1x1x96xf32, #tpu.memory_space<vmem>>, vector<1x1x96xf32>
    %626 = vector.shape_cast %625 : vector<1x1x96xf32> to vector<1x96xf32>
    %627 = vector.broadcast %626 : vector<1x96xf32> to vector<2x96xf32>
    %628 = arith.addf %624, %627 : vector<2x96xf32>
    %c1_277 = arith.constant 1 : index
    %c0_278 = arith.constant 0 : index
    %c0_279 = arith.constant 0 : index
    %629 = vector.load %arg9[%c1_277, %c0_278, %c0_279] : memref<2x32x96xf32, #tpu.memory_space<vmem>>, vector<1x32x96xf32>
    %630 = vector.shape_cast %629 : vector<1x32x96xf32> to vector<32x96xf32>
    %cst_280 = arith.constant dense<0.000000e+00> : vector<2x96xf32>
    %631 = tpu.matmul %580, %630, %cst_280 {dimension_numbers = #tpu.dot_dimension_numbers<[1], [0], [0], [1], [0, 0, 1, 1], [], []>} : vector<2x32xf32>, vector<32x96xf32>, vector<2x96xf32> -> vector<2x96xf32>
    %c1_281 = arith.constant 1 : index
    %c0_282 = arith.constant 0 : index
    %c0_283 = arith.constant 0 : index
    %632 = vector.load %arg10[%c1_281, %c0_282, %c0_283] : memref<2x1x96xf32, #tpu.memory_space<vmem>>, vector<1x1x96xf32>
    %633 = vector.shape_cast %632 : vector<1x1x96xf32> to vector<1x96xf32>
    %634 = vector.broadcast %633 : vector<1x96xf32> to vector<2x96xf32>
    %635 = arith.addf %631, %634 : vector<2x96xf32>
    %636 = vector.extract_strided_slice %628 {offsets = [0, 0], sizes = [2, 64], strides = [1, 1]} : vector<2x96xf32> to vector<2x64xf32>
    %637 = vector.extract_strided_slice %635 {offsets = [0, 0], sizes = [2, 64], strides = [1, 1]} : vector<2x96xf32> to vector<2x64xf32>
    %638 = arith.addf %636, %637 : vector<2x64xf32>
    %639 = arith.negf %638 : vector<2x64xf32>
    %640 = math.exp %639 : vector<2x64xf32>
    %cst_284 = arith.constant 1.000000e+00 : f32
    %641 = vector.broadcast %cst_284 : f32 to vector<2x64xf32>
    %642 = arith.addf %641, %640 : vector<2x64xf32>
    %643 = arith.divf %641, %642 : vector<2x64xf32>
    %644 = vector.extract_strided_slice %643 {offsets = [0, 0], sizes = [2, 32], strides = [1, 1]} : vector<2x64xf32> to vector<2x32xf32>
    %645 = vector.extract_strided_slice %643 {offsets = [0, 32], sizes = [2, 32], strides = [1, 1]} : vector<2x64xf32> to vector<2x32xf32>
    %646 = vector.extract_strided_slice %628 {offsets = [0, 64], sizes = [2, 32], strides = [1, 1]} : vector<2x96xf32> to vector<2x32xf32>
    %647 = vector.extract_strided_slice %635 {offsets = [0, 64], sizes = [2, 32], strides = [1, 1]} : vector<2x96xf32> to vector<2x32xf32>
    %648 = arith.mulf %644, %647 : vector<2x32xf32>
    %649 = arith.addf %646, %648 : vector<2x32xf32>
    %650 = math.tanh %649 : vector<2x32xf32>
    %cst_285 = arith.constant 1.000000e+00 : f32
    %651 = vector.broadcast %cst_285 : f32 to vector<2x32xf32>
    %652 = arith.subf %651, %645 : vector<2x32xf32>
    %653 = arith.mulf %652, %650 : vector<2x32xf32>
    %654 = arith.mulf %645, %580 : vector<2x32xf32>
    %655 = arith.addf %653, %654 : vector<2x32xf32>
    %c0_286 = arith.constant 0 : index
    %c0_287 = arith.constant 0 : index
    %656 = vector.load %arg13[%c0_286, %c0_287] : memref<32x4xf32, #tpu.memory_space<vmem>>, vector<32x4xf32>
    %cst_288 = arith.constant dense<0.000000e+00> : vector<2x4xf32>
    %657 = tpu.matmul %655, %656, %cst_288 {dimension_numbers = #tpu.dot_dimension_numbers<[1], [0], [0], [1], [0, 0, 1, 1], [], []>} : vector<2x32xf32>, vector<32x4xf32>, vector<2x4xf32> -> vector<2x4xf32>
    %c0_289 = arith.constant 0 : index
    %c0_290 = arith.constant 0 : index
    %658 = vector.load %arg14[%c0_289, %c0_290] : memref<1x4xf32, #tpu.memory_space<vmem>>, vector<1x4xf32>
    %659 = vector.broadcast %658 : vector<1x4xf32> to vector<2x4xf32>
    %660 = arith.addf %657, %659 : vector<2x4xf32>
    %661 = arith.index_cast %c1_i32_255 : i32 to index
    %c0_291 = arith.constant 0 : index
    %c0_292 = arith.constant 0 : index
    %662 = vector.load %arg15[%661, %c0_291, %c0_292] : memref<8x2x4xf32, #tpu.memory_space<vmem>>, vector<1x2x4xf32>
    %663 = vector.shape_cast %662 : vector<1x2x4xf32> to vector<2x4xf32>
    %664 = vector.shape_cast %660 : vector<2x4xf32> to vector<1x2x4xf32>
    tpu.vector_store %arg15[%661, %c0_291, %c0_292], %664 {strides = array<i32>} : memref<8x2x4xf32, #tpu.memory_space<vmem>>, vector<1x2x4xf32>,
    %c2_i32_293 = arith.constant 2 : i32
    %c0_294 = arith.constant 0 : index
    %c0_295 = arith.constant 0 : index
    %665 = vector.load %arg7[%c0_294, %c0_295] : memref<4x96xf32, #tpu.memory_space<vmem>>, vector<4x96xf32>
    %cst_296 = arith.constant dense<0.000000e+00> : vector<2x96xf32>
    %666 = tpu.matmul %660, %665, %cst_296 {dimension_numbers = #tpu.dot_dimension_numbers<[1], [0], [0], [1], [0, 0, 1, 1], [], []>} : vector<2x4xf32>, vector<4x96xf32>, vector<2x96xf32> -> vector<2x96xf32>
    %c0_297 = arith.constant 0 : index
    %c0_298 = arith.constant 0 : index
    %667 = vector.load %arg8[%c0_297, %c0_298] : memref<1x96xf32, #tpu.memory_space<vmem>>, vector<1x96xf32>
    %668 = vector.broadcast %667 : vector<1x96xf32> to vector<2x96xf32>
    %669 = arith.addf %666, %668 : vector<2x96xf32>
    %c0_299 = arith.constant 0 : index
    %c0_300 = arith.constant 0 : index
    %c0_301 = arith.constant 0 : index
    %670 = vector.load %arg9[%c0_299, %c0_300, %c0_301] : memref<2x32x96xf32, #tpu.memory_space<vmem>>, vector<1x32x96xf32>
    %671 = vector.shape_cast %670 : vector<1x32x96xf32> to vector<32x96xf32>
    %cst_302 = arith.constant dense<0.000000e+00> : vector<2x96xf32>
    %672 = tpu.matmul %621, %671, %cst_302 {dimension_numbers = #tpu.dot_dimension_numbers<[1], [0], [0], [1], [0, 0, 1, 1], [], []>} : vector<2x32xf32>, vector<32x96xf32>, vector<2x96xf32> -> vector<2x96xf32>
    %c0_303 = arith.constant 0 : index
    %c0_304 = arith.constant 0 : index
    %c0_305 = arith.constant 0 : index
    %673 = vector.load %arg10[%c0_303, %c0_304, %c0_305] : memref<2x1x96xf32, #tpu.memory_space<vmem>>, vector<1x1x96xf32>
    %674 = vector.shape_cast %673 : vector<1x1x96xf32> to vector<1x96xf32>
    %675 = vector.broadcast %674 : vector<1x96xf32> to vector<2x96xf32>
    %676 = arith.addf %672, %675 : vector<2x96xf32>
    %677 = vector.extract_strided_slice %669 {offsets = [0, 0], sizes = [2, 64], strides = [1, 1]} : vector<2x96xf32> to vector<2x64xf32>
    %678 = vector.extract_strided_slice %676 {offsets = [0, 0], sizes = [2, 64], strides = [1, 1]} : vector<2x96xf32> to vector<2x64xf32>
    %679 = arith.addf %677, %678 : vector<2x64xf32>
    %680 = arith.negf %679 : vector<2x64xf32>
    %681 = math.exp %680 : vector<2x64xf32>
    %cst_306 = arith.constant 1.000000e+00 : f32
    %682 = vector.broadcast %cst_306 : f32 to vector<2x64xf32>
    %683 = arith.addf %682, %681 : vector<2x64xf32>
    %684 = arith.divf %682, %683 : vector<2x64xf32>
    %685 = vector.extract_strided_slice %684 {offsets = [0, 0], sizes = [2, 32], strides = [1, 1]} : vector<2x64xf32> to vector<2x32xf32>
    %686 = vector.extract_strided_slice %684 {offsets = [0, 32], sizes = [2, 32], strides = [1, 1]} : vector<2x64xf32> to vector<2x32xf32>
    %687 = vector.extract_strided_slice %669 {offsets = [0, 64], sizes = [2, 32], strides = [1, 1]} : vector<2x96xf32> to vector<2x32xf32>
    %688 = vector.extract_strided_slice %676 {offsets = [0, 64], sizes = [2, 32], strides = [1, 1]} : vector<2x96xf32> to vector<2x32xf32>
    %689 = arith.mulf %685, %688 : vector<2x32xf32>
    %690 = arith.addf %687, %689 : vector<2x32xf32>
    %691 = math.tanh %690 : vector<2x32xf32>
    %cst_307 = arith.constant 1.000000e+00 : f32
    %692 = vector.broadcast %cst_307 : f32 to vector<2x32xf32>
    %693 = arith.subf %692, %686 : vector<2x32xf32>
    %694 = arith.mulf %693, %691 : vector<2x32xf32>
    %695 = arith.mulf %686, %621 : vector<2x32xf32>
    %696 = arith.addf %694, %695 : vector<2x32xf32>
    %c0_308 = arith.constant 0 : index
    %c0_309 = arith.constant 0 : index
    %c0_310 = arith.constant 0 : index
    %697 = vector.load %arg11[%c0_308, %c0_309, %c0_310] : memref<1x32x96xf32, #tpu.memory_space<vmem>>, vector<1x32x96xf32>
    %698 = vector.shape_cast %697 : vector<1x32x96xf32> to vector<32x96xf32>
    %cst_311 = arith.constant dense<0.000000e+00> : vector<2x96xf32>
    %699 = tpu.matmul %696, %698, %cst_311 {dimension_numbers = #tpu.dot_dimension_numbers<[1], [0], [0], [1], [0, 0, 1, 1], [], []>} : vector<2x32xf32>, vector<32x96xf32>, vector<2x96xf32> -> vector<2x96xf32>
    %c0_312 = arith.constant 0 : index
    %c0_313 = arith.constant 0 : index
    %c0_314 = arith.constant 0 : index
    %700 = vector.load %arg12[%c0_312, %c0_313, %c0_314] : memref<1x1x96xf32, #tpu.memory_space<vmem>>, vector<1x1x96xf32>
    %701 = vector.shape_cast %700 : vector<1x1x96xf32> to vector<1x96xf32>
    %702 = vector.broadcast %701 : vector<1x96xf32> to vector<2x96xf32>
    %703 = arith.addf %699, %702 : vector<2x96xf32>
    %c1_315 = arith.constant 1 : index
    %c0_316 = arith.constant 0 : index
    %c0_317 = arith.constant 0 : index
    %704 = vector.load %arg9[%c1_315, %c0_316, %c0_317] : memref<2x32x96xf32, #tpu.memory_space<vmem>>, vector<1x32x96xf32>
    %705 = vector.shape_cast %704 : vector<1x32x96xf32> to vector<32x96xf32>
    %cst_318 = arith.constant dense<0.000000e+00> : vector<2x96xf32>
    %706 = tpu.matmul %655, %705, %cst_318 {dimension_numbers = #tpu.dot_dimension_numbers<[1], [0], [0], [1], [0, 0, 1, 1], [], []>} : vector<2x32xf32>, vector<32x96xf32>, vector<2x96xf32> -> vector<2x96xf32>
    %c1_319 = arith.constant 1 : index
    %c0_320 = arith.constant 0 : index
    %c0_321 = arith.constant 0 : index
    %707 = vector.load %arg10[%c1_319, %c0_320, %c0_321] : memref<2x1x96xf32, #tpu.memory_space<vmem>>, vector<1x1x96xf32>
    %708 = vector.shape_cast %707 : vector<1x1x96xf32> to vector<1x96xf32>
    %709 = vector.broadcast %708 : vector<1x96xf32> to vector<2x96xf32>
    %710 = arith.addf %706, %709 : vector<2x96xf32>
    %711 = vector.extract_strided_slice %703 {offsets = [0, 0], sizes = [2, 64], strides = [1, 1]} : vector<2x96xf32> to vector<2x64xf32>
    %712 = vector.extract_strided_slice %710 {offsets = [0, 0], sizes = [2, 64], strides = [1, 1]} : vector<2x96xf32> to vector<2x64xf32>
    %713 = arith.addf %711, %712 : vector<2x64xf32>
    %714 = arith.negf %713 : vector<2x64xf32>
    %715 = math.exp %714 : vector<2x64xf32>
    %cst_322 = arith.constant 1.000000e+00 : f32
    %716 = vector.broadcast %cst_322 : f32 to vector<2x64xf32>
    %717 = arith.addf %716, %715 : vector<2x64xf32>
    %718 = arith.divf %716, %717 : vector<2x64xf32>
    %719 = vector.extract_strided_slice %718 {offsets = [0, 0], sizes = [2, 32], strides = [1, 1]} : vector<2x64xf32> to vector<2x32xf32>
    %720 = vector.extract_strided_slice %718 {offsets = [0, 32], sizes = [2, 32], strides = [1, 1]} : vector<2x64xf32> to vector<2x32xf32>
    %721 = vector.extract_strided_slice %703 {offsets = [0, 64], sizes = [2, 32], strides = [1, 1]} : vector<2x96xf32> to vector<2x32xf32>
    %722 = vector.extract_strided_slice %710 {offsets = [0, 64], sizes = [2, 32], strides = [1, 1]} : vector<2x96xf32> to vector<2x32xf32>
    %723 = arith.mulf %719, %722 : vector<2x32xf32>
    %724 = arith.addf %721, %723 : vector<2x32xf32>
    %725 = math.tanh %724 : vector<2x32xf32>
    %cst_323 = arith.constant 1.000000e+00 : f32
    %726 = vector.broadcast %cst_323 : f32 to vector<2x32xf32>
    %727 = arith.subf %726, %720 : vector<2x32xf32>
    %728 = arith.mulf %727, %725 : vector<2x32xf32>
    %729 = arith.mulf %720, %655 : vector<2x32xf32>
    %730 = arith.addf %728, %729 : vector<2x32xf32>
    %c0_324 = arith.constant 0 : index
    %c0_325 = arith.constant 0 : index
    %731 = vector.load %arg13[%c0_324, %c0_325] : memref<32x4xf32, #tpu.memory_space<vmem>>, vector<32x4xf32>
    %cst_326 = arith.constant dense<0.000000e+00> : vector<2x4xf32>
    %732 = tpu.matmul %730, %731, %cst_326 {dimension_numbers = #tpu.dot_dimension_numbers<[1], [0], [0], [1], [0, 0, 1, 1], [], []>} : vector<2x32xf32>, vector<32x4xf32>, vector<2x4xf32> -> vector<2x4xf32>
    %c0_327 = arith.constant 0 : index
    %c0_328 = arith.constant 0 : index
    %733 = vector.load %arg14[%c0_327, %c0_328] : memref<1x4xf32, #tpu.memory_space<vmem>>, vector<1x4xf32>
    %734 = vector.broadcast %733 : vector<1x4xf32> to vector<2x4xf32>
    %735 = arith.addf %732, %734 : vector<2x4xf32>
    %736 = arith.index_cast %c2_i32_293 : i32 to index
    %c0_329 = arith.constant 0 : index
    %c0_330 = arith.constant 0 : index
    %737 = vector.load %arg15[%736, %c0_329, %c0_330] : memref<8x2x4xf32, #tpu.memory_space<vmem>>, vector<1x2x4xf32>
    %738 = vector.shape_cast %737 : vector<1x2x4xf32> to vector<2x4xf32>
    %739 = vector.shape_cast %735 : vector<2x4xf32> to vector<1x2x4xf32>
    tpu.vector_store %arg15[%736, %c0_329, %c0_330], %739 {strides = array<i32>} : memref<8x2x4xf32, #tpu.memory_space<vmem>>, vector<1x2x4xf32>,
    %c3_i32_331 = arith.constant 3 : i32
    %c0_332 = arith.constant 0 : index
    %c0_333 = arith.constant 0 : index
    %740 = vector.load %arg7[%c0_332, %c0_333] : memref<4x96xf32, #tpu.memory_space<vmem>>, vector<4x96xf32>
    %cst_334 = arith.constant dense<0.000000e+00> : vector<2x96xf32>
    %741 = tpu.matmul %735, %740, %cst_334 {dimension_numbers = #tpu.dot_dimension_numbers<[1], [0], [0], [1], [0, 0, 1, 1], [], []>} : vector<2x4xf32>, vector<4x96xf32>, vector<2x96xf32> -> vector<2x96xf32>
    %c0_335 = arith.constant 0 : index
    %c0_336 = arith.constant 0 : index
    %742 = vector.load %arg8[%c0_335, %c0_336] : memref<1x96xf32, #tpu.memory_space<vmem>>, vector<1x96xf32>
    %743 = vector.broadcast %742 : vector<1x96xf32> to vector<2x96xf32>
    %744 = arith.addf %741, %743 : vector<2x96xf32>
    %c0_337 = arith.constant 0 : index
    %c0_338 = arith.constant 0 : index
    %c0_339 = arith.constant 0 : index
    %745 = vector.load %arg9[%c0_337, %c0_338, %c0_339] : memref<2x32x96xf32, #tpu.memory_space<vmem>>, vector<1x32x96xf32>
    %746 = vector.shape_cast %745 : vector<1x32x96xf32> to vector<32x96xf32>
    %cst_340 = arith.constant dense<0.000000e+00> : vector<2x96xf32>
    %747 = tpu.matmul %696, %746, %cst_340 {dimension_numbers = #tpu.dot_dimension_numbers<[1], [0], [0], [1], [0, 0, 1, 1], [], []>} : vector<2x32xf32>, vector<32x96xf32>, vector<2x96xf32> -> vector<2x96xf32>
    %c0_341 = arith.constant 0 : index
    %c0_342 = arith.constant 0 : index
    %c0_343 = arith.constant 0 : index
    %748 = vector.load %arg10[%c0_341, %c0_342, %c0_343] : memref<2x1x96xf32, #tpu.memory_space<vmem>>, vector<1x1x96xf32>
    %749 = vector.shape_cast %748 : vector<1x1x96xf32> to vector<1x96xf32>
    %750 = vector.broadcast %749 : vector<1x96xf32> to vector<2x96xf32>
    %751 = arith.addf %747, %750 : vector<2x96xf32>
    %752 = vector.extract_strided_slice %744 {offsets = [0, 0], sizes = [2, 64], strides = [1, 1]} : vector<2x96xf32> to vector<2x64xf32>
    %753 = vector.extract_strided_slice %751 {offsets = [0, 0], sizes = [2, 64], strides = [1, 1]} : vector<2x96xf32> to vector<2x64xf32>
    %754 = arith.addf %752, %753 : vector<2x64xf32>
    %755 = arith.negf %754 : vector<2x64xf32>
    %756 = math.exp %755 : vector<2x64xf32>
    %cst_344 = arith.constant 1.000000e+00 : f32
    %757 = vector.broadcast %cst_344 : f32 to vector<2x64xf32>
    %758 = arith.addf %757, %756 : vector<2x64xf32>
    %759 = arith.divf %757, %758 : vector<2x64xf32>
    %760 = vector.extract_strided_slice %759 {offsets = [0, 0], sizes = [2, 32], strides = [1, 1]} : vector<2x64xf32> to vector<2x32xf32>
    %761 = vector.extract_strided_slice %759 {offsets = [0, 32], sizes = [2, 32], strides = [1, 1]} : vector<2x64xf32> to vector<2x32xf32>
    %762 = vector.extract_strided_slice %744 {offsets = [0, 64], sizes = [2, 32], strides = [1, 1]} : vector<2x96xf32> to vector<2x32xf32>
    %763 = vector.extract_strided_slice %751 {offsets = [0, 64], sizes = [2, 32], strides = [1, 1]} : vector<2x96xf32> to vector<2x32xf32>
    %764 = arith.mulf %760, %763 : vector<2x32xf32>
    %765 = arith.addf %762, %764 : vector<2x32xf32>
    %766 = math.tanh %765 : vector<2x32xf32>
    %cst_345 = arith.constant 1.000000e+00 : f32
    %767 = vector.broadcast %cst_345 : f32 to vector<2x32xf32>
    %768 = arith.subf %767, %761 : vector<2x32xf32>
    %769 = arith.mulf %768, %766 : vector<2x32xf32>
    %770 = arith.mulf %761, %696 : vector<2x32xf32>
    %771 = arith.addf %769, %770 : vector<2x32xf32>
    %c0_346 = arith.constant 0 : index
    %c0_347 = arith.constant 0 : index
    %c0_348 = arith.constant 0 : index
    %772 = vector.load %arg11[%c0_346, %c0_347, %c0_348] : memref<1x32x96xf32, #tpu.memory_space<vmem>>, vector<1x32x96xf32>
    %773 = vector.shape_cast %772 : vector<1x32x96xf32> to vector<32x96xf32>
    %cst_349 = arith.constant dense<0.000000e+00> : vector<2x96xf32>
    %774 = tpu.matmul %771, %773, %cst_349 {dimension_numbers = #tpu.dot_dimension_numbers<[1], [0], [0], [1], [0, 0, 1, 1], [], []>} : vector<2x32xf32>, vector<32x96xf32>, vector<2x96xf32> -> vector<2x96xf32>
    %c0_350 = arith.constant 0 : index
    %c0_351 = arith.constant 0 : index
    %c0_352 = arith.constant 0 : index
    %775 = vector.load %arg12[%c0_350, %c0_351, %c0_352] : memref<1x1x96xf32, #tpu.memory_space<vmem>>, vector<1x1x96xf32>
    %776 = vector.shape_cast %775 : vector<1x1x96xf32> to vector<1x96xf32>
    %777 = vector.broadcast %776 : vector<1x96xf32> to vector<2x96xf32>
    %778 = arith.addf %774, %777 : vector<2x96xf32>
    %c1_353 = arith.constant 1 : index
    %c0_354 = arith.constant 0 : index
    %c0_355 = arith.constant 0 : index
    %779 = vector.load %arg9[%c1_353, %c0_354, %c0_355] : memref<2x32x96xf32, #tpu.memory_space<vmem>>, vector<1x32x96xf32>
    %780 = vector.shape_cast %779 : vector<1x32x96xf32> to vector<32x96xf32>
    %cst_356 = arith.constant dense<0.000000e+00> : vector<2x96xf32>
    %781 = tpu.matmul %730, %780, %cst_356 {dimension_numbers = #tpu.dot_dimension_numbers<[1], [0], [0], [1], [0, 0, 1, 1], [], []>} : vector<2x32xf32>, vector<32x96xf32>, vector<2x96xf32> -> vector<2x96xf32>
    %c1_357 = arith.constant 1 : index
    %c0_358 = arith.constant 0 : index
    %c0_359 = arith.constant 0 : index
    %782 = vector.load %arg10[%c1_357, %c0_358, %c0_359] : memref<2x1x96xf32, #tpu.memory_space<vmem>>, vector<1x1x96xf32>
    %783 = vector.shape_cast %782 : vector<1x1x96xf32> to vector<1x96xf32>
    %784 = vector.broadcast %783 : vector<1x96xf32> to vector<2x96xf32>
    %785 = arith.addf %781, %784 : vector<2x96xf32>
    %786 = vector.extract_strided_slice %778 {offsets = [0, 0], sizes = [2, 64], strides = [1, 1]} : vector<2x96xf32> to vector<2x64xf32>
    %787 = vector.extract_strided_slice %785 {offsets = [0, 0], sizes = [2, 64], strides = [1, 1]} : vector<2x96xf32> to vector<2x64xf32>
    %788 = arith.addf %786, %787 : vector<2x64xf32>
    %789 = arith.negf %788 : vector<2x64xf32>
    %790 = math.exp %789 : vector<2x64xf32>
    %cst_360 = arith.constant 1.000000e+00 : f32
    %791 = vector.broadcast %cst_360 : f32 to vector<2x64xf32>
    %792 = arith.addf %791, %790 : vector<2x64xf32>
    %793 = arith.divf %791, %792 : vector<2x64xf32>
    %794 = vector.extract_strided_slice %793 {offsets = [0, 0], sizes = [2, 32], strides = [1, 1]} : vector<2x64xf32> to vector<2x32xf32>
    %795 = vector.extract_strided_slice %793 {offsets = [0, 32], sizes = [2, 32], strides = [1, 1]} : vector<2x64xf32> to vector<2x32xf32>
    %796 = vector.extract_strided_slice %778 {offsets = [0, 64], sizes = [2, 32], strides = [1, 1]} : vector<2x96xf32> to vector<2x32xf32>
    %797 = vector.extract_strided_slice %785 {offsets = [0, 64], sizes = [2, 32], strides = [1, 1]} : vector<2x96xf32> to vector<2x32xf32>
    %798 = arith.mulf %794, %797 : vector<2x32xf32>
    %799 = arith.addf %796, %798 : vector<2x32xf32>
    %800 = math.tanh %799 : vector<2x32xf32>
    %cst_361 = arith.constant 1.000000e+00 : f32
    %801 = vector.broadcast %cst_361 : f32 to vector<2x32xf32>
    %802 = arith.subf %801, %795 : vector<2x32xf32>
    %803 = arith.mulf %802, %800 : vector<2x32xf32>
    %804 = arith.mulf %795, %730 : vector<2x32xf32>
    %805 = arith.addf %803, %804 : vector<2x32xf32>
    %c0_362 = arith.constant 0 : index
    %c0_363 = arith.constant 0 : index
    %806 = vector.load %arg13[%c0_362, %c0_363] : memref<32x4xf32, #tpu.memory_space<vmem>>, vector<32x4xf32>
    %cst_364 = arith.constant dense<0.000000e+00> : vector<2x4xf32>
    %807 = tpu.matmul %805, %806, %cst_364 {dimension_numbers = #tpu.dot_dimension_numbers<[1], [0], [0], [1], [0, 0, 1, 1], [], []>} : vector<2x32xf32>, vector<32x4xf32>, vector<2x4xf32> -> vector<2x4xf32>
    %c0_365 = arith.constant 0 : index
    %c0_366 = arith.constant 0 : index
    %808 = vector.load %arg14[%c0_365, %c0_366] : memref<1x4xf32, #tpu.memory_space<vmem>>, vector<1x4xf32>
    %809 = vector.broadcast %808 : vector<1x4xf32> to vector<2x4xf32>
    %810 = arith.addf %807, %809 : vector<2x4xf32>
    %811 = arith.index_cast %c3_i32_331 : i32 to index
    %c0_367 = arith.constant 0 : index
    %c0_368 = arith.constant 0 : index
    %812 = vector.load %arg15[%811, %c0_367, %c0_368] : memref<8x2x4xf32, #tpu.memory_space<vmem>>, vector<1x2x4xf32>
    %813 = vector.shape_cast %812 : vector<1x2x4xf32> to vector<2x4xf32>
    %814 = vector.shape_cast %810 : vector<2x4xf32> to vector<1x2x4xf32>
    tpu.vector_store %arg15[%811, %c0_367, %c0_368], %814 {strides = array<i32>} : memref<8x2x4xf32, #tpu.memory_space<vmem>>, vector<1x2x4xf32>,
    %c4_i32_369 = arith.constant 4 : i32
    %c0_370 = arith.constant 0 : index
    %c0_371 = arith.constant 0 : index
    %815 = vector.load %arg7[%c0_370, %c0_371] : memref<4x96xf32, #tpu.memory_space<vmem>>, vector<4x96xf32>
    %cst_372 = arith.constant dense<0.000000e+00> : vector<2x96xf32>
    %816 = tpu.matmul %810, %815, %cst_372 {dimension_numbers = #tpu.dot_dimension_numbers<[1], [0], [0], [1], [0, 0, 1, 1], [], []>} : vector<2x4xf32>, vector<4x96xf32>, vector<2x96xf32> -> vector<2x96xf32>
    %c0_373 = arith.constant 0 : index
    %c0_374 = arith.constant 0 : index
    %817 = vector.load %arg8[%c0_373, %c0_374] : memref<1x96xf32, #tpu.memory_space<vmem>>, vector<1x96xf32>
    %818 = vector.broadcast %817 : vector<1x96xf32> to vector<2x96xf32>
    %819 = arith.addf %816, %818 : vector<2x96xf32>
    %c0_375 = arith.constant 0 : index
    %c0_376 = arith.constant 0 : index
    %c0_377 = arith.constant 0 : index
    %820 = vector.load %arg9[%c0_375, %c0_376, %c0_377] : memref<2x32x96xf32, #tpu.memory_space<vmem>>, vector<1x32x96xf32>
    %821 = vector.shape_cast %820 : vector<1x32x96xf32> to vector<32x96xf32>
    %cst_378 = arith.constant dense<0.000000e+00> : vector<2x96xf32>
    %822 = tpu.matmul %771, %821, %cst_378 {dimension_numbers = #tpu.dot_dimension_numbers<[1], [0], [0], [1], [0, 0, 1, 1], [], []>} : vector<2x32xf32>, vector<32x96xf32>, vector<2x96xf32> -> vector<2x96xf32>
    %c0_379 = arith.constant 0 : index
    %c0_380 = arith.constant 0 : index
    %c0_381 = arith.constant 0 : index
    %823 = vector.load %arg10[%c0_379, %c0_380, %c0_381] : memref<2x1x96xf32, #tpu.memory_space<vmem>>, vector<1x1x96xf32>
    %824 = vector.shape_cast %823 : vector<1x1x96xf32> to vector<1x96xf32>
    %825 = vector.broadcast %824 : vector<1x96xf32> to vector<2x96xf32>
    %826 = arith.addf %822, %825 : vector<2x96xf32>
    %827 = vector.extract_strided_slice %819 {offsets = [0, 0], sizes = [2, 64], strides = [1, 1]} : vector<2x96xf32> to vector<2x64xf32>
    %828 = vector.extract_strided_slice %826 {offsets = [0, 0], sizes = [2, 64], strides = [1, 1]} : vector<2x96xf32> to vector<2x64xf32>
    %829 = arith.addf %827, %828 : vector<2x64xf32>
    %830 = arith.negf %829 : vector<2x64xf32>
    %831 = math.exp %830 : vector<2x64xf32>
    %cst_382 = arith.constant 1.000000e+00 : f32
    %832 = vector.broadcast %cst_382 : f32 to vector<2x64xf32>
    %833 = arith.addf %832, %831 : vector<2x64xf32>
    %834 = arith.divf %832, %833 : vector<2x64xf32>
    %835 = vector.extract_strided_slice %834 {offsets = [0, 0], sizes = [2, 32], strides = [1, 1]} : vector<2x64xf32> to vector<2x32xf32>
    %836 = vector.extract_strided_slice %834 {offsets = [0, 32], sizes = [2, 32], strides = [1, 1]} : vector<2x64xf32> to vector<2x32xf32>
    %837 = vector.extract_strided_slice %819 {offsets = [0, 64], sizes = [2, 32], strides = [1, 1]} : vector<2x96xf32> to vector<2x32xf32>
    %838 = vector.extract_strided_slice %826 {offsets = [0, 64], sizes = [2, 32], strides = [1, 1]} : vector<2x96xf32> to vector<2x32xf32>
    %839 = arith.mulf %835, %838 : vector<2x32xf32>
    %840 = arith.addf %837, %839 : vector<2x32xf32>
    %841 = math.tanh %840 : vector<2x32xf32>
    %cst_383 = arith.constant 1.000000e+00 : f32
    %842 = vector.broadcast %cst_383 : f32 to vector<2x32xf32>
    %843 = arith.subf %842, %836 : vector<2x32xf32>
    %844 = arith.mulf %843, %841 : vector<2x32xf32>
    %845 = arith.mulf %836, %771 : vector<2x32xf32>
    %846 = arith.addf %844, %845 : vector<2x32xf32>
    %c0_384 = arith.constant 0 : index
    %c0_385 = arith.constant 0 : index
    %c0_386 = arith.constant 0 : index
    %847 = vector.load %arg11[%c0_384, %c0_385, %c0_386] : memref<1x32x96xf32, #tpu.memory_space<vmem>>, vector<1x32x96xf32>
    %848 = vector.shape_cast %847 : vector<1x32x96xf32> to vector<32x96xf32>
    %cst_387 = arith.constant dense<0.000000e+00> : vector<2x96xf32>
    %849 = tpu.matmul %846, %848, %cst_387 {dimension_numbers = #tpu.dot_dimension_numbers<[1], [0], [0], [1], [0, 0, 1, 1], [], []>} : vector<2x32xf32>, vector<32x96xf32>, vector<2x96xf32> -> vector<2x96xf32>
    %c0_388 = arith.constant 0 : index
    %c0_389 = arith.constant 0 : index
    %c0_390 = arith.constant 0 : index
    %850 = vector.load %arg12[%c0_388, %c0_389, %c0_390] : memref<1x1x96xf32, #tpu.memory_space<vmem>>, vector<1x1x96xf32>
    %851 = vector.shape_cast %850 : vector<1x1x96xf32> to vector<1x96xf32>
    %852 = vector.broadcast %851 : vector<1x96xf32> to vector<2x96xf32>
    %853 = arith.addf %849, %852 : vector<2x96xf32>
    %c1_391 = arith.constant 1 : index
    %c0_392 = arith.constant 0 : index
    %c0_393 = arith.constant 0 : index
    %854 = vector.load %arg9[%c1_391, %c0_392, %c0_393] : memref<2x32x96xf32, #tpu.memory_space<vmem>>, vector<1x32x96xf32>
    %855 = vector.shape_cast %854 : vector<1x32x96xf32> to vector<32x96xf32>
    %cst_394 = arith.constant dense<0.000000e+00> : vector<2x96xf32>
    %856 = tpu.matmul %805, %855, %cst_394 {dimension_numbers = #tpu.dot_dimension_numbers<[1], [0], [0], [1], [0, 0, 1, 1], [], []>} : vector<2x32xf32>, vector<32x96xf32>, vector<2x96xf32> -> vector<2x96xf32>
    %c1_395 = arith.constant 1 : index
    %c0_396 = arith.constant 0 : index
    %c0_397 = arith.constant 0 : index
    %857 = vector.load %arg10[%c1_395, %c0_396, %c0_397] : memref<2x1x96xf32, #tpu.memory_space<vmem>>, vector<1x1x96xf32>
    %858 = vector.shape_cast %857 : vector<1x1x96xf32> to vector<1x96xf32>
    %859 = vector.broadcast %858 : vector<1x96xf32> to vector<2x96xf32>
    %860 = arith.addf %856, %859 : vector<2x96xf32>
    %861 = vector.extract_strided_slice %853 {offsets = [0, 0], sizes = [2, 64], strides = [1, 1]} : vector<2x96xf32> to vector<2x64xf32>
    %862 = vector.extract_strided_slice %860 {offsets = [0, 0], sizes = [2, 64], strides = [1, 1]} : vector<2x96xf32> to vector<2x64xf32>
    %863 = arith.addf %861, %862 : vector<2x64xf32>
    %864 = arith.negf %863 : vector<2x64xf32>
    %865 = math.exp %864 : vector<2x64xf32>
    %cst_398 = arith.constant 1.000000e+00 : f32
    %866 = vector.broadcast %cst_398 : f32 to vector<2x64xf32>
    %867 = arith.addf %866, %865 : vector<2x64xf32>
    %868 = arith.divf %866, %867 : vector<2x64xf32>
    %869 = vector.extract_strided_slice %868 {offsets = [0, 0], sizes = [2, 32], strides = [1, 1]} : vector<2x64xf32> to vector<2x32xf32>
    %870 = vector.extract_strided_slice %868 {offsets = [0, 32], sizes = [2, 32], strides = [1, 1]} : vector<2x64xf32> to vector<2x32xf32>
    %871 = vector.extract_strided_slice %853 {offsets = [0, 64], sizes = [2, 32], strides = [1, 1]} : vector<2x96xf32> to vector<2x32xf32>
    %872 = vector.extract_strided_slice %860 {offsets = [0, 64], sizes = [2, 32], strides = [1, 1]} : vector<2x96xf32> to vector<2x32xf32>
    %873 = arith.mulf %869, %872 : vector<2x32xf32>
    %874 = arith.addf %871, %873 : vector<2x32xf32>
    %875 = math.tanh %874 : vector<2x32xf32>
    %cst_399 = arith.constant 1.000000e+00 : f32
    %876 = vector.broadcast %cst_399 : f32 to vector<2x32xf32>
    %877 = arith.subf %876, %870 : vector<2x32xf32>
    %878 = arith.mulf %877, %875 : vector<2x32xf32>
    %879 = arith.mulf %870, %805 : vector<2x32xf32>
    %880 = arith.addf %878, %879 : vector<2x32xf32>
    %c0_400 = arith.constant 0 : index
    %c0_401 = arith.constant 0 : index
    %881 = vector.load %arg13[%c0_400, %c0_401] : memref<32x4xf32, #tpu.memory_space<vmem>>, vector<32x4xf32>
    %cst_402 = arith.constant dense<0.000000e+00> : vector<2x4xf32>
    %882 = tpu.matmul %880, %881, %cst_402 {dimension_numbers = #tpu.dot_dimension_numbers<[1], [0], [0], [1], [0, 0, 1, 1], [], []>} : vector<2x32xf32>, vector<32x4xf32>, vector<2x4xf32> -> vector<2x4xf32>
    %c0_403 = arith.constant 0 : index
    %c0_404 = arith.constant 0 : index
    %883 = vector.load %arg14[%c0_403, %c0_404] : memref<1x4xf32, #tpu.memory_space<vmem>>, vector<1x4xf32>
    %884 = vector.broadcast %883 : vector<1x4xf32> to vector<2x4xf32>
    %885 = arith.addf %882, %884 : vector<2x4xf32>
    %886 = arith.index_cast %c4_i32_369 : i32 to index
    %c0_405 = arith.constant 0 : index
    %c0_406 = arith.constant 0 : index
    %887 = vector.load %arg15[%886, %c0_405, %c0_406] : memref<8x2x4xf32, #tpu.memory_space<vmem>>, vector<1x2x4xf32>
    %888 = vector.shape_cast %887 : vector<1x2x4xf32> to vector<2x4xf32>
    %889 = vector.shape_cast %885 : vector<2x4xf32> to vector<1x2x4xf32>
    tpu.vector_store %arg15[%886, %c0_405, %c0_406], %889 {strides = array<i32>} : memref<8x2x4xf32, #tpu.memory_space<vmem>>, vector<1x2x4xf32>,
    %c5_i32_407 = arith.constant 5 : i32
    %c0_408 = arith.constant 0 : index
    %c0_409 = arith.constant 0 : index
    %890 = vector.load %arg7[%c0_408, %c0_409] : memref<4x96xf32, #tpu.memory_space<vmem>>, vector<4x96xf32>
    %cst_410 = arith.constant dense<0.000000e+00> : vector<2x96xf32>
    %891 = tpu.matmul %885, %890, %cst_410 {dimension_numbers = #tpu.dot_dimension_numbers<[1], [0], [0], [1], [0, 0, 1, 1], [], []>} : vector<2x4xf32>, vector<4x96xf32>, vector<2x96xf32> -> vector<2x96xf32>
    %c0_411 = arith.constant 0 : index
    %c0_412 = arith.constant 0 : index
    %892 = vector.load %arg8[%c0_411, %c0_412] : memref<1x96xf32, #tpu.memory_space<vmem>>, vector<1x96xf32>
    %893 = vector.broadcast %892 : vector<1x96xf32> to vector<2x96xf32>
    %894 = arith.addf %891, %893 : vector<2x96xf32>
    %c0_413 = arith.constant 0 : index
    %c0_414 = arith.constant 0 : index
    %c0_415 = arith.constant 0 : index
    %895 = vector.load %arg9[%c0_413, %c0_414, %c0_415] : memref<2x32x96xf32, #tpu.memory_space<vmem>>, vector<1x32x96xf32>
    %896 = vector.shape_cast %895 : vector<1x32x96xf32> to vector<32x96xf32>
    %cst_416 = arith.constant dense<0.000000e+00> : vector<2x96xf32>
    %897 = tpu.matmul %846, %896, %cst_416 {dimension_numbers = #tpu.dot_dimension_numbers<[1], [0], [0], [1], [0, 0, 1, 1], [], []>} : vector<2x32xf32>, vector<32x96xf32>, vector<2x96xf32> -> vector<2x96xf32>
    %c0_417 = arith.constant 0 : index
    %c0_418 = arith.constant 0 : index
    %c0_419 = arith.constant 0 : index
    %898 = vector.load %arg10[%c0_417, %c0_418, %c0_419] : memref<2x1x96xf32, #tpu.memory_space<vmem>>, vector<1x1x96xf32>
    %899 = vector.shape_cast %898 : vector<1x1x96xf32> to vector<1x96xf32>
    %900 = vector.broadcast %899 : vector<1x96xf32> to vector<2x96xf32>
    %901 = arith.addf %897, %900 : vector<2x96xf32>
    %902 = vector.extract_strided_slice %894 {offsets = [0, 0], sizes = [2, 64], strides = [1, 1]} : vector<2x96xf32> to vector<2x64xf32>
    %903 = vector.extract_strided_slice %901 {offsets = [0, 0], sizes = [2, 64], strides = [1, 1]} : vector<2x96xf32> to vector<2x64xf32>
    %904 = arith.addf %902, %903 : vector<2x64xf32>
    %905 = arith.negf %904 : vector<2x64xf32>
    %906 = math.exp %905 : vector<2x64xf32>
    %cst_420 = arith.constant 1.000000e+00 : f32
    %907 = vector.broadcast %cst_420 : f32 to vector<2x64xf32>
    %908 = arith.addf %907, %906 : vector<2x64xf32>
    %909 = arith.divf %907, %908 : vector<2x64xf32>
    %910 = vector.extract_strided_slice %909 {offsets = [0, 0], sizes = [2, 32], strides = [1, 1]} : vector<2x64xf32> to vector<2x32xf32>
    %911 = vector.extract_strided_slice %909 {offsets = [0, 32], sizes = [2, 32], strides = [1, 1]} : vector<2x64xf32> to vector<2x32xf32>
    %912 = vector.extract_strided_slice %894 {offsets = [0, 64], sizes = [2, 32], strides = [1, 1]} : vector<2x96xf32> to vector<2x32xf32>
    %913 = vector.extract_strided_slice %901 {offsets = [0, 64], sizes = [2, 32], strides = [1, 1]} : vector<2x96xf32> to vector<2x32xf32>
    %914 = arith.mulf %910, %913 : vector<2x32xf32>
    %915 = arith.addf %912, %914 : vector<2x32xf32>
    %916 = math.tanh %915 : vector<2x32xf32>
    %cst_421 = arith.constant 1.000000e+00 : f32
    %917 = vector.broadcast %cst_421 : f32 to vector<2x32xf32>
    %918 = arith.subf %917, %911 : vector<2x32xf32>
    %919 = arith.mulf %918, %916 : vector<2x32xf32>
    %920 = arith.mulf %911, %846 : vector<2x32xf32>
    %921 = arith.addf %919, %920 : vector<2x32xf32>
    %c0_422 = arith.constant 0 : index
    %c0_423 = arith.constant 0 : index
    %c0_424 = arith.constant 0 : index
    %922 = vector.load %arg11[%c0_422, %c0_423, %c0_424] : memref<1x32x96xf32, #tpu.memory_space<vmem>>, vector<1x32x96xf32>
    %923 = vector.shape_cast %922 : vector<1x32x96xf32> to vector<32x96xf32>
    %cst_425 = arith.constant dense<0.000000e+00> : vector<2x96xf32>
    %924 = tpu.matmul %921, %923, %cst_425 {dimension_numbers = #tpu.dot_dimension_numbers<[1], [0], [0], [1], [0, 0, 1, 1], [], []>} : vector<2x32xf32>, vector<32x96xf32>, vector<2x96xf32> -> vector<2x96xf32>
    %c0_426 = arith.constant 0 : index
    %c0_427 = arith.constant 0 : index
    %c0_428 = arith.constant 0 : index
    %925 = vector.load %arg12[%c0_426, %c0_427, %c0_428] : memref<1x1x96xf32, #tpu.memory_space<vmem>>, vector<1x1x96xf32>
    %926 = vector.shape_cast %925 : vector<1x1x96xf32> to vector<1x96xf32>
    %927 = vector.broadcast %926 : vector<1x96xf32> to vector<2x96xf32>
    %928 = arith.addf %924, %927 : vector<2x96xf32>
    %c1_429 = arith.constant 1 : index
    %c0_430 = arith.constant 0 : index
    %c0_431 = arith.constant 0 : index
    %929 = vector.load %arg9[%c1_429, %c0_430, %c0_431] : memref<2x32x96xf32, #tpu.memory_space<vmem>>, vector<1x32x96xf32>
    %930 = vector.shape_cast %929 : vector<1x32x96xf32> to vector<32x96xf32>
    %cst_432 = arith.constant dense<0.000000e+00> : vector<2x96xf32>
    %931 = tpu.matmul %880, %930, %cst_432 {dimension_numbers = #tpu.dot_dimension_numbers<[1], [0], [0], [1], [0, 0, 1, 1], [], []>} : vector<2x32xf32>, vector<32x96xf32>, vector<2x96xf32> -> vector<2x96xf32>
    %c1_433 = arith.constant 1 : index
    %c0_434 = arith.constant 0 : index
    %c0_435 = arith.constant 0 : index
    %932 = vector.load %arg10[%c1_433, %c0_434, %c0_435] : memref<2x1x96xf32, #tpu.memory_space<vmem>>, vector<1x1x96xf32>
    %933 = vector.shape_cast %932 : vector<1x1x96xf32> to vector<1x96xf32>
    %934 = vector.broadcast %933 : vector<1x96xf32> to vector<2x96xf32>
    %935 = arith.addf %931, %934 : vector<2x96xf32>
    %936 = vector.extract_strided_slice %928 {offsets = [0, 0], sizes = [2, 64], strides = [1, 1]} : vector<2x96xf32> to vector<2x64xf32>
    %937 = vector.extract_strided_slice %935 {offsets = [0, 0], sizes = [2, 64], strides = [1, 1]} : vector<2x96xf32> to vector<2x64xf32>
    %938 = arith.addf %936, %937 : vector<2x64xf32>
    %939 = arith.negf %938 : vector<2x64xf32>
    %940 = math.exp %939 : vector<2x64xf32>
    %cst_436 = arith.constant 1.000000e+00 : f32
    %941 = vector.broadcast %cst_436 : f32 to vector<2x64xf32>
    %942 = arith.addf %941, %940 : vector<2x64xf32>
    %943 = arith.divf %941, %942 : vector<2x64xf32>
    %944 = vector.extract_strided_slice %943 {offsets = [0, 0], sizes = [2, 32], strides = [1, 1]} : vector<2x64xf32> to vector<2x32xf32>
    %945 = vector.extract_strided_slice %943 {offsets = [0, 32], sizes = [2, 32], strides = [1, 1]} : vector<2x64xf32> to vector<2x32xf32>
    %946 = vector.extract_strided_slice %928 {offsets = [0, 64], sizes = [2, 32], strides = [1, 1]} : vector<2x96xf32> to vector<2x32xf32>
    %947 = vector.extract_strided_slice %935 {offsets = [0, 64], sizes = [2, 32], strides = [1, 1]} : vector<2x96xf32> to vector<2x32xf32>
    %948 = arith.mulf %944, %947 : vector<2x32xf32>
    %949 = arith.addf %946, %948 : vector<2x32xf32>
    %950 = math.tanh %949 : vector<2x32xf32>
    %cst_437 = arith.constant 1.000000e+00 : f32
    %951 = vector.broadcast %cst_437 : f32 to vector<2x32xf32>
    %952 = arith.subf %951, %945 : vector<2x32xf32>
    %953 = arith.mulf %952, %950 : vector<2x32xf32>
    %954 = arith.mulf %945, %880 : vector<2x32xf32>
    %955 = arith.addf %953, %954 : vector<2x32xf32>
    %c0_438 = arith.constant 0 : index
    %c0_439 = arith.constant 0 : index
    %956 = vector.load %arg13[%c0_438, %c0_439] : memref<32x4xf32, #tpu.memory_space<vmem>>, vector<32x4xf32>
    %cst_440 = arith.constant dense<0.000000e+00> : vector<2x4xf32>
    %957 = tpu.matmul %955, %956, %cst_440 {dimension_numbers = #tpu.dot_dimension_numbers<[1], [0], [0], [1], [0, 0, 1, 1], [], []>} : vector<2x32xf32>, vector<32x4xf32>, vector<2x4xf32> -> vector<2x4xf32>
    %c0_441 = arith.constant 0 : index
    %c0_442 = arith.constant 0 : index
    %958 = vector.load %arg14[%c0_441, %c0_442] : memref<1x4xf32, #tpu.memory_space<vmem>>, vector<1x4xf32>
    %959 = vector.broadcast %958 : vector<1x4xf32> to vector<2x4xf32>
    %960 = arith.addf %957, %959 : vector<2x4xf32>
    %961 = arith.index_cast %c5_i32_407 : i32 to index
    %c0_443 = arith.constant 0 : index
    %c0_444 = arith.constant 0 : index
    %962 = vector.load %arg15[%961, %c0_443, %c0_444] : memref<8x2x4xf32, #tpu.memory_space<vmem>>, vector<1x2x4xf32>
    %963 = vector.shape_cast %962 : vector<1x2x4xf32> to vector<2x4xf32>
    %964 = vector.shape_cast %960 : vector<2x4xf32> to vector<1x2x4xf32>
    tpu.vector_store %arg15[%961, %c0_443, %c0_444], %964 {strides = array<i32>} : memref<8x2x4xf32, #tpu.memory_space<vmem>>, vector<1x2x4xf32>,
    %c6_i32_445 = arith.constant 6 : i32
    %c0_446 = arith.constant 0 : index
    %c0_447 = arith.constant 0 : index
    %965 = vector.load %arg7[%c0_446, %c0_447] : memref<4x96xf32, #tpu.memory_space<vmem>>, vector<4x96xf32>
    %cst_448 = arith.constant dense<0.000000e+00> : vector<2x96xf32>
    %966 = tpu.matmul %960, %965, %cst_448 {dimension_numbers = #tpu.dot_dimension_numbers<[1], [0], [0], [1], [0, 0, 1, 1], [], []>} : vector<2x4xf32>, vector<4x96xf32>, vector<2x96xf32> -> vector<2x96xf32>
    %c0_449 = arith.constant 0 : index
    %c0_450 = arith.constant 0 : index
    %967 = vector.load %arg8[%c0_449, %c0_450] : memref<1x96xf32, #tpu.memory_space<vmem>>, vector<1x96xf32>
    %968 = vector.broadcast %967 : vector<1x96xf32> to vector<2x96xf32>
    %969 = arith.addf %966, %968 : vector<2x96xf32>
    %c0_451 = arith.constant 0 : index
    %c0_452 = arith.constant 0 : index
    %c0_453 = arith.constant 0 : index
    %970 = vector.load %arg9[%c0_451, %c0_452, %c0_453] : memref<2x32x96xf32, #tpu.memory_space<vmem>>, vector<1x32x96xf32>
    %971 = vector.shape_cast %970 : vector<1x32x96xf32> to vector<32x96xf32>
    %cst_454 = arith.constant dense<0.000000e+00> : vector<2x96xf32>
    %972 = tpu.matmul %921, %971, %cst_454 {dimension_numbers = #tpu.dot_dimension_numbers<[1], [0], [0], [1], [0, 0, 1, 1], [], []>} : vector<2x32xf32>, vector<32x96xf32>, vector<2x96xf32> -> vector<2x96xf32>
    %c0_455 = arith.constant 0 : index
    %c0_456 = arith.constant 0 : index
    %c0_457 = arith.constant 0 : index
    %973 = vector.load %arg10[%c0_455, %c0_456, %c0_457] : memref<2x1x96xf32, #tpu.memory_space<vmem>>, vector<1x1x96xf32>
    %974 = vector.shape_cast %973 : vector<1x1x96xf32> to vector<1x96xf32>
    %975 = vector.broadcast %974 : vector<1x96xf32> to vector<2x96xf32>
    %976 = arith.addf %972, %975 : vector<2x96xf32>
    %977 = vector.extract_strided_slice %969 {offsets = [0, 0], sizes = [2, 64], strides = [1, 1]} : vector<2x96xf32> to vector<2x64xf32>
    %978 = vector.extract_strided_slice %976 {offsets = [0, 0], sizes = [2, 64], strides = [1, 1]} : vector<2x96xf32> to vector<2x64xf32>
    %979 = arith.addf %977, %978 : vector<2x64xf32>
    %980 = arith.negf %979 : vector<2x64xf32>
    %981 = math.exp %980 : vector<2x64xf32>
    %cst_458 = arith.constant 1.000000e+00 : f32
    %982 = vector.broadcast %cst_458 : f32 to vector<2x64xf32>
    %983 = arith.addf %982, %981 : vector<2x64xf32>
    %984 = arith.divf %982, %983 : vector<2x64xf32>
    %985 = vector.extract_strided_slice %984 {offsets = [0, 0], sizes = [2, 32], strides = [1, 1]} : vector<2x64xf32> to vector<2x32xf32>
    %986 = vector.extract_strided_slice %984 {offsets = [0, 32], sizes = [2, 32], strides = [1, 1]} : vector<2x64xf32> to vector<2x32xf32>
    %987 = vector.extract_strided_slice %969 {offsets = [0, 64], sizes = [2, 32], strides = [1, 1]} : vector<2x96xf32> to vector<2x32xf32>
    %988 = vector.extract_strided_slice %976 {offsets = [0, 64], sizes = [2, 32], strides = [1, 1]} : vector<2x96xf32> to vector<2x32xf32>
    %989 = arith.mulf %985, %988 : vector<2x32xf32>
    %990 = arith.addf %987, %989 : vector<2x32xf32>
    %991 = math.tanh %990 : vector<2x32xf32>
    %cst_459 = arith.constant 1.000000e+00 : f32
    %992 = vector.broadcast %cst_459 : f32 to vector<2x32xf32>
    %993 = arith.subf %992, %986 : vector<2x32xf32>
    %994 = arith.mulf %993, %991 : vector<2x32xf32>
    %995 = arith.mulf %986, %921 : vector<2x32xf32>
    %996 = arith.addf %994, %995 : vector<2x32xf32>
    %c0_460 = arith.constant 0 : index
    %c0_461 = arith.constant 0 : index
    %c0_462 = arith.constant 0 : index
    %997 = vector.load %arg11[%c0_460, %c0_461, %c0_462] : memref<1x32x96xf32, #tpu.memory_space<vmem>>, vector<1x32x96xf32>
    %998 = vector.shape_cast %997 : vector<1x32x96xf32> to vector<32x96xf32>
    %cst_463 = arith.constant dense<0.000000e+00> : vector<2x96xf32>
    %999 = tpu.matmul %996, %998, %cst_463 {dimension_numbers = #tpu.dot_dimension_numbers<[1], [0], [0], [1], [0, 0, 1, 1], [], []>} : vector<2x32xf32>, vector<32x96xf32>, vector<2x96xf32> -> vector<2x96xf32>
    %c0_464 = arith.constant 0 : index
    %c0_465 = arith.constant 0 : index
    %c0_466 = arith.constant 0 : index
    %1000 = vector.load %arg12[%c0_464, %c0_465, %c0_466] : memref<1x1x96xf32, #tpu.memory_space<vmem>>, vector<1x1x96xf32>
    %1001 = vector.shape_cast %1000 : vector<1x1x96xf32> to vector<1x96xf32>
    %1002 = vector.broadcast %1001 : vector<1x96xf32> to vector<2x96xf32>
    %1003 = arith.addf %999, %1002 : vector<2x96xf32>
    %c1_467 = arith.constant 1 : index
    %c0_468 = arith.constant 0 : index
    %c0_469 = arith.constant 0 : index
    %1004 = vector.load %arg9[%c1_467, %c0_468, %c0_469] : memref<2x32x96xf32, #tpu.memory_space<vmem>>, vector<1x32x96xf32>
    %1005 = vector.shape_cast %1004 : vector<1x32x96xf32> to vector<32x96xf32>
    %cst_470 = arith.constant dense<0.000000e+00> : vector<2x96xf32>
    %1006 = tpu.matmul %955, %1005, %cst_470 {dimension_numbers = #tpu.dot_dimension_numbers<[1], [0], [0], [1], [0, 0, 1, 1], [], []>} : vector<2x32xf32>, vector<32x96xf32>, vector<2x96xf32> -> vector<2x96xf32>
    %c1_471 = arith.constant 1 : index
    %c0_472 = arith.constant 0 : index
    %c0_473 = arith.constant 0 : index
    %1007 = vector.load %arg10[%c1_471, %c0_472, %c0_473] : memref<2x1x96xf32, #tpu.memory_space<vmem>>, vector<1x1x96xf32>
    %1008 = vector.shape_cast %1007 : vector<1x1x96xf32> to vector<1x96xf32>
    %1009 = vector.broadcast %1008 : vector<1x96xf32> to vector<2x96xf32>
    %1010 = arith.addf %1006, %1009 : vector<2x96xf32>
    %1011 = vector.extract_strided_slice %1003 {offsets = [0, 0], sizes = [2, 64], strides = [1, 1]} : vector<2x96xf32> to vector<2x64xf32>
    %1012 = vector.extract_strided_slice %1010 {offsets = [0, 0], sizes = [2, 64], strides = [1, 1]} : vector<2x96xf32> to vector<2x64xf32>
    %1013 = arith.addf %1011, %1012 : vector<2x64xf32>
    %1014 = arith.negf %1013 : vector<2x64xf32>
    %1015 = math.exp %1014 : vector<2x64xf32>
    %cst_474 = arith.constant 1.000000e+00 : f32
    %1016 = vector.broadcast %cst_474 : f32 to vector<2x64xf32>
    %1017 = arith.addf %1016, %1015 : vector<2x64xf32>
    %1018 = arith.divf %1016, %1017 : vector<2x64xf32>
    %1019 = vector.extract_strided_slice %1018 {offsets = [0, 0], sizes = [2, 32], strides = [1, 1]} : vector<2x64xf32> to vector<2x32xf32>
    %1020 = vector.extract_strided_slice %1018 {offsets = [0, 32], sizes = [2, 32], strides = [1, 1]} : vector<2x64xf32> to vector<2x32xf32>
    %1021 = vector.extract_strided_slice %1003 {offsets = [0, 64], sizes = [2, 32], strides = [1, 1]} : vector<2x96xf32> to vector<2x32xf32>
    %1022 = vector.extract_strided_slice %1010 {offsets = [0, 64], sizes = [2, 32], strides = [1, 1]} : vector<2x96xf32> to vector<2x32xf32>
    %1023 = arith.mulf %1019, %1022 : vector<2x32xf32>
    %1024 = arith.addf %1021, %1023 : vector<2x32xf32>
    %1025 = math.tanh %1024 : vector<2x32xf32>
    %cst_475 = arith.constant 1.000000e+00 : f32
    %1026 = vector.broadcast %cst_475 : f32 to vector<2x32xf32>
    %1027 = arith.subf %1026, %1020 : vector<2x32xf32>
    %1028 = arith.mulf %1027, %1025 : vector<2x32xf32>
    %1029 = arith.mulf %1020, %955 : vector<2x32xf32>
    %1030 = arith.addf %1028, %1029 : vector<2x32xf32>
    %c0_476 = arith.constant 0 : index
    %c0_477 = arith.constant 0 : index
    %1031 = vector.load %arg13[%c0_476, %c0_477] : memref<32x4xf32, #tpu.memory_space<vmem>>, vector<32x4xf32>
    %cst_478 = arith.constant dense<0.000000e+00> : vector<2x4xf32>
    %1032 = tpu.matmul %1030, %1031, %cst_478 {dimension_numbers = #tpu.dot_dimension_numbers<[1], [0], [0], [1], [0, 0, 1, 1], [], []>} : vector<2x32xf32>, vector<32x4xf32>, vector<2x4xf32> -> vector<2x4xf32>
    %c0_479 = arith.constant 0 : index
    %c0_480 = arith.constant 0 : index
    %1033 = vector.load %arg14[%c0_479, %c0_480] : memref<1x4xf32, #tpu.memory_space<vmem>>, vector<1x4xf32>
    %1034 = vector.broadcast %1033 : vector<1x4xf32> to vector<2x4xf32>
    %1035 = arith.addf %1032, %1034 : vector<2x4xf32>
    %1036 = arith.index_cast %c6_i32_445 : i32 to index
    %c0_481 = arith.constant 0 : index
    %c0_482 = arith.constant 0 : index
    %1037 = vector.load %arg15[%1036, %c0_481, %c0_482] : memref<8x2x4xf32, #tpu.memory_space<vmem>>, vector<1x2x4xf32>
    %1038 = vector.shape_cast %1037 : vector<1x2x4xf32> to vector<2x4xf32>
    %1039 = vector.shape_cast %1035 : vector<2x4xf32> to vector<1x2x4xf32>
    tpu.vector_store %arg15[%1036, %c0_481, %c0_482], %1039 {strides = array<i32>} : memref<8x2x4xf32, #tpu.memory_space<vmem>>, vector<1x2x4xf32>,
    %c7_i32_483 = arith.constant 7 : i32
    %c0_484 = arith.constant 0 : index
    %c0_485 = arith.constant 0 : index
    %1040 = vector.load %arg7[%c0_484, %c0_485] : memref<4x96xf32, #tpu.memory_space<vmem>>, vector<4x96xf32>
    %cst_486 = arith.constant dense<0.000000e+00> : vector<2x96xf32>
    %1041 = tpu.matmul %1035, %1040, %cst_486 {dimension_numbers = #tpu.dot_dimension_numbers<[1], [0], [0], [1], [0, 0, 1, 1], [], []>} : vector<2x4xf32>, vector<4x96xf32>, vector<2x96xf32> -> vector<2x96xf32>
    %c0_487 = arith.constant 0 : index
    %c0_488 = arith.constant 0 : index
    %1042 = vector.load %arg8[%c0_487, %c0_488] : memref<1x96xf32, #tpu.memory_space<vmem>>, vector<1x96xf32>
    %1043 = vector.broadcast %1042 : vector<1x96xf32> to vector<2x96xf32>
    %1044 = arith.addf %1041, %1043 : vector<2x96xf32>
    %c0_489 = arith.constant 0 : index
    %c0_490 = arith.constant 0 : index
    %c0_491 = arith.constant 0 : index
    %1045 = vector.load %arg9[%c0_489, %c0_490, %c0_491] : memref<2x32x96xf32, #tpu.memory_space<vmem>>, vector<1x32x96xf32>
    %1046 = vector.shape_cast %1045 : vector<1x32x96xf32> to vector<32x96xf32>
    %cst_492 = arith.constant dense<0.000000e+00> : vector<2x96xf32>
    %1047 = tpu.matmul %996, %1046, %cst_492 {dimension_numbers = #tpu.dot_dimension_numbers<[1], [0], [0], [1], [0, 0, 1, 1], [], []>} : vector<2x32xf32>, vector<32x96xf32>, vector<2x96xf32> -> vector<2x96xf32>
    %c0_493 = arith.constant 0 : index
    %c0_494 = arith.constant 0 : index
    %c0_495 = arith.constant 0 : index
    %1048 = vector.load %arg10[%c0_493, %c0_494, %c0_495] : memref<2x1x96xf32, #tpu.memory_space<vmem>>, vector<1x1x96xf32>
    %1049 = vector.shape_cast %1048 : vector<1x1x96xf32> to vector<1x96xf32>
    %1050 = vector.broadcast %1049 : vector<1x96xf32> to vector<2x96xf32>
    %1051 = arith.addf %1047, %1050 : vector<2x96xf32>
    %1052 = vector.extract_strided_slice %1044 {offsets = [0, 0], sizes = [2, 64], strides = [1, 1]} : vector<2x96xf32> to vector<2x64xf32>
    %1053 = vector.extract_strided_slice %1051 {offsets = [0, 0], sizes = [2, 64], strides = [1, 1]} : vector<2x96xf32> to vector<2x64xf32>
    %1054 = arith.addf %1052, %1053 : vector<2x64xf32>
    %1055 = arith.negf %1054 : vector<2x64xf32>
    %1056 = math.exp %1055 : vector<2x64xf32>
    %cst_496 = arith.constant 1.000000e+00 : f32
    %1057 = vector.broadcast %cst_496 : f32 to vector<2x64xf32>
    %1058 = arith.addf %1057, %1056 : vector<2x64xf32>
    %1059 = arith.divf %1057, %1058 : vector<2x64xf32>
    %1060 = vector.extract_strided_slice %1059 {offsets = [0, 0], sizes = [2, 32], strides = [1, 1]} : vector<2x64xf32> to vector<2x32xf32>
    %1061 = vector.extract_strided_slice %1059 {offsets = [0, 32], sizes = [2, 32], strides = [1, 1]} : vector<2x64xf32> to vector<2x32xf32>
    %1062 = vector.extract_strided_slice %1044 {offsets = [0, 64], sizes = [2, 32], strides = [1, 1]} : vector<2x96xf32> to vector<2x32xf32>
    %1063 = vector.extract_strided_slice %1051 {offsets = [0, 64], sizes = [2, 32], strides = [1, 1]} : vector<2x96xf32> to vector<2x32xf32>
    %1064 = arith.mulf %1060, %1063 : vector<2x32xf32>
    %1065 = arith.addf %1062, %1064 : vector<2x32xf32>
    %1066 = math.tanh %1065 : vector<2x32xf32>
    %cst_497 = arith.constant 1.000000e+00 : f32
    %1067 = vector.broadcast %cst_497 : f32 to vector<2x32xf32>
    %1068 = arith.subf %1067, %1061 : vector<2x32xf32>
    %1069 = arith.mulf %1068, %1066 : vector<2x32xf32>
    %1070 = arith.mulf %1061, %996 : vector<2x32xf32>
    %1071 = arith.addf %1069, %1070 : vector<2x32xf32>
    %c0_498 = arith.constant 0 : index
    %c0_499 = arith.constant 0 : index
    %c0_500 = arith.constant 0 : index
    %1072 = vector.load %arg11[%c0_498, %c0_499, %c0_500] : memref<1x32x96xf32, #tpu.memory_space<vmem>>, vector<1x32x96xf32>
    %1073 = vector.shape_cast %1072 : vector<1x32x96xf32> to vector<32x96xf32>
    %cst_501 = arith.constant dense<0.000000e+00> : vector<2x96xf32>
    %1074 = tpu.matmul %1071, %1073, %cst_501 {dimension_numbers = #tpu.dot_dimension_numbers<[1], [0], [0], [1], [0, 0, 1, 1], [], []>} : vector<2x32xf32>, vector<32x96xf32>, vector<2x96xf32> -> vector<2x96xf32>
    %c0_502 = arith.constant 0 : index
    %c0_503 = arith.constant 0 : index
    %c0_504 = arith.constant 0 : index
    %1075 = vector.load %arg12[%c0_502, %c0_503, %c0_504] : memref<1x1x96xf32, #tpu.memory_space<vmem>>, vector<1x1x96xf32>
    %1076 = vector.shape_cast %1075 : vector<1x1x96xf32> to vector<1x96xf32>
    %1077 = vector.broadcast %1076 : vector<1x96xf32> to vector<2x96xf32>
    %1078 = arith.addf %1074, %1077 : vector<2x96xf32>
    %c1_505 = arith.constant 1 : index
    %c0_506 = arith.constant 0 : index
    %c0_507 = arith.constant 0 : index
    %1079 = vector.load %arg9[%c1_505, %c0_506, %c0_507] : memref<2x32x96xf32, #tpu.memory_space<vmem>>, vector<1x32x96xf32>
    %1080 = vector.shape_cast %1079 : vector<1x32x96xf32> to vector<32x96xf32>
    %cst_508 = arith.constant dense<0.000000e+00> : vector<2x96xf32>
    %1081 = tpu.matmul %1030, %1080, %cst_508 {dimension_numbers = #tpu.dot_dimension_numbers<[1], [0], [0], [1], [0, 0, 1, 1], [], []>} : vector<2x32xf32>, vector<32x96xf32>, vector<2x96xf32> -> vector<2x96xf32>
    %c1_509 = arith.constant 1 : index
    %c0_510 = arith.constant 0 : index
    %c0_511 = arith.constant 0 : index
    %1082 = vector.load %arg10[%c1_509, %c0_510, %c0_511] : memref<2x1x96xf32, #tpu.memory_space<vmem>>, vector<1x1x96xf32>
    %1083 = vector.shape_cast %1082 : vector<1x1x96xf32> to vector<1x96xf32>
    %1084 = vector.broadcast %1083 : vector<1x96xf32> to vector<2x96xf32>
    %1085 = arith.addf %1081, %1084 : vector<2x96xf32>
    %1086 = vector.extract_strided_slice %1078 {offsets = [0, 0], sizes = [2, 64], strides = [1, 1]} : vector<2x96xf32> to vector<2x64xf32>
    %1087 = vector.extract_strided_slice %1085 {offsets = [0, 0], sizes = [2, 64], strides = [1, 1]} : vector<2x96xf32> to vector<2x64xf32>
    %1088 = arith.addf %1086, %1087 : vector<2x64xf32>
    %1089 = arith.negf %1088 : vector<2x64xf32>
    %1090 = math.exp %1089 : vector<2x64xf32>
    %cst_512 = arith.constant 1.000000e+00 : f32
    %1091 = vector.broadcast %cst_512 : f32 to vector<2x64xf32>
    %1092 = arith.addf %1091, %1090 : vector<2x64xf32>
    %1093 = arith.divf %1091, %1092 : vector<2x64xf32>
    %1094 = vector.extract_strided_slice %1093 {offsets = [0, 0], sizes = [2, 32], strides = [1, 1]} : vector<2x64xf32> to vector<2x32xf32>
    %1095 = vector.extract_strided_slice %1093 {offsets = [0, 32], sizes = [2, 32], strides = [1, 1]} : vector<2x64xf32> to vector<2x32xf32>
    %1096 = vector.extract_strided_slice %1078 {offsets = [0, 64], sizes = [2, 32], strides = [1, 1]} : vector<2x96xf32> to vector<2x32xf32>
    %1097 = vector.extract_strided_slice %1085 {offsets = [0, 64], sizes = [2, 32], strides = [1, 1]} : vector<2x96xf32> to vector<2x32xf32>
    %1098 = arith.mulf %1094, %1097 : vector<2x32xf32>
    %1099 = arith.addf %1096, %1098 : vector<2x32xf32>
    %1100 = math.tanh %1099 : vector<2x32xf32>
    %cst_513 = arith.constant 1.000000e+00 : f32
    %1101 = vector.broadcast %cst_513 : f32 to vector<2x32xf32>
    %1102 = arith.subf %1101, %1095 : vector<2x32xf32>
    %1103 = arith.mulf %1102, %1100 : vector<2x32xf32>
    %1104 = arith.mulf %1095, %1030 : vector<2x32xf32>
    %1105 = arith.addf %1103, %1104 : vector<2x32xf32>
    %c0_514 = arith.constant 0 : index
    %c0_515 = arith.constant 0 : index
    %1106 = vector.load %arg13[%c0_514, %c0_515] : memref<32x4xf32, #tpu.memory_space<vmem>>, vector<32x4xf32>
    %cst_516 = arith.constant dense<0.000000e+00> : vector<2x4xf32>
    %1107 = tpu.matmul %1105, %1106, %cst_516 {dimension_numbers = #tpu.dot_dimension_numbers<[1], [0], [0], [1], [0, 0, 1, 1], [], []>} : vector<2x32xf32>, vector<32x4xf32>, vector<2x4xf32> -> vector<2x4xf32>
    %c0_517 = arith.constant 0 : index
    %c0_518 = arith.constant 0 : index
    %1108 = vector.load %arg14[%c0_517, %c0_518] : memref<1x4xf32, #tpu.memory_space<vmem>>, vector<1x4xf32>
    %1109 = vector.broadcast %1108 : vector<1x4xf32> to vector<2x4xf32>
    %1110 = arith.addf %1107, %1109 : vector<2x4xf32>
    %1111 = arith.index_cast %c7_i32_483 : i32 to index
    %c0_519 = arith.constant 0 : index
    %c0_520 = arith.constant 0 : index
    %1112 = vector.load %arg15[%1111, %c0_519, %c0_520] : memref<8x2x4xf32, #tpu.memory_space<vmem>>, vector<1x2x4xf32>
    %1113 = vector.shape_cast %1112 : vector<1x2x4xf32> to vector<2x4xf32>
    %1114 = vector.shape_cast %1110 : vector<2x4xf32> to vector<1x2x4xf32>
    tpu.vector_store %arg15[%1111, %c0_519, %c0_520], %1114 {strides = array<i32>} : memref<8x2x4xf32, #tpu.memory_space<vmem>>, vector<1x2x4xf32>,
    %c8_i32_521 = arith.constant 8 : i32
    return
  }
  func.func @transform_0(%arg0: i32) -> (i32, i32, i32) {
    %c0_i32 = arith.constant 0 : i32
    %c0_i32_0 = arith.constant 0 : i32
    %c0_i32_1 = arith.constant 0 : i32
    return %c0_i32, %arg0, %c0_i32_0 : i32, i32, i32
  }
  func.func @transform_1(%arg0: i32) -> (i32, i32) {
    %c0_i32 = arith.constant 0 : i32
    %c0_i32_0 = arith.constant 0 : i32
    return %arg0, %c0_i32 : i32, i32
  }
  func.func @transform_2(%arg0: i32) -> (i32, i32, i32) {
    %c0_i32 = arith.constant 0 : i32
    %c0_i32_0 = arith.constant 0 : i32
    %c0_i32_1 = arith.constant 0 : i32
    %c0_i32_2 = arith.constant 0 : i32
    return %c0_i32, %c0_i32_0, %c0_i32_1 : i32, i32, i32
  }
  func.func @transform_3(%arg0: i32) -> (i32, i32, i32) {
    %c0_i32 = arith.constant 0 : i32
    %c0_i32_0 = arith.constant 0 : i32
    %c0_i32_1 = arith.constant 0 : i32
    %c0_i32_2 = arith.constant 0 : i32
    return %c0_i32, %c0_i32_0, %c0_i32_1 : i32, i32, i32
  }
  func.func @transform_4(%arg0: i32) -> (i32, i32, i32) {
    %c0_i32 = arith.constant 0 : i32
    %c0_i32_0 = arith.constant 0 : i32
    %c0_i32_1 = arith.constant 0 : i32
    %c0_i32_2 = arith.constant 0 : i32
    return %c0_i32, %c0_i32_0, %c0_i32_1 : i32, i32, i32
  }
  func.func @transform_5(%arg0: i32) -> (i32, i32, i32) {
    %c0_i32 = arith.constant 0 : i32
    %c0_i32_0 = arith.constant 0 : i32
    %c0_i32_1 = arith.constant 0 : i32
    %c0_i32_2 = arith.constant 0 : i32
    return %c0_i32, %c0_i32_0, %c0_i32_1 : i32, i32, i32
  }
  func.func @transform_6(%arg0: i32) -> (i32, i32) {
    %c0_i32 = arith.constant 0 : i32
    %c0_i32_0 = arith.constant 0 : i32
    %c0_i32_1 = arith.constant 0 : i32
    return %c0_i32, %c0_i32_0 : i32, i32
  }
  func.func @transform_7(%arg0: i32) -> (i32, i32) {
    %c0_i32 = arith.constant 0 : i32
    %c0_i32_0 = arith.constant 0 : i32
    %c0_i32_1 = arith.constant 0 : i32
    return %c0_i32, %c0_i32_0 : i32, i32
  }
  func.func @transform_8(%arg0: i32) -> (i32, i32, i32) {
    %c0_i32 = arith.constant 0 : i32
    %c0_i32_0 = arith.constant 0 : i32
    %c0_i32_1 = arith.constant 0 : i32
    %c0_i32_2 = arith.constant 0 : i32
    return %c0_i32, %c0_i32_0, %c0_i32_1 : i32, i32, i32
  }
  func.func @transform_9(%arg0: i32) -> (i32, i32, i32) {
    %c0_i32 = arith.constant 0 : i32
    %c0_i32_0 = arith.constant 0 : i32
    %c0_i32_1 = arith.constant 0 : i32
    %c0_i32_2 = arith.constant 0 : i32
    return %c0_i32, %c0_i32_0, %c0_i32_1 : i32, i32, i32
  }
  func.func @transform_10(%arg0: i32) -> (i32, i32, i32) {
    %c0_i32 = arith.constant 0 : i32
    %c0_i32_0 = arith.constant 0 : i32
    %c0_i32_1 = arith.constant 0 : i32
    %c0_i32_2 = arith.constant 0 : i32
    return %c0_i32, %c0_i32_0, %c0_i32_1 : i32, i32, i32
  }
  func.func @transform_11(%arg0: i32) -> (i32, i32, i32) {
    %c0_i32 = arith.constant 0 : i32
    %c0_i32_0 = arith.constant 0 : i32
    %c0_i32_1 = arith.constant 0 : i32
    %c0_i32_2 = arith.constant 0 : i32
    return %c0_i32, %c0_i32_0, %c0_i32_1 : i32, i32, i32
  }
  func.func @transform_12(%arg0: i32) -> (i32, i32) {
    %c0_i32 = arith.constant 0 : i32
    %c0_i32_0 = arith.constant 0 : i32
    %c0_i32_1 = arith.constant 0 : i32
    return %c0_i32, %c0_i32_0 : i32, i32
  }
  func.func @transform_13(%arg0: i32) -> (i32, i32) {
    %c0_i32 = arith.constant 0 : i32
    %c0_i32_0 = arith.constant 0 : i32
    %c0_i32_1 = arith.constant 0 : i32
    return %c0_i32, %c0_i32_0 : i32, i32
  }
  func.func @transform_14(%arg0: i32) -> (i32, i32, i32) {
    %c0_i32 = arith.constant 0 : i32
    %c0_i32_0 = arith.constant 0 : i32
    %c0_i32_1 = arith.constant 0 : i32
    return %c0_i32, %arg0, %c0_i32_0 : i32, i32, i32
  }
}

</mosaic_0001>

<llo_original>
// kernel: seq_translator_rnn_forward.1
$region0: #{seq_translator_rnn_forward.1}
  #allocation0 [shape = 'u32[]', space=smem, size = 0x4, offset = 0x4, fixed_abs, tag = 'smem constant byte address 0x4 - core index']
  #allocation1 [shape = 'u32[144,128]{1,0:T(1,128)}', space=vmem, size = 0x12000, scoped, tag = 'internal scratch']
  %s0 = inlined_call_operand.vmem [shape: f32[8,2,96], index: 0, kind: input, shape index: {}]
  %s1 = inlined_call_operand.vmem [shape: f32[2,4], index: 1, kind: input, shape index: {}]
  %s2 = inlined_call_operand.vmem [shape: f32[2,32,96], index: 2, kind: input, shape index: {}]
  %s3 = inlined_call_operand.vmem [shape: f32[2,1,96], index: 3, kind: input, shape index: {}]
  %s4 = inlined_call_operand.vmem [shape: f32[1,32,96], index: 4, kind: input, shape index: {}]
  %s5 = inlined_call_operand.vmem [shape: f32[1,1,96], index: 5, kind: input, shape index: {}]
  %s6 = inlined_call_operand.vmem [shape: f32[4,96], index: 6, kind: input, shape index: {}]
  %s7 = inlined_call_operand.vmem [shape: f32[1,96], index: 7, kind: input, shape index: {}]
  %s8 = inlined_call_operand.vmem [shape: f32[2,32,96], index: 8, kind: input, shape index: {}]
  %s9 = inlined_call_operand.vmem [shape: f32[2,1,96], index: 9, kind: input, shape index: {}]
  %s10 = inlined_call_operand.vmem [shape: f32[1,32,96], index: 10, kind: input, shape index: {}]
  %s11 = inlined_call_operand.vmem [shape: f32[1,1,96], index: 11, kind: input, shape index: {}]
  %s12 = inlined_call_operand.vmem [shape: f32[32,4], index: 12, kind: input, shape index: {}]
  %s13 = inlined_call_operand.vmem [shape: f32[1,4], index: 13, kind: input, shape index: {}]
  %s14 = inlined_call_operand.vmem [shape: f32[8,2,4], index: 14, kind: output, shape index: {}]
  %s15 = sld [smem:[#allocation0]]
  $region66: #{seq_translator_rnn_forward.1} parent=0
    _
  %s17 = ssub.s32 1, %s15
  %s18 = scalar_select 0, %s17, %s15
  // Predicated region
  $region2: #{seq_translator_rnn_forward.1} parent=0 // pred_check
    _
  $region3: #{seq_translator_rnn_forward.1} parent=0 // pred_check_branch
    %20 = sbr.rel (0) target = $region5
  $region4: #{seq_translator_rnn_forward.1} parent=0 // pred_region
    _
  $region5: #{seq_translator_rnn_forward.1} parent=0 // pred_fallthru
    _
  // Predicated region
  $region6: #{seq_translator_rnn_forward.1} parent=0 // pred_check
    _
  $region7: #{seq_translator_rnn_forward.1} parent=0 // pred_check_branch
    %22 = sbr.rel (0) target = $region9
  $region8: #{seq_translator_rnn_forward.1} parent=0 // pred_region
    _
  $region9: #{seq_translator_rnn_forward.1} parent=0 // pred_fallthru
    _
  // Predicated region
  $region10: #{seq_translator_rnn_forward.1} parent=0 // pred_check
    _
  $region11: #{seq_translator_rnn_forward.1} parent=0 // pred_check_branch
    %24 = sbr.rel (0) target = $region13
  $region12: #{seq_translator_rnn_forward.1} parent=0 // pred_region
    _
  $region13: #{seq_translator_rnn_forward.1} parent=0 // pred_fallthru
    _
  // Predicated region
  $region14: #{seq_translator_rnn_forward.1} parent=0 // pred_check
    _
  $region15: #{seq_translator_rnn_forward.1} parent=0 // pred_check_branch
    %26 = sbr.rel (0) target = $region17
  $region16: #{seq_translator_rnn_forward.1} parent=0 // pred_region
    _
  $region17: #{seq_translator_rnn_forward.1} parent=0 // pred_fallthru
    _
  // Predicated region
  $region18: #{seq_translator_rnn_forward.1} parent=0 // pred_check
    _
  $region19: #{seq_translator_rnn_forward.1} parent=0 // pred_check_branch
    %28 = sbr.rel (0) target = $region21
  $region20: #{seq_translator_rnn_forward.1} parent=0 // pred_region
    _
  $region21: #{seq_translator_rnn_forward.1} parent=0 // pred_fallthru
    _
  // Predicated region
  $region22: #{seq_translator_rnn_forward.1} parent=0 // pred_check
    _
  $region23: #{seq_translator_rnn_forward.1} parent=0 // pred_check_branch
    %30 = sbr.rel (0) target = $region25
  $region24: #{seq_translator_rnn_forward.1} parent=0 // pred_region
    _
  $region25: #{seq_translator_rnn_forward.1} parent=0 // pred_fallthru
    _
  // Predicated region
  $region26: #{seq_translator_rnn_forward.1} parent=0 // pred_check
    _
  $region27: #{seq_translator_rnn_forward.1} parent=0 // pred_check_branch
    %32 = sbr.rel (0) target = $region29
  $region28: #{seq_translator_rnn_forward.1} parent=0 // pred_region
    _
  $region29: #{seq_translator_rnn_forward.1} parent=0 // pred_fallthru
    _
  // Predicated region
  $region30: #{seq_translator_rnn_forward.1} parent=0 // pred_check
    _
  $region31: #{seq_translator_rnn_forward.1} parent=0 // pred_check_branch
    %34 = sbr.rel (0) target = $region33
  $region32: #{seq_translator_rnn_forward.1} parent=0 // pred_region
    _
  $region33: #{seq_translator_rnn_forward.1} parent=0 // pred_fallthru
    _
  // Predicated region
  $region34: #{seq_translator_rnn_forward.1} parent=0 // pred_check
    _
  $region35: #{seq_translator_rnn_forward.1} parent=0 // pred_check_branch
    %36 = sbr.rel (0) target = $region37
  $region36: #{seq_translator_rnn_forward.1} parent=0 // pred_region
    _
  $region37: #{seq_translator_rnn_forward.1} parent=0 // pred_fallthru
    _
  // Predicated region
  $region38: #{seq_translator_rnn_forward.1} parent=0 // pred_check
    _
  $region39: #{seq_translator_rnn_forward.1} parent=0 // pred_check_branch
    %38 = sbr.rel (0) target = $region41
  $region40: #{seq_translator_rnn_forward.1} parent=0 // pred_region
    _
  $region41: #{seq_translator_rnn_forward.1} parent=0 // pred_fallthru
    _
  // Predicated region
  $region42: #{seq_translator_rnn_forward.1} parent=0 // pred_check
    _
  $region43: #{seq_translator_rnn_forward.1} parent=0 // pred_check_branch
    %40 = sbr.rel (0) target = $region45
  $region44: #{seq_translator_rnn_forward.1} parent=0 // pred_region
    _
  $region45: #{seq_translator_rnn_forward.1} parent=0 // pred_fallthru
    _
  // Predicated region
  $region46: #{seq_translator_rnn_forward.1} parent=0 // pred_check
    _
  $region47: #{seq_translator_rnn_forward.1} parent=0 // pred_check_branch
    %42 = sbr.rel (0) target = $region49
  $region48: #{seq_translator_rnn_forward.1} parent=0 // pred_region
    _
  $region49: #{seq_translator_rnn_forward.1} parent=0 // pred_fallthru
    _
  // Predicated region
  $region50: #{seq_translator_rnn_forward.1} parent=0 // pred_check
    _
  $region51: #{seq_translator_rnn_forward.1} parent=0 // pred_check_branch
    %44 = sbr.rel (0) target = $region53
  $region52: #{seq_translator_rnn_forward.1} parent=0 // pred_region
    _
  $region53: #{seq_translator_rnn_forward.1} parent=0 // pred_fallthru
    _
  // Predicated region
  $region54: #{seq_translator_rnn_forward.1} parent=0 // pred_check
    _
  $region55: #{seq_translator_rnn_forward.1} parent=0 // pred_check_branch
    %46 = sbr.rel (0) target = $region57
  $region56: #{seq_translator_rnn_forward.1} parent=0 // pred_region
    _
  $region57: #{seq_translator_rnn_forward.1} parent=0 // pred_fallthru
    _
  %v47 = vld [vmem:[%s0] sm:$0x3]
  %v48 = vld [vmem:[%s2] sm:$0xff]
  %v49 = vld [vmem:[%s2 + $0x8] sm:$0xff]
  %v50 = vld [vmem:[%s2 + $0x10] sm:$0xff]
  %v51 = vld [vmem:[%s2 + $0x18] sm:$0xff]
  %v52 = vld [vmem:[%s3] sm:$0x1]
  %v54 = vlaneseq
  %v55 = vshrl.u32 %v54, 7
  %v56 = vsub.s32 0, %v55
  %v57 = vrot.slane %v52, %v56
  %vm59 = vcmask 261120
  %v61 = vsel %vm59, 0.0, 0
  %63 = vmatprep.subr.mxu0 0.0
  %64 = vmatpush1.msra.mxu0 %v48
  %65 = vmatprep.subr.mxu0 0.0
  %66 = vmatpush1.msra.mxu0 %v49
  %67 = vmatprep.subr.mxu0 0.0
  %68 = vmatpush1.msra.mxu0 %v50
  %69 = vmatprep.subr.mxu0 0.0
  %70 = vmatpush1.msra.mxu0 %v51
  %71 = vmatprep.subr.mxu0 0.0
  %72 = vmatpush1.msra.mxu0 0.0
  %73 = vmatprep.subr.mxu0 0.0
  %74 = vmatpush1.msra.mxu0 0.0
  %75 = vmatprep.subr.mxu0 0.0
  %76 = vmatpush1.msra.mxu0 0.0
  %77 = vmatprep.subr.mxu0 0.0
  %78 = vmatpush1.msra.mxu0 0.0
  %79 = vmatprep.subr.mxu0 0.0
  %80 = vmatpush1.msra.mxu0 0.0
  %81 = vmatprep.subr.mxu0 0.0
  %82 = vmatpush1.msra.mxu0 0.0
  %83 = vmatprep.subr.mxu0 0.0
  %84 = vmatpush1.msra.mxu0 0.0
  %85 = vmatprep.subr.mxu0 0.0
  %86 = vmatpush1.msra.mxu0 0.0
  %87 = vmatprep.subr.mxu0 0.0
  %88 = vmatpush1.msra.mxu0 0.0
  %89 = vmatprep.subr.mxu0 0.0
  %90 = vmatpush1.msra.mxu0 0.0
  %91 = vmatprep.subr.mxu0 0.0
  %92 = vmatpush1.msra.mxu0 0.0
  %93 = vmatprep.subr.mxu0 0.0
  %94 = vmatpush1.msra.mxu0 0.0
  %95 = vmatprep.subr.mxu0 0.0
  %96 = vmatpush1.msra.mxu0 0.0
  %97 = vmatprep.subr.mxu0 0.0
  %98 = vmatpush1.msra.mxu0 0.0
  %99 = vmatprep.subr.mxu0 0.0
  %100 = vmatpush1.msra.mxu0 0.0
  %101 = vmatprep.subr.mxu0 0.0
  %102 = vmatpush1.msra.mxu0 0.0
  %103 = vmatprep.subr.mxu0 0.0
  %104 = vmatpush1.msra.mxu0 0.0
  %105 = vmatprep.subr.mxu0 0.0
  %106 = vmatpush1.msra.mxu0 0.0
  %107 = vmatprep.subr.mxu0 0.0
  %108 = vmatpush1.msra.mxu0 0.0
  %109 = vmatprep.subr.mxu0 0.0
  %110 = vmatpush1.msra.mxu0 0.0
  %111 = vmatprep.subr.mxu0 0.0
  %112 = vmatpush1.msra.mxu0 0.0
  %113 = vmatprep.subr.mxu0 0.0
  %114 = vmatpush1.msra.mxu0 0.0
  %115 = vmatprep.subr.mxu0 0.0
  %116 = vmatpush1.msra.mxu0 0.0
  %117 = vmatprep.subr.mxu0 0.0
  %118 = vmatpush1.msra.mxu0 0.0
  %119 = vmatprep.subr.mxu0 0.0
  %120 = vmatpush1.msra.mxu0 0.0
  %121 = vmatprep.subr.mxu0 0.0
  %122 = vmatpush1.msra.mxu0 0.0
  %123 = vmatprep.subr.mxu0 0.0
  %124 = vmatpush1.msra.mxu0 0.0
  %125 = vmatprep.subr.mxu0 0.0
  %126 = vmatpush1.msra.mxu0 0.0
  %127 = vmatprep.mubr.f32.mxu0 0.0
  %128 = vmatmul.mubr.f32.gmra.mrb[0].mxu0 %v61
  %v129 = vpop.f32.mrb[0].mxu0
  %v130 = vadd.f32 %v57, %v129
  %v131 = vpop.f32.mrb[0].mxu0
  %132 = vdwg.mxu0
  %v133 = vadd.f32 %v47, %v130
  %v134 = vxor.u32 %v133, 2147483648
  %v135 = vmul.f32 %v134, 1.442695
  %v136 = vpow.pop %v135
  %v137 = vadd.f32 %v136, 1.0
  %v138 = vrcp.pop %v137
  %v139 = vmul.f32 1.0, %v138
  %141 = vrot.lane.b32.xlu0 %v130, 64
  %v142 = vpop.permute.xlu0 %141
  %v144 = vmul.f32 %v139, %v142
  %146 = vrot.lane.b32.xlu0 %v144, 64
  %v147 = vpop.permute.xlu0 %146
  %v149 = vadd.f32 %v47, %v147
  %v150 = vtanh.pop %v149
  %v151 = vsub.f32 1.0, %v139
  %153 = vrot.lane.b32.xlu0 %v150, 96
  %v154 = vpop.permute.xlu0 %153
  %v156 = vmul.f32 %v151, %v154
  %v157 = vmul.f32 %v139, 0.0
  %v158 = vadd.f32 %v156, %v157
  %v159 = vld [vmem:[%s4] sm:$0xff]
  %v160 = vld [vmem:[%s4 + $0x8] sm:$0xff]
  %v161 = vld [vmem:[%s4 + $0x10] sm:$0xff]
  %v162 = vld [vmem:[%s4 + $0x18] sm:$0xff]
  %v163 = vld [vmem:[%s5] sm:$0x1]
  %v165 = vlaneseq
  %v166 = vshrl.u32 %v165, 7
  %v167 = vsub.s32 0, %v166
  %v168 = vrot.slane %v163, %v167
  %171 = vrot.lane.b32.xlu0 %v158, 96
  %v172 = vpop.permute.xlu0 %171
  %v173 = vsel %vm59, %v172, 0
  %175 = vmatprep.subr.mxu0 0.0
  %176 = vmatpush1.msra.mxu0 %v159
  %177 = vmatprep.subr.mxu0 0.0
  %178 = vmatpush1.msra.mxu0 %v160
  %179 = vmatprep.subr.mxu0 0.0
  %180 = vmatpush1.msra.mxu0 %v161
  %181 = vmatprep.subr.mxu0 0.0
  %182 = vmatpush1.msra.mxu0 %v162
  %183 = vmatprep.subr.mxu0 0.0
  %184 = vmatpush1.msra.mxu0 0.0
  %185 = vmatprep.subr.mxu0 0.0
  %186 = vmatpush1.msra.mxu0 0.0
  %187 = vmatprep.subr.mxu0 0.0
  %188 = vmatpush1.msra.mxu0 0.0
  %189 = vmatprep.subr.mxu0 0.0
  %190 = vmatpush1.msra.mxu0 0.0
  %191 = vmatprep.subr.mxu0 0.0
  %192 = vmatpush1.msra.mxu0 0.0
  %193 = vmatprep.subr.mxu0 0.0
  %194 = vmatpush1.msra.mxu0 0.0
  %195 = vmatprep.subr.mxu0 0.0
  %196 = vmatpush1.msra.mxu0 0.0
  %197 = vmatprep.subr.mxu0 0.0
  %198 = vmatpush1.msra.mxu0 0.0
  %199 = vmatprep.subr.mxu0 0.0
  %200 = vmatpush1.msra.mxu0 0.0
  %201 = vmatprep.subr.mxu0 0.0
  %202 = vmatpush1.msra.mxu0 0.0
  %203 = vmatprep.subr.mxu0 0.0
  %204 = vmatpush1.msra.mxu0 0.0
  %205 = vmatprep.subr.mxu0 0.0
  %206 = vmatpush1.msra.mxu0 0.0
  %207 = vmatprep.subr.mxu0 0.0
  %208 = vmatpush1.msra.mxu0 0.0
  %209 = vmatprep.subr.mxu0 0.0
  %210 = vmatpush1.msra.mxu0 0.0
  %211 = vmatprep.subr.mxu0 0.0
  %212 = vmatpush1.msra.mxu0 0.0
  %213 = vmatprep.subr.mxu0 0.0
  %214 = vmatpush1.msra.mxu0 0.0
  %215 = vmatprep.subr.mxu0 0.0
  %216 = vmatpush1.msra.mxu0 0.0
  %217 = vmatprep.subr.mxu0 0.0
  %218 = vmatpush1.msra.mxu0 0.0
  %219 = vmatprep.subr.mxu0 0.0
  %220 = vmatpush1.msra.mxu0 0.0
  %221 = vmatprep.subr.mxu0 0.0
  %222 = vmatpush1.msra.mxu0 0.0
  %223 = vmatprep.subr.mxu0 0.0
  %224 = vmatpush1.msra.mxu0 0.0
  %225 = vmatprep.subr.mxu0 0.0
  %226 = vmatpush1.msra.mxu0 0.0
  %227 = vmatprep.subr.mxu0 0.0
  %228 = vmatpush1.msra.mxu0 0.0
  %229 = vmatprep.subr.mxu0 0.0
  %230 = vmatpush1.msra.mxu0 0.0
  %231 = vmatprep.subr.mxu0 0.0
  %232 = vmatpush1.msra.mxu0 0.0
  %233 = vmatprep.subr.mxu0 0.0
  %234 = vmatpush1.msra.mxu0 0.0
  %235 = vmatprep.subr.mxu0 0.0
  %236 = vmatpush1.msra.mxu0 0.0
  %237 = vmatprep.subr.mxu0 0.0
  %238 = vmatpush1.msra.mxu0 0.0
  %239 = vmatprep.mubr.f32.mxu0 0.0
  %240 = vmatmul.mubr.f32.gmra.mrb[0].mxu0 %v173
  %v241 = vpop.f32.mrb[0].mxu0
  %v242 = vadd.f32 %v168, %v241
  %v243 = vpop.f32.mrb[0].mxu0
  %244 = vdwg.mxu0
  %s245 = scalar_lea.vmem %s2, 32
  %v246 = vld [vmem:[%s245] sm:$0xff]
  %v247 = vld [vmem:[%s245 + $0x8] sm:$0xff]
  %v248 = vld [vmem:[%s245 + $0x10] sm:$0xff]
  %v249 = vld [vmem:[%s245 + $0x18] sm:$0xff]
  %s250 = scalar_lea.vmem %s3, 1
  %v251 = vld [vmem:[%s250] sm:$0x1]
  %v253 = vlaneseq
  %v254 = vshrl.u32 %v253, 7
  %v255 = vsub.s32 0, %v254
  %v256 = vrot.slane %v251, %v255
  %258 = vmatprep.subr.mxu0 0.0
  %259 = vmatpush1.msra.mxu0 %v246
  %260 = vmatprep.subr.mxu0 0.0
  %261 = vmatpush1.msra.mxu0 %v247
  %262 = vmatprep.subr.mxu0 0.0
  %263 = vmatpush1.msra.mxu0 %v248
  %264 = vmatprep.subr.mxu0 0.0
  %265 = vmatpush1.msra.mxu0 %v249
  %266 = vmatprep.subr.mxu0 0.0
  %267 = vmatpush1.msra.mxu0 0.0
  %268 = vmatprep.subr.mxu0 0.0
  %269 = vmatpush1.msra.mxu0 0.0
  %270 = vmatprep.subr.mxu0 0.0
  %271 = vmatpush1.msra.mxu0 0.0
  %272 = vmatprep.subr.mxu0 0.0
  %273 = vmatpush1.msra.mxu0 0.0
  %274 = vmatprep.subr.mxu0 0.0
  %275 = vmatpush1.msra.mxu0 0.0
  %276 = vmatprep.subr.mxu0 0.0
  %277 = vmatpush1.msra.mxu0 0.0
  %278 = vmatprep.subr.mxu0 0.0
  %279 = vmatpush1.msra.mxu0 0.0
  %280 = vmatprep.subr.mxu0 0.0
  %281 = vmatpush1.msra.mxu0 0.0
  %282 = vmatprep.subr.mxu0 0.0
  %283 = vmatpush1.msra.mxu0 0.0
  %284 = vmatprep.subr.mxu0 0.0
  %285 = vmatpush1.msra.mxu0 0.0
  %286 = vmatprep.subr.mxu0 0.0
  %287 = vmatpush1.msra.mxu0 0.0
  %288 = vmatprep.subr.mxu0 0.0
  %289 = vmatpush1.msra.mxu0 0.0
  %290 = vmatprep.subr.mxu0 0.0
  %291 = vmatpush1.msra.mxu0 0.0
  %292 = vmatprep.subr.mxu0 0.0
  %293 = vmatpush1.msra.mxu0 0.0
  %294 = vmatprep.subr.mxu0 0.0
  %295 = vmatpush1.msra.mxu0 0.0
  %296 = vmatprep.subr.mxu0 0.0
  %297 = vmatpush1.msra.mxu0 0.0
  %298 = vmatprep.subr.mxu0 0.0
  %299 = vmatpush1.msra.mxu0 0.0
  %300 = vmatprep.subr.mxu0 0.0
  %301 = vmatpush1.msra.mxu0 0.0
  %302 = vmatprep.subr.mxu0 0.0
  %303 = vmatpush1.msra.mxu0 0.0
  %304 = vmatprep.subr.mxu0 0.0
  %305 = vmatpush1.msra.mxu0 0.0
  %306 = vmatprep.subr.mxu0 0.0
  %307 = vmatpush1.msra.mxu0 0.0
  %308 = vmatprep.subr.mxu0 0.0
  %309 = vmatpush1.msra.mxu0 0.0
  %310 = vmatprep.subr.mxu0 0.0
  %311 = vmatpush1.msra.mxu0 0.0
  %312 = vmatprep.subr.mxu0 0.0
  %313 = vmatpush1.msra.mxu0 0.0
  %314 = vmatprep.subr.mxu0 0.0
  %315 = vmatpush1.msra.mxu0 0.0
  %316 = vmatprep.subr.mxu0 0.0
  %317 = vmatpush1.msra.mxu0 0.0
  %318 = vmatprep.subr.mxu0 0.0
  %319 = vmatpush1.msra.mxu0 0.0
  %320 = vmatprep.subr.mxu0 0.0
  %321 = vmatpush1.msra.mxu0 0.0
  %322 = vmatprep.mubr.f32.mxu0 0.0
  %323 = vmatmul.mubr.f32.gmra.mrb[0].mxu0 %v61
  %v324 = vpop.f32.mrb[0].mxu0
  %v325 = vadd.f32 %v256, %v324
  %v326 = vpop.f32.mrb[0].mxu0
  %327 = vdwg.mxu0
  %v328 = vadd.f32 %v242, %v325
  %v329 = vxor.u32 %v328, 2147483648
  %v330 = vmul.f32 %v329, 1.442695
  %v331 = vpow.pop %v330
  %v332 = vadd.f32 %v331, 1.0
  %v333 = vrcp.pop %v332
  %v334 = vmul.f32 1.0, %v333
  %336 = vrot.lane.b32.xlu0 %v325, 64
  %v337 = vpop.permute.xlu0 %336
  %v339 = vmul.f32 %v334, %v337
  %341 = vrot.lane.b32.xlu0 %v339, 64
  %v342 = vpop.permute.xlu0 %341
  %v344 = vadd.f32 %v242, %v342
  %v345 = vtanh.pop %v344
  %v346 = vsub.f32 1.0, %v334
  %348 = vrot.lane.b32.xlu0 %v345, 96
  %v349 = vpop.permute.xlu0 %348
  %v351 = vmul.f32 %v346, %v349
  %v352 = vmul.f32 %v334, 0.0
  %v353 = vadd.f32 %v351, %v352
  %s354 = scalar_lea.vmem %s0, 2
  %v355 = vld [vmem:[%s354] sm:$0x3]
  %356 = vmatprep.subr.mxu0 0.0
  %357 = vmatpush1.msra.mxu0 %v48
  %358 = vmatprep.subr.mxu0 0.0
  %359 = vmatpush1.msra.mxu0 %v49
  %360 = vmatprep.subr.mxu0 0.0
  %361 = vmatpush1.msra.mxu0 %v50
  %362 = vmatprep.subr.mxu0 0.0
  %363 = vmatpush1.msra.mxu0 %v51
  %364 = vmatprep.subr.mxu0 0.0
  %365 = vmatpush1.msra.mxu0 0.0
  %366 = vmatprep.subr.mxu0 0.0
  %367 = vmatpush1.msra.mxu0 0.0
  %368 = vmatprep.subr.mxu0 0.0
  %369 = vmatpush1.msra.mxu0 0.0
  %370 = vmatprep.subr.mxu0 0.0
  %371 = vmatpush1.msra.mxu0 0.0
  %372 = vmatprep.subr.mxu0 0.0
  %373 = vmatpush1.msra.mxu0 0.0
  %374 = vmatprep.subr.mxu0 0.0
  %375 = vmatpush1.msra.mxu0 0.0
  %376 = vmatprep.subr.mxu0 0.0
  %377 = vmatpush1.msra.mxu0 0.0
  %378 = vmatprep.subr.mxu0 0.0
  %379 = vmatpush1.msra.mxu0 0.0
  %380 = vmatprep.subr.mxu0 0.0
  %381 = vmatpush1.msra.mxu0 0.0
  %382 = vmatprep.subr.mxu0 0.0
  %383 = vmatpush1.msra.mxu0 0.0
  %384 = vmatprep.subr.mxu0 0.0
  %385 = vmatpush1.msra.mxu0 0.0
  %386 = vmatprep.subr.mxu0 0.0
  %387 = vmatpush1.msra.mxu0 0.0
  %388 = vmatprep.subr.mxu0 0.0
  %389 = vmatpush1.msra.mxu0 0.0
  %390 = vmatprep.subr.mxu0 0.0
  %391 = vmatpush1.msra.mxu0 0.0
  %392 = vmatprep.subr.mxu0 0.0
  %393 = vmatpush1.msra.mxu0 0.0
  %394 = vmatprep.subr.mxu0 0.0
  %395 = vmatpush1.msra.mxu0 0.0
  %396 = vmatprep.subr.mxu0 0.0
  %397 = vmatpush1.msra.mxu0 0.0
  %398 = vmatprep.subr.mxu0 0.0
  %399 = vmatpush1.msra.mxu0 0.0
  %400 = vmatprep.subr.mxu0 0.0
  %401 = vmatpush1.msra.mxu0 0.0
  %402 = vmatprep.subr.mxu0 0.0
  %403 = vmatpush1.msra.mxu0 0.0
  %404 = vmatprep.subr.mxu0 0.0
  %405 = vmatpush1.msra.mxu0 0.0
  %406 = vmatprep.subr.mxu0 0.0
  %407 = vmatpush1.msra.mxu0 0.0
  %408 = vmatprep.subr.mxu0 0.0
  %409 = vmatpush1.msra.mxu0 0.0
  %410 = vmatprep.subr.mxu0 0.0
  %411 = vmatpush1.msra.mxu0 0.0
  %412 = vmatprep.subr.mxu0 0.0
  %413 = vmatpush1.msra.mxu0 0.0
  %414 = vmatprep.subr.mxu0 0.0
  %415 = vmatpush1.msra.mxu0 0.0
  %416 = vmatprep.subr.mxu0 0.0
  %417 = vmatpush1.msra.mxu0 0.0
  %418 = vmatprep.subr.mxu0 0.0
  %419 = vmatpush1.msra.mxu0 0.0
  %420 = vmatprep.mubr.f32.mxu0 0.0
  %421 = vmatmul.mubr.f32.gmra.mrb[0].mxu0 %v173
  %v422 = vpop.f32.mrb[0].mxu0
  %v423 = vadd.f32 %v57, %v422
  %v424 = vpop.f32.mrb[0].mxu0
  %425 = vdwg.mxu0
  %v426 = vadd.f32 %v355, %v423
  %v427 = vxor.u32 %v426, 2147483648
  %v428 = vmul.f32 %v427, 1.442695
  %v429 = vpow.pop %v428
  %v430 = vadd.f32 %v429, 1.0
  %v431 = vrcp.pop %v430
  %v432 = vmul.f32 1.0, %v431
  %434 = vrot.lane.b32.xlu0 %v423, 64
  %v435 = vpop.permute.xlu0 %434
  %v437 = vmul.f32 %v432, %v435
  %439 = vrot.lane.b32.xlu0 %v437, 64
  %v440 = vpop.permute.xlu0 %439
  %v442 = vadd.f32 %v355, %v440
  %v443 = vtanh.pop %v442
  %v444 = vsub.f32 1.0, %v432
  %446 = vrot.lane.b32.xlu0 %v443, 96
  %v447 = vpop.permute.xlu0 %446
  %v449 = vmul.f32 %v444, %v447
  %v450 = vmul.f32 %v432, %v158
  %v451 = vadd.f32 %v449, %v450
  %453 = vrot.lane.b32.xlu0 %v451, 96
  %v454 = vpop.permute.xlu0 %453
  %v455 = vsel %vm59, %v454, 0
  %457 = vmatprep.subr.mxu0 0.0
  %458 = vmatpush1.msra.mxu0 %v159
  %459 = vmatprep.subr.mxu0 0.0
  %460 = vmatpush1.msra.mxu0 %v160
  %461 = vmatprep.subr.mxu0 0.0
  %462 = vmatpush1.msra.mxu0 %v161
  %463 = vmatprep.subr.mxu0 0.0
  %464 = vmatpush1.msra.mxu0 %v162
  %465 = vmatprep.subr.mxu0 0.0
  %466 = vmatpush1.msra.mxu0 0.0
  %467 = vmatprep.subr.mxu0 0.0
  %468 = vmatpush1.msra.mxu0 0.0
  %469 = vmatprep.subr.mxu0 0.0
  %470 = vmatpush1.msra.mxu0 0.0
  %471 = vmatprep.subr.mxu0 0.0
  %472 = vmatpush1.msra.mxu0 0.0
  %473 = vmatprep.subr.mxu0 0.0
  %474 = vmatpush1.msra.mxu0 0.0
  %475 = vmatprep.subr.mxu0 0.0
  %476 = vmatpush1.msra.mxu0 0.0
  %477 = vmatprep.subr.mxu0 0.0
  %478 = vmatpush1.msra.mxu0 0.0
  %479 = vmatprep.subr.mxu0 0.0
  %480 = vmatpush1.msra.mxu0 0.0
  %481 = vmatprep.subr.mxu0 0.0
  %482 = vmatpush1.msra.mxu0 0.0
  %483 = vmatprep.subr.mxu0 0.0
  %484 = vmatpush1.msra.mxu0 0.0
  %485 = vmatprep.subr.mxu0 0.0
  %486 = vmatpush1.msra.mxu0 0.0
  %487 = vmatprep.subr.mxu0 0.0
  %488 = vmatpush1.msra.mxu0 0.0
  %489 = vmatprep.subr.mxu0 0.0
  %490 = vmatpush1.msra.mxu0 0.0
  %491 = vmatprep.subr.mxu0 0.0
  %492 = vmatpush1.msra.mxu0 0.0
  %493 = vmatprep.subr.mxu0 0.0
  %494 = vmatpush1.msra.mxu0 0.0
  %495 = vmatprep.subr.mxu0 0.0
  %496 = vmatpush1.msra.mxu0 0.0
  %497 = vmatprep.subr.mxu0 0.0
  %498 = vmatpush1.msra.mxu0 0.0
  %499 = vmatprep.subr.mxu0 0.0
  %500 = vmatpush1.msra.mxu0 0.0
  %501 = vmatprep.subr.mxu0 0.0
  %502 = vmatpush1.msra.mxu0 0.0
  %503 = vmatprep.subr.mxu0 0.0
  %504 = vmatpush1.msra.mxu0 0.0
  %505 = vmatprep.subr.mxu0 0.0
  %506 = vmatpush1.msra.mxu0 0.0
  %507 = vmatprep.subr.mxu0 0.0
  %508 = vmatpush1.msra.mxu0 0.0
  %509 = vmatprep.subr.mxu0 0.0
  %510 = vmatpush1.msra.mxu0 0.0
  %511 = vmatprep.subr.mxu0 0.0
  %512 = vmatpush1.msra.mxu0 0.0
  %513 = vmatprep.subr.mxu0 0.0
  %514 = vmatpush1.msra.mxu0 0.0
  %515 = vmatprep.subr.mxu0 0.0
  %516 = vmatpush1.msra.mxu0 0.0
  %517 = vmatprep.subr.mxu0 0.0
  %518 = vmatpush1.msra.mxu0 0.0
  %519 = vmatprep.subr.mxu0 0.0
  %520 = vmatpush1.msra.mxu0 0.0
  %521 = vmatprep.mubr.f32.mxu0 0.0
  %522 = vmatmul.mubr.f32.gmra.mrb[0].mxu0 %v455
  %v523 = vpop.f32.mrb[0].mxu0
  %v524 = vadd.f32 %v168, %v523
  %v525 = vpop.f32.mrb[0].mxu0
  %526 = vdwg.mxu0
  %528 = vrot.lane.b32.xlu0 %v353, 96
  %v529 = vpop.permute.xlu0 %528
  %v530 = vsel %vm59, %v529, 0
  %532 = vmatprep.subr.mxu0 0.0
  %533 = vmatpush1.msra.mxu0 %v246
  %534 = vmatprep.subr.mxu0 0.0
  %535 = vmatpush1.msra.mxu0 %v247
  %536 = vmatprep.subr.mxu0 0.0
  %537 = vmatpush1.msra.mxu0 %v248
  %538 = vmatprep.subr.mxu0 0.0
  %539 = vmatpush1.msra.mxu0 %v249
  %540 = vmatprep.subr.mxu0 0.0
  %541 = vmatpush1.msra.mxu0 0.0
  %542 = vmatprep.subr.mxu0 0.0
  %543 = vmatpush1.msra.mxu0 0.0
  %544 = vmatprep.subr.mxu0 0.0
  %545 = vmatpush1.msra.mxu0 0.0
  %546 = vmatprep.subr.mxu0 0.0
  %547 = vmatpush1.msra.mxu0 0.0
  %548 = vmatprep.subr.mxu0 0.0
  %549 = vmatpush1.msra.mxu0 0.0
  %550 = vmatprep.subr.mxu0 0.0
  %551 = vmatpush1.msra.mxu0 0.0
  %552 = vmatprep.subr.mxu0 0.0
  %553 = vmatpush1.msra.mxu0 0.0
  %554 = vmatprep.subr.mxu0 0.0
  %555 = vmatpush1.msra.mxu0 0.0
  %556 = vmatprep.subr.mxu0 0.0
  %557 = vmatpush1.msra.mxu0 0.0
  %558 = vmatprep.subr.mxu0 0.0
  %559 = vmatpush1.msra.mxu0 0.0
  %560 = vmatprep.subr.mxu0 0.0
  %561 = vmatpush1.msra.mxu0 0.0
  %562 = vmatprep.subr.mxu0 0.0
  %563 = vmatpush1.msra.mxu0 0.0
  %564 = vmatprep.subr.mxu0 0.0
  %565 = vmatpush1.msra.mxu0 0.0
  %566 = vmatprep.subr.mxu0 0.0
  %567 = vmatpush1.msra.mxu0 0.0
  %568 = vmatprep.subr.mxu0 0.0
  %569 = vmatpush1.msra.mxu0 0.0
  %570 = vmatprep.subr.mxu0 0.0
  %571 = vmatpush1.msra.mxu0 0.0
  %572 = vmatprep.subr.mxu0 0.0
  %573 = vmatpush1.msra.mxu0 0.0
  %574 = vmatprep.subr.mxu0 0.0
  %575 = vmatpush1.msra.mxu0 0.0
  %576 = vmatprep.subr.mxu0 0.0
  %577 = vmatpush1.msra.mxu0 0.0
  %578 = vmatprep.subr.mxu0 0.0
  %579 = vmatpush1.msra.mxu0 0.0
  %580 = vmatprep.subr.mxu0 0.0
  %581 = vmatpush1.msra.mxu0 0.0
  %582 = vmatprep.subr.mxu0 0.0
  %583 = vmatpush1.msra.mxu0 0.0
  %584 = vmatprep.subr.mxu0 0.0
  %585 = vmatpush1.msra.mxu0 0.0
  %586 = vmatprep.subr.mxu0 0.0
  %587 = vmatpush1.msra.mxu0 0.0
  %588 = vmatprep.subr.mxu0 0.0
  %589 = vmatpush1.msra.mxu0 0.0
  %590 = vmatprep.subr.mxu0 0.0
  %591 = vmatpush1.msra.mxu0 0.0
  %592 = vmatprep.subr.mxu0 0.0
  %593 = vmatpush1.msra.mxu0 0.0
  %594 = vmatprep.subr.mxu0 0.0
  %595 = vmatpush1.msra.mxu0 0.0
  %596 = vmatprep.mubr.f32.mxu0 0.0
  %597 = vmatmul.mubr.f32.gmra.mrb[0].mxu0 %v530
  %v598 = vpop.f32.mrb[0].mxu0
  %v599 = vadd.f32 %v256, %v598
  %v600 = vpop.f32.mrb[0].mxu0
  %601 = vdwg.mxu0
  %v602 = vadd.f32 %v524, %v599
  %v603 = vxor.u32 %v602, 2147483648
  %v604 = vmul.f32 %v603, 1.442695
  %v605 = vpow.pop %v604
  %v606 = vadd.f32 %v605, 1.0
  %v607 = vrcp.pop %v606
  %v608 = vmul.f32 1.0, %v607
  %610 = vrot.lane.b32.xlu0 %v599, 64
  %v611 = vpop.permute.xlu0 %610
  %v613 = vmul.f32 %v608, %v611
  %615 = vrot.lane.b32.xlu0 %v613, 64
  %v616 = vpop.permute.xlu0 %615
  %v618 = vadd.f32 %v524, %v616
  %v619 = vtanh.pop %v618
  %v620 = vsub.f32 1.0, %v608
  %622 = vrot.lane.b32.xlu0 %v619, 96
  %v623 = vpop.permute.xlu0 %622
  %v625 = vmul.f32 %v620, %v623
  %v626 = vmul.f32 %v608, %v353
  %v627 = vadd.f32 %v625, %v626
  %s628 = scalar_lea.vmem %s0, 4
  %v629 = vld [vmem:[%s628] sm:$0x3]
  %630 = vmatprep.subr.mxu0 0.0
  %631 = vmatpush1.msra.mxu0 %v48
  %632 = vmatprep.subr.mxu0 0.0
  %633 = vmatpush1.msra.mxu0 %v49
  %634 = vmatprep.subr.mxu0 0.0
  %635 = vmatpush1.msra.mxu0 %v50
  %636 = vmatprep.subr.mxu0 0.0
  %637 = vmatpush1.msra.mxu0 %v51
  %638 = vmatprep.subr.mxu0 0.0
  %639 = vmatpush1.msra.mxu0 0.0
  %640 = vmatprep.subr.mxu0 0.0
  %641 = vmatpush1.msra.mxu0 0.0
  %642 = vmatprep.subr.mxu0 0.0
  %643 = vmatpush1.msra.mxu0 0.0
  %644 = vmatprep.subr.mxu0 0.0
  %645 = vmatpush1.msra.mxu0 0.0
  %646 = vmatprep.subr.mxu0 0.0
  %647 = vmatpush1.msra.mxu0 0.0
  %648 = vmatprep.subr.mxu0 0.0
  %649 = vmatpush1.msra.mxu0 0.0
  %650 = vmatprep.subr.mxu0 0.0
  %651 = vmatpush1.msra.mxu0 0.0
  %652 = vmatprep.subr.mxu0 0.0
  %653 = vmatpush1.msra.mxu0 0.0
  %654 = vmatprep.subr.mxu0 0.0
  %655 = vmatpush1.msra.mxu0 0.0
  %656 = vmatprep.subr.mxu0 0.0
  %657 = vmatpush1.msra.mxu0 0.0
  %658 = vmatprep.subr.mxu0 0.0
  %659 = vmatpush1.msra.mxu0 0.0
  %660 = vmatprep.subr.mxu0 0.0
  %661 = vmatpush1.msra.mxu0 0.0
  %662 = vmatprep.subr.mxu0 0.0
  %663 = vmatpush1.msra.mxu0 0.0
  %664 = vmatprep.subr.mxu0 0.0
  %665 = vmatpush1.msra.mxu0 0.0
  %666 = vmatprep.subr.mxu0 0.0
  %667 = vmatpush1.msra.mxu0 0.0
  %668 = vmatprep.subr.mxu0 0.0
  %669 = vmatpush1.msra.mxu0 0.0
  %670 = vmatprep.subr.mxu0 0.0
  %671 = vmatpush1.msra.mxu0 0.0
  %672 = vmatprep.subr.mxu0 0.0
  %673 = vmatpush1.msra.mxu0 0.0
  %674 = vmatprep.subr.mxu0 0.0
  %675 = vmatpush1.msra.mxu0 0.0
  %676 = vmatprep.subr.mxu0 0.0
  %677 = vmatpush1.msra.mxu0 0.0
  %678 = vmatprep.subr.mxu0 0.0
  %679 = vmatpush1.msra.mxu0 0.0
  %680 = vmatprep.subr.mxu0 0.0
  %681 = vmatpush1.msra.mxu0 0.0
  %682 = vmatprep.subr.mxu0 0.0
  %683 = vmatpush1.msra.mxu0 0.0
  %684 = vmatprep.subr.mxu0 0.0
  %685 = vmatpush1.msra.mxu0 0.0
  %686 = vmatprep.subr.mxu0 0.0
  %687 = vmatpush1.msra.mxu0 0.0
  %688 = vmatprep.subr.mxu0 0.0
  %689 = vmatpush1.msra.mxu0 0.0
  %690 = vmatprep.subr.mxu0 0.0
  %691 = vmatpush1.msra.mxu0 0.0
  %692 = vmatprep.subr.mxu0 0.0
  %693 = vmatpush1.msra.mxu0 0.0
  %694 = vmatprep.mubr.f32.mxu0 0.0
  %695 = vmatmul.mubr.f32.gmra.mrb[0].mxu0 %v455
  %v696 = vpop.f32.mrb[0].mxu0
  %v697 = vadd.f32 %v57, %v696
  %v698 = vpop.f32.mrb[0].mxu0
  %699 = vdwg.mxu0
  %v700 = vadd.f32 %v629, %v697
  %v701 = vxor.u32 %v700, 2147483648
  %v702 = vmul.f32 %v701, 1.442695
  %v703 = vpow.pop %v702
  %v704 = vadd.f32 %v703, 1.0
  %v705 = vrcp.pop %v704
  %v706 = vmul.f32 1.0, %v705
  %708 = vrot.lane.b32.xlu0 %v697, 64
  %v709 = vpop.permute.xlu0 %708
  %v711 = vmul.f32 %v706, %v709
  %713 = vrot.lane.b32.xlu0 %v711, 64
  %v714 = vpop.permute.xlu0 %713
  %v716 = vadd.f32 %v629, %v714
  %v717 = vtanh.pop %v716
  %v718 = vsub.f32 1.0, %v706
  %720 = vrot.lane.b32.xlu0 %v717, 96
  %v721 = vpop.permute.xlu0 %720
  %v723 = vmul.f32 %v718, %v721
  %v724 = vmul.f32 %v706, %v451
  %v725 = vadd.f32 %v723, %v724
  %727 = vrot.lane.b32.xlu0 %v725, 96
  %v728 = vpop.permute.xlu0 %727
  %v729 = vsel %vm59, %v728, 0
  %731 = vmatprep.subr.mxu0 0.0
  %732 = vmatpush1.msra.mxu0 %v159
  %733 = vmatprep.subr.mxu0 0.0
  %734 = vmatpush1.msra.mxu0 %v160
  %735 = vmatprep.subr.mxu0 0.0
  %736 = vmatpush1.msra.mxu0 %v161
  %737 = vmatprep.subr.mxu0 0.0
  %738 = vmatpush1.msra.mxu0 %v162
  %739 = vmatprep.subr.mxu0 0.0
  %740 = vmatpush1.msra.mxu0 0.0
  %741 = vmatprep.subr.mxu0 0.0
  %742 = vmatpush1.msra.mxu0 0.0
  %743 = vmatprep.subr.mxu0 0.0
  %744 = vmatpush1.msra.mxu0 0.0
  %745 = vmatprep.subr.mxu0 0.0
  %746 = vmatpush1.msra.mxu0 0.0
  %747 = vmatprep.subr.mxu0 0.0
  %748 = vmatpush1.msra.mxu0 0.0
  %749 = vmatprep.subr.mxu0 0.0
  %750 = vmatpush1.msra.mxu0 0.0
  %751 = vmatprep.subr.mxu0 0.0
  %752 = vmatpush1.msra.mxu0 0.0
  %753 = vmatprep.subr.mxu0 0.0
  %754 = vmatpush1.msra.mxu0 0.0
  %755 = vmatprep.subr.mxu0 0.0
  %756 = vmatpush1.msra.mxu0 0.0
  %757 = vmatprep.subr.mxu0 0.0
  %758 = vmatpush1.msra.mxu0 0.0
  %759 = vmatprep.subr.mxu0 0.0
  %760 = vmatpush1.msra.mxu0 0.0
  %761 = vmatprep.subr.mxu0 0.0
  %762 = vmatpush1.msra.mxu0 0.0
  %763 = vmatprep.subr.mxu0 0.0
  %764 = vmatpush1.msra.mxu0 0.0
  %765 = vmatprep.subr.mxu0 0.0
  %766 = vmatpush1.msra.mxu0 0.0
  %767 = vmatprep.subr.mxu0 0.0
  %768 = vmatpush1.msra.mxu0 0.0
  %769 = vmatprep.subr.mxu0 0.0
  %770 = vmatpush1.msra.mxu0 0.0
  %771 = vmatprep.subr.mxu0 0.0
  %772 = vmatpush1.msra.mxu0 0.0
  %773 = vmatprep.subr.mxu0 0.0
  %774 = vmatpush1.msra.mxu0 0.0
  %775 = vmatprep.subr.mxu0 0.0
  %776 = vmatpush1.msra.mxu0 0.0
  %777 = vmatprep.subr.mxu0 0.0
  %778 = vmatpush1.msra.mxu0 0.0
  %779 = vmatprep.subr.mxu0 0.0
  %780 = vmatpush1.msra.mxu0 0.0
  %781 = vmatprep.subr.mxu0 0.0
  %782 = vmatpush1.msra.mxu0 0.0
  %783 = vmatprep.subr.mxu0 0.0
  %784 = vmatpush1.msra.mxu0 0.0
  %785 = vmatprep.subr.mxu0 0.0
  %786 = vmatpush1.msra.mxu0 0.0
  %787 = vmatprep.subr.mxu0 0.0
  %788 = vmatpush1.msra.mxu0 0.0
  %789 = vmatprep.subr.mxu0 0.0
  %790 = vmatpush1.msra.mxu0 0.0
  %791 = vmatprep.subr.mxu0 0.0
  %792 = vmatpush1.msra.mxu0 0.0
  %793 = vmatprep.subr.mxu0 0.0
  %794 = vmatpush1.msra.mxu0 0.0
  %795 = vmatprep.mubr.f32.mxu0 0.0
  %796 = vmatmul.mubr.f32.gmra.mrb[0].mxu0 %v729
  %v797 = vpop.f32.mrb[0].mxu0
  %v798 = vadd.f32 %v168, %v797
  %v799 = vpop.f32.mrb[0].mxu0
  %800 = vdwg.mxu0
  %802 = vrot.lane.b32.xlu0 %v627, 96
  %v803 = vpop.permute.xlu0 %802
  %v804 = vsel %vm59, %v803, 0
  %806 = vmatprep.subr.mxu0 0.0
  %807 = vmatpush1.msra.mxu0 %v246
  %808 = vmatprep.subr.mxu0 0.0
  %809 = vmatpush1.msra.mxu0 %v247
  %810 = vmatprep.subr.mxu0 0.0
  %811 = vmatpush1.msra.mxu0 %v248
  %812 = vmatprep.subr.mxu0 0.0
  %813 = vmatpush1.msra.mxu0 %v249
  %814 = vmatprep.subr.mxu0 0.0
  %815 = vmatpush1.msra.mxu0 0.0
  %816 = vmatprep.subr.mxu0 0.0
  %817 = vmatpush1.msra.mxu0 0.0
  %818 = vmatprep.subr.mxu0 0.0
  %819 = vmatpush1.msra.mxu0 0.0
  %820 = vmatprep.subr.mxu0 0.0
  %821 = vmatpush1.msra.mxu0 0.0
  %822 = vmatprep.subr.mxu0 0.0
  %823 = vmatpush1.msra.mxu0 0.0
  %824 = vmatprep.subr.mxu0 0.0
  %825 = vmatpush1.msra.mxu0 0.0
  %826 = vmatprep.subr.mxu0 0.0
  %827 = vmatpush1.msra.mxu0 0.0
  %828 = vmatprep.subr.mxu0 0.0
  %829 = vmatpush1.msra.mxu0 0.0
  %830 = vmatprep.subr.mxu0 0.0
  %831 = vmatpush1.msra.mxu0 0.0
  %832 = vmatprep.subr.mxu0 0.0
  %833 = vmatpush1.msra.mxu0 0.0
  %834 = vmatprep.subr.mxu0 0.0
  %835 = vmatpush1.msra.mxu0 0.0
  %836 = vmatprep.subr.mxu0 0.0
  %837 = vmatpush1.msra.mxu0 0.0
  %838 = vmatprep.subr.mxu0 0.0
  %839 = vmatpush1.msra.mxu0 0.0
  %840 = vmatprep.subr.mxu0 0.0
  %841 = vmatpush1.msra.mxu0 0.0
  %842 = vmatprep.subr.mxu0 0.0
  %843 = vmatpush1.msra.mxu0 0.0
  %844 = vmatprep.subr.mxu0 0.0
  %845 = vmatpush1.msra.mxu0 0.0
  %846 = vmatprep.subr.mxu0 0.0
  %847 = vmatpush1.msra.mxu0 0.0
  %848 = vmatprep.subr.mxu0 0.0
  %849 = vmatpush1.msra.mxu0 0.0
  %850 = vmatprep.subr.mxu0 0.0
  %851 = vmatpush1.msra.mxu0 0.0
  %852 = vmatprep.subr.mxu0 0.0
  %853 = vmatpush1.msra.mxu0 0.0
  %854 = vmatprep.subr.mxu0 0.0
  %855 = vmatpush1.msra.mxu0 0.0
  %856 = vmatprep.subr.mxu0 0.0
  %857 = vmatpush1.msra.mxu0 0.0
  %858 = vmatprep.subr.mxu0 0.0
  %859 = vmatpush1.msra.mxu0 0.0
  %860 = vmatprep.subr.mxu0 0.0
  %861 = vmatpush1.msra.mxu0 0.0
  %862 = vmatprep.subr.mxu0 0.0
  %863 = vmatpush1.msra.mxu0 0.0
  %864 = vmatprep.subr.mxu0 0.0
  %865 = vmatpush1.msra.mxu0 0.0
  %866 = vmatprep.subr.mxu0 0.0
  %867 = vmatpush1.msra.mxu0 0.0
  %868 = vmatprep.subr.mxu0 0.0
  %869 = vmatpush1.msra.mxu0 0.0
  %870 = vmatprep.mubr.f32.mxu0 0.0
  %871 = vmatmul.mubr.f32.gmra.mrb[0].mxu0 %v804
  %v872 = vpop.f32.mrb[0].mxu0
  %v873 = vadd.f32 %v256, %v872
  %v874 = vpop.f32.mrb[0].mxu0
  %875 = vdwg.mxu0
  %v876 = vadd.f32 %v798, %v873
  %v877 = vxor.u32 %v876, 2147483648
  %v878 = vmul.f32 %v877, 1.442695
  %v879 = vpow.pop %v878
  %v880 = vadd.f32 %v879, 1.0
  %v881 = vrcp.pop %v880
  %v882 = vmul.f32 1.0, %v881
  %884 = vrot.lane.b32.xlu0 %v873, 64
  %v885 = vpop.permute.xlu0 %884
  %v887 = vmul.f32 %v882, %v885
  %889 = vrot.lane.b32.xlu0 %v887, 64
  %v890 = vpop.permute.xlu0 %889
  %v892 = vadd.f32 %v798, %v890
  %v893 = vtanh.pop %v892
  %v894 = vsub.f32 1.0, %v882
  %896 = vrot.lane.b32.xlu0 %v893, 96
  %v897 = vpop.permute.xlu0 %896
  %v899 = vmul.f32 %v894, %v897
  %v900 = vmul.f32 %v882, %v627
  %v901 = vadd.f32 %v899, %v900
  %s902 = scalar_lea.vmem %s0, 6
  %v903 = vld [vmem:[%s902] sm:$0x3]
  %904 = vmatprep.subr.mxu0 0.0
  %905 = vmatpush1.msra.mxu0 %v48
  %906 = vmatprep.subr.mxu0 0.0
  %907 = vmatpush1.msra.mxu0 %v49
  %908 = vmatprep.subr.mxu0 0.0
  %909 = vmatpush1.msra.mxu0 %v50
  %910 = vmatprep.subr.mxu0 0.0
  %911 = vmatpush1.msra.mxu0 %v51
  %912 = vmatprep.subr.mxu0 0.0
  %913 = vmatpush1.msra.mxu0 0.0
  %914 = vmatprep.subr.mxu0 0.0
  %915 = vmatpush1.msra.mxu0 0.0
  %916 = vmatprep.subr.mxu0 0.0
  %917 = vmatpush1.msra.mxu0 0.0
  %918 = vmatprep.subr.mxu0 0.0
  %919 = vmatpush1.msra.mxu0 0.0
  %920 = vmatprep.subr.mxu0 0.0
  %921 = vmatpush1.msra.mxu0 0.0
  %922 = vmatprep.subr.mxu0 0.0
  %923 = vmatpush1.msra.mxu0 0.0
  %924 = vmatprep.subr.mxu0 0.0
  %925 = vmatpush1.msra.mxu0 0.0
  %926 = vmatprep.subr.mxu0 0.0
  %927 = vmatpush1.msra.mxu0 0.0
  %928 = vmatprep.subr.mxu0 0.0
  %929 = vmatpush1.msra.mxu0 0.0
  %930 = vmatprep.subr.mxu0 0.0
  %931 = vmatpush1.msra.mxu0 0.0
  %932 = vmatprep.subr.mxu0 0.0
  %933 = vmatpush1.msra.mxu0 0.0
  %934 = vmatprep.subr.mxu0 0.0
  %935 = vmatpush1.msra.mxu0 0.0
  %936 = vmatprep.subr.mxu0 0.0
  %937 = vmatpush1.msra.mxu0 0.0
  %938 = vmatprep.subr.mxu0 0.0
  %939 = vmatpush1.msra.mxu0 0.0
  %940 = vmatprep.subr.mxu0 0.0
  %941 = vmatpush1.msra.mxu0 0.0
  %942 = vmatprep.subr.mxu0 0.0
  %943 = vmatpush1.msra.mxu0 0.0
  %944 = vmatprep.subr.mxu0 0.0
  %945 = vmatpush1.msra.mxu0 0.0
  %946 = vmatprep.subr.mxu0 0.0
  %947 = vmatpush1.msra.mxu0 0.0
  %948 = vmatprep.subr.mxu0 0.0
  %949 = vmatpush1.msra.mxu0 0.0
  %950 = vmatprep.subr.mxu0 0.0
  %951 = vmatpush1.msra.mxu0 0.0
  %952 = vmatprep.subr.mxu0 0.0
  %953 = vmatpush1.msra.mxu0 0.0
  %954 = vmatprep.subr.mxu0 0.0
  %955 = vmatpush1.msra.mxu0 0.0
  %956 = vmatprep.subr.mxu0 0.0
  %957 = vmatpush1.msra.mxu0 0.0
  %958 = vmatprep.subr.mxu0 0.0
  %959 = vmatpush1.msra.mxu0 0.0
  %960 = vmatprep.subr.mxu0 0.0
  %961 = vmatpush1.msra.mxu0 0.0
  %962 = vmatprep.subr.mxu0 0.0
  %963 = vmatpush1.msra.mxu0 0.0
  %964 = vmatprep.subr.mxu0 0.0
  %965 = vmatpush1.msra.mxu0 0.0
  %966 = vmatprep.subr.mxu0 0.0
  %967 = vmatpush1.msra.mxu0 0.0
  %968 = vmatprep.mubr.f32.mxu0 0.0
  %969 = vmatmul.mubr.f32.gmra.mrb[0].mxu0 %v729
  %v970 = vpop.f32.mrb[0].mxu0
  %v971 = vadd.f32 %v57, %v970
  %v972 = vpop.f32.mrb[0].mxu0
  %973 = vdwg.mxu0
  %v974 = vadd.f32 %v903, %v971
  %v975 = vxor.u32 %v974, 2147483648
  %v976 = vmul.f32 %v975, 1.442695
  %v977 = vpow.pop %v976
  %v978 = vadd.f32 %v977, 1.0
  %v979 = vrcp.pop %v978
  %v980 = vmul.f32 1.0, %v979
  %982 = vrot.lane.b32.xlu0 %v971, 64
  %v983 = vpop.permute.xlu0 %982
  %v985 = vmul.f32 %v980, %v983
  %987 = vrot.lane.b32.xlu0 %v985, 64
  %v988 = vpop.permute.xlu0 %987
  %v990 = vadd.f32 %v903, %v988
  %v991 = vtanh.pop %v990
  %v992 = vsub.f32 1.0, %v980
  %994 = vrot.lane.b32.xlu0 %v991, 96
  %v995 = vpop.permute.xlu0 %994
  %v997 = vmul.f32 %v992, %v995
  %v998 = vmul.f32 %v980, %v725
  %v999 = vadd.f32 %v997, %v998
  %1001 = vrot.lane.b32.xlu0 %v999, 96
  %v1002 = vpop.permute.xlu0 %1001
  %v1003 = vsel %vm59, %v1002, 0
  %1005 = vmatprep.subr.mxu0 0.0
  %1006 = vmatpush1.msra.mxu0 %v159
  %1007 = vmatprep.subr.mxu0 0.0
  %1008 = vmatpush1.msra.mxu0 %v160
  %1009 = vmatprep.subr.mxu0 0.0
  %1010 = vmatpush1.msra.mxu0 %v161
  %1011 = vmatprep.subr.mxu0 0.0
  %1012 = vmatpush1.msra.mxu0 %v162
  %1013 = vmatprep.subr.mxu0 0.0
  %1014 = vmatpush1.msra.mxu0 0.0
  %1015 = vmatprep.subr.mxu0 0.0
  %1016 = vmatpush1.msra.mxu0 0.0
  %1017 = vmatprep.subr.mxu0 0.0
  %1018 = vmatpush1.msra.mxu0 0.0
  %1019 = vmatprep.subr.mxu0 0.0
  %1020 = vmatpush1.msra.mxu0 0.0
  %1021 = vmatprep.subr.mxu0 0.0
  %1022 = vmatpush1.msra.mxu0 0.0
  %1023 = vmatprep.subr.mxu0 0.0
  %1024 = vmatpush1.msra.mxu0 0.0
  %1025 = vmatprep.subr.mxu0 0.0
  %1026 = vmatpush1.msra.mxu0 0.0
  %1027 = vmatprep.subr.mxu0 0.0
  %1028 = vmatpush1.msra.mxu0 0.0
  %1029 = vmatprep.subr.mxu0 0.0
  %1030 = vmatpush1.msra.mxu0 0.0
  %1031 = vmatprep.subr.mxu0 0.0
  %1032 = vmatpush1.msra.mxu0 0.0
  %1033 = vmatprep.subr.mxu0 0.0
  %1034 = vmatpush1.msra.mxu0 0.0
  %1035 = vmatprep.subr.mxu0 0.0
  %1036 = vmatpush1.msra.mxu0 0.0
  %1037 = vmatprep.subr.mxu0 0.0
  %1038 = vmatpush1.msra.mxu0 0.0
  %1039 = vmatprep.subr.mxu0 0.0
  %1040 = vmatpush1.msra.mxu0 0.0
  %1041 = vmatprep.subr.mxu0 0.0
  %1042 = vmatpush1.msra.mxu0 0.0
  %1043 = vmatprep.subr.mxu0 0.0
  %1044 = vmatpush1.msra.mxu0 0.0
  %1045 = vmatprep.subr.mxu0 0.0
  %1046 = vmatpush1.msra.mxu0 0.0
  %1047 = vmatprep.subr.mxu0 0.0
  %1048 = vmatpush1.msra.mxu0 0.0
  %1049 = vmatprep.subr.mxu0 0.0
  %1050 = vmatpush1.msra.mxu0 0.0
  %1051 = vmatprep.subr.mxu0 0.0
  %1052 = vmatpush1.msra.mxu0 0.0
  %1053 = vmatprep.subr.mxu0 0.0
  %1054 = vmatpush1.msra.mxu0 0.0
  %1055 = vmatprep.subr.mxu0 0.0
  %1056 = vmatpush1.msra.mxu0 0.0
  %1057 = vmatprep.subr.mxu0 0.0
  %1058 = vmatpush1.msra.mxu0 0.0
  %1059 = vmatprep.subr.mxu0 0.0
  %1060 = vmatpush1.msra.mxu0 0.0
  %1061 = vmatprep.subr.mxu0 0.0
  %1062 = vmatpush1.msra.mxu0 0.0
  %1063 = vmatprep.subr.mxu0 0.0
  %1064 = vmatpush1.msra.mxu0 0.0
  %1065 = vmatprep.subr.mxu0 0.0
  %1066 = vmatpush1.msra.mxu0 0.0
  %1067 = vmatprep.subr.mxu0 0.0
  %1068 = vmatpush1.msra.mxu0 0.0
  %1069 = vmatprep.mubr.f32.mxu0 0.0
  %1070 = vmatmul.mubr.f32.gmra.mrb[0].mxu0 %v1003
  %v1071 = vpop.f32.mrb[0].mxu0
  %v1072 = vadd.f32 %v168, %v1071
  %v1073 = vpop.f32.mrb[0].mxu0
  %1074 = vdwg.mxu0
  %1076 = vrot.lane.b32.xlu0 %v901, 96
  %v1077 = vpop.permute.xlu0 %1076
  %v1078 = vsel %vm59, %v1077, 0
  %1080 = vmatprep.subr.mxu0 0.0
  %1081 = vmatpush1.msra.mxu0 %v246
  %1082 = vmatprep.subr.mxu0 0.0
  %1083 = vmatpush1.msra.mxu0 %v247
  %1084 = vmatprep.subr.mxu0 0.0
  %1085 = vmatpush1.msra.mxu0 %v248
  %1086 = vmatprep.subr.mxu0 0.0
  %1087 = vmatpush1.msra.mxu0 %v249
  %1088 = vmatprep.subr.mxu0 0.0
  %1089 = vmatpush1.msra.mxu0 0.0
  %1090 = vmatprep.subr.mxu0 0.0
  %1091 = vmatpush1.msra.mxu0 0.0
  %1092 = vmatprep.subr.mxu0 0.0
  %1093 = vmatpush1.msra.mxu0 0.0
  %1094 = vmatprep.subr.mxu0 0.0
  %1095 = vmatpush1.msra.mxu0 0.0
  %1096 = vmatprep.subr.mxu0 0.0
  %1097 = vmatpush1.msra.mxu0 0.0
  %1098 = vmatprep.subr.mxu0 0.0
  %1099 = vmatpush1.msra.mxu0 0.0
  %1100 = vmatprep.subr.mxu0 0.0
  %1101 = vmatpush1.msra.mxu0 0.0
  %1102 = vmatprep.subr.mxu0 0.0
  %1103 = vmatpush1.msra.mxu0 0.0
  %1104 = vmatprep.subr.mxu0 0.0
  %1105 = vmatpush1.msra.mxu0 0.0
  %1106 = vmatprep.subr.mxu0 0.0
  %1107 = vmatpush1.msra.mxu0 0.0
  %1108 = vmatprep.subr.mxu0 0.0
  %1109 = vmatpush1.msra.mxu0 0.0
  %1110 = vmatprep.subr.mxu0 0.0
  %1111 = vmatpush1.msra.mxu0 0.0
  %1112 = vmatprep.subr.mxu0 0.0
  %1113 = vmatpush1.msra.mxu0 0.0
  %1114 = vmatprep.subr.mxu0 0.0
  %1115 = vmatpush1.msra.mxu0 0.0
  %1116 = vmatprep.subr.mxu0 0.0
  %1117 = vmatpush1.msra.mxu0 0.0
  %1118 = vmatprep.subr.mxu0 0.0
  %1119 = vmatpush1.msra.mxu0 0.0
  %1120 = vmatprep.subr.mxu0 0.0
  %1121 = vmatpush1.msra.mxu0 0.0
  %1122 = vmatprep.subr.mxu0 0.0
  %1123 = vmatpush1.msra.mxu0 0.0
  %1124 = vmatprep.subr.mxu0 0.0
  %1125 = vmatpush1.msra.mxu0 0.0
  %1126 = vmatprep.subr.mxu0 0.0
  %1127 = vmatpush1.msra.mxu0 0.0
  %1128 = vmatprep.subr.mxu0 0.0
  %1129 = vmatpush1.msra.mxu0 0.0
  %1130 = vmatprep.subr.mxu0 0.0
  %1131 = vmatpush1.msra.mxu0 0.0
  %1132 = vmatprep.subr.mxu0 0.0
  %1133 = vmatpush1.msra.mxu0 0.0
  %1134 = vmatprep.subr.mxu0 0.0
  %1135 = vmatpush1.msra.mxu0 0.0
  %1136 = vmatprep.subr.mxu0 0.0
  %1137 = vmatpush1.msra.mxu0 0.0
  %1138 = vmatprep.subr.mxu0 0.0
  %1139 = vmatpush1.msra.mxu0 0.0
  %1140 = vmatprep.subr.mxu0 0.0
  %1141 = vmatpush1.msra.mxu0 0.0
  %1142 = vmatprep.subr.mxu0 0.0
  %1143 = vmatpush1.msra.mxu0 0.0
  %1144 = vmatprep.mubr.f32.mxu0 0.0
  %1145 = vmatmul.mubr.f32.gmra.mrb[0].mxu0 %v1078
  %v1146 = vpop.f32.mrb[0].mxu0
  %v1147 = vadd.f32 %v256, %v1146
  %v1148 = vpop.f32.mrb[0].mxu0
  %1149 = vdwg.mxu0
  %v1150 = vadd.f32 %v1072, %v1147
  %v1151 = vxor.u32 %v1150, 2147483648
  %v1152 = vmul.f32 %v1151, 1.442695
  %v1153 = vpow.pop %v1152
  %v1154 = vadd.f32 %v1153, 1.0
  %v1155 = vrcp.pop %v1154
  %v1156 = vmul.f32 1.0, %v1155
  %1158 = vrot.lane.b32.xlu0 %v1147, 64
  %v1159 = vpop.permute.xlu0 %1158
  %v1161 = vmul.f32 %v1156, %v1159
  %1163 = vrot.lane.b32.xlu0 %v1161, 64
  %v1164 = vpop.permute.xlu0 %1163
  %v1166 = vadd.f32 %v1072, %v1164
  %v1167 = vtanh.pop %v1166
  %v1168 = vsub.f32 1.0, %v1156
  %1170 = vrot.lane.b32.xlu0 %v1167, 96
  %v1171 = vpop.permute.xlu0 %1170
  %v1173 = vmul.f32 %v1168, %v1171
  %v1174 = vmul.f32 %v1156, %v901
  %v1175 = vadd.f32 %v1173, %v1174
  %s1176 = scalar_lea.vmem %s0, 8
  %v1177 = vld [vmem:[%s1176] sm:$0x3]
  %1178 = vmatprep.subr.mxu0 0.0
  %1179 = vmatpush1.msra.mxu0 %v48
  %1180 = vmatprep.subr.mxu0 0.0
  %1181 = vmatpush1.msra.mxu0 %v49
  %1182 = vmatprep.subr.mxu0 0.0
  %1183 = vmatpush1.msra.mxu0 %v50
  %1184 = vmatprep.subr.mxu0 0.0
  %1185 = vmatpush1.msra.mxu0 %v51
  %1186 = vmatprep.subr.mxu0 0.0
  %1187 = vmatpush1.msra.mxu0 0.0
  %1188 = vmatprep.subr.mxu0 0.0
  %1189 = vmatpush1.msra.mxu0 0.0
  %1190 = vmatprep.subr.mxu0 0.0
  %1191 = vmatpush1.msra.mxu0 0.0
  %1192 = vmatprep.subr.mxu0 0.0
  %1193 = vmatpush1.msra.mxu0 0.0
  %1194 = vmatprep.subr.mxu0 0.0
  %1195 = vmatpush1.msra.mxu0 0.0
  %1196 = vmatprep.subr.mxu0 0.0
  %1197 = vmatpush1.msra.mxu0 0.0
  %1198 = vmatprep.subr.mxu0 0.0
  %1199 = vmatpush1.msra.mxu0 0.0
  %1200 = vmatprep.subr.mxu0 0.0
  %1201 = vmatpush1.msra.mxu0 0.0
  %1202 = vmatprep.subr.mxu0 0.0
  %1203 = vmatpush1.msra.mxu0 0.0
  %1204 = vmatprep.subr.mxu0 0.0
  %1205 = vmatpush1.msra.mxu0 0.0
  %1206 = vmatprep.subr.mxu0 0.0
  %1207 = vmatpush1.msra.mxu0 0.0
  %1208 = vmatprep.subr.mxu0 0.0
  %1209 = vmatpush1.msra.mxu0 0.0
  %1210 = vmatprep.subr.mxu0 0.0
  %1211 = vmatpush1.msra.mxu0 0.0
  %1212 = vmatprep.subr.mxu0 0.0
  %1213 = vmatpush1.msra.mxu0 0.0
  %1214 = vmatprep.subr.mxu0 0.0
  %1215 = vmatpush1.msra.mxu0 0.0
  %1216 = vmatprep.subr.mxu0 0.0
  %1217 = vmatpush1.msra.mxu0 0.0
  %1218 = vmatprep.subr.mxu0 0.0
  %1219 = vmatpush1.msra.mxu0 0.0
  %1220 = vmatprep.subr.mxu0 0.0
  %1221 = vmatpush1.msra.mxu0 0.0
  %1222 = vmatprep.subr.mxu0 0.0
  %1223 = vmatpush1.msra.mxu0 0.0
  %1224 = vmatprep.subr.mxu0 0.0
  %1225 = vmatpush1.msra.mxu0 0.0
  %1226 = vmatprep.subr.mxu0 0.0
  %1227 = vmatpush1.msra.mxu0 0.0
  %1228 = vmatprep.subr.mxu0 0.0
  %1229 = vmatpush1.msra.mxu0 0.0
  %1230 = vmatprep.subr.mxu0 0.0
  %1231 = vmatpush1.msra.mxu0 0.0
  %1232 = vmatprep.subr.mxu0 0.0
  %1233 = vmatpush1.msra.mxu0 0.0
  %1234 = vmatprep.subr.mxu0 0.0
  %1235 = vmatpush1.msra.mxu0 0.0
  %1236 = vmatprep.subr.mxu0 0.0
  %1237 = vmatpush1.msra.mxu0 0.0
  %1238 = vmatprep.subr.mxu0 0.0
  %1239 = vmatpush1.msra.mxu0 0.0
  %1240 = vmatprep.subr.mxu0 0.0
  %1241 = vmatpush1.msra.mxu0 0.0
  %1242 = vmatprep.mubr.f32.mxu0 0.0
  %1243 = vmatmul.mubr.f32.gmra.mrb[0].mxu0 %v1003
  %v1244 = vpop.f32.mrb[0].mxu0
  %v1245 = vadd.f32 %v57, %v1244
  %v1246 = vpop.f32.mrb[0].mxu0
  %1247 = vdwg.mxu0
  %v1248 = vadd.f32 %v1177, %v1245
  %v1249 = vxor.u32 %v1248, 2147483648
  %v1250 = vmul.f32 %v1249, 1.442695
  %v1251 = vpow.pop %v1250
  %v1252 = vadd.f32 %v1251, 1.0
  %v1253 = vrcp.pop %v1252
  %v1254 = vmul.f32 1.0, %v1253
  %1256 = vrot.lane.b32.xlu0 %v1245, 64
  %v1257 = vpop.permute.xlu0 %1256
  %v1259 = vmul.f32 %v1254, %v1257
  %1261 = vrot.lane.b32.xlu0 %v1259, 64
  %v1262 = vpop.permute.xlu0 %1261
  %v1264 = vadd.f32 %v1177, %v1262
  %v1265 = vtanh.pop %v1264
  %v1266 = vsub.f32 1.0, %v1254
  %1268 = vrot.lane.b32.xlu0 %v1265, 96
  %v1269 = vpop.permute.xlu0 %1268
  %v1271 = vmul.f32 %v1266, %v1269
  %v1272 = vmul.f32 %v1254, %v999
  %v1273 = vadd.f32 %v1271, %v1272
  %1275 = vrot.lane.b32.xlu0 %v1273, 96
  %v1276 = vpop.permute.xlu0 %1275
  %v1277 = vsel %vm59, %v1276, 0
  %1279 = vmatprep.subr.mxu0 0.0
  %1280 = vmatpush1.msra.mxu0 %v159
  %1281 = vmatprep.subr.mxu0 0.0
  %1282 = vmatpush1.msra.mxu0 %v160
  %1283 = vmatprep.subr.mxu0 0.0
  %1284 = vmatpush1.msra.mxu0 %v161
  %1285 = vmatprep.subr.mxu0 0.0
  %1286 = vmatpush1.msra.mxu0 %v162
  %1287 = vmatprep.subr.mxu0 0.0
  %1288 = vmatpush1.msra.mxu0 0.0
  %1289 = vmatprep.subr.mxu0 0.0
  %1290 = vmatpush1.msra.mxu0 0.0
  %1291 = vmatprep.subr.mxu0 0.0
  %1292 = vmatpush1.msra.mxu0 0.0
  %1293 = vmatprep.subr.mxu0 0.0
  %1294 = vmatpush1.msra.mxu0 0.0
  %1295 = vmatprep.subr.mxu0 0.0
  %1296 = vmatpush1.msra.mxu0 0.0
  %1297 = vmatprep.subr.mxu0 0.0
  %1298 = vmatpush1.msra.mxu0 0.0
  %1299 = vmatprep.subr.mxu0 0.0
  %1300 = vmatpush1.msra.mxu0 0.0
  %1301 = vmatprep.subr.mxu0 0.0
  %1302 = vmatpush1.msra.mxu0 0.0
  %1303 = vmatprep.subr.mxu0 0.0
  %1304 = vmatpush1.msra.mxu0 0.0
  %1305 = vmatprep.subr.mxu0 0.0
  %1306 = vmatpush1.msra.mxu0 0.0
  %1307 = vmatprep.subr.mxu0 0.0
  %1308 = vmatpush1.msra.mxu0 0.0
  %1309 = vmatprep.subr.mxu0 0.0
  %1310 = vmatpush1.msra.mxu0 0.0
  %1311 = vmatprep.subr.mxu0 0.0
  %1312 = vmatpush1.msra.mxu0 0.0
  %1313 = vmatprep.subr.mxu0 0.0
  %1314 = vmatpush1.msra.mxu0 0.0
  %1315 = vmatprep.subr.mxu0 0.0
  %1316 = vmatpush1.msra.mxu0 0.0
  %1317 = vmatprep.subr.mxu0 0.0
  %1318 = vmatpush1.msra.mxu0 0.0
  %1319 = vmatprep.subr.mxu0 0.0
  %1320 = vmatpush1.msra.mxu0 0.0
  %1321 = vmatprep.subr.mxu0 0.0
  %1322 = vmatpush1.msra.mxu0 0.0
  %1323 = vmatprep.subr.mxu0 0.0
  %1324 = vmatpush1.msra.mxu0 0.0
  %1325 = vmatprep.subr.mxu0 0.0
  %1326 = vmatpush1.msra.mxu0 0.0
  %1327 = vmatprep.subr.mxu0 0.0
  %1328 = vmatpush1.msra.mxu0 0.0
  %1329 = vmatprep.subr.mxu0 0.0
  %1330 = vmatpush1.msra.mxu0 0.0
  %1331 = vmatprep.subr.mxu0 0.0
  %1332 = vmatpush1.msra.mxu0 0.0
  %1333 = vmatprep.subr.mxu0 0.0
  %1334 = vmatpush1.msra.mxu0 0.0
  %1335 = vmatprep.subr.mxu0 0.0
  %1336 = vmatpush1.msra.mxu0 0.0
  %1337 = vmatprep.subr.mxu0 0.0
  %1338 = vmatpush1.msra.mxu0 0.0
  %1339 = vmatprep.subr.mxu0 0.0
  %1340 = vmatpush1.msra.mxu0 0.0
  %1341 = vmatprep.subr.mxu0 0.0
  %1342 = vmatpush1.msra.mxu0 0.0
  %1343 = vmatprep.mubr.f32.mxu0 0.0
  %1344 = vmatmul.mubr.f32.gmra.mrb[0].mxu0 %v1277
  %v1345 = vpop.f32.mrb[0].mxu0
  %v1346 = vadd.f32 %v168, %v1345
  %v1347 = vpop.f32.mrb[0].mxu0
  %1348 = vdwg.mxu0
  %1350 = vrot.lane.b32.xlu0 %v1175, 96
  %v1351 = vpop.permute.xlu0 %1350
  %v1352 = vsel %vm59, %v1351, 0
  %1354 = vmatprep.subr.mxu0 0.0
  %1355 = vmatpush1.msra.mxu0 %v246
  %1356 = vmatprep.subr.mxu0 0.0
  %1357 = vmatpush1.msra.mxu0 %v247
  %1358 = vmatprep.subr.mxu0 0.0
  %1359 = vmatpush1.msra.mxu0 %v248
  %1360 = vmatprep.subr.mxu0 0.0
  %1361 = vmatpush1.msra.mxu0 %v249
  %1362 = vmatprep.subr.mxu0 0.0
  %1363 = vmatpush1.msra.mxu0 0.0
  %1364 = vmatprep.subr.mxu0 0.0
  %1365 = vmatpush1.msra.mxu0 0.0
  %1366 = vmatprep.subr.mxu0 0.0
  %1367 = vmatpush1.msra.mxu0 0.0
  %1368 = vmatprep.subr.mxu0 0.0
  %1369 = vmatpush1.msra.mxu0 0.0
  %1370 = vmatprep.subr.mxu0 0.0
  %1371 = vmatpush1.msra.mxu0 0.0
  %1372 = vmatprep.subr.mxu0 0.0
  %1373 = vmatpush1.msra.mxu0 0.0
  %1374 = vmatprep.subr.mxu0 0.0
  %1375 = vmatpush1.msra.mxu0 0.0
  %1376 = vmatprep.subr.mxu0 0.0
  %1377 = vmatpush1.msra.mxu0 0.0
  %1378 = vmatprep.subr.mxu0 0.0
  %1379 = vmatpush1.msra.mxu0 0.0
  %1380 = vmatprep.subr.mxu0 0.0
  %1381 = vmatpush1.msra.mxu0 0.0
  %1382 = vmatprep.subr.mxu0 0.0
  %1383 = vmatpush1.msra.mxu0 0.0
  %1384 = vmatprep.subr.mxu0 0.0
  %1385 = vmatpush1.msra.mxu0 0.0
  %1386 = vmatprep.subr.mxu0 0.0
  %1387 = vmatpush1.msra.mxu0 0.0
  %1388 = vmatprep.subr.mxu0 0.0
  %1389 = vmatpush1.msra.mxu0 0.0
  %1390 = vmatprep.subr.mxu0 0.0
  %1391 = vmatpush1.msra.mxu0 0.0
  %1392 = vmatprep.subr.mxu0 0.0
  %1393 = vmatpush1.msra.mxu0 0.0
  %1394 = vmatprep.subr.mxu0 0.0
  %1395 = vmatpush1.msra.mxu0 0.0
  %1396 = vmatprep.subr.mxu0 0.0
  %1397 = vmatpush1.msra.mxu0 0.0
  %1398 = vmatprep.subr.mxu0 0.0
  %1399 = vmatpush1.msra.mxu0 0.0
  %1400 = vmatprep.subr.mxu0 0.0
  %1401 = vmatpush1.msra.mxu0 0.0
  %1402 = vmatprep.subr.mxu0 0.0
  %1403 = vmatpush1.msra.mxu0 0.0
  %1404 = vmatprep.subr.mxu0 0.0
  %1405 = vmatpush1.msra.mxu0 0.0
  %1406 = vmatprep.subr.mxu0 0.0
  %1407 = vmatpush1.msra.mxu0 0.0
  %1408 = vmatprep.subr.mxu0 0.0
  %1409 = vmatpush1.msra.mxu0 0.0
  %1410 = vmatprep.subr.mxu0 0.0
  %1411 = vmatpush1.msra.mxu0 0.0
  %1412 = vmatprep.subr.mxu0 0.0
  %1413 = vmatpush1.msra.mxu0 0.0
  %1414 = vmatprep.subr.mxu0 0.0
  %1415 = vmatpush1.msra.mxu0 0.0
  %1416 = vmatprep.subr.mxu0 0.0
  %1417 = vmatpush1.msra.mxu0 0.0
  %1418 = vmatprep.mubr.f32.mxu0 0.0
  %1419 = vmatmul.mubr.f32.gmra.mrb[0].mxu0 %v1352
  %v1420 = vpop.f32.mrb[0].mxu0
  %v1421 = vadd.f32 %v256, %v1420
  %v1422 = vpop.f32.mrb[0].mxu0
  %1423 = vdwg.mxu0
  %v1424 = vadd.f32 %v1346, %v1421
  %v1425 = vxor.u32 %v1424, 2147483648
  %v1426 = vmul.f32 %v1425, 1.442695
  %v1427 = vpow.pop %v1426
  %v1428 = vadd.f32 %v1427, 1.0
  %v1429 = vrcp.pop %v1428
  %v1430 = vmul.f32 1.0, %v1429
  %1432 = vrot.lane.b32.xlu0 %v1421, 64
  %v1433 = vpop.permute.xlu0 %1432
  %v1435 = vmul.f32 %v1430, %v1433
  %1437 = vrot.lane.b32.xlu0 %v1435, 64
  %v1438 = vpop.permute.xlu0 %1437
  %v1440 = vadd.f32 %v1346, %v1438
  %v1441 = vtanh.pop %v1440
  %v1442 = vsub.f32 1.0, %v1430
  %1444 = vrot.lane.b32.xlu0 %v1441, 96
  %v1445 = vpop.permute.xlu0 %1444
  %v1447 = vmul.f32 %v1442, %v1445
  %v1448 = vmul.f32 %v1430, %v1175
  %v1449 = vadd.f32 %v1447, %v1448
  %s1450 = scalar_lea.vmem %s0, 10
  %v1451 = vld [vmem:[%s1450] sm:$0x3]
  %1452 = vmatprep.subr.mxu0 0.0
  %1453 = vmatpush1.msra.mxu0 %v48
  %1454 = vmatprep.subr.mxu0 0.0
  %1455 = vmatpush1.msra.mxu0 %v49
  %1456 = vmatprep.subr.mxu0 0.0
  %1457 = vmatpush1.msra.mxu0 %v50
  %1458 = vmatprep.subr.mxu0 0.0
  %1459 = vmatpush1.msra.mxu0 %v51
  %1460 = vmatprep.subr.mxu0 0.0
  %1461 = vmatpush1.msra.mxu0 0.0
  %1462 = vmatprep.subr.mxu0 0.0
  %1463 = vmatpush1.msra.mxu0 0.0
  %1464 = vmatprep.subr.mxu0 0.0
  %1465 = vmatpush1.msra.mxu0 0.0
  %1466 = vmatprep.subr.mxu0 0.0
  %1467 = vmatpush1.msra.mxu0 0.0
  %1468 = vmatprep.subr.mxu0 0.0
  %1469 = vmatpush1.msra.mxu0 0.0
  %1470 = vmatprep.subr.mxu0 0.0
  %1471 = vmatpush1.msra.mxu0 0.0
  %1472 = vmatprep.subr.mxu0 0.0
  %1473 = vmatpush1.msra.mxu0 0.0
  %1474 = vmatprep.subr.mxu0 0.0
  %1475 = vmatpush1.msra.mxu0 0.0
  %1476 = vmatprep.subr.mxu0 0.0
  %1477 = vmatpush1.msra.mxu0 0.0
  %1478 = vmatprep.subr.mxu0 0.0
  %1479 = vmatpush1.msra.mxu0 0.0
  %1480 = vmatprep.subr.mxu0 0.0
  %1481 = vmatpush1.msra.mxu0 0.0
  %1482 = vmatprep.subr.mxu0 0.0
  %1483 = vmatpush1.msra.mxu0 0.0
  %1484 = vmatprep.subr.mxu0 0.0
  %1485 = vmatpush1.msra.mxu0 0.0
  %1486 = vmatprep.subr.mxu0 0.0
  %1487 = vmatpush1.msra.mxu0 0.0
  %1488 = vmatprep.subr.mxu0 0.0
  %1489 = vmatpush1.msra.mxu0 0.0
  %1490 = vmatprep.subr.mxu0 0.0
  %1491 = vmatpush1.msra.mxu0 0.0
  %1492 = vmatprep.subr.mxu0 0.0
  %1493 = vmatpush1.msra.mxu0 0.0
  %1494 = vmatprep.subr.mxu0 0.0
  %1495 = vmatpush1.msra.mxu0 0.0
  %1496 = vmatprep.subr.mxu0 0.0
  %1497 = vmatpush1.msra.mxu0 0.0
  %1498 = vmatprep.subr.mxu0 0.0
  %1499 = vmatpush1.msra.mxu0 0.0
  %1500 = vmatprep.subr.mxu0 0.0
  %1501 = vmatpush1.msra.mxu0 0.0
  %1502 = vmatprep.subr.mxu0 0.0
  %1503 = vmatpush1.msra.mxu0 0.0
  %1504 = vmatprep.subr.mxu0 0.0
  %1505 = vmatpush1.msra.mxu0 0.0
  %1506 = vmatprep.subr.mxu0 0.0
  %1507 = vmatpush1.msra.mxu0 0.0
  %1508 = vmatprep.subr.mxu0 0.0
  %1509 = vmatpush1.msra.mxu0 0.0
  %1510 = vmatprep.subr.mxu0 0.0
  %1511 = vmatpush1.msra.mxu0 0.0
  %1512 = vmatprep.subr.mxu0 0.0
  %1513 = vmatpush1.msra.mxu0 0.0
  %1514 = vmatprep.subr.mxu0 0.0
  %1515 = vmatpush1.msra.mxu0 0.0
  %1516 = vmatprep.mubr.f32.mxu0 0.0
  %1517 = vmatmul.mubr.f32.gmra.mrb[0].mxu0 %v1277
  %v1518 = vpop.f32.mrb[0].mxu0
  %v1519 = vadd.f32 %v57, %v1518
  %v1520 = vpop.f32.mrb[0].mxu0
  %1521 = vdwg.mxu0
  %v1522 = vadd.f32 %v1451, %v1519
  %v1523 = vxor.u32 %v1522, 2147483648
  %v1524 = vmul.f32 %v1523, 1.442695
  %v1525 = vpow.pop %v1524
  %v1526 = vadd.f32 %v1525, 1.0
  %v1527 = vrcp.pop %v1526
  %v1528 = vmul.f32 1.0, %v1527
  %1530 = vrot.lane.b32.xlu0 %v1519, 64
  %v1531 = vpop.permute.xlu0 %1530
  %v1533 = vmul.f32 %v1528, %v1531
  %1535 = vrot.lane.b32.xlu0 %v1533, 64
  %v1536 = vpop.permute.xlu0 %1535
  %v1538 = vadd.f32 %v1451, %v1536
  %v1539 = vtanh.pop %v1538
  %v1540 = vsub.f32 1.0, %v1528
  %1542 = vrot.lane.b32.xlu0 %v1539, 96
  %v1543 = vpop.permute.xlu0 %1542
  %v1545 = vmul.f32 %v1540, %v1543
  %v1546 = vmul.f32 %v1528, %v1273
  %v1547 = vadd.f32 %v1545, %v1546
  %1549 = vrot.lane.b32.xlu0 %v1547, 96
  %v1550 = vpop.permute.xlu0 %1549
  %v1551 = vsel %vm59, %v1550, 0
  %1553 = vmatprep.subr.mxu0 0.0
  %1554 = vmatpush1.msra.mxu0 %v159
  %1555 = vmatprep.subr.mxu0 0.0
  %1556 = vmatpush1.msra.mxu0 %v160
  %1557 = vmatprep.subr.mxu0 0.0
  %1558 = vmatpush1.msra.mxu0 %v161
  %1559 = vmatprep.subr.mxu0 0.0
  %1560 = vmatpush1.msra.mxu0 %v162
  %1561 = vmatprep.subr.mxu0 0.0
  %1562 = vmatpush1.msra.mxu0 0.0
  %1563 = vmatprep.subr.mxu0 0.0
  %1564 = vmatpush1.msra.mxu0 0.0
  %1565 = vmatprep.subr.mxu0 0.0
  %1566 = vmatpush1.msra.mxu0 0.0
  %1567 = vmatprep.subr.mxu0 0.0
  %1568 = vmatpush1.msra.mxu0 0.0
  %1569 = vmatprep.subr.mxu0 0.0
  %1570 = vmatpush1.msra.mxu0 0.0
  %1571 = vmatprep.subr.mxu0 0.0
  %1572 = vmatpush1.msra.mxu0 0.0
  %1573 = vmatprep.subr.mxu0 0.0
  %1574 = vmatpush1.msra.mxu0 0.0
  %1575 = vmatprep.subr.mxu0 0.0
  %1576 = vmatpush1.msra.mxu0 0.0
  %1577 = vmatprep.subr.mxu0 0.0
  %1578 = vmatpush1.msra.mxu0 0.0
  %1579 = vmatprep.subr.mxu0 0.0
  %1580 = vmatpush1.msra.mxu0 0.0
  %1581 = vmatprep.subr.mxu0 0.0
  %1582 = vmatpush1.msra.mxu0 0.0
  %1583 = vmatprep.subr.mxu0 0.0
  %1584 = vmatpush1.msra.mxu0 0.0
  %1585 = vmatprep.subr.mxu0 0.0
  %1586 = vmatpush1.msra.mxu0 0.0
  %1587 = vmatprep.subr.mxu0 0.0
  %1588 = vmatpush1.msra.mxu0 0.0
  %1589 = vmatprep.subr.mxu0 0.0
  %1590 = vmatpush1.msra.mxu0 0.0
  %1591 = vmatprep.subr.mxu0 0.0
  %1592 = vmatpush1.msra.mxu0 0.0
  %1593 = vmatprep.subr.mxu0 0.0
  %1594 = vmatpush1.msra.mxu0 0.0
  %1595 = vmatprep.subr.mxu0 0.0
  %1596 = vmatpush1.msra.mxu0 0.0
  %1597 = vmatprep.subr.mxu0 0.0
  %1598 = vmatpush1.msra.mxu0 0.0
  %1599 = vmatprep.subr.mxu0 0.0
  %1600 = vmatpush1.msra.mxu0 0.0
  %1601 = vmatprep.subr.mxu0 0.0
  %1602 = vmatpush1.msra.mxu0 0.0
  %1603 = vmatprep.subr.mxu0 0.0
  %1604 = vmatpush1.msra.mxu0 0.0
  %1605 = vmatprep.subr.mxu0 0.0
  %1606 = vmatpush1.msra.mxu0 0.0
  %1607 = vmatprep.subr.mxu0 0.0
  %1608 = vmatpush1.msra.mxu0 0.0
  %1609 = vmatprep.subr.mxu0 0.0
  %1610 = vmatpush1.msra.mxu0 0.0
  %1611 = vmatprep.subr.mxu0 0.0
  %1612 = vmatpush1.msra.mxu0 0.0
  %1613 = vmatprep.subr.mxu0 0.0
  %1614 = vmatpush1.msra.mxu0 0.0
  %1615 = vmatprep.subr.mxu0 0.0
  %1616 = vmatpush1.msra.mxu0 0.0
  %1617 = vmatprep.mubr.f32.mxu0 0.0
  %1618 = vmatmul.mubr.f32.gmra.mrb[0].mxu0 %v1551
  %v1619 = vpop.f32.mrb[0].mxu0
  %v1620 = vadd.f32 %v168, %v1619
  %v1621 = vpop.f32.mrb[0].mxu0
  %1622 = vdwg.mxu0
  %1624 = vrot.lane.b32.xlu0 %v1449, 96
  %v1625 = vpop.permute.xlu0 %1624
  %v1626 = vsel %vm59, %v1625, 0
  %1628 = vmatprep.subr.mxu0 0.0
  %1629 = vmatpush1.msra.mxu0 %v246
  %1630 = vmatprep.subr.mxu0 0.0
  %1631 = vmatpush1.msra.mxu0 %v247
  %1632 = vmatprep.subr.mxu0 0.0
  %1633 = vmatpush1.msra.mxu0 %v248
  %1634 = vmatprep.subr.mxu0 0.0
  %1635 = vmatpush1.msra.mxu0 %v249
  %1636 = vmatprep.subr.mxu0 0.0
  %1637 = vmatpush1.msra.mxu0 0.0
  %1638 = vmatprep.subr.mxu0 0.0
  %1639 = vmatpush1.msra.mxu0 0.0
  %1640 = vmatprep.subr.mxu0 0.0
  %1641 = vmatpush1.msra.mxu0 0.0
  %1642 = vmatprep.subr.mxu0 0.0
  %1643 = vmatpush1.msra.mxu0 0.0
  %1644 = vmatprep.subr.mxu0 0.0
  %1645 = vmatpush1.msra.mxu0 0.0
  %1646 = vmatprep.subr.mxu0 0.0
  %1647 = vmatpush1.msra.mxu0 0.0
  %1648 = vmatprep.subr.mxu0 0.0
  %1649 = vmatpush1.msra.mxu0 0.0
  %1650 = vmatprep.subr.mxu0 0.0
  %1651 = vmatpush1.msra.mxu0 0.0
  %1652 = vmatprep.subr.mxu0 0.0
  %1653 = vmatpush1.msra.mxu0 0.0
  %1654 = vmatprep.subr.mxu0 0.0
  %1655 = vmatpush1.msra.mxu0 0.0
  %1656 = vmatprep.subr.mxu0 0.0
  %1657 = vmatpush1.msra.mxu0 0.0
  %1658 = vmatprep.subr.mxu0 0.0
  %1659 = vmatpush1.msra.mxu0 0.0
  %1660 = vmatprep.subr.mxu0 0.0
  %1661 = vmatpush1.msra.mxu0 0.0
  %1662 = vmatprep.subr.mxu0 0.0
  %1663 = vmatpush1.msra.mxu0 0.0
  %1664 = vmatprep.subr.mxu0 0.0
  %1665 = vmatpush1.msra.mxu0 0.0
  %1666 = vmatprep.subr.mxu0 0.0
  %1667 = vmatpush1.msra.mxu0 0.0
  %1668 = vmatprep.subr.mxu0 0.0
  %1669 = vmatpush1.msra.mxu0 0.0
  %1670 = vmatprep.subr.mxu0 0.0
  %1671 = vmatpush1.msra.mxu0 0.0
  %1672 = vmatprep.subr.mxu0 0.0
  %1673 = vmatpush1.msra.mxu0 0.0
  %1674 = vmatprep.subr.mxu0 0.0
  %1675 = vmatpush1.msra.mxu0 0.0
  %1676 = vmatprep.subr.mxu0 0.0
  %1677 = vmatpush1.msra.mxu0 0.0
  %1678 = vmatprep.subr.mxu0 0.0
  %1679 = vmatpush1.msra.mxu0 0.0
  %1680 = vmatprep.subr.mxu0 0.0
  %1681 = vmatpush1.msra.mxu0 0.0
  %1682 = vmatprep.subr.mxu0 0.0
  %1683 = vmatpush1.msra.mxu0 0.0
  %1684 = vmatprep.subr.mxu0 0.0
  %1685 = vmatpush1.msra.mxu0 0.0
  %1686 = vmatprep.subr.mxu0 0.0
  %1687 = vmatpush1.msra.mxu0 0.0
  %1688 = vmatprep.subr.mxu0 0.0
  %1689 = vmatpush1.msra.mxu0 0.0
  %1690 = vmatprep.subr.mxu0 0.0
  %1691 = vmatpush1.msra.mxu0 0.0
  %1692 = vmatprep.mubr.f32.mxu0 0.0
  %1693 = vmatmul.mubr.f32.gmra.mrb[0].mxu0 %v1626
  %v1694 = vpop.f32.mrb[0].mxu0
  %v1695 = vadd.f32 %v256, %v1694
  %v1696 = vpop.f32.mrb[0].mxu0
  %1697 = vdwg.mxu0
  %v1698 = vadd.f32 %v1620, %v1695
  %v1699 = vxor.u32 %v1698, 2147483648
  %v1700 = vmul.f32 %v1699, 1.442695
  %v1701 = vpow.pop %v1700
  %v1702 = vadd.f32 %v1701, 1.0
  %v1703 = vrcp.pop %v1702
  %v1704 = vmul.f32 1.0, %v1703
  %1706 = vrot.lane.b32.xlu0 %v1695, 64
  %v1707 = vpop.permute.xlu0 %1706
  %v1709 = vmul.f32 %v1704, %v1707
  %1711 = vrot.lane.b32.xlu0 %v1709, 64
  %v1712 = vpop.permute.xlu0 %1711
  %v1714 = vadd.f32 %v1620, %v1712
  %v1715 = vtanh.pop %v1714
  %v1716 = vsub.f32 1.0, %v1704
  %1718 = vrot.lane.b32.xlu0 %v1715, 96
  %v1719 = vpop.permute.xlu0 %1718
  %v1721 = vmul.f32 %v1716, %v1719
  %v1722 = vmul.f32 %v1704, %v1449
  %v1723 = vadd.f32 %v1721, %v1722
  %s1724 = scalar_lea.vmem %s0, 12
  %v1725 = vld [vmem:[%s1724] sm:$0x3]
  %1726 = vmatprep.subr.mxu0 0.0
  %1727 = vmatpush1.msra.mxu0 %v48
  %1728 = vmatprep.subr.mxu0 0.0
  %1729 = vmatpush1.msra.mxu0 %v49
  %1730 = vmatprep.subr.mxu0 0.0
  %1731 = vmatpush1.msra.mxu0 %v50
  %1732 = vmatprep.subr.mxu0 0.0
  %1733 = vmatpush1.msra.mxu0 %v51
  %1734 = vmatprep.subr.mxu0 0.0
  %1735 = vmatpush1.msra.mxu0 0.0
  %1736 = vmatprep.subr.mxu0 0.0
  %1737 = vmatpush1.msra.mxu0 0.0
  %1738 = vmatprep.subr.mxu0 0.0
  %1739 = vmatpush1.msra.mxu0 0.0
  %1740 = vmatprep.subr.mxu0 0.0
  %1741 = vmatpush1.msra.mxu0 0.0
  %1742 = vmatprep.subr.mxu0 0.0
  %1743 = vmatpush1.msra.mxu0 0.0
  %1744 = vmatprep.subr.mxu0 0.0
  %1745 = vmatpush1.msra.mxu0 0.0
  %1746 = vmatprep.subr.mxu0 0.0
  %1747 = vmatpush1.msra.mxu0 0.0
  %1748 = vmatprep.subr.mxu0 0.0
  %1749 = vmatpush1.msra.mxu0 0.0
  %1750 = vmatprep.subr.mxu0 0.0
  %1751 = vmatpush1.msra.mxu0 0.0
  %1752 = vmatprep.subr.mxu0 0.0
  %1753 = vmatpush1.msra.mxu0 0.0
  %1754 = vmatprep.subr.mxu0 0.0
  %1755 = vmatpush1.msra.mxu0 0.0
  %1756 = vmatprep.subr.mxu0 0.0
  %1757 = vmatpush1.msra.mxu0 0.0
  %1758 = vmatprep.subr.mxu0 0.0
  %1759 = vmatpush1.msra.mxu0 0.0
  %1760 = vmatprep.subr.mxu0 0.0
  %1761 = vmatpush1.msra.mxu0 0.0
  %1762 = vmatprep.subr.mxu0 0.0
  %1763 = vmatpush1.msra.mxu0 0.0
  %1764 = vmatprep.subr.mxu0 0.0
  %1765 = vmatpush1.msra.mxu0 0.0
  %1766 = vmatprep.subr.mxu0 0.0
  %1767 = vmatpush1.msra.mxu0 0.0
  %1768 = vmatprep.subr.mxu0 0.0
  %1769 = vmatpush1.msra.mxu0 0.0
  %1770 = vmatprep.subr.mxu0 0.0
  %1771 = vmatpush1.msra.mxu0 0.0
  %1772 = vmatprep.subr.mxu0 0.0
  %1773 = vmatpush1.msra.mxu0 0.0
  %1774 = vmatprep.subr.mxu0 0.0
  %1775 = vmatpush1.msra.mxu0 0.0
  %1776 = vmatprep.subr.mxu0 0.0
  %1777 = vmatpush1.msra.mxu0 0.0
  %1778 = vmatprep.subr.mxu0 0.0
  %1779 = vmatpush1.msra.mxu0 0.0
  %1780 = vmatprep.subr.mxu0 0.0
  %1781 = vmatpush1.msra.mxu0 0.0
  %1782 = vmatprep.subr.mxu0 0.0
  %1783 = vmatpush1.msra.mxu0 0.0
  %1784 = vmatprep.subr.mxu0 0.0
  %1785 = vmatpush1.msra.mxu0 0.0
  %1786 = vmatprep.subr.mxu0 0.0
  %1787 = vmatpush1.msra.mxu0 0.0
  %1788 = vmatprep.subr.mxu0 0.0
  %1789 = vmatpush1.msra.mxu0 0.0
  %1790 = vmatprep.mubr.f32.mxu0 0.0
  %1791 = vmatmul.mubr.f32.gmra.mrb[0].mxu0 %v1551
  %v1792 = vpop.f32.mrb[0].mxu0
  %v1793 = vadd.f32 %v57, %v1792
  %v1794 = vpop.f32.mrb[0].mxu0
  %1795 = vdwg.mxu0
  %v1796 = vadd.f32 %v1725, %v1793
  %v1797 = vxor.u32 %v1796, 2147483648
  %v1798 = vmul.f32 %v1797, 1.442695
  %v1799 = vpow.pop %v1798
  %v1800 = vadd.f32 %v1799, 1.0
  %v1801 = vrcp.pop %v1800
  %v1802 = vmul.f32 1.0, %v1801
  %1804 = vrot.lane.b32.xlu0 %v1793, 64
  %v1805 = vpop.permute.xlu0 %1804
  %v1807 = vmul.f32 %v1802, %v1805
  %1809 = vrot.lane.b32.xlu0 %v1807, 64
  %v1810 = vpop.permute.xlu0 %1809
  %v1812 = vadd.f32 %v1725, %v1810
  %v1813 = vtanh.pop %v1812
  %v1814 = vsub.f32 1.0, %v1802
  %1816 = vrot.lane.b32.xlu0 %v1813, 96
  %v1817 = vpop.permute.xlu0 %1816
  %v1819 = vmul.f32 %v1814, %v1817
  %v1820 = vmul.f32 %v1802, %v1547
  %v1821 = vadd.f32 %v1819, %v1820
  %1823 = vrot.lane.b32.xlu0 %v1821, 96
  %v1824 = vpop.permute.xlu0 %1823
  %v1825 = vsel %vm59, %v1824, 0
  %1827 = vmatprep.subr.mxu0 0.0
  %1828 = vmatpush1.msra.mxu0 %v159
  %1829 = vmatprep.subr.mxu0 0.0
  %1830 = vmatpush1.msra.mxu0 %v160
  %1831 = vmatprep.subr.mxu0 0.0
  %1832 = vmatpush1.msra.mxu0 %v161
  %1833 = vmatprep.subr.mxu0 0.0
  %1834 = vmatpush1.msra.mxu0 %v162
  %1835 = vmatprep.subr.mxu0 0.0
  %1836 = vmatpush1.msra.mxu0 0.0
  %1837 = vmatprep.subr.mxu0 0.0
  %1838 = vmatpush1.msra.mxu0 0.0
  %1839 = vmatprep.subr.mxu0 0.0
  %1840 = vmatpush1.msra.mxu0 0.0
  %1841 = vmatprep.subr.mxu0 0.0
  %1842 = vmatpush1.msra.mxu0 0.0
  %1843 = vmatprep.subr.mxu0 0.0
  %1844 = vmatpush1.msra.mxu0 0.0
  %1845 = vmatprep.subr.mxu0 0.0
  %1846 = vmatpush1.msra.mxu0 0.0
  %1847 = vmatprep.subr.mxu0 0.0
  %1848 = vmatpush1.msra.mxu0 0.0
  %1849 = vmatprep.subr.mxu0 0.0
  %1850 = vmatpush1.msra.mxu0 0.0
  %1851 = vmatprep.subr.mxu0 0.0
  %1852 = vmatpush1.msra.mxu0 0.0
  %1853 = vmatprep.subr.mxu0 0.0
  %1854 = vmatpush1.msra.mxu0 0.0
  %1855 = vmatprep.subr.mxu0 0.0
  %1856 = vmatpush1.msra.mxu0 0.0
  %1857 = vmatprep.subr.mxu0 0.0
  %1858 = vmatpush1.msra.mxu0 0.0
  %1859 = vmatprep.subr.mxu0 0.0
  %1860 = vmatpush1.msra.mxu0 0.0
  %1861 = vmatprep.subr.mxu0 0.0
  %1862 = vmatpush1.msra.mxu0 0.0
  %1863 = vmatprep.subr.mxu0 0.0
  %1864 = vmatpush1.msra.mxu0 0.0
  %1865 = vmatprep.subr.mxu0 0.0
  %1866 = vmatpush1.msra.mxu0 0.0
  %1867 = vmatprep.subr.mxu0 0.0
  %1868 = vmatpush1.msra.mxu0 0.0
  %1869 = vmatprep.subr.mxu0 0.0
  %1870 = vmatpush1.msra.mxu0 0.0
  %1871 = vmatprep.subr.mxu0 0.0
  %1872 = vmatpush1.msra.mxu0 0.0
  %1873 = vmatprep.subr.mxu0 0.0
  %1874 = vmatpush1.msra.mxu0 0.0
  %1875 = vmatprep.subr.mxu0 0.0
  %1876 = vmatpush1.msra.mxu0 0.0
  %1877 = vmatprep.subr.mxu0 0.0
  %1878 = vmatpush1.msra.mxu0 0.0
  %1879 = vmatprep.subr.mxu0 0.0
  %1880 = vmatpush1.msra.mxu0 0.0
  %1881 = vmatprep.subr.mxu0 0.0
  %1882 = vmatpush1.msra.mxu0 0.0
  %1883 = vmatprep.subr.mxu0 0.0
  %1884 = vmatpush1.msra.mxu0 0.0
  %1885 = vmatprep.subr.mxu0 0.0
  %1886 = vmatpush1.msra.mxu0 0.0
  %1887 = vmatprep.subr.mxu0 0.0
  %1888 = vmatpush1.msra.mxu0 0.0
  %1889 = vmatprep.subr.mxu0 0.0
  %1890 = vmatpush1.msra.mxu0 0.0
  %1891 = vmatprep.mubr.f32.mxu0 0.0
  %1892 = vmatmul.mubr.f32.gmra.mrb[0].mxu0 %v1825
  %v1893 = vpop.f32.mrb[0].mxu0
  %v1894 = vadd.f32 %v168, %v1893
  %v1895 = vpop.f32.mrb[0].mxu0
  %1896 = vdwg.mxu0
  %1898 = vrot.lane.b32.xlu0 %v1723, 96
  %v1899 = vpop.permute.xlu0 %1898
  %v1900 = vsel %vm59, %v1899, 0
  %1902 = vmatprep.subr.mxu0 0.0
  %1903 = vmatpush1.msra.mxu0 %v246
  %1904 = vmatprep.subr.mxu0 0.0
  %1905 = vmatpush1.msra.mxu0 %v247
  %1906 = vmatprep.subr.mxu0 0.0
  %1907 = vmatpush1.msra.mxu0 %v248
  %1908 = vmatprep.subr.mxu0 0.0
  %1909 = vmatpush1.msra.mxu0 %v249
  %1910 = vmatprep.subr.mxu0 0.0
  %1911 = vmatpush1.msra.mxu0 0.0
  %1912 = vmatprep.subr.mxu0 0.0
  %1913 = vmatpush1.msra.mxu0 0.0
  %1914 = vmatprep.subr.mxu0 0.0
  %1915 = vmatpush1.msra.mxu0 0.0
  %1916 = vmatprep.subr.mxu0 0.0
  %1917 = vmatpush1.msra.mxu0 0.0
  %1918 = vmatprep.subr.mxu0 0.0
  %1919 = vmatpush1.msra.mxu0 0.0
  %1920 = vmatprep.subr.mxu0 0.0
  %1921 = vmatpush1.msra.mxu0 0.0
  %1922 = vmatprep.subr.mxu0 0.0
  %1923 = vmatpush1.msra.mxu0 0.0
  %1924 = vmatprep.subr.mxu0 0.0
  %1925 = vmatpush1.msra.mxu0 0.0
  %1926 = vmatprep.subr.mxu0 0.0
  %1927 = vmatpush1.msra.mxu0 0.0
  %1928 = vmatprep.subr.mxu0 0.0
  %1929 = vmatpush1.msra.mxu0 0.0
  %1930 = vmatprep.subr.mxu0 0.0
  %1931 = vmatpush1.msra.mxu0 0.0
  %1932 = vmatprep.subr.mxu0 0.0
  %1933 = vmatpush1.msra.mxu0 0.0
  %1934 = vmatprep.subr.mxu0 0.0
  %1935 = vmatpush1.msra.mxu0 0.0
  %1936 = vmatprep.subr.mxu0 0.0
  %1937 = vmatpush1.msra.mxu0 0.0
  %1938 = vmatprep.subr.mxu0 0.0
  %1939 = vmatpush1.msra.mxu0 0.0
  %1940 = vmatprep.subr.mxu0 0.0
  %1941 = vmatpush1.msra.mxu0 0.0
  %1942 = vmatprep.subr.mxu0 0.0
  %1943 = vmatpush1.msra.mxu0 0.0
  %1944 = vmatprep.subr.mxu0 0.0
  %1945 = vmatpush1.msra.mxu0 0.0
  %1946 = vmatprep.subr.mxu0 0.0
  %1947 = vmatpush1.msra.mxu0 0.0
  %1948 = vmatprep.subr.mxu0 0.0
  %1949 = vmatpush1.msra.mxu0 0.0
  %1950 = vmatprep.subr.mxu0 0.0
  %1951 = vmatpush1.msra.mxu0 0.0
  %1952 = vmatprep.subr.mxu0 0.0
  %1953 = vmatpush1.msra.mxu0 0.0
  %1954 = vmatprep.subr.mxu0 0.0
  %1955 = vmatpush1.msra.mxu0 0.0
  %1956 = vmatprep.subr.mxu0 0.0
  %1957 = vmatpush1.msra.mxu0 0.0
  %1958 = vmatprep.subr.mxu0 0.0
  %1959 = vmatpush1.msra.mxu0 0.0
  %1960 = vmatprep.subr.mxu0 0.0
  %1961 = vmatpush1.msra.mxu0 0.0
  %1962 = vmatprep.subr.mxu0 0.0
  %1963 = vmatpush1.msra.mxu0 0.0
  %1964 = vmatprep.subr.mxu0 0.0
  %1965 = vmatpush1.msra.mxu0 0.0
  %1966 = vmatprep.mubr.f32.mxu0 0.0
  %1967 = vmatmul.mubr.f32.gmra.mrb[0].mxu0 %v1900
  %v1968 = vpop.f32.mrb[0].mxu0
  %v1969 = vadd.f32 %v256, %v1968
  %v1970 = vpop.f32.mrb[0].mxu0
  %1971 = vdwg.mxu0
  %v1972 = vadd.f32 %v1894, %v1969
  %v1973 = vxor.u32 %v1972, 2147483648
  %v1974 = vmul.f32 %v1973, 1.442695
  %v1975 = vpow.pop %v1974
  %v1976 = vadd.f32 %v1975, 1.0
  %v1977 = vrcp.pop %v1976
  %v1978 = vmul.f32 1.0, %v1977
  %1980 = vrot.lane.b32.xlu0 %v1969, 64
  %v1981 = vpop.permute.xlu0 %1980
  %v1983 = vmul.f32 %v1978, %v1981
  %1985 = vrot.lane.b32.xlu0 %v1983, 64
  %v1986 = vpop.permute.xlu0 %1985
  %v1988 = vadd.f32 %v1894, %v1986
  %v1989 = vtanh.pop %v1988
  %v1990 = vsub.f32 1.0, %v1978
  %1992 = vrot.lane.b32.xlu0 %v1989, 96
  %v1993 = vpop.permute.xlu0 %1992
  %v1995 = vmul.f32 %v1990, %v1993
  %v1996 = vmul.f32 %v1978, %v1723
  %v1997 = vadd.f32 %v1995, %v1996
  %s1998 = scalar_lea.vmem %s0, 14
  %v1999 = vld [vmem:[%s1998] sm:$0x3]
  %2000 = vmatprep.subr.mxu0 0.0
  %2001 = vmatpush1.msra.mxu0 %v48
  %2002 = vmatprep.subr.mxu0 0.0
  %2003 = vmatpush1.msra.mxu0 %v49
  %2004 = vmatprep.subr.mxu0 0.0
  %2005 = vmatpush1.msra.mxu0 %v50
  %2006 = vmatprep.subr.mxu0 0.0
  %2007 = vmatpush1.msra.mxu0 %v51
  %2008 = vmatprep.subr.mxu0 0.0
  %2009 = vmatpush1.msra.mxu0 0.0
  %2010 = vmatprep.subr.mxu0 0.0
  %2011 = vmatpush1.msra.mxu0 0.0
  %2012 = vmatprep.subr.mxu0 0.0
  %2013 = vmatpush1.msra.mxu0 0.0
  %2014 = vmatprep.subr.mxu0 0.0
  %2015 = vmatpush1.msra.mxu0 0.0
  %2016 = vmatprep.subr.mxu0 0.0
  %2017 = vmatpush1.msra.mxu0 0.0
  %2018 = vmatprep.subr.mxu0 0.0
  %2019 = vmatpush1.msra.mxu0 0.0
  %2020 = vmatprep.subr.mxu0 0.0
  %2021 = vmatpush1.msra.mxu0 0.0
  %2022 = vmatprep.subr.mxu0 0.0
  %2023 = vmatpush1.msra.mxu0 0.0
  %2024 = vmatprep.subr.mxu0 0.0
  %2025 = vmatpush1.msra.mxu0 0.0
  %2026 = vmatprep.subr.mxu0 0.0
  %2027 = vmatpush1.msra.mxu0 0.0
  %2028 = vmatprep.subr.mxu0 0.0
  %2029 = vmatpush1.msra.mxu0 0.0
  %2030 = vmatprep.subr.mxu0 0.0
  %2031 = vmatpush1.msra.mxu0 0.0
  %2032 = vmatprep.subr.mxu0 0.0
  %2033 = vmatpush1.msra.mxu0 0.0
  %2034 = vmatprep.subr.mxu0 0.0
  %2035 = vmatpush1.msra.mxu0 0.0
  %2036 = vmatprep.subr.mxu0 0.0
  %2037 = vmatpush1.msra.mxu0 0.0
  %2038 = vmatprep.subr.mxu0 0.0
  %2039 = vmatpush1.msra.mxu0 0.0
  %2040 = vmatprep.subr.mxu0 0.0
  %2041 = vmatpush1.msra.mxu0 0.0
  %2042 = vmatprep.subr.mxu0 0.0
  %2043 = vmatpush1.msra.mxu0 0.0
  %2044 = vmatprep.subr.mxu0 0.0
  %2045 = vmatpush1.msra.mxu0 0.0
  %2046 = vmatprep.subr.mxu0 0.0
  %2047 = vmatpush1.msra.mxu0 0.0
  %2048 = vmatprep.subr.mxu0 0.0
  %2049 = vmatpush1.msra.mxu0 0.0
  %2050 = vmatprep.subr.mxu0 0.0
  %2051 = vmatpush1.msra.mxu0 0.0
  %2052 = vmatprep.subr.mxu0 0.0
  %2053 = vmatpush1.msra.mxu0 0.0
  %2054 = vmatprep.subr.mxu0 0.0
  %2055 = vmatpush1.msra.mxu0 0.0
  %2056 = vmatprep.subr.mxu0 0.0
  %2057 = vmatpush1.msra.mxu0 0.0
  %2058 = vmatprep.subr.mxu0 0.0
  %2059 = vmatpush1.msra.mxu0 0.0
  %2060 = vmatprep.subr.mxu0 0.0
  %2061 = vmatpush1.msra.mxu0 0.0
  %2062 = vmatprep.subr.mxu0 0.0
  %2063 = vmatpush1.msra.mxu0 0.0
  %2064 = vmatprep.mubr.f32.mxu0 0.0
  %2065 = vmatmul.mubr.f32.gmra.mrb[0].mxu0 %v1825
  %v2066 = vpop.f32.mrb[0].mxu0
  %v2067 = vadd.f32 %v57, %v2066
  %v2068 = vpop.f32.mrb[0].mxu0
  %2069 = vdwg.mxu0
  %v2070 = vadd.f32 %v1999, %v2067
  %v2071 = vxor.u32 %v2070, 2147483648
  %v2072 = vmul.f32 %v2071, 1.442695
  %v2073 = vpow.pop %v2072
  %v2074 = vadd.f32 %v2073, 1.0
  %v2075 = vrcp.pop %v2074
  %v2076 = vmul.f32 1.0, %v2075
  %2078 = vrot.lane.b32.xlu0 %v2067, 64
  %v2079 = vpop.permute.xlu0 %2078
  %v2081 = vmul.f32 %v2076, %v2079
  %2083 = vrot.lane.b32.xlu0 %v2081, 64
  %v2084 = vpop.permute.xlu0 %2083
  %v2086 = vadd.f32 %v1999, %v2084
  %v2087 = vtanh.pop %v2086
  %v2088 = vsub.f32 1.0, %v2076
  %2090 = vrot.lane.b32.xlu0 %v2087, 96
  %v2091 = vpop.permute.xlu0 %2090
  %v2093 = vmul.f32 %v2088, %v2091
  %v2094 = vmul.f32 %v2076, %v1821
  %v2095 = vadd.f32 %v2093, %v2094
  %2097 = vrot.lane.b32.xlu0 %v2095, 96
  %v2098 = vpop.permute.xlu0 %2097
  %v2099 = vsel %vm59, %v2098, 0
  %2101 = vmatprep.subr.mxu0 0.0
  %2102 = vmatpush1.msra.mxu0 %v159
  %2103 = vmatprep.subr.mxu0 0.0
  %2104 = vmatpush1.msra.mxu0 %v160
  %2105 = vmatprep.subr.mxu0 0.0
  %2106 = vmatpush1.msra.mxu0 %v161
  %2107 = vmatprep.subr.mxu0 0.0
  %2108 = vmatpush1.msra.mxu0 %v162
  %2109 = vmatprep.subr.mxu0 0.0
  %2110 = vmatpush1.msra.mxu0 0.0
  %2111 = vmatprep.subr.mxu0 0.0
  %2112 = vmatpush1.msra.mxu0 0.0
  %2113 = vmatprep.subr.mxu0 0.0
  %2114 = vmatpush1.msra.mxu0 0.0
  %2115 = vmatprep.subr.mxu0 0.0
  %2116 = vmatpush1.msra.mxu0 0.0
  %2117 = vmatprep.subr.mxu0 0.0
  %2118 = vmatpush1.msra.mxu0 0.0
  %2119 = vmatprep.subr.mxu0 0.0
  %2120 = vmatpush1.msra.mxu0 0.0
  %2121 = vmatprep.subr.mxu0 0.0
  %2122 = vmatpush1.msra.mxu0 0.0
  %2123 = vmatprep.subr.mxu0 0.0
  %2124 = vmatpush1.msra.mxu0 0.0
  %2125 = vmatprep.subr.mxu0 0.0
  %2126 = vmatpush1.msra.mxu0 0.0
  %2127 = vmatprep.subr.mxu0 0.0
  %2128 = vmatpush1.msra.mxu0 0.0
  %2129 = vmatprep.subr.mxu0 0.0
  %2130 = vmatpush1.msra.mxu0 0.0
  %2131 = vmatprep.subr.mxu0 0.0
  %2132 = vmatpush1.msra.mxu0 0.0
  %2133 = vmatprep.subr.mxu0 0.0
  %2134 = vmatpush1.msra.mxu0 0.0
  %2135 = vmatprep.subr.mxu0 0.0
  %2136 = vmatpush1.msra.mxu0 0.0
  %2137 = vmatprep.subr.mxu0 0.0
  %2138 = vmatpush1.msra.mxu0 0.0
  %2139 = vmatprep.subr.mxu0 0.0
  %2140 = vmatpush1.msra.mxu0 0.0
  %2141 = vmatprep.subr.mxu0 0.0
  %2142 = vmatpush1.msra.mxu0 0.0
  %2143 = vmatprep.subr.mxu0 0.0
  %2144 = vmatpush1.msra.mxu0 0.0
  %2145 = vmatprep.subr.mxu0 0.0
  %2146 = vmatpush1.msra.mxu0 0.0
  %2147 = vmatprep.subr.mxu0 0.0
  %2148 = vmatpush1.msra.mxu0 0.0
  %2149 = vmatprep.subr.mxu0 0.0
  %2150 = vmatpush1.msra.mxu0 0.0
  %2151 = vmatprep.subr.mxu0 0.0
  %2152 = vmatpush1.msra.mxu0 0.0
  %2153 = vmatprep.subr.mxu0 0.0
  %2154 = vmatpush1.msra.mxu0 0.0
  %2155 = vmatprep.subr.mxu0 0.0
  %2156 = vmatpush1.msra.mxu0 0.0
  %2157 = vmatprep.subr.mxu0 0.0
  %2158 = vmatpush1.msra.mxu0 0.0
  %2159 = vmatprep.subr.mxu0 0.0
  %2160 = vmatpush1.msra.mxu0 0.0
  %2161 = vmatprep.subr.mxu0 0.0
  %2162 = vmatpush1.msra.mxu0 0.0
  %2163 = vmatprep.subr.mxu0 0.0
  %2164 = vmatpush1.msra.mxu0 0.0
  %2165 = vmatprep.mubr.f32.mxu0 0.0
  %2166 = vmatmul.mubr.f32.gmra.mrb[0].mxu0 %v2099
  %v2167 = vpop.f32.mrb[0].mxu0
  %v2168 = vadd.f32 %v168, %v2167
  %v2169 = vpop.f32.mrb[0].mxu0
  %2170 = vdwg.mxu0
  %2172 = vrot.lane.b32.xlu0 %v1997, 96
  %v2173 = vpop.permute.xlu0 %2172
  %v2174 = vsel %vm59, %v2173, 0
  %2176 = vmatprep.subr.mxu0 0.0
  %2177 = vmatpush1.msra.mxu0 %v246
  %2178 = vmatprep.subr.mxu0 0.0
  %2179 = vmatpush1.msra.mxu0 %v247
  %2180 = vmatprep.subr.mxu0 0.0
  %2181 = vmatpush1.msra.mxu0 %v248
  %2182 = vmatprep.subr.mxu0 0.0
  %2183 = vmatpush1.msra.mxu0 %v249
  %2184 = vmatprep.subr.mxu0 0.0
  %2185 = vmatpush1.msra.mxu0 0.0
  %2186 = vmatprep.subr.mxu0 0.0
  %2187 = vmatpush1.msra.mxu0 0.0
  %2188 = vmatprep.subr.mxu0 0.0
  %2189 = vmatpush1.msra.mxu0 0.0
  %2190 = vmatprep.subr.mxu0 0.0
  %2191 = vmatpush1.msra.mxu0 0.0
  %2192 = vmatprep.subr.mxu0 0.0
  %2193 = vmatpush1.msra.mxu0 0.0
  %2194 = vmatprep.subr.mxu0 0.0
  %2195 = vmatpush1.msra.mxu0 0.0
  %2196 = vmatprep.subr.mxu0 0.0
  %2197 = vmatpush1.msra.mxu0 0.0
  %2198 = vmatprep.subr.mxu0 0.0
  %2199 = vmatpush1.msra.mxu0 0.0
  %2200 = vmatprep.subr.mxu0 0.0
  %2201 = vmatpush1.msra.mxu0 0.0
  %2202 = vmatprep.subr.mxu0 0.0
  %2203 = vmatpush1.msra.mxu0 0.0
  %2204 = vmatprep.subr.mxu0 0.0
  %2205 = vmatpush1.msra.mxu0 0.0
  %2206 = vmatprep.subr.mxu0 0.0
  %2207 = vmatpush1.msra.mxu0 0.0
  %2208 = vmatprep.subr.mxu0 0.0
  %2209 = vmatpush1.msra.mxu0 0.0
  %2210 = vmatprep.subr.mxu0 0.0
  %2211 = vmatpush1.msra.mxu0 0.0
  %2212 = vmatprep.subr.mxu0 0.0
  %2213 = vmatpush1.msra.mxu0 0.0
  %2214 = vmatprep.subr.mxu0 0.0
  %2215 = vmatpush1.msra.mxu0 0.0
  %2216 = vmatprep.subr.mxu0 0.0
  %2217 = vmatpush1.msra.mxu0 0.0
  %2218 = vmatprep.subr.mxu0 0.0
  %2219 = vmatpush1.msra.mxu0 0.0
  %2220 = vmatprep.subr.mxu0 0.0
  %2221 = vmatpush1.msra.mxu0 0.0
  %2222 = vmatprep.subr.mxu0 0.0
  %2223 = vmatpush1.msra.mxu0 0.0
  %2224 = vmatprep.subr.mxu0 0.0
  %2225 = vmatpush1.msra.mxu0 0.0
  %2226 = vmatprep.subr.mxu0 0.0
  %2227 = vmatpush1.msra.mxu0 0.0
  %2228 = vmatprep.subr.mxu0 0.0
  %2229 = vmatpush1.msra.mxu0 0.0
  %2230 = vmatprep.subr.mxu0 0.0
  %2231 = vmatpush1.msra.mxu0 0.0
  %2232 = vmatprep.subr.mxu0 0.0
  %2233 = vmatpush1.msra.mxu0 0.0
  %2234 = vmatprep.subr.mxu0 0.0
  %2235 = vmatpush1.msra.mxu0 0.0
  %2236 = vmatprep.subr.mxu0 0.0
  %2237 = vmatpush1.msra.mxu0 0.0
  %2238 = vmatprep.subr.mxu0 0.0
  %2239 = vmatpush1.msra.mxu0 0.0
  %2240 = vmatprep.mubr.f32.mxu0 0.0
  %2241 = vmatmul.mubr.f32.gmra.mrb[0].mxu0 %v2174
  %v2242 = vpop.f32.mrb[0].mxu0
  %v2243 = vadd.f32 %v256, %v2242
  %v2244 = vpop.f32.mrb[0].mxu0
  %2245 = vdwg.mxu0
  %v2246 = vadd.f32 %v2168, %v2243
  %v2247 = vxor.u32 %v2246, 2147483648
  %v2248 = vmul.f32 %v2247, 1.442695
  %v2249 = vpow.pop %v2248
  %v2250 = vadd.f32 %v2249, 1.0
  %v2251 = vrcp.pop %v2250
  %v2252 = vmul.f32 1.0, %v2251
  %2254 = vrot.lane.b32.xlu0 %v2243, 64
  %v2255 = vpop.permute.xlu0 %2254
  %v2257 = vmul.f32 %v2252, %v2255
  %2259 = vrot.lane.b32.xlu0 %v2257, 64
  %v2260 = vpop.permute.xlu0 %2259
  %v2262 = vadd.f32 %v2168, %v2260
  %v2263 = vtanh.pop %v2262
  %v2264 = vsub.f32 1.0, %v2252
  %2266 = vrot.lane.b32.xlu0 %v2263, 96
  %v2267 = vpop.permute.xlu0 %2266
  %v2269 = vmul.f32 %v2264, %v2267
  %v2270 = vmul.f32 %v2252, %v1997
  %v2271 = vadd.f32 %v2269, %v2270
  %v2272 = vld [vmem:[%s1] sm:$0x3]
  %v2273 = vld [vmem:[%s6] sm:$0xf]
  %v2274 = vld [vmem:[%s7] sm:$0x1]
  %v2276 = vlaneseq
  %v2277 = vshrl.u32 %v2276, 7
  %v2278 = vsub.s32 0, %v2277
  %v2279 = vrot.slane %v2274, %v2278
  %vm2281 = vcmask 31744
  %v2283 = vsel %vm2281, %v2272, 0
  %vm2285 = vcmask 1043456
  %v2287 = vsel %vm2285, %v2273, 0
  %2289 = vmatprep.subr.mxu0 0.0
  %2290 = vmatpush1.msra.mxu0 %v2287
  %2291 = vmatprep.subr.mxu0 0.0
  %2292 = vmatpush1.msra.mxu0 0.0
  %2293 = vmatprep.subr.mxu0 0.0
  %2294 = vmatpush1.msra.mxu0 0.0
  %2295 = vmatprep.subr.mxu0 0.0
  %2296 = vmatpush1.msra.mxu0 0.0
  %2297 = vmatprep.subr.mxu0 0.0
  %2298 = vmatpush1.msra.mxu0 0.0
  %2299 = vmatprep.subr.mxu0 0.0
  %2300 = vmatpush1.msra.mxu0 0.0
  %2301 = vmatprep.subr.mxu0 0.0
  %2302 = vmatpush1.msra.mxu0 0.0
  %2303 = vmatprep.subr.mxu0 0.0
  %2304 = vmatpush1.msra.mxu0 0.0
  %2305 = vmatprep.subr.mxu0 0.0
  %2306 = vmatpush1.msra.mxu0 0.0
  %2307 = vmatprep.subr.mxu0 0.0
  %2308 = vmatpush1.msra.mxu0 0.0
  %2309 = vmatprep.subr.mxu0 0.0
  %2310 = vmatpush1.msra.mxu0 0.0
  %2311 = vmatprep.subr.mxu0 0.0
  %2312 = vmatpush1.msra.mxu0 0.0
  %2313 = vmatprep.subr.mxu0 0.0
  %2314 = vmatpush1.msra.mxu0 0.0
  %2315 = vmatprep.subr.mxu0 0.0
  %2316 = vmatpush1.msra.mxu0 0.0
  %2317 = vmatprep.subr.mxu0 0.0
  %2318 = vmatpush1.msra.mxu0 0.0
  %2319 = vmatprep.subr.mxu0 0.0
  %2320 = vmatpush1.msra.mxu0 0.0
  %2321 = vmatprep.subr.mxu0 0.0
  %2322 = vmatpush1.msra.mxu0 0.0
  %2323 = vmatprep.subr.mxu0 0.0
  %2324 = vmatpush1.msra.mxu0 0.0
  %2325 = vmatprep.subr.mxu0 0.0
  %2326 = vmatpush1.msra.mxu0 0.0
  %2327 = vmatprep.subr.mxu0 0.0
  %2328 = vmatpush1.msra.mxu0 0.0
  %2329 = vmatprep.subr.mxu0 0.0
  %2330 = vmatpush1.msra.mxu0 0.0
  %2331 = vmatprep.subr.mxu0 0.0
  %2332 = vmatpush1.msra.mxu0 0.0
  %2333 = vmatprep.subr.mxu0 0.0
  %2334 = vmatpush1.msra.mxu0 0.0
  %2335 = vmatprep.subr.mxu0 0.0
  %2336 = vmatpush1.msra.mxu0 0.0
  %2337 = vmatprep.subr.mxu0 0.0
  %2338 = vmatpush1.msra.mxu0 0.0
  %2339 = vmatprep.subr.mxu0 0.0
  %2340 = vmatpush1.msra.mxu0 0.0
  %2341 = vmatprep.subr.mxu0 0.0
  %2342 = vmatpush1.msra.mxu0 0.0
  %2343 = vmatprep.subr.mxu0 0.0
  %2344 = vmatpush1.msra.mxu0 0.0
  %2345 = vmatprep.subr.mxu0 0.0
  %2346 = vmatpush1.msra.mxu0 0.0
  %2347 = vmatprep.subr.mxu0 0.0
  %2348 = vmatpush1.msra.mxu0 0.0
  %2349 = vmatprep.subr.mxu0 0.0
  %2350 = vmatpush1.msra.mxu0 0.0
  %2351 = vmatprep.subr.mxu0 0.0
  %2352 = vmatpush1.msra.mxu0 0.0
  %2353 = vmatprep.mubr.f32.mxu0 0.0
  %2354 = vmatmul.mubr.f32.gmra.mrb[0].mxu0 %v2283
  %v2355 = vpop.f32.mrb[0].mxu0
  %v2356 = vadd.f32 %v2279, %v2355
  %v2357 = vpop.f32.mrb[0].mxu0
  %2358 = vdwg.mxu0
  %v2359 = vld [vmem:[%s8] sm:$0xff]
  %v2360 = vld [vmem:[%s8 + $0x8] sm:$0xff]
  %v2361 = vld [vmem:[%s8 + $0x10] sm:$0xff]
  %v2362 = vld [vmem:[%s8 + $0x18] sm:$0xff]
  %v2363 = vld [vmem:[%s9] sm:$0x1]
  %v2365 = vlaneseq
  %v2366 = vshrl.u32 %v2365, 7
  %v2367 = vsub.s32 0, %v2366
  %v2368 = vrot.slane %v2363, %v2367
  %2370 = vmatprep.subr.mxu0 0.0
  %2371 = vmatpush1.msra.mxu0 %v2359
  %2372 = vmatprep.subr.mxu0 0.0
  %2373 = vmatpush1.msra.mxu0 %v2360
  %2374 = vmatprep.subr.mxu0 0.0
  %2375 = vmatpush1.msra.mxu0 %v2361
  %2376 = vmatprep.subr.mxu0 0.0
  %2377 = vmatpush1.msra.mxu0 %v2362
  %2378 = vmatprep.subr.mxu0 0.0
  %2379 = vmatpush1.msra.mxu0 0.0
  %2380 = vmatprep.subr.mxu0 0.0
  %2381 = vmatpush1.msra.mxu0 0.0
  %2382 = vmatprep.subr.mxu0 0.0
  %2383 = vmatpush1.msra.mxu0 0.0
  %2384 = vmatprep.subr.mxu0 0.0
  %2385 = vmatpush1.msra.mxu0 0.0
  %2386 = vmatprep.subr.mxu0 0.0
  %2387 = vmatpush1.msra.mxu0 0.0
  %2388 = vmatprep.subr.mxu0 0.0
  %2389 = vmatpush1.msra.mxu0 0.0
  %2390 = vmatprep.subr.mxu0 0.0
  %2391 = vmatpush1.msra.mxu0 0.0
  %2392 = vmatprep.subr.mxu0 0.0
  %2393 = vmatpush1.msra.mxu0 0.0
  %2394 = vmatprep.subr.mxu0 0.0
  %2395 = vmatpush1.msra.mxu0 0.0
  %2396 = vmatprep.subr.mxu0 0.0
  %2397 = vmatpush1.msra.mxu0 0.0
  %2398 = vmatprep.subr.mxu0 0.0
  %2399 = vmatpush1.msra.mxu0 0.0
  %2400 = vmatprep.subr.mxu0 0.0
  %2401 = vmatpush1.msra.mxu0 0.0
  %2402 = vmatprep.subr.mxu0 0.0
  %2403 = vmatpush1.msra.mxu0 0.0
  %2404 = vmatprep.subr.mxu0 0.0
  %2405 = vmatpush1.msra.mxu0 0.0
  %2406 = vmatprep.subr.mxu0 0.0
  %2407 = vmatpush1.msra.mxu0 0.0
  %2408 = vmatprep.subr.mxu0 0.0
  %2409 = vmatpush1.msra.mxu0 0.0
  %2410 = vmatprep.subr.mxu0 0.0
  %2411 = vmatpush1.msra.mxu0 0.0
  %2412 = vmatprep.subr.mxu0 0.0
  %2413 = vmatpush1.msra.mxu0 0.0
  %2414 = vmatprep.subr.mxu0 0.0
  %2415 = vmatpush1.msra.mxu0 0.0
  %2416 = vmatprep.subr.mxu0 0.0
  %2417 = vmatpush1.msra.mxu0 0.0
  %2418 = vmatprep.subr.mxu0 0.0
  %2419 = vmatpush1.msra.mxu0 0.0
  %2420 = vmatprep.subr.mxu0 0.0
  %2421 = vmatpush1.msra.mxu0 0.0
  %2422 = vmatprep.subr.mxu0 0.0
  %2423 = vmatpush1.msra.mxu0 0.0
  %2424 = vmatprep.subr.mxu0 0.0
  %2425 = vmatpush1.msra.mxu0 0.0
  %2426 = vmatprep.subr.mxu0 0.0
  %2427 = vmatpush1.msra.mxu0 0.0
  %2428 = vmatprep.subr.mxu0 0.0
  %2429 = vmatpush1.msra.mxu0 0.0
  %2430 = vmatprep.subr.mxu0 0.0
  %2431 = vmatpush1.msra.mxu0 0.0
  %2432 = vmatprep.subr.mxu0 0.0
  %2433 = vmatpush1.msra.mxu0 0.0
  %2434 = vmatprep.mubr.f32.mxu0 0.0
  %2435 = vmatmul.mubr.f32.gmra.mrb[0].mxu0 %v2099
  %v2436 = vpop.f32.mrb[0].mxu0
  %v2437 = vadd.f32 %v2368, %v2436
  %v2438 = vpop.f32.mrb[0].mxu0
  %2439 = vdwg.mxu0
  %v2440 = vadd.f32 %v2356, %v2437
  %v2441 = vxor.u32 %v2440, 2147483648
  %v2442 = vmul.f32 %v2441, 1.442695
  %v2443 = vpow.pop %v2442
  %v2444 = vadd.f32 %v2443, 1.0
  %v2445 = vrcp.pop %v2444
  %v2446 = vmul.f32 1.0, %v2445
  %2448 = vrot.lane.b32.xlu0 %v2437, 64
  %v2449 = vpop.permute.xlu0 %2448
  %v2451 = vmul.f32 %v2446, %v2449
  %2453 = vrot.lane.b32.xlu0 %v2451, 64
  %v2454 = vpop.permute.xlu0 %2453
  %v2456 = vadd.f32 %v2356, %v2454
  %v2457 = vtanh.pop %v2456
  %v2458 = vsub.f32 1.0, %v2446
  %2460 = vrot.lane.b32.xlu0 %v2457, 96
  %v2461 = vpop.permute.xlu0 %2460
  %v2463 = vmul.f32 %v2458, %v2461
  %v2464 = vmul.f32 %v2446, %v2095
  %v2465 = vadd.f32 %v2463, %v2464
  %v2466 = vld [vmem:[%s10] sm:$0xff]
  %v2467 = vld [vmem:[%s10 + $0x8] sm:$0xff]
  %v2468 = vld [vmem:[%s10 + $0x10] sm:$0xff]
  %v2469 = vld [vmem:[%s10 + $0x18] sm:$0xff]
  %v2470 = vld [vmem:[%s11] sm:$0x1]
  %v2472 = vlaneseq
  %v2473 = vshrl.u32 %v2472, 7
  %v2474 = vsub.s32 0, %v2473
  %v2475 = vrot.slane %v2470, %v2474
  %2478 = vrot.lane.b32.xlu0 %v2465, 96
  %v2479 = vpop.permute.xlu0 %2478
  %v2480 = vsel %vm59, %v2479, 0
  %2482 = vmatprep.subr.mxu0 0.0
  %2483 = vmatpush1.msra.mxu0 %v2466
  %2484 = vmatprep.subr.mxu0 0.0
  %2485 = vmatpush1.msra.mxu0 %v2467
  %2486 = vmatprep.subr.mxu0 0.0
  %2487 = vmatpush1.msra.mxu0 %v2468
  %2488 = vmatprep.subr.mxu0 0.0
  %2489 = vmatpush1.msra.mxu0 %v2469
  %2490 = vmatprep.subr.mxu0 0.0
  %2491 = vmatpush1.msra.mxu0 0.0
  %2492 = vmatprep.subr.mxu0 0.0
  %2493 = vmatpush1.msra.mxu0 0.0
  %2494 = vmatprep.subr.mxu0 0.0
  %2495 = vmatpush1.msra.mxu0 0.0
  %2496 = vmatprep.subr.mxu0 0.0
  %2497 = vmatpush1.msra.mxu0 0.0
  %2498 = vmatprep.subr.mxu0 0.0
  %2499 = vmatpush1.msra.mxu0 0.0
  %2500 = vmatprep.subr.mxu0 0.0
  %2501 = vmatpush1.msra.mxu0 0.0
  %2502 = vmatprep.subr.mxu0 0.0
  %2503 = vmatpush1.msra.mxu0 0.0
  %2504 = vmatprep.subr.mxu0 0.0
  %2505 = vmatpush1.msra.mxu0 0.0
  %2506 = vmatprep.subr.mxu0 0.0
  %2507 = vmatpush1.msra.mxu0 0.0
  %2508 = vmatprep.subr.mxu0 0.0
  %2509 = vmatpush1.msra.mxu0 0.0
  %2510 = vmatprep.subr.mxu0 0.0
  %2511 = vmatpush1.msra.mxu0 0.0
  %2512 = vmatprep.subr.mxu0 0.0
  %2513 = vmatpush1.msra.mxu0 0.0
  %2514 = vmatprep.subr.mxu0 0.0
  %2515 = vmatpush1.msra.mxu0 0.0
  %2516 = vmatprep.subr.mxu0 0.0
  %2517 = vmatpush1.msra.mxu0 0.0
  %2518 = vmatprep.subr.mxu0 0.0
  %2519 = vmatpush1.msra.mxu0 0.0
  %2520 = vmatprep.subr.mxu0 0.0
  %2521 = vmatpush1.msra.mxu0 0.0
  %2522 = vmatprep.subr.mxu0 0.0
  %2523 = vmatpush1.msra.mxu0 0.0
  %2524 = vmatprep.subr.mxu0 0.0
  %2525 = vmatpush1.msra.mxu0 0.0
  %2526 = vmatprep.subr.mxu0 0.0
  %2527 = vmatpush1.msra.mxu0 0.0
  %2528 = vmatprep.subr.mxu0 0.0
  %2529 = vmatpush1.msra.mxu0 0.0
  %2530 = vmatprep.subr.mxu0 0.0
  %2531 = vmatpush1.msra.mxu0 0.0
  %2532 = vmatprep.subr.mxu0 0.0
  %2533 = vmatpush1.msra.mxu0 0.0
  %2534 = vmatprep.subr.mxu0 0.0
  %2535 = vmatpush1.msra.mxu0 0.0
  %2536 = vmatprep.subr.mxu0 0.0
  %2537 = vmatpush1.msra.mxu0 0.0
  %2538 = vmatprep.subr.mxu0 0.0
  %2539 = vmatpush1.msra.mxu0 0.0
  %2540 = vmatprep.subr.mxu0 0.0
  %2541 = vmatpush1.msra.mxu0 0.0
  %2542 = vmatprep.subr.mxu0 0.0
  %2543 = vmatpush1.msra.mxu0 0.0
  %2544 = vmatprep.subr.mxu0 0.0
  %2545 = vmatpush1.msra.mxu0 0.0
  %2546 = vmatprep.mubr.f32.mxu0 0.0
  %2547 = vmatmul.mubr.f32.gmra.mrb[0].mxu0 %v2480
  %v2548 = vpop.f32.mrb[0].mxu0
  %v2549 = vadd.f32 %v2475, %v2548
  %v2550 = vpop.f32.mrb[0].mxu0
  %2551 = vdwg.mxu0
  %s2552 = scalar_lea.vmem %s8, 32
  %v2553 = vld [vmem:[%s2552] sm:$0xff]
  %v2554 = vld [vmem:[%s2552 + $0x8] sm:$0xff]
  %v2555 = vld [vmem:[%s2552 + $0x10] sm:$0xff]
  %v2556 = vld [vmem:[%s2552 + $0x18] sm:$0xff]
  %s2557 = scalar_lea.vmem %s9, 1
  %v2558 = vld [vmem:[%s2557] sm:$0x1]
  %v2560 = vlaneseq
  %v2561 = vshrl.u32 %v2560, 7
  %v2562 = vsub.s32 0, %v2561
  %v2563 = vrot.slane %v2558, %v2562
  %2566 = vrot.lane.b32.xlu0 %v2271, 96
  %v2567 = vpop.permute.xlu0 %2566
  %v2568 = vsel %vm59, %v2567, 0
  %2570 = vmatprep.subr.mxu0 0.0
  %2571 = vmatpush1.msra.mxu0 %v2553
  %2572 = vmatprep.subr.mxu0 0.0
  %2573 = vmatpush1.msra.mxu0 %v2554
  %2574 = vmatprep.subr.mxu0 0.0
  %2575 = vmatpush1.msra.mxu0 %v2555
  %2576 = vmatprep.subr.mxu0 0.0
  %2577 = vmatpush1.msra.mxu0 %v2556
  %2578 = vmatprep.subr.mxu0 0.0
  %2579 = vmatpush1.msra.mxu0 0.0
  %2580 = vmatprep.subr.mxu0 0.0
  %2581 = vmatpush1.msra.mxu0 0.0
  %2582 = vmatprep.subr.mxu0 0.0
  %2583 = vmatpush1.msra.mxu0 0.0
  %2584 = vmatprep.subr.mxu0 0.0
  %2585 = vmatpush1.msra.mxu0 0.0
  %2586 = vmatprep.subr.mxu0 0.0
  %2587 = vmatpush1.msra.mxu0 0.0
  %2588 = vmatprep.subr.mxu0 0.0
  %2589 = vmatpush1.msra.mxu0 0.0
  %2590 = vmatprep.subr.mxu0 0.0
  %2591 = vmatpush1.msra.mxu0 0.0
  %2592 = vmatprep.subr.mxu0 0.0
  %2593 = vmatpush1.msra.mxu0 0.0
  %2594 = vmatprep.subr.mxu0 0.0
  %2595 = vmatpush1.msra.mxu0 0.0
  %2596 = vmatprep.subr.mxu0 0.0
  %2597 = vmatpush1.msra.mxu0 0.0
  %2598 = vmatprep.subr.mxu0 0.0
  %2599 = vmatpush1.msra.mxu0 0.0
  %2600 = vmatprep.subr.mxu0 0.0
  %2601 = vmatpush1.msra.mxu0 0.0
  %2602 = vmatprep.subr.mxu0 0.0
  %2603 = vmatpush1.msra.mxu0 0.0
  %2604 = vmatprep.subr.mxu0 0.0
  %2605 = vmatpush1.msra.mxu0 0.0
  %2606 = vmatprep.subr.mxu0 0.0
  %2607 = vmatpush1.msra.mxu0 0.0
  %2608 = vmatprep.subr.mxu0 0.0
  %2609 = vmatpush1.msra.mxu0 0.0
  %2610 = vmatprep.subr.mxu0 0.0
  %2611 = vmatpush1.msra.mxu0 0.0
  %2612 = vmatprep.subr.mxu0 0.0
  %2613 = vmatpush1.msra.mxu0 0.0
  %2614 = vmatprep.subr.mxu0 0.0
  %2615 = vmatpush1.msra.mxu0 0.0
  %2616 = vmatprep.subr.mxu0 0.0
  %2617 = vmatpush1.msra.mxu0 0.0
  %2618 = vmatprep.subr.mxu0 0.0
  %2619 = vmatpush1.msra.mxu0 0.0
  %2620 = vmatprep.subr.mxu0 0.0
  %2621 = vmatpush1.msra.mxu0 0.0
  %2622 = vmatprep.subr.mxu0 0.0
  %2623 = vmatpush1.msra.mxu0 0.0
  %2624 = vmatprep.subr.mxu0 0.0
  %2625 = vmatpush1.msra.mxu0 0.0
  %2626 = vmatprep.subr.mxu0 0.0
  %2627 = vmatpush1.msra.mxu0 0.0
  %2628 = vmatprep.subr.mxu0 0.0
  %2629 = vmatpush1.msra.mxu0 0.0
  %2630 = vmatprep.subr.mxu0 0.0
  %2631 = vmatpush1.msra.mxu0 0.0
  %2632 = vmatprep.subr.mxu0 0.0
  %2633 = vmatpush1.msra.mxu0 0.0
  %2634 = vmatprep.mubr.f32.mxu0 0.0
  %2635 = vmatmul.mubr.f32.gmra.mrb[0].mxu0 %v2568
  %v2636 = vpop.f32.mrb[0].mxu0
  %v2637 = vadd.f32 %v2563, %v2636
  %v2638 = vpop.f32.mrb[0].mxu0
  %2639 = vdwg.mxu0
  %v2640 = vadd.f32 %v2549, %v2637
  %v2641 = vxor.u32 %v2640, 2147483648
  %v2642 = vmul.f32 %v2641, 1.442695
  %v2643 = vpow.pop %v2642
  %v2644 = vadd.f32 %v2643, 1.0
  %v2645 = vrcp.pop %v2644
  %v2646 = vmul.f32 1.0, %v2645
  %2648 = vrot.lane.b32.xlu0 %v2637, 64
  %v2649 = vpop.permute.xlu0 %2648
  %v2651 = vmul.f32 %v2646, %v2649
  %2653 = vrot.lane.b32.xlu0 %v2651, 64
  %v2654 = vpop.permute.xlu0 %2653
  %v2656 = vadd.f32 %v2549, %v2654
  %v2657 = vtanh.pop %v2656
  %v2658 = vsub.f32 1.0, %v2646
  %2660 = vrot.lane.b32.xlu0 %v2657, 96
  %v2661 = vpop.permute.xlu0 %2660
  %v2663 = vmul.f32 %v2658, %v2661
  %v2664 = vmul.f32 %v2646, %v2271
  %v2665 = vadd.f32 %v2663, %v2664
  %v2666 = vld [vmem:[%s12] sm:$0xff]
  %v2667 = vld [vmem:[%s12 + $0x8] sm:$0xff]
  %v2668 = vld [vmem:[%s12 + $0x10] sm:$0xff]
  %v2669 = vld [vmem:[%s12 + $0x18] sm:$0xff]
  %v2670 = vld [vmem:[%s13] sm:$0x1]
  %v2672 = vlaneseq
  %v2673 = vshrl.u32 %v2672, 7
  %v2674 = vsub.s32 0, %v2673
  %v2675 = vrot.slane %v2670, %v2674
  %2678 = vrot.lane.b32.xlu0 %v2665, 96
  %v2679 = vpop.permute.xlu0 %2678
  %v2680 = vsel %vm59, %v2679, 0
  %2682 = vmatprep.subr.mxu0 0.0
  %2683 = vmatpush1.msra.mxu0 %v2666
  %2684 = vmatprep.subr.mxu0 0.0
  %2685 = vmatpush1.msra.mxu0 %v2667
  %2686 = vmatprep.subr.mxu0 0.0
  %2687 = vmatpush1.msra.mxu0 %v2668
  %2688 = vmatprep.subr.mxu0 0.0
  %2689 = vmatpush1.msra.mxu0 %v2669
  %2690 = vmatprep.subr.mxu0 0.0
  %2691 = vmatpush1.msra.mxu0 0.0
  %2692 = vmatprep.subr.mxu0 0.0
  %2693 = vmatpush1.msra.mxu0 0.0
  %2694 = vmatprep.subr.mxu0 0.0
  %2695 = vmatpush1.msra.mxu0 0.0
  %2696 = vmatprep.subr.mxu0 0.0
  %2697 = vmatpush1.msra.mxu0 0.0
  %2698 = vmatprep.subr.mxu0 0.0
  %2699 = vmatpush1.msra.mxu0 0.0
  %2700 = vmatprep.subr.mxu0 0.0
  %2701 = vmatpush1.msra.mxu0 0.0
  %2702 = vmatprep.subr.mxu0 0.0
  %2703 = vmatpush1.msra.mxu0 0.0
  %2704 = vmatprep.subr.mxu0 0.0
  %2705 = vmatpush1.msra.mxu0 0.0
  %2706 = vmatprep.subr.mxu0 0.0
  %2707 = vmatpush1.msra.mxu0 0.0
  %2708 = vmatprep.subr.mxu0 0.0
  %2709 = vmatpush1.msra.mxu0 0.0
  %2710 = vmatprep.subr.mxu0 0.0
  %2711 = vmatpush1.msra.mxu0 0.0
  %2712 = vmatprep.subr.mxu0 0.0
  %2713 = vmatpush1.msra.mxu0 0.0
  %2714 = vmatprep.subr.mxu0 0.0
  %2715 = vmatpush1.msra.mxu0 0.0
  %2716 = vmatprep.subr.mxu0 0.0
  %2717 = vmatpush1.msra.mxu0 0.0
  %2718 = vmatprep.subr.mxu0 0.0
  %2719 = vmatpush1.msra.mxu0 0.0
  %2720 = vmatprep.subr.mxu0 0.0
  %2721 = vmatpush1.msra.mxu0 0.0
  %2722 = vmatprep.subr.mxu0 0.0
  %2723 = vmatpush1.msra.mxu0 0.0
  %2724 = vmatprep.subr.mxu0 0.0
  %2725 = vmatpush1.msra.mxu0 0.0
  %2726 = vmatprep.subr.mxu0 0.0
  %2727 = vmatpush1.msra.mxu0 0.0
  %2728 = vmatprep.subr.mxu0 0.0
  %2729 = vmatpush1.msra.mxu0 0.0
  %2730 = vmatprep.subr.mxu0 0.0
  %2731 = vmatpush1.msra.mxu0 0.0
  %2732 = vmatprep.subr.mxu0 0.0
  %2733 = vmatpush1.msra.mxu0 0.0
  %2734 = vmatprep.subr.mxu0 0.0
  %2735 = vmatpush1.msra.mxu0 0.0
  %2736 = vmatprep.subr.mxu0 0.0
  %2737 = vmatpush1.msra.mxu0 0.0
  %2738 = vmatprep.subr.mxu0 0.0
  %2739 = vmatpush1.msra.mxu0 0.0
  %2740 = vmatprep.subr.mxu0 0.0
  %2741 = vmatpush1.msra.mxu0 0.0
  %2742 = vmatprep.subr.mxu0 0.0
  %2743 = vmatpush1.msra.mxu0 0.0
  %2744 = vmatprep.subr.mxu0 0.0
  %2745 = vmatpush1.msra.mxu0 0.0
  %2746 = vmatprep.mubr.f32.mxu0 0.0
  %2747 = vmatmul.mubr.f32.gmra.mrb[0].mxu0 %v2680
  %v2748 = vpop.f32.mrb[0].mxu0
  %v2749 = vadd.f32 %v2675, %v2748
  %v2750 = vpop.f32.mrb[0].mxu0
  %2751 = vdwg.mxu0
  %vm2752 = vcmask 25600
  %2753 = vst.msk [vmem:[%s14] sm:$0x3] %vm2752, %v2749
  %v2754 = vld [vmem:[%s6] sm:$0xf]
  %v2755 = vld [vmem:[%s7] sm:$0x1]
  %v2757 = vlaneseq
  %v2758 = vshrl.u32 %v2757, 7
  %v2759 = vsub.s32 0, %v2758
  %v2760 = vrot.slane %v2755, %v2759
  %v2763 = vsel %vm2281, %v2749, 0
  %v2766 = vsel %vm2285, %v2754, 0
  %2768 = vmatprep.subr.mxu0 0.0
  %2769 = vmatpush1.msra.mxu0 %v2766
  %2770 = vmatprep.subr.mxu0 0.0
  %2771 = vmatpush1.msra.mxu0 0.0
  %2772 = vmatprep.subr.mxu0 0.0
  %2773 = vmatpush1.msra.mxu0 0.0
  %2774 = vmatprep.subr.mxu0 0.0
  %2775 = vmatpush1.msra.mxu0 0.0
  %2776 = vmatprep.subr.mxu0 0.0
  %2777 = vmatpush1.msra.mxu0 0.0
  %2778 = vmatprep.subr.mxu0 0.0
  %2779 = vmatpush1.msra.mxu0 0.0
  %2780 = vmatprep.subr.mxu0 0.0
  %2781 = vmatpush1.msra.mxu0 0.0
  %2782 = vmatprep.subr.mxu0 0.0
  %2783 = vmatpush1.msra.mxu0 0.0
  %2784 = vmatprep.subr.mxu0 0.0
  %2785 = vmatpush1.msra.mxu0 0.0
  %2786 = vmatprep.subr.mxu0 0.0
  %2787 = vmatpush1.msra.mxu0 0.0
  %2788 = vmatprep.subr.mxu0 0.0
  %2789 = vmatpush1.msra.mxu0 0.0
  %2790 = vmatprep.subr.mxu0 0.0
  %2791 = vmatpush1.msra.mxu0 0.0
  %2792 = vmatprep.subr.mxu0 0.0
  %2793 = vmatpush1.msra.mxu0 0.0
  %2794 = vmatprep.subr.mxu0 0.0
  %2795 = vmatpush1.msra.mxu0 0.0
  %2796 = vmatprep.subr.mxu0 0.0
  %2797 = vmatpush1.msra.mxu0 0.0
  %2798 = vmatprep.subr.mxu0 0.0
  %2799 = vmatpush1.msra.mxu0 0.0
  %2800 = vmatprep.subr.mxu0 0.0
  %2801 = vmatpush1.msra.mxu0 0.0
  %2802 = vmatprep.subr.mxu0 0.0
  %2803 = vmatpush1.msra.mxu0 0.0
  %2804 = vmatprep.subr.mxu0 0.0
  %2805 = vmatpush1.msra.mxu0 0.0
  %2806 = vmatprep.subr.mxu0 0.0
  %2807 = vmatpush1.msra.mxu0 0.0
  %2808 = vmatprep.subr.mxu0 0.0
  %2809 = vmatpush1.msra.mxu0 0.0
  %2810 = vmatprep.subr.mxu0 0.0
  %2811 = vmatpush1.msra.mxu0 0.0
  %2812 = vmatprep.subr.mxu0 0.0
  %2813 = vmatpush1.msra.mxu0 0.0
  %2814 = vmatprep.subr.mxu0 0.0
  %2815 = vmatpush1.msra.mxu0 0.0
  %2816 = vmatprep.subr.mxu0 0.0
  %2817 = vmatpush1.msra.mxu0 0.0
  %2818 = vmatprep.subr.mxu0 0.0
  %2819 = vmatpush1.msra.mxu0 0.0
  %2820 = vmatprep.subr.mxu0 0.0
  %2821 = vmatpush1.msra.mxu0 0.0
  %2822 = vmatprep.subr.mxu0 0.0
  %2823 = vmatpush1.msra.mxu0 0.0
  %2824 = vmatprep.subr.mxu0 0.0
  %2825 = vmatpush1.msra.mxu0 0.0
  %2826 = vmatprep.subr.mxu0 0.0
  %2827 = vmatpush1.msra.mxu0 0.0
  %2828 = vmatprep.subr.mxu0 0.0
  %2829 = vmatpush1.msra.mxu0 0.0
  %2830 = vmatprep.subr.mxu0 0.0
  %2831 = vmatpush1.msra.mxu0 0.0
  %2832 = vmatprep.mubr.f32.mxu0 0.0
  %2833 = vmatmul.mubr.f32.gmra.mrb[0].mxu0 %v2763
  %v2834 = vpop.f32.mrb[0].mxu0
  %v2835 = vadd.f32 %v2760, %v2834
  %v2836 = vpop.f32.mrb[0].mxu0
  %2837 = vdwg.mxu0
  %v2838 = vld [vmem:[%s8] sm:$0xff]
  %v2839 = vld [vmem:[%s8 + $0x8] sm:$0xff]
  %v2840 = vld [vmem:[%s8 + $0x10] sm:$0xff]
  %v2841 = vld [vmem:[%s8 + $0x18] sm:$0xff]
  %v2842 = vld [vmem:[%s9] sm:$0x1]
  %v2844 = vlaneseq
  %v2845 = vshrl.u32 %v2844, 7
  %v2846 = vsub.s32 0, %v2845
  %v2847 = vrot.slane %v2842, %v2846
  %2849 = vmatprep.subr.mxu0 0.0
  %2850 = vmatpush1.msra.mxu0 %v2838
  %2851 = vmatprep.subr.mxu0 0.0
  %2852 = vmatpush1.msra.mxu0 %v2839
  %2853 = vmatprep.subr.mxu0 0.0
  %2854 = vmatpush1.msra.mxu0 %v2840
  %2855 = vmatprep.subr.mxu0 0.0
  %2856 = vmatpush1.msra.mxu0 %v2841
  %2857 = vmatprep.subr.mxu0 0.0
  %2858 = vmatpush1.msra.mxu0 0.0
  %2859 = vmatprep.subr.mxu0 0.0
  %2860 = vmatpush1.msra.mxu0 0.0
  %2861 = vmatprep.subr.mxu0 0.0
  %2862 = vmatpush1.msra.mxu0 0.0
  %2863 = vmatprep.subr.mxu0 0.0
  %2864 = vmatpush1.msra.mxu0 0.0
  %2865 = vmatprep.subr.mxu0 0.0
  %2866 = vmatpush1.msra.mxu0 0.0
  %2867 = vmatprep.subr.mxu0 0.0
  %2868 = vmatpush1.msra.mxu0 0.0
  %2869 = vmatprep.subr.mxu0 0.0
  %2870 = vmatpush1.msra.mxu0 0.0
  %2871 = vmatprep.subr.mxu0 0.0
  %2872 = vmatpush1.msra.mxu0 0.0
  %2873 = vmatprep.subr.mxu0 0.0
  %2874 = vmatpush1.msra.mxu0 0.0
  %2875 = vmatprep.subr.mxu0 0.0
  %2876 = vmatpush1.msra.mxu0 0.0
  %2877 = vmatprep.subr.mxu0 0.0
  %2878 = vmatpush1.msra.mxu0 0.0
  %2879 = vmatprep.subr.mxu0 0.0
  %2880 = vmatpush1.msra.mxu0 0.0
  %2881 = vmatprep.subr.mxu0 0.0
  %2882 = vmatpush1.msra.mxu0 0.0
  %2883 = vmatprep.subr.mxu0 0.0
  %2884 = vmatpush1.msra.mxu0 0.0
  %2885 = vmatprep.subr.mxu0 0.0
  %2886 = vmatpush1.msra.mxu0 0.0
  %2887 = vmatprep.subr.mxu0 0.0
  %2888 = vmatpush1.msra.mxu0 0.0
  %2889 = vmatprep.subr.mxu0 0.0
  %2890 = vmatpush1.msra.mxu0 0.0
  %2891 = vmatprep.subr.mxu0 0.0
  %2892 = vmatpush1.msra.mxu0 0.0
  %2893 = vmatprep.subr.mxu0 0.0
  %2894 = vmatpush1.msra.mxu0 0.0
  %2895 = vmatprep.subr.mxu0 0.0
  %2896 = vmatpush1.msra.mxu0 0.0
  %2897 = vmatprep.subr.mxu0 0.0
  %2898 = vmatpush1.msra.mxu0 0.0
  %2899 = vmatprep.subr.mxu0 0.0
  %2900 = vmatpush1.msra.mxu0 0.0
  %2901 = vmatprep.subr.mxu0 0.0
  %2902 = vmatpush1.msra.mxu0 0.0
  %2903 = vmatprep.subr.mxu0 0.0
  %2904 = vmatpush1.msra.mxu0 0.0
  %2905 = vmatprep.subr.mxu0 0.0
  %2906 = vmatpush1.msra.mxu0 0.0
  %2907 = vmatprep.subr.mxu0 0.0
  %2908 = vmatpush1.msra.mxu0 0.0
  %2909 = vmatprep.subr.mxu0 0.0
  %2910 = vmatpush1.msra.mxu0 0.0
  %2911 = vmatprep.subr.mxu0 0.0
  %2912 = vmatpush1.msra.mxu0 0.0
  %2913 = vmatprep.mubr.f32.mxu0 0.0
  %2914 = vmatmul.mubr.f32.gmra.mrb[0].mxu0 %v2480
  %v2915 = vpop.f32.mrb[0].mxu0
  %v2916 = vadd.f32 %v2847, %v2915
  %v2917 = vpop.f32.mrb[0].mxu0
  %2918 = vdwg.mxu0
  %v2919 = vadd.f32 %v2835, %v2916
  %v2920 = vxor.u32 %v2919, 2147483648
  %v2921 = vmul.f32 %v2920, 1.442695
  %v2922 = vpow.pop %v2921
  %v2923 = vadd.f32 %v2922, 1.0
  %v2924 = vrcp.pop %v2923
  %v2925 = vmul.f32 1.0, %v2924
  %2927 = vrot.lane.b32.xlu0 %v2916, 64
  %v2928 = vpop.permute.xlu0 %2927
  %v2930 = vmul.f32 %v2925, %v2928
  %2932 = vrot.lane.b32.xlu0 %v2930, 64
  %v2933 = vpop.permute.xlu0 %2932
  %v2935 = vadd.f32 %v2835, %v2933
  %v2936 = vtanh.pop %v2935
  %v2937 = vsub.f32 1.0, %v2925
  %2939 = vrot.lane.b32.xlu0 %v2936, 96
  %v2940 = vpop.permute.xlu0 %2939
  %v2942 = vmul.f32 %v2937, %v2940
  %v2943 = vmul.f32 %v2925, %v2465
  %v2944 = vadd.f32 %v2942, %v2943
  %v2945 = vld [vmem:[%s10] sm:$0xff]
  %v2946 = vld [vmem:[%s10 + $0x8] sm:$0xff]
  %v2947 = vld [vmem:[%s10 + $0x10] sm:$0xff]
  %v2948 = vld [vmem:[%s10 + $0x18] sm:$0xff]
  %v2949 = vld [vmem:[%s11] sm:$0x1]
  %v2951 = vlaneseq
  %v2952 = vshrl.u32 %v2951, 7
  %v2953 = vsub.s32 0, %v2952
  %v2954 = vrot.slane %v2949, %v2953
  %2957 = vrot.lane.b32.xlu0 %v2944, 96
  %v2958 = vpop.permute.xlu0 %2957
  %v2959 = vsel %vm59, %v2958, 0
  %2961 = vmatprep.subr.mxu0 0.0
  %2962 = vmatpush1.msra.mxu0 %v2945
  %2963 = vmatprep.subr.mxu0 0.0
  %2964 = vmatpush1.msra.mxu0 %v2946
  %2965 = vmatprep.subr.mxu0 0.0
  %2966 = vmatpush1.msra.mxu0 %v2947
  %2967 = vmatprep.subr.mxu0 0.0
  %2968 = vmatpush1.msra.mxu0 %v2948
  %2969 = vmatprep.subr.mxu0 0.0
  %2970 = vmatpush1.msra.mxu0 0.0
  %2971 = vmatprep.subr.mxu0 0.0
  %2972 = vmatpush1.msra.mxu0 0.0
  %2973 = vmatprep.subr.mxu0 0.0
  %2974 = vmatpush1.msra.mxu0 0.0
  %2975 = vmatprep.subr.mxu0 0.0
  %2976 = vmatpush1.msra.mxu0 0.0
  %2977 = vmatprep.subr.mxu0 0.0
  %2978 = vmatpush1.msra.mxu0 0.0
  %2979 = vmatprep.subr.mxu0 0.0
  %2980 = vmatpush1.msra.mxu0 0.0
  %2981 = vmatprep.subr.mxu0 0.0
  %2982 = vmatpush1.msra.mxu0 0.0
  %2983 = vmatprep.subr.mxu0 0.0
  %2984 = vmatpush1.msra.mxu0 0.0
  %2985 = vmatprep.subr.mxu0 0.0
  %2986 = vmatpush1.msra.mxu0 0.0
  %2987 = vmatprep.subr.mxu0 0.0
  %2988 = vmatpush1.msra.mxu0 0.0
  %2989 = vmatprep.subr.mxu0 0.0
  %2990 = vmatpush1.msra.mxu0 0.0
  %2991 = vmatprep.subr.mxu0 0.0
  %2992 = vmatpush1.msra.mxu0 0.0
  %2993 = vmatprep.subr.mxu0 0.0
  %2994 = vmatpush1.msra.mxu0 0.0
  %2995 = vmatprep.subr.mxu0 0.0
  %2996 = vmatpush1.msra.mxu0 0.0
  %2997 = vmatprep.subr.mxu0 0.0
  %2998 = vmatpush1.msra.mxu0 0.0
  %2999 = vmatprep.subr.mxu0 0.0
  %3000 = vmatpush1.msra.mxu0 0.0
  %3001 = vmatprep.subr.mxu0 0.0
  %3002 = vmatpush1.msra.mxu0 0.0
  %3003 = vmatprep.subr.mxu0 0.0
  %3004 = vmatpush1.msra.mxu0 0.0
  %3005 = vmatprep.subr.mxu0 0.0
  %3006 = vmatpush1.msra.mxu0 0.0
  %3007 = vmatprep.subr.mxu0 0.0
  %3008 = vmatpush1.msra.mxu0 0.0
  %3009 = vmatprep.subr.mxu0 0.0
  %3010 = vmatpush1.msra.mxu0 0.0
  %3011 = vmatprep.subr.mxu0 0.0
  %3012 = vmatpush1.msra.mxu0 0.0
  %3013 = vmatprep.subr.mxu0 0.0
  %3014 = vmatpush1.msra.mxu0 0.0
  %3015 = vmatprep.subr.mxu0 0.0
  %3016 = vmatpush1.msra.mxu0 0.0
  %3017 = vmatprep.subr.mxu0 0.0
  %3018 = vmatpush1.msra.mxu0 0.0
  %3019 = vmatprep.subr.mxu0 0.0
  %3020 = vmatpush1.msra.mxu0 0.0
  %3021 = vmatprep.subr.mxu0 0.0
  %3022 = vmatpush1.msra.mxu0 0.0
  %3023 = vmatprep.subr.mxu0 0.0
  %3024 = vmatpush1.msra.mxu0 0.0
  %3025 = vmatprep.mubr.f32.mxu0 0.0
  %3026 = vmatmul.mubr.f32.gmra.mrb[0].mxu0 %v2959
  %v3027 = vpop.f32.mrb[0].mxu0
  %v3028 = vadd.f32 %v2954, %v3027
  %v3029 = vpop.f32.mrb[0].mxu0
  %3030 = vdwg.mxu0
  %v3031 = vld [vmem:[%s2552] sm:$0xff]
  %v3032 = vld [vmem:[%s2552 + $0x8] sm:$0xff]
  %v3033 = vld [vmem:[%s2552 + $0x10] sm:$0xff]
  %v3034 = vld [vmem:[%s2552 + $0x18] sm:$0xff]
  %v3035 = vld [vmem:[%s2557] sm:$0x1]
  %v3037 = vlaneseq
  %v3038 = vshrl.u32 %v3037, 7
  %v3039 = vsub.s32 0, %v3038
  %v3040 = vrot.slane %v3035, %v3039
  %3042 = vmatprep.subr.mxu0 0.0
  %3043 = vmatpush1.msra.mxu0 %v3031
  %3044 = vmatprep.subr.mxu0 0.0
  %3045 = vmatpush1.msra.mxu0 %v3032
  %3046 = vmatprep.subr.mxu0 0.0
  %3047 = vmatpush1.msra.mxu0 %v3033
  %3048 = vmatprep.subr.mxu0 0.0
  %3049 = vmatpush1.msra.mxu0 %v3034
  %3050 = vmatprep.subr.mxu0 0.0
  %3051 = vmatpush1.msra.mxu0 0.0
  %3052 = vmatprep.subr.mxu0 0.0
  %3053 = vmatpush1.msra.mxu0 0.0
  %3054 = vmatprep.subr.mxu0 0.0
  %3055 = vmatpush1.msra.mxu0 0.0
  %3056 = vmatprep.subr.mxu0 0.0
  %3057 = vmatpush1.msra.mxu0 0.0
  %3058 = vmatprep.subr.mxu0 0.0
  %3059 = vmatpush1.msra.mxu0 0.0
  %3060 = vmatprep.subr.mxu0 0.0
  %3061 = vmatpush1.msra.mxu0 0.0
  %3062 = vmatprep.subr.mxu0 0.0
  %3063 = vmatpush1.msra.mxu0 0.0
  %3064 = vmatprep.subr.mxu0 0.0
  %3065 = vmatpush1.msra.mxu0 0.0
  %3066 = vmatprep.subr.mxu0 0.0
  %3067 = vmatpush1.msra.mxu0 0.0
  %3068 = vmatprep.subr.mxu0 0.0
  %3069 = vmatpush1.msra.mxu0 0.0
  %3070 = vmatprep.subr.mxu0 0.0
  %3071 = vmatpush1.msra.mxu0 0.0
  %3072 = vmatprep.subr.mxu0 0.0
  %3073 = vmatpush1.msra.mxu0 0.0
  %3074 = vmatprep.subr.mxu0 0.0
  %3075 = vmatpush1.msra.mxu0 0.0
  %3076 = vmatprep.subr.mxu0 0.0
  %3077 = vmatpush1.msra.mxu0 0.0
  %3078 = vmatprep.subr.mxu0 0.0
  %3079 = vmatpush1.msra.mxu0 0.0
  %3080 = vmatprep.subr.mxu0 0.0
  %3081 = vmatpush1.msra.mxu0 0.0
  %3082 = vmatprep.subr.mxu0 0.0
  %3083 = vmatpush1.msra.mxu0 0.0
  %3084 = vmatprep.subr.mxu0 0.0
  %3085 = vmatpush1.msra.mxu0 0.0
  %3086 = vmatprep.subr.mxu0 0.0
  %3087 = vmatpush1.msra.mxu0 0.0
  %3088 = vmatprep.subr.mxu0 0.0
  %3089 = vmatpush1.msra.mxu0 0.0
  %3090 = vmatprep.subr.mxu0 0.0
  %3091 = vmatpush1.msra.mxu0 0.0
  %3092 = vmatprep.subr.mxu0 0.0
  %3093 = vmatpush1.msra.mxu0 0.0
  %3094 = vmatprep.subr.mxu0 0.0
  %3095 = vmatpush1.msra.mxu0 0.0
  %3096 = vmatprep.subr.mxu0 0.0
  %3097 = vmatpush1.msra.mxu0 0.0
  %3098 = vmatprep.subr.mxu0 0.0
  %3099 = vmatpush1.msra.mxu0 0.0
  %3100 = vmatprep.subr.mxu0 0.0
  %3101 = vmatpush1.msra.mxu0 0.0
  %3102 = vmatprep.subr.mxu0 0.0
  %3103 = vmatpush1.msra.mxu0 0.0
  %3104 = vmatprep.subr.mxu0 0.0
  %3105 = vmatpush1.msra.mxu0 0.0
  %3106 = vmatprep.mubr.f32.mxu0 0.0
  %3107 = vmatmul.mubr.f32.gmra.mrb[0].mxu0 %v2680
  %v3108 = vpop.f32.mrb[0].mxu0
  %v3109 = vadd.f32 %v3040, %v3108
  %v3110 = vpop.f32.mrb[0].mxu0
  %3111 = vdwg.mxu0
  %v3112 = vadd.f32 %v3028, %v3109
  %v3113 = vxor.u32 %v3112, 2147483648
  %v3114 = vmul.f32 %v3113, 1.442695
  %v3115 = vpow.pop %v3114
  %v3116 = vadd.f32 %v3115, 1.0
  %v3117 = vrcp.pop %v3116
  %v3118 = vmul.f32 1.0, %v3117
  %3120 = vrot.lane.b32.xlu0 %v3109, 64
  %v3121 = vpop.permute.xlu0 %3120
  %v3123 = vmul.f32 %v3118, %v3121
  %3125 = vrot.lane.b32.xlu0 %v3123, 64
  %v3126 = vpop.permute.xlu0 %3125
  %v3128 = vadd.f32 %v3028, %v3126
  %v3129 = vtanh.pop %v3128
  %v3130 = vsub.f32 1.0, %v3118
  %3132 = vrot.lane.b32.xlu0 %v3129, 96
  %v3133 = vpop.permute.xlu0 %3132
  %v3135 = vmul.f32 %v3130, %v3133
  %v3136 = vmul.f32 %v3118, %v2665
  %v3137 = vadd.f32 %v3135, %v3136
  %v3138 = vld [vmem:[%s12] sm:$0xff]
  %v3139 = vld [vmem:[%s12 + $0x8] sm:$0xff]
  %v3140 = vld [vmem:[%s12 + $0x10] sm:$0xff]
  %v3141 = vld [vmem:[%s12 + $0x18] sm:$0xff]
  %v3142 = vld [vmem:[%s13] sm:$0x1]
  %v3144 = vlaneseq
  %v3145 = vshrl.u32 %v3144, 7
  %v3146 = vsub.s32 0, %v3145
  %v3147 = vrot.slane %v3142, %v3146
  %3150 = vrot.lane.b32.xlu0 %v3137, 96
  %v3151 = vpop.permute.xlu0 %3150
  %v3152 = vsel %vm59, %v3151, 0
  %3154 = vmatprep.subr.mxu0 0.0
  %3155 = vmatpush1.msra.mxu0 %v3138
  %3156 = vmatprep.subr.mxu0 0.0
  %3157 = vmatpush1.msra.mxu0 %v3139
  %3158 = vmatprep.subr.mxu0 0.0
  %3159 = vmatpush1.msra.mxu0 %v3140
  %3160 = vmatprep.subr.mxu0 0.0
  %3161 = vmatpush1.msra.mxu0 %v3141
  %3162 = vmatprep.subr.mxu0 0.0
  %3163 = vmatpush1.msra.mxu0 0.0
  %3164 = vmatprep.subr.mxu0 0.0
  %3165 = vmatpush1.msra.mxu0 0.0
  %3166 = vmatprep.subr.mxu0 0.0
  %3167 = vmatpush1.msra.mxu0 0.0
  %3168 = vmatprep.subr.mxu0 0.0
  %3169 = vmatpush1.msra.mxu0 0.0
  %3170 = vmatprep.subr.mxu0 0.0
  %3171 = vmatpush1.msra.mxu0 0.0
  %3172 = vmatprep.subr.mxu0 0.0
  %3173 = vmatpush1.msra.mxu0 0.0
  %3174 = vmatprep.subr.mxu0 0.0
  %3175 = vmatpush1.msra.mxu0 0.0
  %3176 = vmatprep.subr.mxu0 0.0
  %3177 = vmatpush1.msra.mxu0 0.0
  %3178 = vmatprep.subr.mxu0 0.0
  %3179 = vmatpush1.msra.mxu0 0.0
  %3180 = vmatprep.subr.mxu0 0.0
  %3181 = vmatpush1.msra.mxu0 0.0
  %3182 = vmatprep.subr.mxu0 0.0
  %3183 = vmatpush1.msra.mxu0 0.0
  %3184 = vmatprep.subr.mxu0 0.0
  %3185 = vmatpush1.msra.mxu0 0.0
  %3186 = vmatprep.subr.mxu0 0.0
  %3187 = vmatpush1.msra.mxu0 0.0
  %3188 = vmatprep.subr.mxu0 0.0
  %3189 = vmatpush1.msra.mxu0 0.0
  %3190 = vmatprep.subr.mxu0 0.0
  %3191 = vmatpush1.msra.mxu0 0.0
  %3192 = vmatprep.subr.mxu0 0.0
  %3193 = vmatpush1.msra.mxu0 0.0
  %3194 = vmatprep.subr.mxu0 0.0
  %3195 = vmatpush1.msra.mxu0 0.0
  %3196 = vmatprep.subr.mxu0 0.0
  %3197 = vmatpush1.msra.mxu0 0.0
  %3198 = vmatprep.subr.mxu0 0.0
  %3199 = vmatpush1.msra.mxu0 0.0
  %3200 = vmatprep.subr.mxu0 0.0
  %3201 = vmatpush1.msra.mxu0 0.0
  %3202 = vmatprep.subr.mxu0 0.0
  %3203 = vmatpush1.msra.mxu0 0.0
  %3204 = vmatprep.subr.mxu0 0.0
  %3205 = vmatpush1.msra.mxu0 0.0
  %3206 = vmatprep.subr.mxu0 0.0
  %3207 = vmatpush1.msra.mxu0 0.0
  %3208 = vmatprep.subr.mxu0 0.0
  %3209 = vmatpush1.msra.mxu0 0.0
  %3210 = vmatprep.subr.mxu0 0.0
  %3211 = vmatpush1.msra.mxu0 0.0
  %3212 = vmatprep.subr.mxu0 0.0
  %3213 = vmatpush1.msra.mxu0 0.0
  %3214 = vmatprep.subr.mxu0 0.0
  %3215 = vmatpush1.msra.mxu0 0.0
  %3216 = vmatprep.subr.mxu0 0.0
  %3217 = vmatpush1.msra.mxu0 0.0
  %3218 = vmatprep.mubr.f32.mxu0 0.0
  %3219 = vmatmul.mubr.f32.gmra.mrb[0].mxu0 %v3152
  %v3220 = vpop.f32.mrb[0].mxu0
  %v3221 = vadd.f32 %v3147, %v3220
  %v3222 = vpop.f32.mrb[0].mxu0
  %3223 = vdwg.mxu0
  %s3224 = scalar_lea.vmem %s14, 2
  %3225 = vst.msk [vmem:[%s3224] sm:$0x3] %vm2752, %v3221
  %v3226 = vld [vmem:[%s6] sm:$0xf]
  %v3227 = vld [vmem:[%s7] sm:$0x1]
  %v3229 = vlaneseq
  %v3230 = vshrl.u32 %v3229, 7
  %v3231 = vsub.s32 0, %v3230
  %v3232 = vrot.slane %v3227, %v3231
  %v3235 = vsel %vm2281, %v3221, 0
  %v3238 = vsel %vm2285, %v3226, 0
  %3240 = vmatprep.subr.mxu0 0.0
  %3241 = vmatpush1.msra.mxu0 %v3238
  %3242 = vmatprep.subr.mxu0 0.0
  %3243 = vmatpush1.msra.mxu0 0.0
  %3244 = vmatprep.subr.mxu0 0.0
  %3245 = vmatpush1.msra.mxu0 0.0
  %3246 = vmatprep.subr.mxu0 0.0
  %3247 = vmatpush1.msra.mxu0 0.0
  %3248 = vmatprep.subr.mxu0 0.0
  %3249 = vmatpush1.msra.mxu0 0.0
  %3250 = vmatprep.subr.mxu0 0.0
  %3251 = vmatpush1.msra.mxu0 0.0
  %3252 = vmatprep.subr.mxu0 0.0
  %3253 = vmatpush1.msra.mxu0 0.0
  %3254 = vmatprep.subr.mxu0 0.0
  %3255 = vmatpush1.msra.mxu0 0.0
  %3256 = vmatprep.subr.mxu0 0.0
  %3257 = vmatpush1.msra.mxu0 0.0
  %3258 = vmatprep.subr.mxu0 0.0
  %3259 = vmatpush1.msra.mxu0 0.0
  %3260 = vmatprep.subr.mxu0 0.0
  %3261 = vmatpush1.msra.mxu0 0.0
  %3262 = vmatprep.subr.mxu0 0.0
  %3263 = vmatpush1.msra.mxu0 0.0
  %3264 = vmatprep.subr.mxu0 0.0
  %3265 = vmatpush1.msra.mxu0 0.0
  %3266 = vmatprep.subr.mxu0 0.0
  %3267 = vmatpush1.msra.mxu0 0.0
  %3268 = vmatprep.subr.mxu0 0.0
  %3269 = vmatpush1.msra.mxu0 0.0
  %3270 = vmatprep.subr.mxu0 0.0
  %3271 = vmatpush1.msra.mxu0 0.0
  %3272 = vmatprep.subr.mxu0 0.0
  %3273 = vmatpush1.msra.mxu0 0.0
  %3274 = vmatprep.subr.mxu0 0.0
  %3275 = vmatpush1.msra.mxu0 0.0
  %3276 = vmatprep.subr.mxu0 0.0
  %3277 = vmatpush1.msra.mxu0 0.0
  %3278 = vmatprep.subr.mxu0 0.0
  %3279 = vmatpush1.msra.mxu0 0.0
  %3280 = vmatprep.subr.mxu0 0.0
  %3281 = vmatpush1.msra.mxu0 0.0
  %3282 = vmatprep.subr.mxu0 0.0
  %3283 = vmatpush1.msra.mxu0 0.0
  %3284 = vmatprep.subr.mxu0 0.0
  %3285 = vmatpush1.msra.mxu0 0.0
  %3286 = vmatprep.subr.mxu0 0.0
  %3287 = vmatpush1.msra.mxu0 0.0
  %3288 = vmatprep.subr.mxu0 0.0
  %3289 = vmatpush1.msra.mxu0 0.0
  %3290 = vmatprep.subr.mxu0 0.0
  %3291 = vmatpush1.msra.mxu0 0.0
  %3292 = vmatprep.subr.mxu0 0.0
  %3293 = vmatpush1.msra.mxu0 0.0
  %3294 = vmatprep.subr.mxu0 0.0
  %3295 = vmatpush1.msra.mxu0 0.0
  %3296 = vmatprep.subr.mxu0 0.0
  %3297 = vmatpush1.msra.mxu0 0.0
  %3298 = vmatprep.subr.mxu0 0.0
  %3299 = vmatpush1.msra.mxu0 0.0
  %3300 = vmatprep.subr.mxu0 0.0
  %3301 = vmatpush1.msra.mxu0 0.0
  %3302 = vmatprep.subr.mxu0 0.0
  %3303 = vmatpush1.msra.mxu0 0.0
  %3304 = vmatprep.mubr.f32.mxu0 0.0
  %3305 = vmatmul.mubr.f32.gmra.mrb[0].mxu0 %v3235
  %v3306 = vpop.f32.mrb[0].mxu0
  %v3307 = vadd.f32 %v3232, %v3306
  %v3308 = vpop.f32.mrb[0].mxu0
  %3309 = vdwg.mxu0
  %v3310 = vld [vmem:[%s8] sm:$0xff]
  %v3311 = vld [vmem:[%s8 + $0x8] sm:$0xff]
  %v3312 = vld [vmem:[%s8 + $0x10] sm:$0xff]
  %v3313 = vld [vmem:[%s8 + $0x18] sm:$0xff]
  %v3314 = vld [vmem:[%s9] sm:$0x1]
  %v3316 = vlaneseq
  %v3317 = vshrl.u32 %v3316, 7
  %v3318 = vsub.s32 0, %v3317
  %v3319 = vrot.slane %v3314, %v3318
  %3321 = vmatprep.subr.mxu0 0.0
  %3322 = vmatpush1.msra.mxu0 %v3310
  %3323 = vmatprep.subr.mxu0 0.0
  %3324 = vmatpush1.msra.mxu0 %v3311
  %3325 = vmatprep.subr.mxu0 0.0
  %3326 = vmatpush1.msra.mxu0 %v3312
  %3327 = vmatprep.subr.mxu0 0.0
  %3328 = vmatpush1.msra.mxu0 %v3313
  %3329 = vmatprep.subr.mxu0 0.0
  %3330 = vmatpush1.msra.mxu0 0.0
  %3331 = vmatprep.subr.mxu0 0.0
  %3332 = vmatpush1.msra.mxu0 0.0
  %3333 = vmatprep.subr.mxu0 0.0
  %3334 = vmatpush1.msra.mxu0 0.0
  %3335 = vmatprep.subr.mxu0 0.0
  %3336 = vmatpush1.msra.mxu0 0.0
  %3337 = vmatprep.subr.mxu0 0.0
  %3338 = vmatpush1.msra.mxu0 0.0
  %3339 = vmatprep.subr.mxu0 0.0
  %3340 = vmatpush1.msra.mxu0 0.0
  %3341 = vmatprep.subr.mxu0 0.0
  %3342 = vmatpush1.msra.mxu0 0.0
  %3343 = vmatprep.subr.mxu0 0.0
  %3344 = vmatpush1.msra.mxu0 0.0
  %3345 = vmatprep.subr.mxu0 0.0
  %3346 = vmatpush1.msra.mxu0 0.0
  %3347 = vmatprep.subr.mxu0 0.0
  %3348 = vmatpush1.msra.mxu0 0.0
  %3349 = vmatprep.subr.mxu0 0.0
  %3350 = vmatpush1.msra.mxu0 0.0
  %3351 = vmatprep.subr.mxu0 0.0
  %3352 = vmatpush1.msra.mxu0 0.0
  %3353 = vmatprep.subr.mxu0 0.0
  %3354 = vmatpush1.msra.mxu0 0.0
  %3355 = vmatprep.subr.mxu0 0.0
  %3356 = vmatpush1.msra.mxu0 0.0
  %3357 = vmatprep.subr.mxu0 0.0
  %3358 = vmatpush1.msra.mxu0 0.0
  %3359 = vmatprep.subr.mxu0 0.0
  %3360 = vmatpush1.msra.mxu0 0.0
  %3361 = vmatprep.subr.mxu0 0.0
  %3362 = vmatpush1.msra.mxu0 0.0
  %3363 = vmatprep.subr.mxu0 0.0
  %3364 = vmatpush1.msra.mxu0 0.0
  %3365 = vmatprep.subr.mxu0 0.0
  %3366 = vmatpush1.msra.mxu0 0.0
  %3367 = vmatprep.subr.mxu0 0.0
  %3368 = vmatpush1.msra.mxu0 0.0
  %3369 = vmatprep.subr.mxu0 0.0
  %3370 = vmatpush1.msra.mxu0 0.0
  %3371 = vmatprep.subr.mxu0 0.0
  %3372 = vmatpush1.msra.mxu0 0.0
  %3373 = vmatprep.subr.mxu0 0.0
  %3374 = vmatpush1.msra.mxu0 0.0
  %3375 = vmatprep.subr.mxu0 0.0
  %3376 = vmatpush1.msra.mxu0 0.0
  %3377 = vmatprep.subr.mxu0 0.0
  %3378 = vmatpush1.msra.mxu0 0.0
  %3379 = vmatprep.subr.mxu0 0.0
  %3380 = vmatpush1.msra.mxu0 0.0
  %3381 = vmatprep.subr.mxu0 0.0
  %3382 = vmatpush1.msra.mxu0 0.0
  %3383 = vmatprep.subr.mxu0 0.0
  %3384 = vmatpush1.msra.mxu0 0.0
  %3385 = vmatprep.mubr.f32.mxu0 0.0
  %3386 = vmatmul.mubr.f32.gmra.mrb[0].mxu0 %v2959
  %v3387 = vpop.f32.mrb[0].mxu0
  %v3388 = vadd.f32 %v3319, %v3387
  %v3389 = vpop.f32.mrb[0].mxu0
  %3390 = vdwg.mxu0
  %v3391 = vadd.f32 %v3307, %v3388
  %v3392 = vxor.u32 %v3391, 2147483648
  %v3393 = vmul.f32 %v3392, 1.442695
  %v3394 = vpow.pop %v3393
  %v3395 = vadd.f32 %v3394, 1.0
  %v3396 = vrcp.pop %v3395
  %v3397 = vmul.f32 1.0, %v3396
  %3399 = vrot.lane.b32.xlu0 %v3388, 64
  %v3400 = vpop.permute.xlu0 %3399
  %v3402 = vmul.f32 %v3397, %v3400
  %3404 = vrot.lane.b32.xlu0 %v3402, 64
  %v3405 = vpop.permute.xlu0 %3404
  %v3407 = vadd.f32 %v3307, %v3405
  %v3408 = vtanh.pop %v3407
  %v3409 = vsub.f32 1.0, %v3397
  %3411 = vrot.lane.b32.xlu0 %v3408, 96
  %v3412 = vpop.permute.xlu0 %3411
  %v3414 = vmul.f32 %v3409, %v3412
  %v3415 = vmul.f32 %v3397, %v2944
  %v3416 = vadd.f32 %v3414, %v3415
  %v3417 = vld [vmem:[%s10] sm:$0xff]
  %v3418 = vld [vmem:[%s10 + $0x8] sm:$0xff]
  %v3419 = vld [vmem:[%s10 + $0x10] sm:$0xff]
  %v3420 = vld [vmem:[%s10 + $0x18] sm:$0xff]
  %v3421 = vld [vmem:[%s11] sm:$0x1]
  %v3423 = vlaneseq
  %v3424 = vshrl.u32 %v3423, 7
  %v3425 = vsub.s32 0, %v3424
  %v3426 = vrot.slane %v3421, %v3425
  %3429 = vrot.lane.b32.xlu0 %v3416, 96
  %v3430 = vpop.permute.xlu0 %3429
  %v3431 = vsel %vm59, %v3430, 0
  %3433 = vmatprep.subr.mxu0 0.0
  %3434 = vmatpush1.msra.mxu0 %v3417
  %3435 = vmatprep.subr.mxu0 0.0
  %3436 = vmatpush1.msra.mxu0 %v3418
  %3437 = vmatprep.subr.mxu0 0.0
  %3438 = vmatpush1.msra.mxu0 %v3419
  %3439 = vmatprep.subr.mxu0 0.0
  %3440 = vmatpush1.msra.mxu0 %v3420
  %3441 = vmatprep.subr.mxu0 0.0
  %3442 = vmatpush1.msra.mxu0 0.0
  %3443 = vmatprep.subr.mxu0 0.0
  %3444 = vmatpush1.msra.mxu0 0.0
  %3445 = vmatprep.subr.mxu0 0.0
  %3446 = vmatpush1.msra.mxu0 0.0
  %3447 = vmatprep.subr.mxu0 0.0
  %3448 = vmatpush1.msra.mxu0 0.0
  %3449 = vmatprep.subr.mxu0 0.0
  %3450 = vmatpush1.msra.mxu0 0.0
  %3451 = vmatprep.subr.mxu0 0.0
  %3452 = vmatpush1.msra.mxu0 0.0
  %3453 = vmatprep.subr.mxu0 0.0
  %3454 = vmatpush1.msra.mxu0 0.0
  %3455 = vmatprep.subr.mxu0 0.0
  %3456 = vmatpush1.msra.mxu0 0.0
  %3457 = vmatprep.subr.mxu0 0.0
  %3458 = vmatpush1.msra.mxu0 0.0
  %3459 = vmatprep.subr.mxu0 0.0
  %3460 = vmatpush1.msra.mxu0 0.0
  %3461 = vmatprep.subr.mxu0 0.0
  %3462 = vmatpush1.msra.mxu0 0.0
  %3463 = vmatprep.subr.mxu0 0.0
  %3464 = vmatpush1.msra.mxu0 0.0
  %3465 = vmatprep.subr.mxu0 0.0
  %3466 = vmatpush1.msra.mxu0 0.0
  %3467 = vmatprep.subr.mxu0 0.0
  %3468 = vmatpush1.msra.mxu0 0.0
  %3469 = vmatprep.subr.mxu0 0.0
  %3470 = vmatpush1.msra.mxu0 0.0
  %3471 = vmatprep.subr.mxu0 0.0
  %3472 = vmatpush1.msra.mxu0 0.0
  %3473 = vmatprep.subr.mxu0 0.0
  %3474 = vmatpush1.msra.mxu0 0.0
  %3475 = vmatprep.subr.mxu0 0.0
  %3476 = vmatpush1.msra.mxu0 0.0
  %3477 = vmatprep.subr.mxu0 0.0
  %3478 = vmatpush1.msra.mxu0 0.0
  %3479 = vmatprep.subr.mxu0 0.0
  %3480 = vmatpush1.msra.mxu0 0.0
  %3481 = vmatprep.subr.mxu0 0.0
  %3482 = vmatpush1.msra.mxu0 0.0
  %3483 = vmatprep.subr.mxu0 0.0
  %3484 = vmatpush1.msra.mxu0 0.0
  %3485 = vmatprep.subr.mxu0 0.0
  %3486 = vmatpush1.msra.mxu0 0.0
  %3487 = vmatprep.subr.mxu0 0.0
  %3488 = vmatpush1.msra.mxu0 0.0
  %3489 = vmatprep.subr.mxu0 0.0
  %3490 = vmatpush1.msra.mxu0 0.0
  %3491 = vmatprep.subr.mxu0 0.0
  %3492 = vmatpush1.msra.mxu0 0.0
  %3493 = vmatprep.subr.mxu0 0.0
  %3494 = vmatpush1.msra.mxu0 0.0
  %3495 = vmatprep.subr.mxu0 0.0
  %3496 = vmatpush1.msra.mxu0 0.0
  %3497 = vmatprep.mubr.f32.mxu0 0.0
  %3498 = vmatmul.mubr.f32.gmra.mrb[0].mxu0 %v3431
  %v3499 = vpop.f32.mrb[0].mxu0
  %v3500 = vadd.f32 %v3426, %v3499
  %v3501 = vpop.f32.mrb[0].mxu0
  %3502 = vdwg.mxu0
  %v3503 = vld [vmem:[%s2552] sm:$0xff]
  %v3504 = vld [vmem:[%s2552 + $0x8] sm:$0xff]
  %v3505 = vld [vmem:[%s2552 + $0x10] sm:$0xff]
  %v3506 = vld [vmem:[%s2552 + $0x18] sm:$0xff]
  %v3507 = vld [vmem:[%s2557] sm:$0x1]
  %v3509 = vlaneseq
  %v3510 = vshrl.u32 %v3509, 7
  %v3511 = vsub.s32 0, %v3510
  %v3512 = vrot.slane %v3507, %v3511
  %3514 = vmatprep.subr.mxu0 0.0
  %3515 = vmatpush1.msra.mxu0 %v3503
  %3516 = vmatprep.subr.mxu0 0.0
  %3517 = vmatpush1.msra.mxu0 %v3504
  %3518 = vmatprep.subr.mxu0 0.0
  %3519 = vmatpush1.msra.mxu0 %v3505
  %3520 = vmatprep.subr.mxu0 0.0
  %3521 = vmatpush1.msra.mxu0 %v3506
  %3522 = vmatprep.subr.mxu0 0.0
  %3523 = vmatpush1.msra.mxu0 0.0
  %3524 = vmatprep.subr.mxu0 0.0
  %3525 = vmatpush1.msra.mxu0 0.0
  %3526 = vmatprep.subr.mxu0 0.0
  %3527 = vmatpush1.msra.mxu0 0.0
  %3528 = vmatprep.subr.mxu0 0.0
  %3529 = vmatpush1.msra.mxu0 0.0
  %3530 = vmatprep.subr.mxu0 0.0
  %3531 = vmatpush1.msra.mxu0 0.0
  %3532 = vmatprep.subr.mxu0 0.0
  %3533 = vmatpush1.msra.mxu0 0.0
  %3534 = vmatprep.subr.mxu0 0.0
  %3535 = vmatpush1.msra.mxu0 0.0
  %3536 = vmatprep.subr.mxu0 0.0
  %3537 = vmatpush1.msra.mxu0 0.0
  %3538 = vmatprep.subr.mxu0 0.0
  %3539 = vmatpush1.msra.mxu0 0.0
  %3540 = vmatprep.subr.mxu0 0.0
  %3541 = vmatpush1.msra.mxu0 0.0
  %3542 = vmatprep.subr.mxu0 0.0
  %3543 = vmatpush1.msra.mxu0 0.0
  %3544 = vmatprep.subr.mxu0 0.0
  %3545 = vmatpush1.msra.mxu0 0.0
  %3546 = vmatprep.subr.mxu0 0.0
  %3547 = vmatpush1.msra.mxu0 0.0
  %3548 = vmatprep.subr.mxu0 0.0
  %3549 = vmatpush1.msra.mxu0 0.0
  %3550 = vmatprep.subr.mxu0 0.0
  %3551 = vmatpush1.msra.mxu0 0.0
  %3552 = vmatprep.subr.mxu0 0.0
  %3553 = vmatpush1.msra.mxu0 0.0
  %3554 = vmatprep.subr.mxu0 0.0
  %3555 = vmatpush1.msra.mxu0 0.0
  %3556 = vmatprep.subr.mxu0 0.0
  %3557 = vmatpush1.msra.mxu0 0.0
  %3558 = vmatprep.subr.mxu0 0.0
  %3559 = vmatpush1.msra.mxu0 0.0
  %3560 = vmatprep.subr.mxu0 0.0
  %3561 = vmatpush1.msra.mxu0 0.0
  %3562 = vmatprep.subr.mxu0 0.0
  %3563 = vmatpush1.msra.mxu0 0.0
  %3564 = vmatprep.subr.mxu0 0.0
  %3565 = vmatpush1.msra.mxu0 0.0
  %3566 = vmatprep.subr.mxu0 0.0
  %3567 = vmatpush1.msra.mxu0 0.0
  %3568 = vmatprep.subr.mxu0 0.0
  %3569 = vmatpush1.msra.mxu0 0.0
  %3570 = vmatprep.subr.mxu0 0.0
  %3571 = vmatpush1.msra.mxu0 0.0
  %3572 = vmatprep.subr.mxu0 0.0
  %3573 = vmatpush1.msra.mxu0 0.0
  %3574 = vmatprep.subr.mxu0 0.0
  %3575 = vmatpush1.msra.mxu0 0.0
  %3576 = vmatprep.subr.mxu0 0.0
  %3577 = vmatpush1.msra.mxu0 0.0
  %3578 = vmatprep.mubr.f32.mxu0 0.0
  %3579 = vmatmul.mubr.f32.gmra.mrb[0].mxu0 %v3152
  %v3580 = vpop.f32.mrb[0].mxu0
  %v3581 = vadd.f32 %v3512, %v3580
  %v3582 = vpop.f32.mrb[0].mxu0
  %3583 = vdwg.mxu0
  %v3584 = vadd.f32 %v3500, %v3581
  %v3585 = vxor.u32 %v3584, 2147483648
  %v3586 = vmul.f32 %v3585, 1.442695
  %v3587 = vpow.pop %v3586
  %v3588 = vadd.f32 %v3587, 1.0
  %v3589 = vrcp.pop %v3588
  %v3590 = vmul.f32 1.0, %v3589
  %3592 = vrot.lane.b32.xlu0 %v3581, 64
  %v3593 = vpop.permute.xlu0 %3592
  %v3595 = vmul.f32 %v3590, %v3593
  %3597 = vrot.lane.b32.xlu0 %v3595, 64
  %v3598 = vpop.permute.xlu0 %3597
  %v3600 = vadd.f32 %v3500, %v3598
  %v3601 = vtanh.pop %v3600
  %v3602 = vsub.f32 1.0, %v3590
  %3604 = vrot.lane.b32.xlu0 %v3601, 96
  %v3605 = vpop.permute.xlu0 %3604
  %v3607 = vmul.f32 %v3602, %v3605
  %v3608 = vmul.f32 %v3590, %v3137
  %v3609 = vadd.f32 %v3607, %v3608
  %v3610 = vld [vmem:[%s12] sm:$0xff]
  %v3611 = vld [vmem:[%s12 + $0x8] sm:$0xff]
  %v3612 = vld [vmem:[%s12 + $0x10] sm:$0xff]
  %v3613 = vld [vmem:[%s12 + $0x18] sm:$0xff]
  %v3614 = vld [vmem:[%s13] sm:$0x1]
  %v3616 = vlaneseq
  %v3617 = vshrl.u32 %v3616, 7
  %v3618 = vsub.s32 0, %v3617
  %v3619 = vrot.slane %v3614, %v3618
  %3622 = vrot.lane.b32.xlu0 %v3609, 96
  %v3623 = vpop.permute.xlu0 %3622
  %v3624 = vsel %vm59, %v3623, 0
  %3626 = vmatprep.subr.mxu0 0.0
  %3627 = vmatpush1.msra.mxu0 %v3610
  %3628 = vmatprep.subr.mxu0 0.0
  %3629 = vmatpush1.msra.mxu0 %v3611
  %3630 = vmatprep.subr.mxu0 0.0
  %3631 = vmatpush1.msra.mxu0 %v3612
  %3632 = vmatprep.subr.mxu0 0.0
  %3633 = vmatpush1.msra.mxu0 %v3613
  %3634 = vmatprep.subr.mxu0 0.0
  %3635 = vmatpush1.msra.mxu0 0.0
  %3636 = vmatprep.subr.mxu0 0.0
  %3637 = vmatpush1.msra.mxu0 0.0
  %3638 = vmatprep.subr.mxu0 0.0
  %3639 = vmatpush1.msra.mxu0 0.0
  %3640 = vmatprep.subr.mxu0 0.0
  %3641 = vmatpush1.msra.mxu0 0.0
  %3642 = vmatprep.subr.mxu0 0.0
  %3643 = vmatpush1.msra.mxu0 0.0
  %3644 = vmatprep.subr.mxu0 0.0
  %3645 = vmatpush1.msra.mxu0 0.0
  %3646 = vmatprep.subr.mxu0 0.0
  %3647 = vmatpush1.msra.mxu0 0.0
  %3648 = vmatprep.subr.mxu0 0.0
  %3649 = vmatpush1.msra.mxu0 0.0
  %3650 = vmatprep.subr.mxu0 0.0
  %3651 = vmatpush1.msra.mxu0 0.0
  %3652 = vmatprep.subr.mxu0 0.0
  %3653 = vmatpush1.msra.mxu0 0.0
  %3654 = vmatprep.subr.mxu0 0.0
  %3655 = vmatpush1.msra.mxu0 0.0
  %3656 = vmatprep.subr.mxu0 0.0
  %3657 = vmatpush1.msra.mxu0 0.0
  %3658 = vmatprep.subr.mxu0 0.0
  %3659 = vmatpush1.msra.mxu0 0.0
  %3660 = vmatprep.subr.mxu0 0.0
  %3661 = vmatpush1.msra.mxu0 0.0
  %3662 = vmatprep.subr.mxu0 0.0
  %3663 = vmatpush1.msra.mxu0 0.0
  %3664 = vmatprep.subr.mxu0 0.0
  %3665 = vmatpush1.msra.mxu0 0.0
  %3666 = vmatprep.subr.mxu0 0.0
  %3667 = vmatpush1.msra.mxu0 0.0
  %3668 = vmatprep.subr.mxu0 0.0
  %3669 = vmatpush1.msra.mxu0 0.0
  %3670 = vmatprep.subr.mxu0 0.0
  %3671 = vmatpush1.msra.mxu0 0.0
  %3672 = vmatprep.subr.mxu0 0.0
  %3673 = vmatpush1.msra.mxu0 0.0
  %3674 = vmatprep.subr.mxu0 0.0
  %3675 = vmatpush1.msra.mxu0 0.0
  %3676 = vmatprep.subr.mxu0 0.0
  %3677 = vmatpush1.msra.mxu0 0.0
  %3678 = vmatprep.subr.mxu0 0.0
  %3679 = vmatpush1.msra.mxu0 0.0
  %3680 = vmatprep.subr.mxu0 0.0
  %3681 = vmatpush1.msra.mxu0 0.0
  %3682 = vmatprep.subr.mxu0 0.0
  %3683 = vmatpush1.msra.mxu0 0.0
  %3684 = vmatprep.subr.mxu0 0.0
  %3685 = vmatpush1.msra.mxu0 0.0
  %3686 = vmatprep.subr.mxu0 0.0
  %3687 = vmatpush1.msra.mxu0 0.0
  %3688 = vmatprep.subr.mxu0 0.0
  %3689 = vmatpush1.msra.mxu0 0.0
  %3690 = vmatprep.mubr.f32.mxu0 0.0
  %3691 = vmatmul.mubr.f32.gmra.mrb[0].mxu0 %v3624
  %v3692 = vpop.f32.mrb[0].mxu0
  %v3693 = vadd.f32 %v3619, %v3692
  %v3694 = vpop.f32.mrb[0].mxu0
  %3695 = vdwg.mxu0
  %s3696 = scalar_lea.vmem %s14, 4
  %3697 = vst.msk [vmem:[%s3696] sm:$0x3] %vm2752, %v3693
  %v3698 = vld [vmem:[%s6] sm:$0xf]
  %v3699 = vld [vmem:[%s7] sm:$0x1]
  %v3701 = vlaneseq
  %v3702 = vshrl.u32 %v3701, 7
  %v3703 = vsub.s32 0, %v3702
  %v3704 = vrot.slane %v3699, %v3703
  %v3707 = vsel %vm2281, %v3693, 0
  %v3710 = vsel %vm2285, %v3698, 0
  %3712 = vmatprep.subr.mxu0 0.0
  %3713 = vmatpush1.msra.mxu0 %v3710
  %3714 = vmatprep.subr.mxu0 0.0
  %3715 = vmatpush1.msra.mxu0 0.0
  %3716 = vmatprep.subr.mxu0 0.0
  %3717 = vmatpush1.msra.mxu0 0.0
  %3718 = vmatprep.subr.mxu0 0.0
  %3719 = vmatpush1.msra.mxu0 0.0
  %3720 = vmatprep.subr.mxu0 0.0
  %3721 = vmatpush1.msra.mxu0 0.0
  %3722 = vmatprep.subr.mxu0 0.0
  %3723 = vmatpush1.msra.mxu0 0.0
  %3724 = vmatprep.subr.mxu0 0.0
  %3725 = vmatpush1.msra.mxu0 0.0
  %3726 = vmatprep.subr.mxu0 0.0
  %3727 = vmatpush1.msra.mxu0 0.0
  %3728 = vmatprep.subr.mxu0 0.0
  %3729 = vmatpush1.msra.mxu0 0.0
  %3730 = vmatprep.subr.mxu0 0.0
  %3731 = vmatpush1.msra.mxu0 0.0
  %3732 = vmatprep.subr.mxu0 0.0
  %3733 = vmatpush1.msra.mxu0 0.0
  %3734 = vmatprep.subr.mxu0 0.0
  %3735 = vmatpush1.msra.mxu0 0.0
  %3736 = vmatprep.subr.mxu0 0.0
  %3737 = vmatpush1.msra.mxu0 0.0
  %3738 = vmatprep.subr.mxu0 0.0
  %3739 = vmatpush1.msra.mxu0 0.0
  %3740 = vmatprep.subr.mxu0 0.0
  %3741 = vmatpush1.msra.mxu0 0.0
  %3742 = vmatprep.subr.mxu0 0.0
  %3743 = vmatpush1.msra.mxu0 0.0
  %3744 = vmatprep.subr.mxu0 0.0
  %3745 = vmatpush1.msra.mxu0 0.0
  %3746 = vmatprep.subr.mxu0 0.0
  %3747 = vmatpush1.msra.mxu0 0.0
  %3748 = vmatprep.subr.mxu0 0.0
  %3749 = vmatpush1.msra.mxu0 0.0
  %3750 = vmatprep.subr.mxu0 0.0
  %3751 = vmatpush1.msra.mxu0 0.0
  %3752 = vmatprep.subr.mxu0 0.0
  %3753 = vmatpush1.msra.mxu0 0.0
  %3754 = vmatprep.subr.mxu0 0.0
  %3755 = vmatpush1.msra.mxu0 0.0
  %3756 = vmatprep.subr.mxu0 0.0
  %3757 = vmatpush1.msra.mxu0 0.0
  %3758 = vmatprep.subr.mxu0 0.0
  %3759 = vmatpush1.msra.mxu0 0.0
  %3760 = vmatprep.subr.mxu0 0.0
  %3761 = vmatpush1.msra.mxu0 0.0
  %3762 = vmatprep.subr.mxu0 0.0
  %3763 = vmatpush1.msra.mxu0 0.0
  %3764 = vmatprep.subr.mxu0 0.0
  %3765 = vmatpush1.msra.mxu0 0.0
  %3766 = vmatprep.subr.mxu0 0.0
  %3767 = vmatpush1.msra.mxu0 0.0
  %3768 = vmatprep.subr.mxu0 0.0
  %3769 = vmatpush1.msra.mxu0 0.0
  %3770 = vmatprep.subr.mxu0 0.0
  %3771 = vmatpush1.msra.mxu0 0.0
  %3772 = vmatprep.subr.mxu0 0.0
  %3773 = vmatpush1.msra.mxu0 0.0
  %3774 = vmatprep.subr.mxu0 0.0
  %3775 = vmatpush1.msra.mxu0 0.0
  %3776 = vmatprep.mubr.f32.mxu0 0.0
  %3777 = vmatmul.mubr.f32.gmra.mrb[0].mxu0 %v3707
  %v3778 = vpop.f32.mrb[0].mxu0
  %v3779 = vadd.f32 %v3704, %v3778
  %v3780 = vpop.f32.mrb[0].mxu0
  %3781 = vdwg.mxu0
  %v3782 = vld [vmem:[%s8] sm:$0xff]
  %v3783 = vld [vmem:[%s8 + $0x8] sm:$0xff]
  %v3784 = vld [vmem:[%s8 + $0x10] sm:$0xff]
  %v3785 = vld [vmem:[%s8 + $0x18] sm:$0xff]
  %v3786 = vld [vmem:[%s9] sm:$0x1]
  %v3788 = vlaneseq
  %v3789 = vshrl.u32 %v3788, 7
  %v3790 = vsub.s32 0, %v3789
  %v3791 = vrot.slane %v3786, %v3790
  %3793 = vmatprep.subr.mxu0 0.0
  %3794 = vmatpush1.msra.mxu0 %v3782
  %3795 = vmatprep.subr.mxu0 0.0
  %3796 = vmatpush1.msra.mxu0 %v3783
  %3797 = vmatprep.subr.mxu0 0.0
  %3798 = vmatpush1.msra.mxu0 %v3784
  %3799 = vmatprep.subr.mxu0 0.0
  %3800 = vmatpush1.msra.mxu0 %v3785
  %3801 = vmatprep.subr.mxu0 0.0
  %3802 = vmatpush1.msra.mxu0 0.0
  %3803 = vmatprep.subr.mxu0 0.0
  %3804 = vmatpush1.msra.mxu0 0.0
  %3805 = vmatprep.subr.mxu0 0.0
  %3806 = vmatpush1.msra.mxu0 0.0
  %3807 = vmatprep.subr.mxu0 0.0
  %3808 = vmatpush1.msra.mxu0 0.0
  %3809 = vmatprep.subr.mxu0 0.0
  %3810 = vmatpush1.msra.mxu0 0.0
  %3811 = vmatprep.subr.mxu0 0.0
  %3812 = vmatpush1.msra.mxu0 0.0
  %3813 = vmatprep.subr.mxu0 0.0
  %3814 = vmatpush1.msra.mxu0 0.0
  %3815 = vmatprep.subr.mxu0 0.0
  %3816 = vmatpush1.msra.mxu0 0.0
  %3817 = vmatprep.subr.mxu0 0.0
  %3818 = vmatpush1.msra.mxu0 0.0
  %3819 = vmatprep.subr.mxu0 0.0
  %3820 = vmatpush1.msra.mxu0 0.0
  %3821 = vmatprep.subr.mxu0 0.0
  %3822 = vmatpush1.msra.mxu0 0.0
  %3823 = vmatprep.subr.mxu0 0.0
  %3824 = vmatpush1.msra.mxu0 0.0
  %3825 = vmatprep.subr.mxu0 0.0
  %3826 = vmatpush1.msra.mxu0 0.0
  %3827 = vmatprep.subr.mxu0 0.0
  %3828 = vmatpush1.msra.mxu0 0.0
  %3829 = vmatprep.subr.mxu0 0.0
  %3830 = vmatpush1.msra.mxu0 0.0
  %3831 = vmatprep.subr.mxu0 0.0
  %3832 = vmatpush1.msra.mxu0 0.0
  %3833 = vmatprep.subr.mxu0 0.0
  %3834 = vmatpush1.msra.mxu0 0.0
  %3835 = vmatprep.subr.mxu0 0.0
  %3836 = vmatpush1.msra.mxu0 0.0
  %3837 = vmatprep.subr.mxu0 0.0
  %3838 = vmatpush1.msra.mxu0 0.0
  %3839 = vmatprep.subr.mxu0 0.0
  %3840 = vmatpush1.msra.mxu0 0.0
  %3841 = vmatprep.subr.mxu0 0.0
  %3842 = vmatpush1.msra.mxu0 0.0
  %3843 = vmatprep.subr.mxu0 0.0
  %3844 = vmatpush1.msra.mxu0 0.0
  %3845 = vmatprep.subr.mxu0 0.0
  %3846 = vmatpush1.msra.mxu0 0.0
  %3847 = vmatprep.subr.mxu0 0.0
  %3848 = vmatpush1.msra.mxu0 0.0
  %3849 = vmatprep.subr.mxu0 0.0
  %3850 = vmatpush1.msra.mxu0 0.0
  %3851 = vmatprep.subr.mxu0 0.0
  %3852 = vmatpush1.msra.mxu0 0.0
  %3853 = vmatprep.subr.mxu0 0.0
  %3854 = vmatpush1.msra.mxu0 0.0
  %3855 = vmatprep.subr.mxu0 0.0
  %3856 = vmatpush1.msra.mxu0 0.0
  %3857 = vmatprep.mubr.f32.mxu0 0.0
  %3858 = vmatmul.mubr.f32.gmra.mrb[0].mxu0 %v3431
  %v3859 = vpop.f32.mrb[0].mxu0
  %v3860 = vadd.f32 %v3791, %v3859
  %v3861 = vpop.f32.mrb[0].mxu0
  %3862 = vdwg.mxu0
  %v3863 = vadd.f32 %v3779, %v3860
  %v3864 = vxor.u32 %v3863, 2147483648
  %v3865 = vmul.f32 %v3864, 1.442695
  %v3866 = vpow.pop %v3865
  %v3867 = vadd.f32 %v3866, 1.0
  %v3868 = vrcp.pop %v3867
  %v3869 = vmul.f32 1.0, %v3868
  %3871 = vrot.lane.b32.xlu0 %v3860, 64
  %v3872 = vpop.permute.xlu0 %3871
  %v3874 = vmul.f32 %v3869, %v3872
  %3876 = vrot.lane.b32.xlu0 %v3874, 64
  %v3877 = vpop.permute.xlu0 %3876
  %v3879 = vadd.f32 %v3779, %v3877
  %v3880 = vtanh.pop %v3879
  %v3881 = vsub.f32 1.0, %v3869
  %3883 = vrot.lane.b32.xlu0 %v3880, 96
  %v3884 = vpop.permute.xlu0 %3883
  %v3886 = vmul.f32 %v3881, %v3884
  %v3887 = vmul.f32 %v3869, %v3416
  %v3888 = vadd.f32 %v3886, %v3887
  %v3889 = vld [vmem:[%s10] sm:$0xff]
  %v3890 = vld [vmem:[%s10 + $0x8] sm:$0xff]
  %v3891 = vld [vmem:[%s10 + $0x10] sm:$0xff]
  %v3892 = vld [vmem:[%s10 + $0x18] sm:$0xff]
  %v3893 = vld [vmem:[%s11] sm:$0x1]
  %v3895 = vlaneseq
  %v3896 = vshrl.u32 %v3895, 7
  %v3897 = vsub.s32 0, %v3896
  %v3898 = vrot.slane %v3893, %v3897
  %3901 = vrot.lane.b32.xlu0 %v3888, 96
  %v3902 = vpop.permute.xlu0 %3901
  %v3903 = vsel %vm59, %v3902, 0
  %3905 = vmatprep.subr.mxu0 0.0
  %3906 = vmatpush1.msra.mxu0 %v3889
  %3907 = vmatprep.subr.mxu0 0.0
  %3908 = vmatpush1.msra.mxu0 %v3890
  %3909 = vmatprep.subr.mxu0 0.0
  %3910 = vmatpush1.msra.mxu0 %v3891
  %3911 = vmatprep.subr.mxu0 0.0
  %3912 = vmatpush1.msra.mxu0 %v3892
  %3913 = vmatprep.subr.mxu0 0.0
  %3914 = vmatpush1.msra.mxu0 0.0
  %3915 = vmatprep.subr.mxu0 0.0
  %3916 = vmatpush1.msra.mxu0 0.0
  %3917 = vmatprep.subr.mxu0 0.0
  %3918 = vmatpush1.msra.mxu0 0.0
  %3919 = vmatprep.subr.mxu0 0.0
  %3920 = vmatpush1.msra.mxu0 0.0
  %3921 = vmatprep.subr.mxu0 0.0
  %3922 = vmatpush1.msra.mxu0 0.0
  %3923 = vmatprep.subr.mxu0 0.0
  %3924 = vmatpush1.msra.mxu0 0.0
  %3925 = vmatprep.subr.mxu0 0.0
  %3926 = vmatpush1.msra.mxu0 0.0
  %3927 = vmatprep.subr.mxu0 0.0
  %3928 = vmatpush1.msra.mxu0 0.0
  %3929 = vmatprep.subr.mxu0 0.0
  %3930 = vmatpush1.msra.mxu0 0.0
  %3931 = vmatprep.subr.mxu0 0.0
  %3932 = vmatpush1.msra.mxu0 0.0
  %3933 = vmatprep.subr.mxu0 0.0
  %3934 = vmatpush1.msra.mxu0 0.0
  %3935 = vmatprep.subr.mxu0 0.0
  %3936 = vmatpush1.msra.mxu0 0.0
  %3937 = vmatprep.subr.mxu0 0.0
  %3938 = vmatpush1.msra.mxu0 0.0
  %3939 = vmatprep.subr.mxu0 0.0
  %3940 = vmatpush1.msra.mxu0 0.0
  %3941 = vmatprep.subr.mxu0 0.0
  %3942 = vmatpush1.msra.mxu0 0.0
  %3943 = vmatprep.subr.mxu0 0.0
  %3944 = vmatpush1.msra.mxu0 0.0
  %3945 = vmatprep.subr.mxu0 0.0
  %3946 = vmatpush1.msra.mxu0 0.0
  %3947 = vmatprep.subr.mxu0 0.0
  %3948 = vmatpush1.msra.mxu0 0.0
  %3949 = vmatprep.subr.mxu0 0.0
  %3950 = vmatpush1.msra.mxu0 0.0
  %3951 = vmatprep.subr.mxu0 0.0
  %3952 = vmatpush1.msra.mxu0 0.0
  %3953 = vmatprep.subr.mxu0 0.0
  %3954 = vmatpush1.msra.mxu0 0.0
  %3955 = vmatprep.subr.mxu0 0.0
  %3956 = vmatpush1.msra.mxu0 0.0
  %3957 = vmatprep.subr.mxu0 0.0
  %3958 = vmatpush1.msra.mxu0 0.0
  %3959 = vmatprep.subr.mxu0 0.0
  %3960 = vmatpush1.msra.mxu0 0.0
  %3961 = vmatprep.subr.mxu0 0.0
  %3962 = vmatpush1.msra.mxu0 0.0
  %3963 = vmatprep.subr.mxu0 0.0
  %3964 = vmatpush1.msra.mxu0 0.0
  %3965 = vmatprep.subr.mxu0 0.0
  %3966 = vmatpush1.msra.mxu0 0.0
  %3967 = vmatprep.subr.mxu0 0.0
  %3968 = vmatpush1.msra.mxu0 0.0
  %3969 = vmatprep.mubr.f32.mxu0 0.0
  %3970 = vmatmul.mubr.f32.gmra.mrb[0].mxu0 %v3903
  %v3971 = vpop.f32.mrb[0].mxu0
  %v3972 = vadd.f32 %v3898, %v3971
  %v3973 = vpop.f32.mrb[0].mxu0
  %3974 = vdwg.mxu0
  %v3975 = vld [vmem:[%s2552] sm:$0xff]
  %v3976 = vld [vmem:[%s2552 + $0x8] sm:$0xff]
  %v3977 = vld [vmem:[%s2552 + $0x10] sm:$0xff]
  %v3978 = vld [vmem:[%s2552 + $0x18] sm:$0xff]
  %v3979 = vld [vmem:[%s2557] sm:$0x1]
  %v3981 = vlaneseq
  %v3982 = vshrl.u32 %v3981, 7
  %v3983 = vsub.s32 0, %v3982
  %v3984 = vrot.slane %v3979, %v3983
  %3986 = vmatprep.subr.mxu0 0.0
  %3987 = vmatpush1.msra.mxu0 %v3975
  %3988 = vmatprep.subr.mxu0 0.0
  %3989 = vmatpush1.msra.mxu0 %v3976
  %3990 = vmatprep.subr.mxu0 0.0
  %3991 = vmatpush1.msra.mxu0 %v3977
  %3992 = vmatprep.subr.mxu0 0.0
  %3993 = vmatpush1.msra.mxu0 %v3978
  %3994 = vmatprep.subr.mxu0 0.0
  %3995 = vmatpush1.msra.mxu0 0.0
  %3996 = vmatprep.subr.mxu0 0.0
  %3997 = vmatpush1.msra.mxu0 0.0
  %3998 = vmatprep.subr.mxu0 0.0
  %3999 = vmatpush1.msra.mxu0 0.0
  %4000 = vmatprep.subr.mxu0 0.0
  %4001 = vmatpush1.msra.mxu0 0.0
  %4002 = vmatprep.subr.mxu0 0.0
  %4003 = vmatpush1.msra.mxu0 0.0
  %4004 = vmatprep.subr.mxu0 0.0
  %4005 = vmatpush1.msra.mxu0 0.0
  %4006 = vmatprep.subr.mxu0 0.0
  %4007 = vmatpush1.msra.mxu0 0.0
  %4008 = vmatprep.subr.mxu0 0.0
  %4009 = vmatpush1.msra.mxu0 0.0
  %4010 = vmatprep.subr.mxu0 0.0
  %4011 = vmatpush1.msra.mxu0 0.0
  %4012 = vmatprep.subr.mxu0 0.0
  %4013 = vmatpush1.msra.mxu0 0.0
  %4014 = vmatprep.subr.mxu0 0.0
  %4015 = vmatpush1.msra.mxu0 0.0
  %4016 = vmatprep.subr.mxu0 0.0
  %4017 = vmatpush1.msra.mxu0 0.0
  %4018 = vmatprep.subr.mxu0 0.0
  %4019 = vmatpush1.msra.mxu0 0.0
  %4020 = vmatprep.subr.mxu0 0.0
  %4021 = vmatpush1.msra.mxu0 0.0
  %4022 = vmatprep.subr.mxu0 0.0
  %4023 = vmatpush1.msra.mxu0 0.0
  %4024 = vmatprep.subr.mxu0 0.0
  %4025 = vmatpush1.msra.mxu0 0.0
  %4026 = vmatprep.subr.mxu0 0.0
  %4027 = vmatpush1.msra.mxu0 0.0
  %4028 = vmatprep.subr.mxu0 0.0
  %4029 = vmatpush1.msra.mxu0 0.0
  %4030 = vmatprep.subr.mxu0 0.0
  %4031 = vmatpush1.msra.mxu0 0.0
  %4032 = vmatprep.subr.mxu0 0.0
  %4033 = vmatpush1.msra.mxu0 0.0
  %4034 = vmatprep.subr.mxu0 0.0
  %4035 = vmatpush1.msra.mxu0 0.0
  %4036 = vmatprep.subr.mxu0 0.0
  %4037 = vmatpush1.msra.mxu0 0.0
  %4038 = vmatprep.subr.mxu0 0.0
  %4039 = vmatpush1.msra.mxu0 0.0
  %4040 = vmatprep.subr.mxu0 0.0
  %4041 = vmatpush1.msra.mxu0 0.0
  %4042 = vmatprep.subr.mxu0 0.0
  %4043 = vmatpush1.msra.mxu0 0.0
  %4044 = vmatprep.subr.mxu0 0.0
  %4045 = vmatpush1.msra.mxu0 0.0
  %4046 = vmatprep.subr.mxu0 0.0
  %4047 = vmatpush1.msra.mxu0 0.0
  %4048 = vmatprep.subr.mxu0 0.0
  %4049 = vmatpush1.msra.mxu0 0.0
  %4050 = vmatprep.mubr.f32.mxu0 0.0
  %4051 = vmatmul.mubr.f32.gmra.mrb[0].mxu0 %v3624
  %v4052 = vpop.f32.mrb[0].mxu0
  %v4053 = vadd.f32 %v3984, %v4052
  %v4054 = vpop.f32.mrb[0].mxu0
  %4055 = vdwg.mxu0
  %v4056 = vadd.f32 %v3972, %v4053
  %v4057 = vxor.u32 %v4056, 2147483648
  %v4058 = vmul.f32 %v4057, 1.442695
  %v4059 = vpow.pop %v4058
  %v4060 = vadd.f32 %v4059, 1.0
  %v4061 = vrcp.pop %v4060
  %v4062 = vmul.f32 1.0, %v4061
  %4064 = vrot.lane.b32.xlu0 %v4053, 64
  %v4065 = vpop.permute.xlu0 %4064
  %v4067 = vmul.f32 %v4062, %v4065
  %4069 = vrot.lane.b32.xlu0 %v4067, 64
  %v4070 = vpop.permute.xlu0 %4069
  %v4072 = vadd.f32 %v3972, %v4070
  %v4073 = vtanh.pop %v4072
  %v4074 = vsub.f32 1.0, %v4062
  %4076 = vrot.lane.b32.xlu0 %v4073, 96
  %v4077 = vpop.permute.xlu0 %4076
  %v4079 = vmul.f32 %v4074, %v4077
  %v4080 = vmul.f32 %v4062, %v3609
  %v4081 = vadd.f32 %v4079, %v4080
  %v4082 = vld [vmem:[%s12] sm:$0xff]
  %v4083 = vld [vmem:[%s12 + $0x8] sm:$0xff]
  %v4084 = vld [vmem:[%s12 + $0x10] sm:$0xff]
  %v4085 = vld [vmem:[%s12 + $0x18] sm:$0xff]
  %v4086 = vld [vmem:[%s13] sm:$0x1]
  %v4088 = vlaneseq
  %v4089 = vshrl.u32 %v4088, 7
  %v4090 = vsub.s32 0, %v4089
  %v4091 = vrot.slane %v4086, %v4090
  %4094 = vrot.lane.b32.xlu0 %v4081, 96
  %v4095 = vpop.permute.xlu0 %4094
  %v4096 = vsel %vm59, %v4095, 0
  %4098 = vmatprep.subr.mxu0 0.0
  %4099 = vmatpush1.msra.mxu0 %v4082
  %4100 = vmatprep.subr.mxu0 0.0
  %4101 = vmatpush1.msra.mxu0 %v4083
  %4102 = vmatprep.subr.mxu0 0.0
  %4103 = vmatpush1.msra.mxu0 %v4084
  %4104 = vmatprep.subr.mxu0 0.0
  %4105 = vmatpush1.msra.mxu0 %v4085
  %4106 = vmatprep.subr.mxu0 0.0
  %4107 = vmatpush1.msra.mxu0 0.0
  %4108 = vmatprep.subr.mxu0 0.0
  %4109 = vmatpush1.msra.mxu0 0.0
  %4110 = vmatprep.subr.mxu0 0.0
  %4111 = vmatpush1.msra.mxu0 0.0
  %4112 = vmatprep.subr.mxu0 0.0
  %4113 = vmatpush1.msra.mxu0 0.0
  %4114 = vmatprep.subr.mxu0 0.0
  %4115 = vmatpush1.msra.mxu0 0.0
  %4116 = vmatprep.subr.mxu0 0.0
  %4117 = vmatpush1.msra.mxu0 0.0
  %4118 = vmatprep.subr.mxu0 0.0
  %4119 = vmatpush1.msra.mxu0 0.0
  %4120 = vmatprep.subr.mxu0 0.0
  %4121 = vmatpush1.msra.mxu0 0.0
  %4122 = vmatprep.subr.mxu0 0.0
  %4123 = vmatpush1.msra.mxu0 0.0
  %4124 = vmatprep.subr.mxu0 0.0
  %4125 = vmatpush1.msra.mxu0 0.0
  %4126 = vmatprep.subr.mxu0 0.0
  %4127 = vmatpush1.msra.mxu0 0.0
  %4128 = vmatprep.subr.mxu0 0.0
  %4129 = vmatpush1.msra.mxu0 0.0
  %4130 = vmatprep.subr.mxu0 0.0
  %4131 = vmatpush1.msra.mxu0 0.0
  %4132 = vmatprep.subr.mxu0 0.0
  %4133 = vmatpush1.msra.mxu0 0.0
  %4134 = vmatprep.subr.mxu0 0.0
  %4135 = vmatpush1.msra.mxu0 0.0
  %4136 = vmatprep.subr.mxu0 0.0
  %4137 = vmatpush1.msra.mxu0 0.0
  %4138 = vmatprep.subr.mxu0 0.0
  %4139 = vmatpush1.msra.mxu0 0.0
  %4140 = vmatprep.subr.mxu0 0.0
  %4141 = vmatpush1.msra.mxu0 0.0
  %4142 = vmatprep.subr.mxu0 0.0
  %4143 = vmatpush1.msra.mxu0 0.0
  %4144 = vmatprep.subr.mxu0 0.0
  %4145 = vmatpush1.msra.mxu0 0.0
  %4146 = vmatprep.subr.mxu0 0.0
  %4147 = vmatpush1.msra.mxu0 0.0
  %4148 = vmatprep.subr.mxu0 0.0
  %4149 = vmatpush1.msra.mxu0 0.0
  %4150 = vmatprep.subr.mxu0 0.0
  %4151 = vmatpush1.msra.mxu0 0.0
  %4152 = vmatprep.subr.mxu0 0.0
  %4153 = vmatpush1.msra.mxu0 0.0
  %4154 = vmatprep.subr.mxu0 0.0
  %4155 = vmatpush1.msra.mxu0 0.0
  %4156 = vmatprep.subr.mxu0 0.0
  %4157 = vmatpush1.msra.mxu0 0.0
  %4158 = vmatprep.subr.mxu0 0.0
  %4159 = vmatpush1.msra.mxu0 0.0
  %4160 = vmatprep.subr.mxu0 0.0
  %4161 = vmatpush1.msra.mxu0 0.0
  %4162 = vmatprep.mubr.f32.mxu0 0.0
  %4163 = vmatmul.mubr.f32.gmra.mrb[0].mxu0 %v4096
  %v4164 = vpop.f32.mrb[0].mxu0
  %v4165 = vadd.f32 %v4091, %v4164
  %v4166 = vpop.f32.mrb[0].mxu0
  %4167 = vdwg.mxu0
  %s4168 = scalar_lea.vmem %s14, 6
  %4169 = vst.msk [vmem:[%s4168] sm:$0x3] %vm2752, %v4165
  %v4170 = vld [vmem:[%s6] sm:$0xf]
  %v4171 = vld [vmem:[%s7] sm:$0x1]
  %v4173 = vlaneseq
  %v4174 = vshrl.u32 %v4173, 7
  %v4175 = vsub.s32 0, %v4174
  %v4176 = vrot.slane %v4171, %v4175
  %v4179 = vsel %vm2281, %v4165, 0
  %v4182 = vsel %vm2285, %v4170, 0
  %4184 = vmatprep.subr.mxu0 0.0
  %4185 = vmatpush1.msra.mxu0 %v4182
  %4186 = vmatprep.subr.mxu0 0.0
  %4187 = vmatpush1.msra.mxu0 0.0
  %4188 = vmatprep.subr.mxu0 0.0
  %4189 = vmatpush1.msra.mxu0 0.0
  %4190 = vmatprep.subr.mxu0 0.0
  %4191 = vmatpush1.msra.mxu0 0.0
  %4192 = vmatprep.subr.mxu0 0.0
  %4193 = vmatpush1.msra.mxu0 0.0
  %4194 = vmatprep.subr.mxu0 0.0
  %4195 = vmatpush1.msra.mxu0 0.0
  %4196 = vmatprep.subr.mxu0 0.0
  %4197 = vmatpush1.msra.mxu0 0.0
  %4198 = vmatprep.subr.mxu0 0.0
  %4199 = vmatpush1.msra.mxu0 0.0
  %4200 = vmatprep.subr.mxu0 0.0
  %4201 = vmatpush1.msra.mxu0 0.0
  %4202 = vmatprep.subr.mxu0 0.0
  %4203 = vmatpush1.msra.mxu0 0.0
  %4204 = vmatprep.subr.mxu0 0.0
  %4205 = vmatpush1.msra.mxu0 0.0
  %4206 = vmatprep.subr.mxu0 0.0
  %4207 = vmatpush1.msra.mxu0 0.0
  %4208 = vmatprep.subr.mxu0 0.0
  %4209 = vmatpush1.msra.mxu0 0.0
  %4210 = vmatprep.subr.mxu0 0.0
  %4211 = vmatpush1.msra.mxu0 0.0
  %4212 = vmatprep.subr.mxu0 0.0
  %4213 = vmatpush1.msra.mxu0 0.0
  %4214 = vmatprep.subr.mxu0 0.0
  %4215 = vmatpush1.msra.mxu0 0.0
  %4216 = vmatprep.subr.mxu0 0.0
  %4217 = vmatpush1.msra.mxu0 0.0
  %4218 = vmatprep.subr.mxu0 0.0
  %4219 = vmatpush1.msra.mxu0 0.0
  %4220 = vmatprep.subr.mxu0 0.0
  %4221 = vmatpush1.msra.mxu0 0.0
  %4222 = vmatprep.subr.mxu0 0.0
  %4223 = vmatpush1.msra.mxu0 0.0
  %4224 = vmatprep.subr.mxu0 0.0
  %4225 = vmatpush1.msra.mxu0 0.0
  %4226 = vmatprep.subr.mxu0 0.0
  %4227 = vmatpush1.msra.mxu0 0.0
  %4228 = vmatprep.subr.mxu0 0.0
  %4229 = vmatpush1.msra.mxu0 0.0
  %4230 = vmatprep.subr.mxu0 0.0
  %4231 = vmatpush1.msra.mxu0 0.0
  %4232 = vmatprep.subr.mxu0 0.0
  %4233 = vmatpush1.msra.mxu0 0.0
  %4234 = vmatprep.subr.mxu0 0.0
  %4235 = vmatpush1.msra.mxu0 0.0
  %4236 = vmatprep.subr.mxu0 0.0
  %4237 = vmatpush1.msra.mxu0 0.0
  %4238 = vmatprep.subr.mxu0 0.0
  %4239 = vmatpush1.msra.mxu0 0.0
  %4240 = vmatprep.subr.mxu0 0.0
  %4241 = vmatpush1.msra.mxu0 0.0
  %4242 = vmatprep.subr.mxu0 0.0
  %4243 = vmatpush1.msra.mxu0 0.0
  %4244 = vmatprep.subr.mxu0 0.0
  %4245 = vmatpush1.msra.mxu0 0.0
  %4246 = vmatprep.subr.mxu0 0.0
  %4247 = vmatpush1.msra.mxu0 0.0
  %4248 = vmatprep.mubr.f32.mxu0 0.0
  %4249 = vmatmul.mubr.f32.gmra.mrb[0].mxu0 %v4179
  %v4250 = vpop.f32.mrb[0].mxu0
  %v4251 = vadd.f32 %v4176, %v4250
  %v4252 = vpop.f32.mrb[0].mxu0
  %4253 = vdwg.mxu0
  %v4254 = vld [vmem:[%s8] sm:$0xff]
  %v4255 = vld [vmem:[%s8 + $0x8] sm:$0xff]
  %v4256 = vld [vmem:[%s8 + $0x10] sm:$0xff]
  %v4257 = vld [vmem:[%s8 + $0x18] sm:$0xff]
  %v4258 = vld [vmem:[%s9] sm:$0x1]
  %v4260 = vlaneseq
  %v4261 = vshrl.u32 %v4260, 7
  %v4262 = vsub.s32 0, %v4261
  %v4263 = vrot.slane %v4258, %v4262
  %4265 = vmatprep.subr.mxu0 0.0
  %4266 = vmatpush1.msra.mxu0 %v4254
  %4267 = vmatprep.subr.mxu0 0.0
  %4268 = vmatpush1.msra.mxu0 %v4255
  %4269 = vmatprep.subr.mxu0 0.0
  %4270 = vmatpush1.msra.mxu0 %v4256
  %4271 = vmatprep.subr.mxu0 0.0
  %4272 = vmatpush1.msra.mxu0 %v4257
  %4273 = vmatprep.subr.mxu0 0.0
  %4274 = vmatpush1.msra.mxu0 0.0
  %4275 = vmatprep.subr.mxu0 0.0
  %4276 = vmatpush1.msra.mxu0 0.0
  %4277 = vmatprep.subr.mxu0 0.0
  %4278 = vmatpush1.msra.mxu0 0.0
  %4279 = vmatprep.subr.mxu0 0.0
  %4280 = vmatpush1.msra.mxu0 0.0
  %4281 = vmatprep.subr.mxu0 0.0
  %4282 = vmatpush1.msra.mxu0 0.0
  %4283 = vmatprep.subr.mxu0 0.0
  %4284 = vmatpush1.msra.mxu0 0.0
  %4285 = vmatprep.subr.mxu0 0.0
  %4286 = vmatpush1.msra.mxu0 0.0
  %4287 = vmatprep.subr.mxu0 0.0
  %4288 = vmatpush1.msra.mxu0 0.0
  %4289 = vmatprep.subr.mxu0 0.0
  %4290 = vmatpush1.msra.mxu0 0.0
  %4291 = vmatprep.subr.mxu0 0.0
  %4292 = vmatpush1.msra.mxu0 0.0
  %4293 = vmatprep.subr.mxu0 0.0
  %4294 = vmatpush1.msra.mxu0 0.0
  %4295 = vmatprep.subr.mxu0 0.0
  %4296 = vmatpush1.msra.mxu0 0.0
  %4297 = vmatprep.subr.mxu0 0.0
  %4298 = vmatpush1.msra.mxu0 0.0
  %4299 = vmatprep.subr.mxu0 0.0
  %4300 = vmatpush1.msra.mxu0 0.0
  %4301 = vmatprep.subr.mxu0 0.0
  %4302 = vmatpush1.msra.mxu0 0.0
  %4303 = vmatprep.subr.mxu0 0.0
  %4304 = vmatpush1.msra.mxu0 0.0
  %4305 = vmatprep.subr.mxu0 0.0
  %4306 = vmatpush1.msra.mxu0 0.0
  %4307 = vmatprep.subr.mxu0 0.0
  %4308 = vmatpush1.msra.mxu0 0.0
  %4309 = vmatprep.subr.mxu0 0.0
  %4310 = vmatpush1.msra.mxu0 0.0
  %4311 = vmatprep.subr.mxu0 0.0
  %4312 = vmatpush1.msra.mxu0 0.0
  %4313 = vmatprep.subr.mxu0 0.0
  %4314 = vmatpush1.msra.mxu0 0.0
  %4315 = vmatprep.subr.mxu0 0.0
  %4316 = vmatpush1.msra.mxu0 0.0
  %4317 = vmatprep.subr.mxu0 0.0
  %4318 = vmatpush1.msra.mxu0 0.0
  %4319 = vmatprep.subr.mxu0 0.0
  %4320 = vmatpush1.msra.mxu0 0.0
  %4321 = vmatprep.subr.mxu0 0.0
  %4322 = vmatpush1.msra.mxu0 0.0
  %4323 = vmatprep.subr.mxu0 0.0
  %4324 = vmatpush1.msra.mxu0 0.0
  %4325 = vmatprep.subr.mxu0 0.0
  %4326 = vmatpush1.msra.mxu0 0.0
  %4327 = vmatprep.subr.mxu0 0.0
  %4328 = vmatpush1.msra.mxu0 0.0
  %4329 = vmatprep.mubr.f32.mxu0 0.0
  %4330 = vmatmul.mubr.f32.gmra.mrb[0].mxu0 %v3903
  %v4331 = vpop.f32.mrb[0].mxu0
  %v4332 = vadd.f32 %v4263, %v4331
  %v4333 = vpop.f32.mrb[0].mxu0
  %4334 = vdwg.mxu0
  %v4335 = vadd.f32 %v4251, %v4332
  %v4336 = vxor.u32 %v4335, 2147483648
  %v4337 = vmul.f32 %v4336, 1.442695
  %v4338 = vpow.pop %v4337
  %v4339 = vadd.f32 %v4338, 1.0
  %v4340 = vrcp.pop %v4339
  %v4341 = vmul.f32 1.0, %v4340
  %4343 = vrot.lane.b32.xlu0 %v4332, 64
  %v4344 = vpop.permute.xlu0 %4343
  %v4346 = vmul.f32 %v4341, %v4344
  %4348 = vrot.lane.b32.xlu0 %v4346, 64
  %v4349 = vpop.permute.xlu0 %4348
  %v4351 = vadd.f32 %v4251, %v4349
  %v4352 = vtanh.pop %v4351
  %v4353 = vsub.f32 1.0, %v4341
  %4355 = vrot.lane.b32.xlu0 %v4352, 96
  %v4356 = vpop.permute.xlu0 %4355
  %v4358 = vmul.f32 %v4353, %v4356
  %v4359 = vmul.f32 %v4341, %v3888
  %v4360 = vadd.f32 %v4358, %v4359
  %v4361 = vld [vmem:[%s10] sm:$0xff]
  %v4362 = vld [vmem:[%s10 + $0x8] sm:$0xff]
  %v4363 = vld [vmem:[%s10 + $0x10] sm:$0xff]
  %v4364 = vld [vmem:[%s10 + $0x18] sm:$0xff]
  %v4365 = vld [vmem:[%s11] sm:$0x1]
  %v4367 = vlaneseq
  %v4368 = vshrl.u32 %v4367, 7
  %v4369 = vsub.s32 0, %v4368
  %v4370 = vrot.slane %v4365, %v4369
  %4373 = vrot.lane.b32.xlu0 %v4360, 96
  %v4374 = vpop.permute.xlu0 %4373
  %v4375 = vsel %vm59, %v4374, 0
  %4377 = vmatprep.subr.mxu0 0.0
  %4378 = vmatpush1.msra.mxu0 %v4361
  %4379 = vmatprep.subr.mxu0 0.0
  %4380 = vmatpush1.msra.mxu0 %v4362
  %4381 = vmatprep.subr.mxu0 0.0
  %4382 = vmatpush1.msra.mxu0 %v4363
  %4383 = vmatprep.subr.mxu0 0.0
  %4384 = vmatpush1.msra.mxu0 %v4364
  %4385 = vmatprep.subr.mxu0 0.0
  %4386 = vmatpush1.msra.mxu0 0.0
  %4387 = vmatprep.subr.mxu0 0.0
  %4388 = vmatpush1.msra.mxu0 0.0
  %4389 = vmatprep.subr.mxu0 0.0
  %4390 = vmatpush1.msra.mxu0 0.0
  %4391 = vmatprep.subr.mxu0 0.0
  %4392 = vmatpush1.msra.mxu0 0.0
  %4393 = vmatprep.subr.mxu0 0.0
  %4394 = vmatpush1.msra.mxu0 0.0
  %4395 = vmatprep.subr.mxu0 0.0
  %4396 = vmatpush1.msra.mxu0 0.0
  %4397 = vmatprep.subr.mxu0 0.0
  %4398 = vmatpush1.msra.mxu0 0.0
  %4399 = vmatprep.subr.mxu0 0.0
  %4400 = vmatpush1.msra.mxu0 0.0
  %4401 = vmatprep.subr.mxu0 0.0
  %4402 = vmatpush1.msra.mxu0 0.0
  %4403 = vmatprep.subr.mxu0 0.0
  %4404 = vmatpush1.msra.mxu0 0.0
  %4405 = vmatprep.subr.mxu0 0.0
  %4406 = vmatpush1.msra.mxu0 0.0
  %4407 = vmatprep.subr.mxu0 0.0
  %4408 = vmatpush1.msra.mxu0 0.0
  %4409 = vmatprep.subr.mxu0 0.0
  %4410 = vmatpush1.msra.mxu0 0.0
  %4411 = vmatprep.subr.mxu0 0.0
  %4412 = vmatpush1.msra.mxu0 0.0
  %4413 = vmatprep.subr.mxu0 0.0
  %4414 = vmatpush1.msra.mxu0 0.0
  %4415 = vmatprep.subr.mxu0 0.0
  %4416 = vmatpush1.msra.mxu0 0.0
  %4417 = vmatprep.subr.mxu0 0.0
  %4418 = vmatpush1.msra.mxu0 0.0
  %4419 = vmatprep.subr.mxu0 0.0
  %4420 = vmatpush1.msra.mxu0 0.0
  %4421 = vmatprep.subr.mxu0 0.0
  %4422 = vmatpush1.msra.mxu0 0.0
  %4423 = vmatprep.subr.mxu0 0.0
  %4424 = vmatpush1.msra.mxu0 0.0
  %4425 = vmatprep.subr.mxu0 0.0
  %4426 = vmatpush1.msra.mxu0 0.0
  %4427 = vmatprep.subr.mxu0 0.0
  %4428 = vmatpush1.msra.mxu0 0.0
  %4429 = vmatprep.subr.mxu0 0.0
  %4430 = vmatpush1.msra.mxu0 0.0
  %4431 = vmatprep.subr.mxu0 0.0
  %4432 = vmatpush1.msra.mxu0 0.0
  %4433 = vmatprep.subr.mxu0 0.0
  %4434 = vmatpush1.msra.mxu0 0.0
  %4435 = vmatprep.subr.mxu0 0.0
  %4436 = vmatpush1.msra.mxu0 0.0
  %4437 = vmatprep.subr.mxu0 0.0
  %4438 = vmatpush1.msra.mxu0 0.0
  %4439 = vmatprep.subr.mxu0 0.0
  %4440 = vmatpush1.msra.mxu0 0.0
  %4441 = vmatprep.mubr.f32.mxu0 0.0
  %4442 = vmatmul.mubr.f32.gmra.mrb[0].mxu0 %v4375
  %v4443 = vpop.f32.mrb[0].mxu0
  %v4444 = vadd.f32 %v4370, %v4443
  %v4445 = vpop.f32.mrb[0].mxu0
  %4446 = vdwg.mxu0
  %v4447 = vld [vmem:[%s2552] sm:$0xff]
  %v4448 = vld [vmem:[%s2552 + $0x8] sm:$0xff]
  %v4449 = vld [vmem:[%s2552 + $0x10] sm:$0xff]
  %v4450 = vld [vmem:[%s2552 + $0x18] sm:$0xff]
  %v4451 = vld [vmem:[%s2557] sm:$0x1]
  %v4453 = vlaneseq
  %v4454 = vshrl.u32 %v4453, 7
  %v4455 = vsub.s32 0, %v4454
  %v4456 = vrot.slane %v4451, %v4455
  %4458 = vmatprep.subr.mxu0 0.0
  %4459 = vmatpush1.msra.mxu0 %v4447
  %4460 = vmatprep.subr.mxu0 0.0
  %4461 = vmatpush1.msra.mxu0 %v4448
  %4462 = vmatprep.subr.mxu0 0.0
  %4463 = vmatpush1.msra.mxu0 %v4449
  %4464 = vmatprep.subr.mxu0 0.0
  %4465 = vmatpush1.msra.mxu0 %v4450
  %4466 = vmatprep.subr.mxu0 0.0
  %4467 = vmatpush1.msra.mxu0 0.0
  %4468 = vmatprep.subr.mxu0 0.0
  %4469 = vmatpush1.msra.mxu0 0.0
  %4470 = vmatprep.subr.mxu0 0.0
  %4471 = vmatpush1.msra.mxu0 0.0
  %4472 = vmatprep.subr.mxu0 0.0
  %4473 = vmatpush1.msra.mxu0 0.0
  %4474 = vmatprep.subr.mxu0 0.0
  %4475 = vmatpush1.msra.mxu0 0.0
  %4476 = vmatprep.subr.mxu0 0.0
  %4477 = vmatpush1.msra.mxu0 0.0
  %4478 = vmatprep.subr.mxu0 0.0
  %4479 = vmatpush1.msra.mxu0 0.0
  %4480 = vmatprep.subr.mxu0 0.0
  %4481 = vmatpush1.msra.mxu0 0.0
  %4482 = vmatprep.subr.mxu0 0.0
  %4483 = vmatpush1.msra.mxu0 0.0
  %4484 = vmatprep.subr.mxu0 0.0
  %4485 = vmatpush1.msra.mxu0 0.0
  %4486 = vmatprep.subr.mxu0 0.0
  %4487 = vmatpush1.msra.mxu0 0.0
  %4488 = vmatprep.subr.mxu0 0.0
  %4489 = vmatpush1.msra.mxu0 0.0
  %4490 = vmatprep.subr.mxu0 0.0
  %4491 = vmatpush1.msra.mxu0 0.0
  %4492 = vmatprep.subr.mxu0 0.0
  %4493 = vmatpush1.msra.mxu0 0.0
  %4494 = vmatprep.subr.mxu0 0.0
  %4495 = vmatpush1.msra.mxu0 0.0
  %4496 = vmatprep.subr.mxu0 0.0
  %4497 = vmatpush1.msra.mxu0 0.0
  %4498 = vmatprep.subr.mxu0 0.0
  %4499 = vmatpush1.msra.mxu0 0.0
  %4500 = vmatprep.subr.mxu0 0.0
  %4501 = vmatpush1.msra.mxu0 0.0
  %4502 = vmatprep.subr.mxu0 0.0
  %4503 = vmatpush1.msra.mxu0 0.0
  %4504 = vmatprep.subr.mxu0 0.0
  %4505 = vmatpush1.msra.mxu0 0.0
  %4506 = vmatprep.subr.mxu0 0.0
  %4507 = vmatpush1.msra.mxu0 0.0
  %4508 = vmatprep.subr.mxu0 0.0
  %4509 = vmatpush1.msra.mxu0 0.0
  %4510 = vmatprep.subr.mxu0 0.0
  %4511 = vmatpush1.msra.mxu0 0.0
  %4512 = vmatprep.subr.mxu0 0.0
  %4513 = vmatpush1.msra.mxu0 0.0
  %4514 = vmatprep.subr.mxu0 0.0
  %4515 = vmatpush1.msra.mxu0 0.0
  %4516 = vmatprep.subr.mxu0 0.0
  %4517 = vmatpush1.msra.mxu0 0.0
  %4518 = vmatprep.subr.mxu0 0.0
  %4519 = vmatpush1.msra.mxu0 0.0
  %4520 = vmatprep.subr.mxu0 0.0
  %4521 = vmatpush1.msra.mxu0 0.0
  %4522 = vmatprep.mubr.f32.mxu0 0.0
  %4523 = vmatmul.mubr.f32.gmra.mrb[0].mxu0 %v4096
  %v4524 = vpop.f32.mrb[0].mxu0
  %v4525 = vadd.f32 %v4456, %v4524
  %v4526 = vpop.f32.mrb[0].mxu0
  %4527 = vdwg.mxu0
  %v4528 = vadd.f32 %v4444, %v4525
  %v4529 = vxor.u32 %v4528, 2147483648
  %v4530 = vmul.f32 %v4529, 1.442695
  %v4531 = vpow.pop %v4530
  %v4532 = vadd.f32 %v4531, 1.0
  %v4533 = vrcp.pop %v4532
  %v4534 = vmul.f32 1.0, %v4533
  %4536 = vrot.lane.b32.xlu0 %v4525, 64
  %v4537 = vpop.permute.xlu0 %4536
  %v4539 = vmul.f32 %v4534, %v4537
  %4541 = vrot.lane.b32.xlu0 %v4539, 64
  %v4542 = vpop.permute.xlu0 %4541
  %v4544 = vadd.f32 %v4444, %v4542
  %v4545 = vtanh.pop %v4544
  %v4546 = vsub.f32 1.0, %v4534
  %4548 = vrot.lane.b32.xlu0 %v4545, 96
  %v4549 = vpop.permute.xlu0 %4548
  %v4551 = vmul.f32 %v4546, %v4549
  %v4552 = vmul.f32 %v4534, %v4081
  %v4553 = vadd.f32 %v4551, %v4552
  %v4554 = vld [vmem:[%s12] sm:$0xff]
  %v4555 = vld [vmem:[%s12 + $0x8] sm:$0xff]
  %v4556 = vld [vmem:[%s12 + $0x10] sm:$0xff]
  %v4557 = vld [vmem:[%s12 + $0x18] sm:$0xff]
  %v4558 = vld [vmem:[%s13] sm:$0x1]
  %v4560 = vlaneseq
  %v4561 = vshrl.u32 %v4560, 7
  %v4562 = vsub.s32 0, %v4561
  %v4563 = vrot.slane %v4558, %v4562
  %4566 = vrot.lane.b32.xlu0 %v4553, 96
  %v4567 = vpop.permute.xlu0 %4566
  %v4568 = vsel %vm59, %v4567, 0
  %4570 = vmatprep.subr.mxu0 0.0
  %4571 = vmatpush1.msra.mxu0 %v4554
  %4572 = vmatprep.subr.mxu0 0.0
  %4573 = vmatpush1.msra.mxu0 %v4555
  %4574 = vmatprep.subr.mxu0 0.0
  %4575 = vmatpush1.msra.mxu0 %v4556
  %4576 = vmatprep.subr.mxu0 0.0
  %4577 = vmatpush1.msra.mxu0 %v4557
  %4578 = vmatprep.subr.mxu0 0.0
  %4579 = vmatpush1.msra.mxu0 0.0
  %4580 = vmatprep.subr.mxu0 0.0
  %4581 = vmatpush1.msra.mxu0 0.0
  %4582 = vmatprep.subr.mxu0 0.0
  %4583 = vmatpush1.msra.mxu0 0.0
  %4584 = vmatprep.subr.mxu0 0.0
  %4585 = vmatpush1.msra.mxu0 0.0
  %4586 = vmatprep.subr.mxu0 0.0
  %4587 = vmatpush1.msra.mxu0 0.0
  %4588 = vmatprep.subr.mxu0 0.0
  %4589 = vmatpush1.msra.mxu0 0.0
  %4590 = vmatprep.subr.mxu0 0.0
  %4591 = vmatpush1.msra.mxu0 0.0
  %4592 = vmatprep.subr.mxu0 0.0
  %4593 = vmatpush1.msra.mxu0 0.0
  %4594 = vmatprep.subr.mxu0 0.0
  %4595 = vmatpush1.msra.mxu0 0.0
  %4596 = vmatprep.subr.mxu0 0.0
  %4597 = vmatpush1.msra.mxu0 0.0
  %4598 = vmatprep.subr.mxu0 0.0
  %4599 = vmatpush1.msra.mxu0 0.0
  %4600 = vmatprep.subr.mxu0 0.0
  %4601 = vmatpush1.msra.mxu0 0.0
  %4602 = vmatprep.subr.mxu0 0.0
  %4603 = vmatpush1.msra.mxu0 0.0
  %4604 = vmatprep.subr.mxu0 0.0
  %4605 = vmatpush1.msra.mxu0 0.0
  %4606 = vmatprep.subr.mxu0 0.0
  %4607 = vmatpush1.msra.mxu0 0.0
  %4608 = vmatprep.subr.mxu0 0.0
  %4609 = vmatpush1.msra.mxu0 0.0
  %4610 = vmatprep.subr.mxu0 0.0
  %4611 = vmatpush1.msra.mxu0 0.0
  %4612 = vmatprep.subr.mxu0 0.0
  %4613 = vmatpush1.msra.mxu0 0.0
  %4614 = vmatprep.subr.mxu0 0.0
  %4615 = vmatpush1.msra.mxu0 0.0
  %4616 = vmatprep.subr.mxu0 0.0
  %4617 = vmatpush1.msra.mxu0 0.0
  %4618 = vmatprep.subr.mxu0 0.0
  %4619 = vmatpush1.msra.mxu0 0.0
  %4620 = vmatprep.subr.mxu0 0.0
  %4621 = vmatpush1.msra.mxu0 0.0
  %4622 = vmatprep.subr.mxu0 0.0
  %4623 = vmatpush1.msra.mxu0 0.0
  %4624 = vmatprep.subr.mxu0 0.0
  %4625 = vmatpush1.msra.mxu0 0.0
  %4626 = vmatprep.subr.mxu0 0.0
  %4627 = vmatpush1.msra.mxu0 0.0
  %4628 = vmatprep.subr.mxu0 0.0
  %4629 = vmatpush1.msra.mxu0 0.0
  %4630 = vmatprep.subr.mxu0 0.0
  %4631 = vmatpush1.msra.mxu0 0.0
  %4632 = vmatprep.subr.mxu0 0.0
  %4633 = vmatpush1.msra.mxu0 0.0
  %4634 = vmatprep.mubr.f32.mxu0 0.0
  %4635 = vmatmul.mubr.f32.gmra.mrb[0].mxu0 %v4568
  %v4636 = vpop.f32.mrb[0].mxu0
  %v4637 = vadd.f32 %v4563, %v4636
  %v4638 = vpop.f32.mrb[0].mxu0
  %4639 = vdwg.mxu0
  %s4640 = scalar_lea.vmem %s14, 8
  %4641 = vst.msk [vmem:[%s4640] sm:$0x3] %vm2752, %v4637
  %v4642 = vld [vmem:[%s6] sm:$0xf]
  %v4643 = vld [vmem:[%s7] sm:$0x1]
  %v4645 = vlaneseq
  %v4646 = vshrl.u32 %v4645, 7
  %v4647 = vsub.s32 0, %v4646
  %v4648 = vrot.slane %v4643, %v4647
  %v4651 = vsel %vm2281, %v4637, 0
  %v4654 = vsel %vm2285, %v4642, 0
  %4656 = vmatprep.subr.mxu0 0.0
  %4657 = vmatpush1.msra.mxu0 %v4654
  %4658 = vmatprep.subr.mxu0 0.0
  %4659 = vmatpush1.msra.mxu0 0.0
  %4660 = vmatprep.subr.mxu0 0.0
  %4661 = vmatpush1.msra.mxu0 0.0
  %4662 = vmatprep.subr.mxu0 0.0
  %4663 = vmatpush1.msra.mxu0 0.0
  %4664 = vmatprep.subr.mxu0 0.0
  %4665 = vmatpush1.msra.mxu0 0.0
  %4666 = vmatprep.subr.mxu0 0.0
  %4667 = vmatpush1.msra.mxu0 0.0
  %4668 = vmatprep.subr.mxu0 0.0
  %4669 = vmatpush1.msra.mxu0 0.0
  %4670 = vmatprep.subr.mxu0 0.0
  %4671 = vmatpush1.msra.mxu0 0.0
  %4672 = vmatprep.subr.mxu0 0.0
  %4673 = vmatpush1.msra.mxu0 0.0
  %4674 = vmatprep.subr.mxu0 0.0
  %4675 = vmatpush1.msra.mxu0 0.0
  %4676 = vmatprep.subr.mxu0 0.0
  %4677 = vmatpush1.msra.mxu0 0.0
  %4678 = vmatprep.subr.mxu0 0.0
  %4679 = vmatpush1.msra.mxu0 0.0
  %4680 = vmatprep.subr.mxu0 0.0
  %4681 = vmatpush1.msra.mxu0 0.0
  %4682 = vmatprep.subr.mxu0 0.0
  %4683 = vmatpush1.msra.mxu0 0.0
  %4684 = vmatprep.subr.mxu0 0.0
  %4685 = vmatpush1.msra.mxu0 0.0
  %4686 = vmatprep.subr.mxu0 0.0
  %4687 = vmatpush1.msra.mxu0 0.0
  %4688 = vmatprep.subr.mxu0 0.0
  %4689 = vmatpush1.msra.mxu0 0.0
  %4690 = vmatprep.subr.mxu0 0.0
  %4691 = vmatpush1.msra.mxu0 0.0
  %4692 = vmatprep.subr.mxu0 0.0
  %4693 = vmatpush1.msra.mxu0 0.0
  %4694 = vmatprep.subr.mxu0 0.0
  %4695 = vmatpush1.msra.mxu0 0.0
  %4696 = vmatprep.subr.mxu0 0.0
  %4697 = vmatpush1.msra.mxu0 0.0
  %4698 = vmatprep.subr.mxu0 0.0
  %4699 = vmatpush1.msra.mxu0 0.0
  %4700 = vmatprep.subr.mxu0 0.0
  %4701 = vmatpush1.msra.mxu0 0.0
  %4702 = vmatprep.subr.mxu0 0.0
  %4703 = vmatpush1.msra.mxu0 0.0
  %4704 = vmatprep.subr.mxu0 0.0
  %4705 = vmatpush1.msra.mxu0 0.0
  %4706 = vmatprep.subr.mxu0 0.0
  %4707 = vmatpush1.msra.mxu0 0.0
  %4708 = vmatprep.subr.mxu0 0.0
  %4709 = vmatpush1.msra.mxu0 0.0
  %4710 = vmatprep.subr.mxu0 0.0
  %4711 = vmatpush1.msra.mxu0 0.0
  %4712 = vmatprep.subr.mxu0 0.0
  %4713 = vmatpush1.msra.mxu0 0.0
  %4714 = vmatprep.subr.mxu0 0.0
  %4715 = vmatpush1.msra.mxu0 0.0
  %4716 = vmatprep.subr.mxu0 0.0
  %4717 = vmatpush1.msra.mxu0 0.0
  %4718 = vmatprep.subr.mxu0 0.0
  %4719 = vmatpush1.msra.mxu0 0.0
  %4720 = vmatprep.mubr.f32.mxu0 0.0
  %4721 = vmatmul.mubr.f32.gmra.mrb[0].mxu0 %v4651
  %v4722 = vpop.f32.mrb[0].mxu0
  %v4723 = vadd.f32 %v4648, %v4722
  %v4724 = vpop.f32.mrb[0].mxu0
  %4725 = vdwg.mxu0
  %v4726 = vld [vmem:[%s8] sm:$0xff]
  %v4727 = vld [vmem:[%s8 + $0x8] sm:$0xff]
  %v4728 = vld [vmem:[%s8 + $0x10] sm:$0xff]
  %v4729 = vld [vmem:[%s8 + $0x18] sm:$0xff]
  %v4730 = vld [vmem:[%s9] sm:$0x1]
  %v4732 = vlaneseq
  %v4733 = vshrl.u32 %v4732, 7
  %v4734 = vsub.s32 0, %v4733
  %v4735 = vrot.slane %v4730, %v4734
  %4737 = vmatprep.subr.mxu0 0.0
  %4738 = vmatpush1.msra.mxu0 %v4726
  %4739 = vmatprep.subr.mxu0 0.0
  %4740 = vmatpush1.msra.mxu0 %v4727
  %4741 = vmatprep.subr.mxu0 0.0
  %4742 = vmatpush1.msra.mxu0 %v4728
  %4743 = vmatprep.subr.mxu0 0.0
  %4744 = vmatpush1.msra.mxu0 %v4729
  %4745 = vmatprep.subr.mxu0 0.0
  %4746 = vmatpush1.msra.mxu0 0.0
  %4747 = vmatprep.subr.mxu0 0.0
  %4748 = vmatpush1.msra.mxu0 0.0
  %4749 = vmatprep.subr.mxu0 0.0
  %4750 = vmatpush1.msra.mxu0 0.0
  %4751 = vmatprep.subr.mxu0 0.0
  %4752 = vmatpush1.msra.mxu0 0.0
  %4753 = vmatprep.subr.mxu0 0.0
  %4754 = vmatpush1.msra.mxu0 0.0
  %4755 = vmatprep.subr.mxu0 0.0
  %4756 = vmatpush1.msra.mxu0 0.0
  %4757 = vmatprep.subr.mxu0 0.0
  %4758 = vmatpush1.msra.mxu0 0.0
  %4759 = vmatprep.subr.mxu0 0.0
  %4760 = vmatpush1.msra.mxu0 0.0
  %4761 = vmatprep.subr.mxu0 0.0
  %4762 = vmatpush1.msra.mxu0 0.0
  %4763 = vmatprep.subr.mxu0 0.0
  %4764 = vmatpush1.msra.mxu0 0.0
  %4765 = vmatprep.subr.mxu0 0.0
  %4766 = vmatpush1.msra.mxu0 0.0
  %4767 = vmatprep.subr.mxu0 0.0
  %4768 = vmatpush1.msra.mxu0 0.0
  %4769 = vmatprep.subr.mxu0 0.0
  %4770 = vmatpush1.msra.mxu0 0.0
  %4771 = vmatprep.subr.mxu0 0.0
  %4772 = vmatpush1.msra.mxu0 0.0
  %4773 = vmatprep.subr.mxu0 0.0
  %4774 = vmatpush1.msra.mxu0 0.0
  %4775 = vmatprep.subr.mxu0 0.0
  %4776 = vmatpush1.msra.mxu0 0.0
  %4777 = vmatprep.subr.mxu0 0.0
  %4778 = vmatpush1.msra.mxu0 0.0
  %4779 = vmatprep.subr.mxu0 0.0
  %4780 = vmatpush1.msra.mxu0 0.0
  %4781 = vmatprep.subr.mxu0 0.0
  %4782 = vmatpush1.msra.mxu0 0.0
  %4783 = vmatprep.subr.mxu0 0.0
  %4784 = vmatpush1.msra.mxu0 0.0
  %4785 = vmatprep.subr.mxu0 0.0
  %4786 = vmatpush1.msra.mxu0 0.0
  %4787 = vmatprep.subr.mxu0 0.0
  %4788 = vmatpush1.msra.mxu0 0.0
  %4789 = vmatprep.subr.mxu0 0.0
  %4790 = vmatpush1.msra.mxu0 0.0
  %4791 = vmatprep.subr.mxu0 0.0
  %4792 = vmatpush1.msra.mxu0 0.0
  %4793 = vmatprep.subr.mxu0 0.0
  %4794 = vmatpush1.msra.mxu0 0.0
  %4795 = vmatprep.subr.mxu0 0.0
  %4796 = vmatpush1.msra.mxu0 0.0
  %4797 = vmatprep.subr.mxu0 0.0
  %4798 = vmatpush1.msra.mxu0 0.0
  %4799 = vmatprep.subr.mxu0 0.0
  %4800 = vmatpush1.msra.mxu0 0.0
  %4801 = vmatprep.mubr.f32.mxu0 0.0
  %4802 = vmatmul.mubr.f32.gmra.mrb[0].mxu0 %v4375
  %v4803 = vpop.f32.mrb[0].mxu0
  %v4804 = vadd.f32 %v4735, %v4803
  %v4805 = vpop.f32.mrb[0].mxu0
  %4806 = vdwg.mxu0
  %v4807 = vadd.f32 %v4723, %v4804
  %v4808 = vxor.u32 %v4807, 2147483648
  %v4809 = vmul.f32 %v4808, 1.442695
  %v4810 = vpow.pop %v4809
  %v4811 = vadd.f32 %v4810, 1.0
  %v4812 = vrcp.pop %v4811
  %v4813 = vmul.f32 1.0, %v4812
  %4815 = vrot.lane.b32.xlu0 %v4804, 64
  %v4816 = vpop.permute.xlu0 %4815
  %v4818 = vmul.f32 %v4813, %v4816
  %4820 = vrot.lane.b32.xlu0 %v4818, 64
  %v4821 = vpop.permute.xlu0 %4820
  %v4823 = vadd.f32 %v4723, %v4821
  %v4824 = vtanh.pop %v4823
  %v4825 = vsub.f32 1.0, %v4813
  %4827 = vrot.lane.b32.xlu0 %v4824, 96
  %v4828 = vpop.permute.xlu0 %4827
  %v4830 = vmul.f32 %v4825, %v4828
  %v4831 = vmul.f32 %v4813, %v4360
  %v4832 = vadd.f32 %v4830, %v4831
  %v4833 = vld [vmem:[%s10] sm:$0xff]
  %v4834 = vld [vmem:[%s10 + $0x8] sm:$0xff]
  %v4835 = vld [vmem:[%s10 + $0x10] sm:$0xff]
  %v4836 = vld [vmem:[%s10 + $0x18] sm:$0xff]
  %v4837 = vld [vmem:[%s11] sm:$0x1]
  %v4839 = vlaneseq
  %v4840 = vshrl.u32 %v4839, 7
  %v4841 = vsub.s32 0, %v4840
  %v4842 = vrot.slane %v4837, %v4841
  %4845 = vrot.lane.b32.xlu0 %v4832, 96
  %v4846 = vpop.permute.xlu0 %4845
  %v4847 = vsel %vm59, %v4846, 0
  %4849 = vmatprep.subr.mxu0 0.0
  %4850 = vmatpush1.msra.mxu0 %v4833
  %4851 = vmatprep.subr.mxu0 0.0
  %4852 = vmatpush1.msra.mxu0 %v4834
  %4853 = vmatprep.subr.mxu0 0.0
  %4854 = vmatpush1.msra.mxu0 %v4835
  %4855 = vmatprep.subr.mxu0 0.0
  %4856 = vmatpush1.msra.mxu0 %v4836
  %4857 = vmatprep.subr.mxu0 0.0
  %4858 = vmatpush1.msra.mxu0 0.0
  %4859 = vmatprep.subr.mxu0 0.0
  %4860 = vmatpush1.msra.mxu0 0.0
  %4861 = vmatprep.subr.mxu0 0.0
  %4862 = vmatpush1.msra.mxu0 0.0
  %4863 = vmatprep.subr.mxu0 0.0
  %4864 = vmatpush1.msra.mxu0 0.0
  %4865 = vmatprep.subr.mxu0 0.0
  %4866 = vmatpush1.msra.mxu0 0.0
  %4867 = vmatprep.subr.mxu0 0.0
  %4868 = vmatpush1.msra.mxu0 0.0
  %4869 = vmatprep.subr.mxu0 0.0
  %4870 = vmatpush1.msra.mxu0 0.0
  %4871 = vmatprep.subr.mxu0 0.0
  %4872 = vmatpush1.msra.mxu0 0.0
  %4873 = vmatprep.subr.mxu0 0.0
  %4874 = vmatpush1.msra.mxu0 0.0
  %4875 = vmatprep.subr.mxu0 0.0
  %4876 = vmatpush1.msra.mxu0 0.0
  %4877 = vmatprep.subr.mxu0 0.0
  %4878 = vmatpush1.msra.mxu0 0.0
  %4879 = vmatprep.subr.mxu0 0.0
  %4880 = vmatpush1.msra.mxu0 0.0
  %4881 = vmatprep.subr.mxu0 0.0
  %4882 = vmatpush1.msra.mxu0 0.0
  %4883 = vmatprep.subr.mxu0 0.0
  %4884 = vmatpush1.msra.mxu0 0.0
  %4885 = vmatprep.subr.mxu0 0.0
  %4886 = vmatpush1.msra.mxu0 0.0
  %4887 = vmatprep.subr.mxu0 0.0
  %4888 = vmatpush1.msra.mxu0 0.0
  %4889 = vmatprep.subr.mxu0 0.0
  %4890 = vmatpush1.msra.mxu0 0.0
  %4891 = vmatprep.subr.mxu0 0.0
  %4892 = vmatpush1.msra.mxu0 0.0
  %4893 = vmatprep.subr.mxu0 0.0
  %4894 = vmatpush1.msra.mxu0 0.0
  %4895 = vmatprep.subr.mxu0 0.0
  %4896 = vmatpush1.msra.mxu0 0.0
  %4897 = vmatprep.subr.mxu0 0.0
  %4898 = vmatpush1.msra.mxu0 0.0
  %4899 = vmatprep.subr.mxu0 0.0
  %4900 = vmatpush1.msra.mxu0 0.0
  %4901 = vmatprep.subr.mxu0 0.0
  %4902 = vmatpush1.msra.mxu0 0.0
  %4903 = vmatprep.subr.mxu0 0.0
  %4904 = vmatpush1.msra.mxu0 0.0
  %4905 = vmatprep.subr.mxu0 0.0
  %4906 = vmatpush1.msra.mxu0 0.0
  %4907 = vmatprep.subr.mxu0 0.0
  %4908 = vmatpush1.msra.mxu0 0.0
  %4909 = vmatprep.subr.mxu0 0.0
  %4910 = vmatpush1.msra.mxu0 0.0
  %4911 = vmatprep.subr.mxu0 0.0
  %4912 = vmatpush1.msra.mxu0 0.0
  %4913 = vmatprep.mubr.f32.mxu0 0.0
  %4914 = vmatmul.mubr.f32.gmra.mrb[0].mxu0 %v4847
  %v4915 = vpop.f32.mrb[0].mxu0
  %v4916 = vadd.f32 %v4842, %v4915
  %v4917 = vpop.f32.mrb[0].mxu0
  %4918 = vdwg.mxu0
  %v4919 = vld [vmem:[%s2552] sm:$0xff]
  %v4920 = vld [vmem:[%s2552 + $0x8] sm:$0xff]
  %v4921 = vld [vmem:[%s2552 + $0x10] sm:$0xff]
  %v4922 = vld [vmem:[%s2552 + $0x18] sm:$0xff]
  %v4923 = vld [vmem:[%s2557] sm:$0x1]
  %v4925 = vlaneseq
  %v4926 = vshrl.u32 %v4925, 7
  %v4927 = vsub.s32 0, %v4926
  %v4928 = vrot.slane %v4923, %v4927
  %4930 = vmatprep.subr.mxu0 0.0
  %4931 = vmatpush1.msra.mxu0 %v4919
  %4932 = vmatprep.subr.mxu0 0.0
  %4933 = vmatpush1.msra.mxu0 %v4920
  %4934 = vmatprep.subr.mxu0 0.0
  %4935 = vmatpush1.msra.mxu0 %v4921
  %4936 = vmatprep.subr.mxu0 0.0
  %4937 = vmatpush1.msra.mxu0 %v4922
  %4938 = vmatprep.subr.mxu0 0.0
  %4939 = vmatpush1.msra.mxu0 0.0
  %4940 = vmatprep.subr.mxu0 0.0
  %4941 = vmatpush1.msra.mxu0 0.0
  %4942 = vmatprep.subr.mxu0 0.0
  %4943 = vmatpush1.msra.mxu0 0.0
  %4944 = vmatprep.subr.mxu0 0.0
  %4945 = vmatpush1.msra.mxu0 0.0
  %4946 = vmatprep.subr.mxu0 0.0
  %4947 = vmatpush1.msra.mxu0 0.0
  %4948 = vmatprep.subr.mxu0 0.0
  %4949 = vmatpush1.msra.mxu0 0.0
  %4950 = vmatprep.subr.mxu0 0.0
  %4951 = vmatpush1.msra.mxu0 0.0
  %4952 = vmatprep.subr.mxu0 0.0
  %4953 = vmatpush1.msra.mxu0 0.0
  %4954 = vmatprep.subr.mxu0 0.0
  %4955 = vmatpush1.msra.mxu0 0.0
  %4956 = vmatprep.subr.mxu0 0.0
  %4957 = vmatpush1.msra.mxu0 0.0
  %4958 = vmatprep.subr.mxu0 0.0
  %4959 = vmatpush1.msra.mxu0 0.0
  %4960 = vmatprep.subr.mxu0 0.0
  %4961 = vmatpush1.msra.mxu0 0.0
  %4962 = vmatprep.subr.mxu0 0.0
  %4963 = vmatpush1.msra.mxu0 0.0
  %4964 = vmatprep.subr.mxu0 0.0
  %4965 = vmatpush1.msra.mxu0 0.0
  %4966 = vmatprep.subr.mxu0 0.0
  %4967 = vmatpush1.msra.mxu0 0.0
  %4968 = vmatprep.subr.mxu0 0.0
  %4969 = vmatpush1.msra.mxu0 0.0
  %4970 = vmatprep.subr.mxu0 0.0
  %4971 = vmatpush1.msra.mxu0 0.0
  %4972 = vmatprep.subr.mxu0 0.0
  %4973 = vmatpush1.msra.mxu0 0.0
  %4974 = vmatprep.subr.mxu0 0.0
  %4975 = vmatpush1.msra.mxu0 0.0
  %4976 = vmatprep.subr.mxu0 0.0
  %4977 = vmatpush1.msra.mxu0 0.0
  %4978 = vmatprep.subr.mxu0 0.0
  %4979 = vmatpush1.msra.mxu0 0.0
  %4980 = vmatprep.subr.mxu0 0.0
  %4981 = vmatpush1.msra.mxu0 0.0
  %4982 = vmatprep.subr.mxu0 0.0
  %4983 = vmatpush1.msra.mxu0 0.0
  %4984 = vmatprep.subr.mxu0 0.0
  %4985 = vmatpush1.msra.mxu0 0.0
  %4986 = vmatprep.subr.mxu0 0.0
  %4987 = vmatpush1.msra.mxu0 0.0
  %4988 = vmatprep.subr.mxu0 0.0
  %4989 = vmatpush1.msra.mxu0 0.0
  %4990 = vmatprep.subr.mxu0 0.0
  %4991 = vmatpush1.msra.mxu0 0.0
  %4992 = vmatprep.subr.mxu0 0.0
  %4993 = vmatpush1.msra.mxu0 0.0
  %4994 = vmatprep.mubr.f32.mxu0 0.0
  %4995 = vmatmul.mubr.f32.gmra.mrb[0].mxu0 %v4568
  %v4996 = vpop.f32.mrb[0].mxu0
  %v4997 = vadd.f32 %v4928, %v4996
  %v4998 = vpop.f32.mrb[0].mxu0
  %4999 = vdwg.mxu0
  %v5000 = vadd.f32 %v4916, %v4997
  %v5001 = vxor.u32 %v5000, 2147483648
  %v5002 = vmul.f32 %v5001, 1.442695
  %v5003 = vpow.pop %v5002
  %v5004 = vadd.f32 %v5003, 1.0
  %v5005 = vrcp.pop %v5004
  %v5006 = vmul.f32 1.0, %v5005
  %5008 = vrot.lane.b32.xlu0 %v4997, 64
  %v5009 = vpop.permute.xlu0 %5008
  %v5011 = vmul.f32 %v5006, %v5009
  %5013 = vrot.lane.b32.xlu0 %v5011, 64
  %v5014 = vpop.permute.xlu0 %5013
  %v5016 = vadd.f32 %v4916, %v5014
  %v5017 = vtanh.pop %v5016
  %v5018 = vsub.f32 1.0, %v5006
  %5020 = vrot.lane.b32.xlu0 %v5017, 96
  %v5021 = vpop.permute.xlu0 %5020
  %v5023 = vmul.f32 %v5018, %v5021
  %v5024 = vmul.f32 %v5006, %v4553
  %v5025 = vadd.f32 %v5023, %v5024
  %v5026 = vld [vmem:[%s12] sm:$0xff]
  %v5027 = vld [vmem:[%s12 + $0x8] sm:$0xff]
  %v5028 = vld [vmem:[%s12 + $0x10] sm:$0xff]
  %v5029 = vld [vmem:[%s12 + $0x18] sm:$0xff]
  %v5030 = vld [vmem:[%s13] sm:$0x1]
  %v5032 = vlaneseq
  %v5033 = vshrl.u32 %v5032, 7
  %v5034 = vsub.s32 0, %v5033
  %v5035 = vrot.slane %v5030, %v5034
  %5038 = vrot.lane.b32.xlu0 %v5025, 96
  %v5039 = vpop.permute.xlu0 %5038
  %v5040 = vsel %vm59, %v5039, 0
  %5042 = vmatprep.subr.mxu0 0.0
  %5043 = vmatpush1.msra.mxu0 %v5026
  %5044 = vmatprep.subr.mxu0 0.0
  %5045 = vmatpush1.msra.mxu0 %v5027
  %5046 = vmatprep.subr.mxu0 0.0
  %5047 = vmatpush1.msra.mxu0 %v5028
  %5048 = vmatprep.subr.mxu0 0.0
  %5049 = vmatpush1.msra.mxu0 %v5029
  %5050 = vmatprep.subr.mxu0 0.0
  %5051 = vmatpush1.msra.mxu0 0.0
  %5052 = vmatprep.subr.mxu0 0.0
  %5053 = vmatpush1.msra.mxu0 0.0
  %5054 = vmatprep.subr.mxu0 0.0
  %5055 = vmatpush1.msra.mxu0 0.0
  %5056 = vmatprep.subr.mxu0 0.0
  %5057 = vmatpush1.msra.mxu0 0.0
  %5058 = vmatprep.subr.mxu0 0.0
  %5059 = vmatpush1.msra.mxu0 0.0
  %5060 = vmatprep.subr.mxu0 0.0
  %5061 = vmatpush1.msra.mxu0 0.0
  %5062 = vmatprep.subr.mxu0 0.0
  %5063 = vmatpush1.msra.mxu0 0.0
  %5064 = vmatprep.subr.mxu0 0.0
  %5065 = vmatpush1.msra.mxu0 0.0
  %5066 = vmatprep.subr.mxu0 0.0
  %5067 = vmatpush1.msra.mxu0 0.0
  %5068 = vmatprep.subr.mxu0 0.0
  %5069 = vmatpush1.msra.mxu0 0.0
  %5070 = vmatprep.subr.mxu0 0.0
  %5071 = vmatpush1.msra.mxu0 0.0
  %5072 = vmatprep.subr.mxu0 0.0
  %5073 = vmatpush1.msra.mxu0 0.0
  %5074 = vmatprep.subr.mxu0 0.0
  %5075 = vmatpush1.msra.mxu0 0.0
  %5076 = vmatprep.subr.mxu0 0.0
  %5077 = vmatpush1.msra.mxu0 0.0
  %5078 = vmatprep.subr.mxu0 0.0
  %5079 = vmatpush1.msra.mxu0 0.0
  %5080 = vmatprep.subr.mxu0 0.0
  %5081 = vmatpush1.msra.mxu0 0.0
  %5082 = vmatprep.subr.mxu0 0.0
  %5083 = vmatpush1.msra.mxu0 0.0
  %5084 = vmatprep.subr.mxu0 0.0
  %5085 = vmatpush1.msra.mxu0 0.0
  %5086 = vmatprep.subr.mxu0 0.0
  %5087 = vmatpush1.msra.mxu0 0.0
  %5088 = vmatprep.subr.mxu0 0.0
  %5089 = vmatpush1.msra.mxu0 0.0
  %5090 = vmatprep.subr.mxu0 0.0
  %5091 = vmatpush1.msra.mxu0 0.0
  %5092 = vmatprep.subr.mxu0 0.0
  %5093 = vmatpush1.msra.mxu0 0.0
  %5094 = vmatprep.subr.mxu0 0.0
  %5095 = vmatpush1.msra.mxu0 0.0
  %5096 = vmatprep.subr.mxu0 0.0
  %5097 = vmatpush1.msra.mxu0 0.0
  %5098 = vmatprep.subr.mxu0 0.0
  %5099 = vmatpush1.msra.mxu0 0.0
  %5100 = vmatprep.subr.mxu0 0.0
  %5101 = vmatpush1.msra.mxu0 0.0
  %5102 = vmatprep.subr.mxu0 0.0
  %5103 = vmatpush1.msra.mxu0 0.0
  %5104 = vmatprep.subr.mxu0 0.0
  %5105 = vmatpush1.msra.mxu0 0.0
  %5106 = vmatprep.mubr.f32.mxu0 0.0
  %5107 = vmatmul.mubr.f32.gmra.mrb[0].mxu0 %v5040
  %v5108 = vpop.f32.mrb[0].mxu0
  %v5109 = vadd.f32 %v5035, %v5108
  %v5110 = vpop.f32.mrb[0].mxu0
  %5111 = vdwg.mxu0
  %s5112 = scalar_lea.vmem %s14, 10
  %5113 = vst.msk [vmem:[%s5112] sm:$0x3] %vm2752, %v5109
  %v5114 = vld [vmem:[%s6] sm:$0xf]
  %v5115 = vld [vmem:[%s7] sm:$0x1]
  %v5117 = vlaneseq
  %v5118 = vshrl.u32 %v5117, 7
  %v5119 = vsub.s32 0, %v5118
  %v5120 = vrot.slane %v5115, %v5119
  %v5123 = vsel %vm2281, %v5109, 0
  %v5126 = vsel %vm2285, %v5114, 0
  %5128 = vmatprep.subr.mxu0 0.0
  %5129 = vmatpush1.msra.mxu0 %v5126
  %5130 = vmatprep.subr.mxu0 0.0
  %5131 = vmatpush1.msra.mxu0 0.0
  %5132 = vmatprep.subr.mxu0 0.0
  %5133 = vmatpush1.msra.mxu0 0.0
  %5134 = vmatprep.subr.mxu0 0.0
  %5135 = vmatpush1.msra.mxu0 0.0
  %5136 = vmatprep.subr.mxu0 0.0
  %5137 = vmatpush1.msra.mxu0 0.0
  %5138 = vmatprep.subr.mxu0 0.0
  %5139 = vmatpush1.msra.mxu0 0.0
  %5140 = vmatprep.subr.mxu0 0.0
  %5141 = vmatpush1.msra.mxu0 0.0
  %5142 = vmatprep.subr.mxu0 0.0
  %5143 = vmatpush1.msra.mxu0 0.0
  %5144 = vmatprep.subr.mxu0 0.0
  %5145 = vmatpush1.msra.mxu0 0.0
  %5146 = vmatprep.subr.mxu0 0.0
  %5147 = vmatpush1.msra.mxu0 0.0
  %5148 = vmatprep.subr.mxu0 0.0
  %5149 = vmatpush1.msra.mxu0 0.0
  %5150 = vmatprep.subr.mxu0 0.0
  %5151 = vmatpush1.msra.mxu0 0.0
  %5152 = vmatprep.subr.mxu0 0.0
  %5153 = vmatpush1.msra.mxu0 0.0
  %5154 = vmatprep.subr.mxu0 0.0
  %5155 = vmatpush1.msra.mxu0 0.0
  %5156 = vmatprep.subr.mxu0 0.0
  %5157 = vmatpush1.msra.mxu0 0.0
  %5158 = vmatprep.subr.mxu0 0.0
  %5159 = vmatpush1.msra.mxu0 0.0
  %5160 = vmatprep.subr.mxu0 0.0
  %5161 = vmatpush1.msra.mxu0 0.0
  %5162 = vmatprep.subr.mxu0 0.0
  %5163 = vmatpush1.msra.mxu0 0.0
  %5164 = vmatprep.subr.mxu0 0.0
  %5165 = vmatpush1.msra.mxu0 0.0
  %5166 = vmatprep.subr.mxu0 0.0
  %5167 = vmatpush1.msra.mxu0 0.0
  %5168 = vmatprep.subr.mxu0 0.0
  %5169 = vmatpush1.msra.mxu0 0.0
  %5170 = vmatprep.subr.mxu0 0.0
  %5171 = vmatpush1.msra.mxu0 0.0
  %5172 = vmatprep.subr.mxu0 0.0
  %5173 = vmatpush1.msra.mxu0 0.0
  %5174 = vmatprep.subr.mxu0 0.0
  %5175 = vmatpush1.msra.mxu0 0.0
  %5176 = vmatprep.subr.mxu0 0.0
  %5177 = vmatpush1.msra.mxu0 0.0
  %5178 = vmatprep.subr.mxu0 0.0
  %5179 = vmatpush1.msra.mxu0 0.0
  %5180 = vmatprep.subr.mxu0 0.0
  %5181 = vmatpush1.msra.mxu0 0.0
  %5182 = vmatprep.subr.mxu0 0.0
  %5183 = vmatpush1.msra.mxu0 0.0
  %5184 = vmatprep.subr.mxu0 0.0
  %5185 = vmatpush1.msra.mxu0 0.0
  %5186 = vmatprep.subr.mxu0 0.0
  %5187 = vmatpush1.msra.mxu0 0.0
  %5188 = vmatprep.subr.mxu0 0.0
  %5189 = vmatpush1.msra.mxu0 0.0
  %5190 = vmatprep.subr.mxu0 0.0
  %5191 = vmatpush1.msra.mxu0 0.0
  %5192 = vmatprep.mubr.f32.mxu0 0.0
  %5193 = vmatmul.mubr.f32.gmra.mrb[0].mxu0 %v5123
  %v5194 = vpop.f32.mrb[0].mxu0
  %v5195 = vadd.f32 %v5120, %v5194
  %v5196 = vpop.f32.mrb[0].mxu0
  %5197 = vdwg.mxu0
  %v5198 = vld [vmem:[%s8] sm:$0xff]
  %v5199 = vld [vmem:[%s8 + $0x8] sm:$0xff]
  %v5200 = vld [vmem:[%s8 + $0x10] sm:$0xff]
  %v5201 = vld [vmem:[%s8 + $0x18] sm:$0xff]
  %v5202 = vld [vmem:[%s9] sm:$0x1]
  %v5204 = vlaneseq
  %v5205 = vshrl.u32 %v5204, 7
  %v5206 = vsub.s32 0, %v5205
  %v5207 = vrot.slane %v5202, %v5206
  %5209 = vmatprep.subr.mxu0 0.0
  %5210 = vmatpush1.msra.mxu0 %v5198
  %5211 = vmatprep.subr.mxu0 0.0
  %5212 = vmatpush1.msra.mxu0 %v5199
  %5213 = vmatprep.subr.mxu0 0.0
  %5214 = vmatpush1.msra.mxu0 %v5200
  %5215 = vmatprep.subr.mxu0 0.0
  %5216 = vmatpush1.msra.mxu0 %v5201
  %5217 = vmatprep.subr.mxu0 0.0
  %5218 = vmatpush1.msra.mxu0 0.0
  %5219 = vmatprep.subr.mxu0 0.0
  %5220 = vmatpush1.msra.mxu0 0.0
  %5221 = vmatprep.subr.mxu0 0.0
  %5222 = vmatpush1.msra.mxu0 0.0
  %5223 = vmatprep.subr.mxu0 0.0
  %5224 = vmatpush1.msra.mxu0 0.0
  %5225 = vmatprep.subr.mxu0 0.0
  %5226 = vmatpush1.msra.mxu0 0.0
  %5227 = vmatprep.subr.mxu0 0.0
  %5228 = vmatpush1.msra.mxu0 0.0
  %5229 = vmatprep.subr.mxu0 0.0
  %5230 = vmatpush1.msra.mxu0 0.0
  %5231 = vmatprep.subr.mxu0 0.0
  %5232 = vmatpush1.msra.mxu0 0.0
  %5233 = vmatprep.subr.mxu0 0.0
  %5234 = vmatpush1.msra.mxu0 0.0
  %5235 = vmatprep.subr.mxu0 0.0
  %5236 = vmatpush1.msra.mxu0 0.0
  %5237 = vmatprep.subr.mxu0 0.0
  %5238 = vmatpush1.msra.mxu0 0.0
  %5239 = vmatprep.subr.mxu0 0.0
  %5240 = vmatpush1.msra.mxu0 0.0
  %5241 = vmatprep.subr.mxu0 0.0
  %5242 = vmatpush1.msra.mxu0 0.0
  %5243 = vmatprep.subr.mxu0 0.0
  %5244 = vmatpush1.msra.mxu0 0.0
  %5245 = vmatprep.subr.mxu0 0.0
  %5246 = vmatpush1.msra.mxu0 0.0
  %5247 = vmatprep.subr.mxu0 0.0
  %5248 = vmatpush1.msra.mxu0 0.0
  %5249 = vmatprep.subr.mxu0 0.0
  %5250 = vmatpush1.msra.mxu0 0.0
  %5251 = vmatprep.subr.mxu0 0.0
  %5252 = vmatpush1.msra.mxu0 0.0
  %5253 = vmatprep.subr.mxu0 0.0
  %5254 = vmatpush1.msra.mxu0 0.0
  %5255 = vmatprep.subr.mxu0 0.0
  %5256 = vmatpush1.msra.mxu0 0.0
  %5257 = vmatprep.subr.mxu0 0.0
  %5258 = vmatpush1.msra.mxu0 0.0
  %5259 = vmatprep.subr.mxu0 0.0
  %5260 = vmatpush1.msra.mxu0 0.0
  %5261 = vmatprep.subr.mxu0 0.0
  %5262 = vmatpush1.msra.mxu0 0.0
  %5263 = vmatprep.subr.mxu0 0.0
  %5264 = vmatpush1.msra.mxu0 0.0
  %5265 = vmatprep.subr.mxu0 0.0
  %5266 = vmatpush1.msra.mxu0 0.0
  %5267 = vmatprep.subr.mxu0 0.0
  %5268 = vmatpush1.msra.mxu0 0.0
  %5269 = vmatprep.subr.mxu0 0.0
  %5270 = vmatpush1.msra.mxu0 0.0
  %5271 = vmatprep.subr.mxu0 0.0
  %5272 = vmatpush1.msra.mxu0 0.0
  %5273 = vmatprep.mubr.f32.mxu0 0.0
  %5274 = vmatmul.mubr.f32.gmra.mrb[0].mxu0 %v4847
  %v5275 = vpop.f32.mrb[0].mxu0
  %v5276 = vadd.f32 %v5207, %v5275
  %v5277 = vpop.f32.mrb[0].mxu0
  %5278 = vdwg.mxu0
  %v5279 = vadd.f32 %v5195, %v5276
  %v5280 = vxor.u32 %v5279, 2147483648
  %v5281 = vmul.f32 %v5280, 1.442695
  %v5282 = vpow.pop %v5281
  %v5283 = vadd.f32 %v5282, 1.0
  %v5284 = vrcp.pop %v5283
  %v5285 = vmul.f32 1.0, %v5284
  %5287 = vrot.lane.b32.xlu0 %v5276, 64
  %v5288 = vpop.permute.xlu0 %5287
  %v5290 = vmul.f32 %v5285, %v5288
  %5292 = vrot.lane.b32.xlu0 %v5290, 64
  %v5293 = vpop.permute.xlu0 %5292
  %v5295 = vadd.f32 %v5195, %v5293
  %v5296 = vtanh.pop %v5295
  %v5297 = vsub.f32 1.0, %v5285
  %5299 = vrot.lane.b32.xlu0 %v5296, 96
  %v5300 = vpop.permute.xlu0 %5299
  %v5302 = vmul.f32 %v5297, %v5300
  %v5303 = vmul.f32 %v5285, %v4832
  %v5304 = vadd.f32 %v5302, %v5303
  %v5305 = vld [vmem:[%s10] sm:$0xff]
  %v5306 = vld [vmem:[%s10 + $0x8] sm:$0xff]
  %v5307 = vld [vmem:[%s10 + $0x10] sm:$0xff]
  %v5308 = vld [vmem:[%s10 + $0x18] sm:$0xff]
  %v5309 = vld [vmem:[%s11] sm:$0x1]
  %v5311 = vlaneseq
  %v5312 = vshrl.u32 %v5311, 7
  %v5313 = vsub.s32 0, %v5312
  %v5314 = vrot.slane %v5309, %v5313
  %5317 = vrot.lane.b32.xlu0 %v5304, 96
  %v5318 = vpop.permute.xlu0 %5317
  %v5319 = vsel %vm59, %v5318, 0
  %5321 = vmatprep.subr.mxu0 0.0
  %5322 = vmatpush1.msra.mxu0 %v5305
  %5323 = vmatprep.subr.mxu0 0.0
  %5324 = vmatpush1.msra.mxu0 %v5306
  %5325 = vmatprep.subr.mxu0 0.0
  %5326 = vmatpush1.msra.mxu0 %v5307
  %5327 = vmatprep.subr.mxu0 0.0
  %5328 = vmatpush1.msra.mxu0 %v5308
  %5329 = vmatprep.subr.mxu0 0.0
  %5330 = vmatpush1.msra.mxu0 0.0
  %5331 = vmatprep.subr.mxu0 0.0
  %5332 = vmatpush1.msra.mxu0 0.0
  %5333 = vmatprep.subr.mxu0 0.0
  %5334 = vmatpush1.msra.mxu0 0.0
  %5335 = vmatprep.subr.mxu0 0.0
  %5336 = vmatpush1.msra.mxu0 0.0
  %5337 = vmatprep.subr.mxu0 0.0
  %5338 = vmatpush1.msra.mxu0 0.0
  %5339 = vmatprep.subr.mxu0 0.0
  %5340 = vmatpush1.msra.mxu0 0.0
  %5341 = vmatprep.subr.mxu0 0.0
  %5342 = vmatpush1.msra.mxu0 0.0
  %5343 = vmatprep.subr.mxu0 0.0
  %5344 = vmatpush1.msra.mxu0 0.0
  %5345 = vmatprep.subr.mxu0 0.0
  %5346 = vmatpush1.msra.mxu0 0.0
  %5347 = vmatprep.subr.mxu0 0.0
  %5348 = vmatpush1.msra.mxu0 0.0
  %5349 = vmatprep.subr.mxu0 0.0
  %5350 = vmatpush1.msra.mxu0 0.0
  %5351 = vmatprep.subr.mxu0 0.0
  %5352 = vmatpush1.msra.mxu0 0.0
  %5353 = vmatprep.subr.mxu0 0.0
  %5354 = vmatpush1.msra.mxu0 0.0
  %5355 = vmatprep.subr.mxu0 0.0
  %5356 = vmatpush1.msra.mxu0 0.0
  %5357 = vmatprep.subr.mxu0 0.0
  %5358 = vmatpush1.msra.mxu0 0.0
  %5359 = vmatprep.subr.mxu0 0.0
  %5360 = vmatpush1.msra.mxu0 0.0
  %5361 = vmatprep.subr.mxu0 0.0
  %5362 = vmatpush1.msra.mxu0 0.0
  %5363 = vmatprep.subr.mxu0 0.0
  %5364 = vmatpush1.msra.mxu0 0.0
  %5365 = vmatprep.subr.mxu0 0.0
  %5366 = vmatpush1.msra.mxu0 0.0
  %5367 = vmatprep.subr.mxu0 0.0
  %5368 = vmatpush1.msra.mxu0 0.0
  %5369 = vmatprep.subr.mxu0 0.0
  %5370 = vmatpush1.msra.mxu0 0.0
  %5371 = vmatprep.subr.mxu0 0.0
  %5372 = vmatpush1.msra.mxu0 0.0
  %5373 = vmatprep.subr.mxu0 0.0
  %5374 = vmatpush1.msra.mxu0 0.0
  %5375 = vmatprep.subr.mxu0 0.0
  %5376 = vmatpush1.msra.mxu0 0.0
  %5377 = vmatprep.subr.mxu0 0.0
  %5378 = vmatpush1.msra.mxu0 0.0
  %5379 = vmatprep.subr.mxu0 0.0
  %5380 = vmatpush1.msra.mxu0 0.0
  %5381 = vmatprep.subr.mxu0 0.0
  %5382 = vmatpush1.msra.mxu0 0.0
  %5383 = vmatprep.subr.mxu0 0.0
  %5384 = vmatpush1.msra.mxu0 0.0
  %5385 = vmatprep.mubr.f32.mxu0 0.0
  %5386 = vmatmul.mubr.f32.gmra.mrb[0].mxu0 %v5319
  %v5387 = vpop.f32.mrb[0].mxu0
  %v5388 = vadd.f32 %v5314, %v5387
  %v5389 = vpop.f32.mrb[0].mxu0
  %5390 = vdwg.mxu0
  %v5391 = vld [vmem:[%s2552] sm:$0xff]
  %v5392 = vld [vmem:[%s2552 + $0x8] sm:$0xff]
  %v5393 = vld [vmem:[%s2552 + $0x10] sm:$0xff]
  %v5394 = vld [vmem:[%s2552 + $0x18] sm:$0xff]
  %v5395 = vld [vmem:[%s2557] sm:$0x1]
  %v5397 = vlaneseq
  %v5398 = vshrl.u32 %v5397, 7
  %v5399 = vsub.s32 0, %v5398
  %v5400 = vrot.slane %v5395, %v5399
  %5402 = vmatprep.subr.mxu0 0.0
  %5403 = vmatpush1.msra.mxu0 %v5391
  %5404 = vmatprep.subr.mxu0 0.0
  %5405 = vmatpush1.msra.mxu0 %v5392
  %5406 = vmatprep.subr.mxu0 0.0
  %5407 = vmatpush1.msra.mxu0 %v5393
  %5408 = vmatprep.subr.mxu0 0.0
  %5409 = vmatpush1.msra.mxu0 %v5394
  %5410 = vmatprep.subr.mxu0 0.0
  %5411 = vmatpush1.msra.mxu0 0.0
  %5412 = vmatprep.subr.mxu0 0.0
  %5413 = vmatpush1.msra.mxu0 0.0
  %5414 = vmatprep.subr.mxu0 0.0
  %5415 = vmatpush1.msra.mxu0 0.0
  %5416 = vmatprep.subr.mxu0 0.0
  %5417 = vmatpush1.msra.mxu0 0.0
  %5418 = vmatprep.subr.mxu0 0.0
  %5419 = vmatpush1.msra.mxu0 0.0
  %5420 = vmatprep.subr.mxu0 0.0
  %5421 = vmatpush1.msra.mxu0 0.0
  %5422 = vmatprep.subr.mxu0 0.0
  %5423 = vmatpush1.msra.mxu0 0.0
  %5424 = vmatprep.subr.mxu0 0.0
  %5425 = vmatpush1.msra.mxu0 0.0
  %5426 = vmatprep.subr.mxu0 0.0
  %5427 = vmatpush1.msra.mxu0 0.0
  %5428 = vmatprep.subr.mxu0 0.0
  %5429 = vmatpush1.msra.mxu0 0.0
  %5430 = vmatprep.subr.mxu0 0.0
  %5431 = vmatpush1.msra.mxu0 0.0
  %5432 = vmatprep.subr.mxu0 0.0
  %5433 = vmatpush1.msra.mxu0 0.0
  %5434 = vmatprep.subr.mxu0 0.0
  %5435 = vmatpush1.msra.mxu0 0.0
  %5436 = vmatprep.subr.mxu0 0.0
  %5437 = vmatpush1.msra.mxu0 0.0
  %5438 = vmatprep.subr.mxu0 0.0
  %5439 = vmatpush1.msra.mxu0 0.0
  %5440 = vmatprep.subr.mxu0 0.0
  %5441 = vmatpush1.msra.mxu0 0.0
  %5442 = vmatprep.subr.mxu0 0.0
  %5443 = vmatpush1.msra.mxu0 0.0
  %5444 = vmatprep.subr.mxu0 0.0
  %5445 = vmatpush1.msra.mxu0 0.0
  %5446 = vmatprep.subr.mxu0 0.0
  %5447 = vmatpush1.msra.mxu0 0.0
  %5448 = vmatprep.subr.mxu0 0.0
  %5449 = vmatpush1.msra.mxu0 0.0
  %5450 = vmatprep.subr.mxu0 0.0
  %5451 = vmatpush1.msra.mxu0 0.0
  %5452 = vmatprep.subr.mxu0 0.0
  %5453 = vmatpush1.msra.mxu0 0.0
  %5454 = vmatprep.subr.mxu0 0.0
  %5455 = vmatpush1.msra.mxu0 0.0
  %5456 = vmatprep.subr.mxu0 0.0
  %5457 = vmatpush1.msra.mxu0 0.0
  %5458 = vmatprep.subr.mxu0 0.0
  %5459 = vmatpush1.msra.mxu0 0.0
  %5460 = vmatprep.subr.mxu0 0.0
  %5461 = vmatpush1.msra.mxu0 0.0
  %5462 = vmatprep.subr.mxu0 0.0
  %5463 = vmatpush1.msra.mxu0 0.0
  %5464 = vmatprep.subr.mxu0 0.0
  %5465 = vmatpush1.msra.mxu0 0.0
  %5466 = vmatprep.mubr.f32.mxu0 0.0
  %5467 = vmatmul.mubr.f32.gmra.mrb[0].mxu0 %v5040
  %v5468 = vpop.f32.mrb[0].mxu0
  %v5469 = vadd.f32 %v5400, %v5468
  %v5470 = vpop.f32.mrb[0].mxu0
  %5471 = vdwg.mxu0
  %v5472 = vadd.f32 %v5388, %v5469
  %v5473 = vxor.u32 %v5472, 2147483648
  %v5474 = vmul.f32 %v5473, 1.442695
  %v5475 = vpow.pop %v5474
  %v5476 = vadd.f32 %v5475, 1.0
  %v5477 = vrcp.pop %v5476
  %v5478 = vmul.f32 1.0, %v5477
  %5480 = vrot.lane.b32.xlu0 %v5469, 64
  %v5481 = vpop.permute.xlu0 %5480
  %v5483 = vmul.f32 %v5478, %v5481
  %5485 = vrot.lane.b32.xlu0 %v5483, 64
  %v5486 = vpop.permute.xlu0 %5485
  %v5488 = vadd.f32 %v5388, %v5486
  %v5489 = vtanh.pop %v5488
  %v5490 = vsub.f32 1.0, %v5478
  %5492 = vrot.lane.b32.xlu0 %v5489, 96
  %v5493 = vpop.permute.xlu0 %5492
  %v5495 = vmul.f32 %v5490, %v5493
  %v5496 = vmul.f32 %v5478, %v5025
  %v5497 = vadd.f32 %v5495, %v5496
  %v5498 = vld [vmem:[%s12] sm:$0xff]
  %v5499 = vld [vmem:[%s12 + $0x8] sm:$0xff]
  %v5500 = vld [vmem:[%s12 + $0x10] sm:$0xff]
  %v5501 = vld [vmem:[%s12 + $0x18] sm:$0xff]
  %v5502 = vld [vmem:[%s13] sm:$0x1]
  %v5504 = vlaneseq
  %v5505 = vshrl.u32 %v5504, 7
  %v5506 = vsub.s32 0, %v5505
  %v5507 = vrot.slane %v5502, %v5506
  %5510 = vrot.lane.b32.xlu0 %v5497, 96
  %v5511 = vpop.permute.xlu0 %5510
  %v5512 = vsel %vm59, %v5511, 0
  %5514 = vmatprep.subr.mxu0 0.0
  %5515 = vmatpush1.msra.mxu0 %v5498
  %5516 = vmatprep.subr.mxu0 0.0
  %5517 = vmatpush1.msra.mxu0 %v5499
  %5518 = vmatprep.subr.mxu0 0.0
  %5519 = vmatpush1.msra.mxu0 %v5500
  %5520 = vmatprep.subr.mxu0 0.0
  %5521 = vmatpush1.msra.mxu0 %v5501
  %5522 = vmatprep.subr.mxu0 0.0
  %5523 = vmatpush1.msra.mxu0 0.0
  %5524 = vmatprep.subr.mxu0 0.0
  %5525 = vmatpush1.msra.mxu0 0.0
  %5526 = vmatprep.subr.mxu0 0.0
  %5527 = vmatpush1.msra.mxu0 0.0
  %5528 = vmatprep.subr.mxu0 0.0
  %5529 = vmatpush1.msra.mxu0 0.0
  %5530 = vmatprep.subr.mxu0 0.0
  %5531 = vmatpush1.msra.mxu0 0.0
  %5532 = vmatprep.subr.mxu0 0.0
  %5533 = vmatpush1.msra.mxu0 0.0
  %5534 = vmatprep.subr.mxu0 0.0
  %5535 = vmatpush1.msra.mxu0 0.0
  %5536 = vmatprep.subr.mxu0 0.0
  %5537 = vmatpush1.msra.mxu0 0.0
  %5538 = vmatprep.subr.mxu0 0.0
  %5539 = vmatpush1.msra.mxu0 0.0
  %5540 = vmatprep.subr.mxu0 0.0
  %5541 = vmatpush1.msra.mxu0 0.0
  %5542 = vmatprep.subr.mxu0 0.0
  %5543 = vmatpush1.msra.mxu0 0.0
  %5544 = vmatprep.subr.mxu0 0.0
  %5545 = vmatpush1.msra.mxu0 0.0
  %5546 = vmatprep.subr.mxu0 0.0
  %5547 = vmatpush1.msra.mxu0 0.0
  %5548 = vmatprep.subr.mxu0 0.0
  %5549 = vmatpush1.msra.mxu0 0.0
  %5550 = vmatprep.subr.mxu0 0.0
  %5551 = vmatpush1.msra.mxu0 0.0
  %5552 = vmatprep.subr.mxu0 0.0
  %5553 = vmatpush1.msra.mxu0 0.0
  %5554 = vmatprep.subr.mxu0 0.0
  %5555 = vmatpush1.msra.mxu0 0.0
  %5556 = vmatprep.subr.mxu0 0.0
  %5557 = vmatpush1.msra.mxu0 0.0
  %5558 = vmatprep.subr.mxu0 0.0
  %5559 = vmatpush1.msra.mxu0 0.0
  %5560 = vmatprep.subr.mxu0 0.0
  %5561 = vmatpush1.msra.mxu0 0.0
  %5562 = vmatprep.subr.mxu0 0.0
  %5563 = vmatpush1.msra.mxu0 0.0
  %5564 = vmatprep.subr.mxu0 0.0
  %5565 = vmatpush1.msra.mxu0 0.0
  %5566 = vmatprep.subr.mxu0 0.0
  %5567 = vmatpush1.msra.mxu0 0.0
  %5568 = vmatprep.subr.mxu0 0.0
  %5569 = vmatpush1.msra.mxu0 0.0
  %5570 = vmatprep.subr.mxu0 0.0
  %5571 = vmatpush1.msra.mxu0 0.0
  %5572 = vmatprep.subr.mxu0 0.0
  %5573 = vmatpush1.msra.mxu0 0.0
  %5574 = vmatprep.subr.mxu0 0.0
  %5575 = vmatpush1.msra.mxu0 0.0
  %5576 = vmatprep.subr.mxu0 0.0
  %5577 = vmatpush1.msra.mxu0 0.0
  %5578 = vmatprep.mubr.f32.mxu0 0.0
  %5579 = vmatmul.mubr.f32.gmra.mrb[0].mxu0 %v5512
  %v5580 = vpop.f32.mrb[0].mxu0
  %v5581 = vadd.f32 %v5507, %v5580
  %v5582 = vpop.f32.mrb[0].mxu0
  %5583 = vdwg.mxu0
  %s5584 = scalar_lea.vmem %s14, 12
  %5585 = vst.msk [vmem:[%s5584] sm:$0x3] %vm2752, %v5581
  %v5586 = vld [vmem:[%s6] sm:$0xf]
  %v5587 = vld [vmem:[%s7] sm:$0x1]
  %v5589 = vlaneseq
  %v5590 = vshrl.u32 %v5589, 7
  %v5591 = vsub.s32 0, %v5590
  %v5592 = vrot.slane %v5587, %v5591
  %v5595 = vsel %vm2281, %v5581, 0
  %v5598 = vsel %vm2285, %v5586, 0
  %5600 = vmatprep.subr.mxu0 0.0
  %5601 = vmatpush1.msra.mxu0 %v5598
  %5602 = vmatprep.subr.mxu0 0.0
  %5603 = vmatpush1.msra.mxu0 0.0
  %5604 = vmatprep.subr.mxu0 0.0
  %5605 = vmatpush1.msra.mxu0 0.0
  %5606 = vmatprep.subr.mxu0 0.0
  %5607 = vmatpush1.msra.mxu0 0.0
  %5608 = vmatprep.subr.mxu0 0.0
  %5609 = vmatpush1.msra.mxu0 0.0
  %5610 = vmatprep.subr.mxu0 0.0
  %5611 = vmatpush1.msra.mxu0 0.0
  %5612 = vmatprep.subr.mxu0 0.0
  %5613 = vmatpush1.msra.mxu0 0.0
  %5614 = vmatprep.subr.mxu0 0.0
  %5615 = vmatpush1.msra.mxu0 0.0
  %5616 = vmatprep.subr.mxu0 0.0
  %5617 = vmatpush1.msra.mxu0 0.0
  %5618 = vmatprep.subr.mxu0 0.0
  %5619 = vmatpush1.msra.mxu0 0.0
  %5620 = vmatprep.subr.mxu0 0.0
  %5621 = vmatpush1.msra.mxu0 0.0
  %5622 = vmatprep.subr.mxu0 0.0
  %5623 = vmatpush1.msra.mxu0 0.0
  %5624 = vmatprep.subr.mxu0 0.0
  %5625 = vmatpush1.msra.mxu0 0.0
  %5626 = vmatprep.subr.mxu0 0.0
  %5627 = vmatpush1.msra.mxu0 0.0
  %5628 = vmatprep.subr.mxu0 0.0
  %5629 = vmatpush1.msra.mxu0 0.0
  %5630 = vmatprep.subr.mxu0 0.0
  %5631 = vmatpush1.msra.mxu0 0.0
  %5632 = vmatprep.subr.mxu0 0.0
  %5633 = vmatpush1.msra.mxu0 0.0
  %5634 = vmatprep.subr.mxu0 0.0
  %5635 = vmatpush1.msra.mxu0 0.0
  %5636 = vmatprep.subr.mxu0 0.0
  %5637 = vmatpush1.msra.mxu0 0.0
  %5638 = vmatprep.subr.mxu0 0.0
  %5639 = vmatpush1.msra.mxu0 0.0
  %5640 = vmatprep.subr.mxu0 0.0
  %5641 = vmatpush1.msra.mxu0 0.0
  %5642 = vmatprep.subr.mxu0 0.0
  %5643 = vmatpush1.msra.mxu0 0.0
  %5644 = vmatprep.subr.mxu0 0.0
  %5645 = vmatpush1.msra.mxu0 0.0
  %5646 = vmatprep.subr.mxu0 0.0
  %5647 = vmatpush1.msra.mxu0 0.0
  %5648 = vmatprep.subr.mxu0 0.0
  %5649 = vmatpush1.msra.mxu0 0.0
  %5650 = vmatprep.subr.mxu0 0.0
  %5651 = vmatpush1.msra.mxu0 0.0
  %5652 = vmatprep.subr.mxu0 0.0
  %5653 = vmatpush1.msra.mxu0 0.0
  %5654 = vmatprep.subr.mxu0 0.0
  %5655 = vmatpush1.msra.mxu0 0.0
  %5656 = vmatprep.subr.mxu0 0.0
  %5657 = vmatpush1.msra.mxu0 0.0
  %5658 = vmatprep.subr.mxu0 0.0
  %5659 = vmatpush1.msra.mxu0 0.0
  %5660 = vmatprep.subr.mxu0 0.0
  %5661 = vmatpush1.msra.mxu0 0.0
  %5662 = vmatprep.subr.mxu0 0.0
  %5663 = vmatpush1.msra.mxu0 0.0
  %5664 = vmatprep.mubr.f32.mxu0 0.0
  %5665 = vmatmul.mubr.f32.gmra.mrb[0].mxu0 %v5595
  %v5666 = vpop.f32.mrb[0].mxu0
  %v5667 = vadd.f32 %v5592, %v5666
  %v5668 = vpop.f32.mrb[0].mxu0
  %5669 = vdwg.mxu0
  %v5670 = vld [vmem:[%s8] sm:$0xff]
  %v5671 = vld [vmem:[%s8 + $0x8] sm:$0xff]
  %v5672 = vld [vmem:[%s8 + $0x10] sm:$0xff]
  %v5673 = vld [vmem:[%s8 + $0x18] sm:$0xff]
  %v5674 = vld [vmem:[%s9] sm:$0x1]
  %v5676 = vlaneseq
  %v5677 = vshrl.u32 %v5676, 7
  %v5678 = vsub.s32 0, %v5677
  %v5679 = vrot.slane %v5674, %v5678
  %5681 = vmatprep.subr.mxu0 0.0
  %5682 = vmatpush1.msra.mxu0 %v5670
  %5683 = vmatprep.subr.mxu0 0.0
  %5684 = vmatpush1.msra.mxu0 %v5671
  %5685 = vmatprep.subr.mxu0 0.0
  %5686 = vmatpush1.msra.mxu0 %v5672
  %5687 = vmatprep.subr.mxu0 0.0
  %5688 = vmatpush1.msra.mxu0 %v5673
  %5689 = vmatprep.subr.mxu0 0.0
  %5690 = vmatpush1.msra.mxu0 0.0
  %5691 = vmatprep.subr.mxu0 0.0
  %5692 = vmatpush1.msra.mxu0 0.0
  %5693 = vmatprep.subr.mxu0 0.0
  %5694 = vmatpush1.msra.mxu0 0.0
  %5695 = vmatprep.subr.mxu0 0.0
  %5696 = vmatpush1.msra.mxu0 0.0
  %5697 = vmatprep.subr.mxu0 0.0
  %5698 = vmatpush1.msra.mxu0 0.0
  %5699 = vmatprep.subr.mxu0 0.0
  %5700 = vmatpush1.msra.mxu0 0.0
  %5701 = vmatprep.subr.mxu0 0.0
  %5702 = vmatpush1.msra.mxu0 0.0
  %5703 = vmatprep.subr.mxu0 0.0
  %5704 = vmatpush1.msra.mxu0 0.0
  %5705 = vmatprep.subr.mxu0 0.0
  %5706 = vmatpush1.msra.mxu0 0.0
  %5707 = vmatprep.subr.mxu0 0.0
  %5708 = vmatpush1.msra.mxu0 0.0
  %5709 = vmatprep.subr.mxu0 0.0
  %5710 = vmatpush1.msra.mxu0 0.0
  %5711 = vmatprep.subr.mxu0 0.0
  %5712 = vmatpush1.msra.mxu0 0.0
  %5713 = vmatprep.subr.mxu0 0.0
  %5714 = vmatpush1.msra.mxu0 0.0
  %5715 = vmatprep.subr.mxu0 0.0
  %5716 = vmatpush1.msra.mxu0 0.0
  %5717 = vmatprep.subr.mxu0 0.0
  %5718 = vmatpush1.msra.mxu0 0.0
  %5719 = vmatprep.subr.mxu0 0.0
  %5720 = vmatpush1.msra.mxu0 0.0
  %5721 = vmatprep.subr.mxu0 0.0
  %5722 = vmatpush1.msra.mxu0 0.0
  %5723 = vmatprep.subr.mxu0 0.0
  %5724 = vmatpush1.msra.mxu0 0.0
  %5725 = vmatprep.subr.mxu0 0.0
  %5726 = vmatpush1.msra.mxu0 0.0
  %5727 = vmatprep.subr.mxu0 0.0
  %5728 = vmatpush1.msra.mxu0 0.0
  %5729 = vmatprep.subr.mxu0 0.0
  %5730 = vmatpush1.msra.mxu0 0.0
  %5731 = vmatprep.subr.mxu0 0.0
  %5732 = vmatpush1.msra.mxu0 0.0
  %5733 = vmatprep.subr.mxu0 0.0
  %5734 = vmatpush1.msra.mxu0 0.0
  %5735 = vmatprep.subr.mxu0 0.0
  %5736 = vmatpush1.msra.mxu0 0.0
  %5737 = vmatprep.subr.mxu0 0.0
  %5738 = vmatpush1.msra.mxu0 0.0
  %5739 = vmatprep.subr.mxu0 0.0
  %5740 = vmatpush1.msra.mxu0 0.0
  %5741 = vmatprep.subr.mxu0 0.0
  %5742 = vmatpush1.msra.mxu0 0.0
  %5743 = vmatprep.subr.mxu0 0.0
  %5744 = vmatpush1.msra.mxu0 0.0
  %5745 = vmatprep.mubr.f32.mxu0 0.0
  %5746 = vmatmul.mubr.f32.gmra.mrb[0].mxu0 %v5319
  %v5747 = vpop.f32.mrb[0].mxu0
  %v5748 = vadd.f32 %v5679, %v5747
  %v5749 = vpop.f32.mrb[0].mxu0
  %5750 = vdwg.mxu0
  %v5751 = vadd.f32 %v5667, %v5748
  %v5752 = vxor.u32 %v5751, 2147483648
  %v5753 = vmul.f32 %v5752, 1.442695
  %v5754 = vpow.pop %v5753
  %v5755 = vadd.f32 %v5754, 1.0
  %v5756 = vrcp.pop %v5755
  %v5757 = vmul.f32 1.0, %v5756
  %5759 = vrot.lane.b32.xlu0 %v5748, 64
  %v5760 = vpop.permute.xlu0 %5759
  %v5762 = vmul.f32 %v5757, %v5760
  %5764 = vrot.lane.b32.xlu0 %v5762, 64
  %v5765 = vpop.permute.xlu0 %5764
  %v5767 = vadd.f32 %v5667, %v5765
  %v5768 = vtanh.pop %v5767
  %v5769 = vsub.f32 1.0, %v5757
  %5771 = vrot.lane.b32.xlu0 %v5768, 96
  %v5772 = vpop.permute.xlu0 %5771
  %v5774 = vmul.f32 %v5769, %v5772
  %v5775 = vmul.f32 %v5757, %v5304
  %v5776 = vadd.f32 %v5774, %v5775
  %v5777 = vld [vmem:[%s10] sm:$0xff]
  %v5778 = vld [vmem:[%s10 + $0x8] sm:$0xff]
  %v5779 = vld [vmem:[%s10 + $0x10] sm:$0xff]
  %v5780 = vld [vmem:[%s10 + $0x18] sm:$0xff]
  %v5781 = vld [vmem:[%s11] sm:$0x1]
  %v5783 = vlaneseq
  %v5784 = vshrl.u32 %v5783, 7
  %v5785 = vsub.s32 0, %v5784
  %v5786 = vrot.slane %v5781, %v5785
  %5789 = vrot.lane.b32.xlu0 %v5776, 96
  %v5790 = vpop.permute.xlu0 %5789
  %v5791 = vsel %vm59, %v5790, 0
  %5793 = vmatprep.subr.mxu0 0.0
  %5794 = vmatpush1.msra.mxu0 %v5777
  %5795 = vmatprep.subr.mxu0 0.0
  %5796 = vmatpush1.msra.mxu0 %v5778
  %5797 = vmatprep.subr.mxu0 0.0
  %5798 = vmatpush1.msra.mxu0 %v5779
  %5799 = vmatprep.subr.mxu0 0.0
  %5800 = vmatpush1.msra.mxu0 %v5780
  %5801 = vmatprep.subr.mxu0 0.0
  %5802 = vmatpush1.msra.mxu0 0.0
  %5803 = vmatprep.subr.mxu0 0.0
  %5804 = vmatpush1.msra.mxu0 0.0
  %5805 = vmatprep.subr.mxu0 0.0
  %5806 = vmatpush1.msra.mxu0 0.0
  %5807 = vmatprep.subr.mxu0 0.0
  %5808 = vmatpush1.msra.mxu0 0.0
  %5809 = vmatprep.subr.mxu0 0.0
  %5810 = vmatpush1.msra.mxu0 0.0
  %5811 = vmatprep.subr.mxu0 0.0
  %5812 = vmatpush1.msra.mxu0 0.0
  %5813 = vmatprep.subr.mxu0 0.0
  %5814 = vmatpush1.msra.mxu0 0.0
  %5815 = vmatprep.subr.mxu0 0.0
  %5816 = vmatpush1.msra.mxu0 0.0
  %5817 = vmatprep.subr.mxu0 0.0
  %5818 = vmatpush1.msra.mxu0 0.0
  %5819 = vmatprep.subr.mxu0 0.0
  %5820 = vmatpush1.msra.mxu0 0.0
  %5821 = vmatprep.subr.mxu0 0.0
  %5822 = vmatpush1.msra.mxu0 0.0
  %5823 = vmatprep.subr.mxu0 0.0
  %5824 = vmatpush1.msra.mxu0 0.0
  %5825 = vmatprep.subr.mxu0 0.0
  %5826 = vmatpush1.msra.mxu0 0.0
  %5827 = vmatprep.subr.mxu0 0.0
  %5828 = vmatpush1.msra.mxu0 0.0
  %5829 = vmatprep.subr.mxu0 0.0
  %5830 = vmatpush1.msra.mxu0 0.0
  %5831 = vmatprep.subr.mxu0 0.0
  %5832 = vmatpush1.msra.mxu0 0.0
  %5833 = vmatprep.subr.mxu0 0.0
  %5834 = vmatpush1.msra.mxu0 0.0
  %5835 = vmatprep.subr.mxu0 0.0
  %5836 = vmatpush1.msra.mxu0 0.0
  %5837 = vmatprep.subr.mxu0 0.0
  %5838 = vmatpush1.msra.mxu0 0.0
  %5839 = vmatprep.subr.mxu0 0.0
  %5840 = vmatpush1.msra.mxu0 0.0
  %5841 = vmatprep.subr.mxu0 0.0
  %5842 = vmatpush1.msra.mxu0 0.0
  %5843 = vmatprep.subr.mxu0 0.0
  %5844 = vmatpush1.msra.mxu0 0.0
  %5845 = vmatprep.subr.mxu0 0.0
  %5846 = vmatpush1.msra.mxu0 0.0
  %5847 = vmatprep.subr.mxu0 0.0
  %5848 = vmatpush1.msra.mxu0 0.0
  %5849 = vmatprep.subr.mxu0 0.0
  %5850 = vmatpush1.msra.mxu0 0.0
  %5851 = vmatprep.subr.mxu0 0.0
  %5852 = vmatpush1.msra.mxu0 0.0
  %5853 = vmatprep.subr.mxu0 0.0
  %5854 = vmatpush1.msra.mxu0 0.0
  %5855 = vmatprep.subr.mxu0 0.0
  %5856 = vmatpush1.msra.mxu0 0.0
  %5857 = vmatprep.mubr.f32.mxu0 0.0
  %5858 = vmatmul.mubr.f32.gmra.mrb[0].mxu0 %v5791
  %v5859 = vpop.f32.mrb[0].mxu0
  %v5860 = vadd.f32 %v5786, %v5859
  %v5861 = vpop.f32.mrb[0].mxu0
  %5862 = vdwg.mxu0
  %v5863 = vld [vmem:[%s2552] sm:$0xff]
  %v5864 = vld [vmem:[%s2552 + $0x8] sm:$0xff]
  %v5865 = vld [vmem:[%s2552 + $0x10] sm:$0xff]
  %v5866 = vld [vmem:[%s2552 + $0x18] sm:$0xff]
  %v5867 = vld [vmem:[%s2557] sm:$0x1]
  %v5869 = vlaneseq
  %v5870 = vshrl.u32 %v5869, 7
  %v5871 = vsub.s32 0, %v5870
  %v5872 = vrot.slane %v5867, %v5871
  %5874 = vmatprep.subr.mxu0 0.0
  %5875 = vmatpush1.msra.mxu0 %v5863
  %5876 = vmatprep.subr.mxu0 0.0
  %5877 = vmatpush1.msra.mxu0 %v5864
  %5878 = vmatprep.subr.mxu0 0.0
  %5879 = vmatpush1.msra.mxu0 %v5865
  %5880 = vmatprep.subr.mxu0 0.0
  %5881 = vmatpush1.msra.mxu0 %v5866
  %5882 = vmatprep.subr.mxu0 0.0
  %5883 = vmatpush1.msra.mxu0 0.0
  %5884 = vmatprep.subr.mxu0 0.0
  %5885 = vmatpush1.msra.mxu0 0.0
  %5886 = vmatprep.subr.mxu0 0.0
  %5887 = vmatpush1.msra.mxu0 0.0
  %5888 = vmatprep.subr.mxu0 0.0
  %5889 = vmatpush1.msra.mxu0 0.0
  %5890 = vmatprep.subr.mxu0 0.0
  %5891 = vmatpush1.msra.mxu0 0.0
  %5892 = vmatprep.subr.mxu0 0.0
  %5893 = vmatpush1.msra.mxu0 0.0
  %5894 = vmatprep.subr.mxu0 0.0
  %5895 = vmatpush1.msra.mxu0 0.0
  %5896 = vmatprep.subr.mxu0 0.0
  %5897 = vmatpush1.msra.mxu0 0.0
  %5898 = vmatprep.subr.mxu0 0.0
  %5899 = vmatpush1.msra.mxu0 0.0
  %5900 = vmatprep.subr.mxu0 0.0
  %5901 = vmatpush1.msra.mxu0 0.0
  %5902 = vmatprep.subr.mxu0 0.0
  %5903 = vmatpush1.msra.mxu0 0.0
  %5904 = vmatprep.subr.mxu0 0.0
  %5905 = vmatpush1.msra.mxu0 0.0
  %5906 = vmatprep.subr.mxu0 0.0
  %5907 = vmatpush1.msra.mxu0 0.0
  %5908 = vmatprep.subr.mxu0 0.0
  %5909 = vmatpush1.msra.mxu0 0.0
  %5910 = vmatprep.subr.mxu0 0.0
  %5911 = vmatpush1.msra.mxu0 0.0
  %5912 = vmatprep.subr.mxu0 0.0
  %5913 = vmatpush1.msra.mxu0 0.0
  %5914 = vmatprep.subr.mxu0 0.0
  %5915 = vmatpush1.msra.mxu0 0.0
  %5916 = vmatprep.subr.mxu0 0.0
  %5917 = vmatpush1.msra.mxu0 0.0
  %5918 = vmatprep.subr.mxu0 0.0
  %5919 = vmatpush1.msra.mxu0 0.0
  %5920 = vmatprep.subr.mxu0 0.0
  %5921 = vmatpush1.msra.mxu0 0.0
  %5922 = vmatprep.subr.mxu0 0.0
  %5923 = vmatpush1.msra.mxu0 0.0
  %5924 = vmatprep.subr.mxu0 0.0
  %5925 = vmatpush1.msra.mxu0 0.0
  %5926 = vmatprep.subr.mxu0 0.0
  %5927 = vmatpush1.msra.mxu0 0.0
  %5928 = vmatprep.subr.mxu0 0.0
  %5929 = vmatpush1.msra.mxu0 0.0
  %5930 = vmatprep.subr.mxu0 0.0
  %5931 = vmatpush1.msra.mxu0 0.0
  %5932 = vmatprep.subr.mxu0 0.0
  %5933 = vmatpush1.msra.mxu0 0.0
  %5934 = vmatprep.subr.mxu0 0.0
  %5935 = vmatpush1.msra.mxu0 0.0
  %5936 = vmatprep.subr.mxu0 0.0
  %5937 = vmatpush1.msra.mxu0 0.0
  %5938 = vmatprep.mubr.f32.mxu0 0.0
  %5939 = vmatmul.mubr.f32.gmra.mrb[0].mxu0 %v5512
  %v5940 = vpop.f32.mrb[0].mxu0
  %v5941 = vadd.f32 %v5872, %v5940
  %v5942 = vpop.f32.mrb[0].mxu0
  %5943 = vdwg.mxu0
  %v5944 = vadd.f32 %v5860, %v5941
  %v5945 = vxor.u32 %v5944, 2147483648
  %v5946 = vmul.f32 %v5945, 1.442695
  %v5947 = vpow.pop %v5946
  %v5948 = vadd.f32 %v5947, 1.0
  %v5949 = vrcp.pop %v5948
  %v5950 = vmul.f32 1.0, %v5949
  %5952 = vrot.lane.b32.xlu0 %v5941, 64
  %v5953 = vpop.permute.xlu0 %5952
  %v5955 = vmul.f32 %v5950, %v5953
  %5957 = vrot.lane.b32.xlu0 %v5955, 64
  %v5958 = vpop.permute.xlu0 %5957
  %v5960 = vadd.f32 %v5860, %v5958
  %v5961 = vtanh.pop %v5960
  %v5962 = vsub.f32 1.0, %v5950
  %5964 = vrot.lane.b32.xlu0 %v5961, 96
  %v5965 = vpop.permute.xlu0 %5964
  %v5967 = vmul.f32 %v5962, %v5965
  %v5968 = vmul.f32 %v5950, %v5497
  %v5969 = vadd.f32 %v5967, %v5968
  %v5970 = vld [vmem:[%s12] sm:$0xff]
  %v5971 = vld [vmem:[%s12 + $0x8] sm:$0xff]
  %v5972 = vld [vmem:[%s12 + $0x10] sm:$0xff]
  %v5973 = vld [vmem:[%s12 + $0x18] sm:$0xff]
  %v5974 = vld [vmem:[%s13] sm:$0x1]
  %v5976 = vlaneseq
  %v5977 = vshrl.u32 %v5976, 7
  %v5978 = vsub.s32 0, %v5977
  %v5979 = vrot.slane %v5974, %v5978
  %5982 = vrot.lane.b32.xlu0 %v5969, 96
  %v5983 = vpop.permute.xlu0 %5982
  %v5984 = vsel %vm59, %v5983, 0
  %5986 = vmatprep.subr.mxu0 0.0
  %5987 = vmatpush1.msra.mxu0 %v5970
  %5988 = vmatprep.subr.mxu0 0.0
  %5989 = vmatpush1.msra.mxu0 %v5971
  %5990 = vmatprep.subr.mxu0 0.0
  %5991 = vmatpush1.msra.mxu0 %v5972
  %5992 = vmatprep.subr.mxu0 0.0
  %5993 = vmatpush1.msra.mxu0 %v5973
  %5994 = vmatprep.subr.mxu0 0.0
  %5995 = vmatpush1.msra.mxu0 0.0
  %5996 = vmatprep.subr.mxu0 0.0
  %5997 = vmatpush1.msra.mxu0 0.0
  %5998 = vmatprep.subr.mxu0 0.0
  %5999 = vmatpush1.msra.mxu0 0.0
  %6000 = vmatprep.subr.mxu0 0.0
  %6001 = vmatpush1.msra.mxu0 0.0
  %6002 = vmatprep.subr.mxu0 0.0
  %6003 = vmatpush1.msra.mxu0 0.0
  %6004 = vmatprep.subr.mxu0 0.0
  %6005 = vmatpush1.msra.mxu0 0.0
  %6006 = vmatprep.subr.mxu0 0.0
  %6007 = vmatpush1.msra.mxu0 0.0
  %6008 = vmatprep.subr.mxu0 0.0
  %6009 = vmatpush1.msra.mxu0 0.0
  %6010 = vmatprep.subr.mxu0 0.0
  %6011 = vmatpush1.msra.mxu0 0.0
  %6012 = vmatprep.subr.mxu0 0.0
  %6013 = vmatpush1.msra.mxu0 0.0
  %6014 = vmatprep.subr.mxu0 0.0
  %6015 = vmatpush1.msra.mxu0 0.0
  %6016 = vmatprep.subr.mxu0 0.0
  %6017 = vmatpush1.msra.mxu0 0.0
  %6018 = vmatprep.subr.mxu0 0.0
  %6019 = vmatpush1.msra.mxu0 0.0
  %6020 = vmatprep.subr.mxu0 0.0
  %6021 = vmatpush1.msra.mxu0 0.0
  %6022 = vmatprep.subr.mxu0 0.0
  %6023 = vmatpush1.msra.mxu0 0.0
  %6024 = vmatprep.subr.mxu0 0.0
  %6025 = vmatpush1.msra.mxu0 0.0
  %6026 = vmatprep.subr.mxu0 0.0
  %6027 = vmatpush1.msra.mxu0 0.0
  %6028 = vmatprep.subr.mxu0 0.0
  %6029 = vmatpush1.msra.mxu0 0.0
  %6030 = vmatprep.subr.mxu0 0.0
  %6031 = vmatpush1.msra.mxu0 0.0
  %6032 = vmatprep.subr.mxu0 0.0
  %6033 = vmatpush1.msra.mxu0 0.0
  %6034 = vmatprep.subr.mxu0 0.0
  %6035 = vmatpush1.msra.mxu0 0.0
  %6036 = vmatprep.subr.mxu0 0.0
  %6037 = vmatpush1.msra.mxu0 0.0
  %6038 = vmatprep.subr.mxu0 0.0
  %6039 = vmatpush1.msra.mxu0 0.0
  %6040 = vmatprep.subr.mxu0 0.0
  %6041 = vmatpush1.msra.mxu0 0.0
  %6042 = vmatprep.subr.mxu0 0.0
  %6043 = vmatpush1.msra.mxu0 0.0
  %6044 = vmatprep.subr.mxu0 0.0
  %6045 = vmatpush1.msra.mxu0 0.0
  %6046 = vmatprep.subr.mxu0 0.0
  %6047 = vmatpush1.msra.mxu0 0.0
  %6048 = vmatprep.subr.mxu0 0.0
  %6049 = vmatpush1.msra.mxu0 0.0
  %6050 = vmatprep.mubr.f32.mxu0 0.0
  %6051 = vmatmul.mubr.f32.gmra.mrb[0].mxu0 %v5984
  %v6052 = vpop.f32.mrb[0].mxu0
  %v6053 = vadd.f32 %v5979, %v6052
  %v6054 = vpop.f32.mrb[0].mxu0
  %6055 = vdwg.mxu0
  %s6056 = scalar_lea.vmem %s14, 14
  %6057 = vst.msk [vmem:[%s6056] sm:$0x3] %vm2752, %v6053
  // Predicated region
  $region58: #{seq_translator_rnn_forward.1} parent=0 // pred_check
    _
  $region59: #{seq_translator_rnn_forward.1} parent=0 // pred_check_branch
    %6059 = sbr.rel (0) target = $region61
  $region60: #{seq_translator_rnn_forward.1} parent=0 // pred_region
    _
  $region61: #{seq_translator_rnn_forward.1} parent=0 // pred_fallthru
    _
  // Predicated region
  $region62: #{seq_translator_rnn_forward.1} parent=0 // pred_check
    _
  $region63: #{seq_translator_rnn_forward.1} parent=0 // pred_check_branch
    %6061 = sbr.rel (0) target = $region65
  $region64: #{seq_translator_rnn_forward.1} parent=0 // pred_region
    _
  $region65: #{seq_translator_rnn_forward.1} parent=0 // pred_fallthru
    _

</llo_original>
